<compile_context>
chip_gen: v6e
topology: v6e:2x2x1
jax: 0.10.0
libtpu: 0.0.40
codegen_flags: <defaults>
</compile_context>

<pallas_src>
import math

import jax
import jax.numpy as jnp
from jax import lax
from jax.experimental import pallas as pl
from jax.experimental.pallas import tpu as pltpu


# ---------------------------------------------------------------------------
# Pallas kernel 1: fused bidirectional masked (packed-equivalent) LSTM
# ---------------------------------------------------------------------------
def _bilstm_kernel(x_ref, m_ref, wih_ref, whh_ref, b_ref, h0_ref, c0_ref,
                   seq_ref, hfin_ref, h_sc, c_sc):
    # x_ref  : (T, N, D)   shared by both directions
    # m_ref  : (T, N, 1)   1.0 = valid step, 0.0 = padding
    # wih_ref: (D, 4H)     this direction's fused input weights  (gates i,f,g,o)
    # whh_ref: (H, 4H)
    # b_ref  : (1, 4H)     bias_ih + bias_hh
    # h0_ref : (N, H), c0_ref: (N, H)
    # seq_ref: (T, N, H)   this direction's slice of the (2, T, N, H) output
    # hfin_ref: (N, H)     this direction's final hidden
    d = pl.program_id(0)           # 0 = forward, 1 = backward
    T = x_ref.shape[0]
    H = h0_ref.shape[-1]

    h_sc[...] = h0_ref[...]
    c_sc[...] = c0_ref[...]
    wih = wih_ref[...]
    whh = whh_ref[...]
    b = b_ref[...]

    def sigmoid(z):                # stable, single EUP tanh per gate
        return 0.5 * (jnp.tanh(0.5 * z) + 1.0)

    def step(t, carry):
        tt = jnp.where(d == 0, t, T - 1 - t)      # in-kernel sequence reversal
        x = x_ref[tt]                             # (N, D)
        m = m_ref[tt]                             # (N, 1)
        h = h_sc[...]
        c = c_sc[...]

        g = (jnp.dot(x, wih, preferred_element_type=jnp.float32)
             + jnp.dot(h, whh, preferred_element_type=jnp.float32)
             + b)                                 # (N, 4H)

        i_g = sigmoid(g[:, 0 * H:1 * H])
        f_g = sigmoid(g[:, 1 * H:2 * H])
        g_g = jnp.tanh(g[:, 2 * H:3 * H])
        o_g = sigmoid(g[:, 3 * H:4 * H])

        c_new = f_g * c + i_g * g_g
        h_new = o_g * jnp.tanh(c_new)

        # packed-sequence emulation: padded steps carry the previous state
        h_upd = m * h_new + (1.0 - m) * h
        c_upd = m * c_new + (1.0 - m) * c
        h_sc[...] = h_upd
        c_sc[...] = c_upd

        seq_ref[tt] = h_upd * m    # pad_packed_sequence outputs zeros at pad
        return carry

    lax.fori_loop(0, T, step, 0, unroll=True)
    hfin_ref[...] = h_sc[...]


def bilstm(x_btd, mask_bt, w_ih, w_hh, b, h0, c0):
    """Fused bidirectional masked LSTM.

    x_btd: (N, T, D), mask_bt: (N, T) bool, w_ih: (2, D, 4H), w_hh: (2, H, 4H),
    b: (2, 1, 4H), h0/c0: (2, N, H) (dir 0 = forward, dir 1 = backward).
    Returns (seq (2, T, N, H), h_final (2, N, H))."""
    N, T, D = x_btd.shape
    H = h0.shape[-1]
    x_tm = jnp.transpose(x_btd, (1, 0, 2)).astype(jnp.float32)        # (T, N, D)
    m_tm = jnp.transpose(mask_bt.astype(jnp.float32), (1, 0))[:, :, None]

    seq, hfin = pl.pallas_call(
        _bilstm_kernel,
        out_shape=(jax.ShapeDtypeStruct((2, T, N, H), jnp.float32),
                   jax.ShapeDtypeStruct((2, N, H), jnp.float32)),
        grid_spec=pltpu.PrefetchScalarGridSpec(
            num_scalar_prefetch=0,
            grid=(2,),
            in_specs=[
                pl.BlockSpec((T, N, D), lambda d: (0, 0, 0)),
                pl.BlockSpec((T, N, 1), lambda d: (0, 0, 0)),
                pl.BlockSpec((None, D, 4 * H), lambda d: (d, 0, 0)),
                pl.BlockSpec((None, H, 4 * H), lambda d: (d, 0, 0)),
                pl.BlockSpec((None, 1, 4 * H), lambda d: (d, 0, 0)),
                pl.BlockSpec((None, N, H), lambda d: (d, 0, 0)),
                pl.BlockSpec((None, N, H), lambda d: (d, 0, 0)),
            ],
            out_specs=(pl.BlockSpec((None, T, N, H), lambda d: (d, 0, 0, 0)),
                       pl.BlockSpec((None, N, H), lambda d: (d, 0, 0))),
            scratch_shapes=[pltpu.VMEM((N, H), jnp.float32),
                            pltpu.VMEM((N, H), jnp.float32)]),
        compiler_params=pltpu.CompilerParams(
            dimension_semantics=("parallel",)),
    )(x_tm, m_tm, w_ih, w_hh, b, h0, c0)
    return seq, hfin


# ---------------------------------------------------------------------------
# Pallas kernel 2: self-attention + tag projection (single invocation)
# ---------------------------------------------------------------------------
def _atten_tag_kernel(x_ref, mk_ref, w1_ref, b1_ref, w2_ref, b2_ref,
                      wta_ref, wtx_ref, bt_ref, out_ref):
    B = out_ref.shape[0]
    T = out_ref.shape[1]
    w1 = w1_ref[...]
    b1 = b1_ref[...]
    w2 = w2_ref[...]
    b2 = b2_ref[...]
    wta = wta_ref[...]
    wtx = wtx_ref[...]
    bt = bt_ref[...]

    rows = lax.broadcasted_iota(jnp.int32, (T, T), 0)
    cols = lax.broadcasted_iota(jnp.int32, (T, T), 1)
    diag = rows == cols

    for bi in range(B):                              # static batch loop (B tiny)
        x = x_ref[bi]                                # (T, F)
        mk = mk_ref[bi]                              # (1, T) key-validity mask

        q = jnp.tanh(jnp.dot(x, w1, preferred_element_type=jnp.float32) + b1)
        k = jnp.tanh(jnp.dot(x, w2, preferred_element_type=jnp.float32) + b2)

        # attn = q @ k^T  (contract feature dims, no explicit transpose)
        attn = lax.dot_general(q, k, (((1,), (1,)), ((), ())),
                               preferred_element_type=jnp.float32)   # (T, T)
        attn = jnp.where(mk > 0.0, attn, jnp.float32(-1e30))

        attn = attn - jnp.max(attn, axis=1, keepdims=True)
        e = jnp.exp(attn)
        w = e * pl.reciprocal(jnp.sum(e, axis=1, keepdims=True), approx=True)
        w = jnp.where(diag, jnp.float32(0.0), w)     # * (1 - eye)

        att_out = jnp.dot(w, x, preferred_element_type=jnp.float32)  # (T, F)

        # att_tag( cat([att_out, x], -1) ) == att_out @ Wa + x @ Wx + b
        out = (jnp.dot(att_out, wta, preferred_element_type=jnp.float32)
               + jnp.dot(x, wtx, preferred_element_type=jnp.float32) + bt)
        out_ref[bi] = out


def atten_tag(lstm_out, mask, w1, b1, w2, b2, wta, wtx, bt):
    B, T, F = lstm_out.shape
    O = bt.shape[-1]
    mk = mask.astype(jnp.float32)[:, None, :]          # (B, 1, T)
    return pl.pallas_call(
        _atten_tag_kernel,
        out_shape=jax.ShapeDtypeStruct((B, T, O), jnp.float32),
        grid_spec=pltpu.PrefetchScalarGridSpec(
            num_scalar_prefetch=0,
            grid=(1,),
            in_specs=[
                pl.BlockSpec((B, T, F), lambda i: (0, 0, 0)),
                pl.BlockSpec((B, 1, T), lambda i: (0, 0, 0)),
                pl.BlockSpec((F, F), lambda i: (0, 0)),
                pl.BlockSpec((1, F), lambda i: (0, 0)),
                pl.BlockSpec((F, F), lambda i: (0, 0)),
                pl.BlockSpec((1, F), lambda i: (0, 0)),
                pl.BlockSpec((F, O), lambda i: (0, 0)),
                pl.BlockSpec((F, O), lambda i: (0, 0)),
                pl.BlockSpec((1, O), lambda i: (0, 0)),
            ],
            out_specs=pl.BlockSpec((B, T, O), lambda i: (0, 0, 0))),
        compiler_params=pltpu.CompilerParams(
            dimension_semantics=("arbitrary",)),
    )(lstm_out.astype(jnp.float32), mk, w1, b1, w2, b2, wta, wtx, bt)


# ---------------------------------------------------------------------------
# CRF: negative-log-likelihood loss + Viterbi decode (plain JAX, lax.scan)
# ---------------------------------------------------------------------------
def _crf_forward_score(feats, mask, transitions):
    B, L, Tg = feats.shape
    start, stop = Tg - 2, Tg - 1
    feats_t = jnp.transpose(feats, (1, 0, 2))          # (L, B, Tg)
    mask_t = jnp.transpose(mask, (1, 0))               # (L, B)

    part0 = feats_t[0] + transitions[start][None, :]   # (B, Tg)

    def step(part, inp):
        f_t, m_t = inp                                  # (B, Tg), (B,)
        cur = f_t[:, None, :] + transitions[None, :, :] + part[:, :, None]
        cur_part = jax.nn.logsumexp(cur, axis=1)        # (B, Tg)
        part_new = jnp.where(m_t[:, None], cur_part, part)
        return part_new, None

    part, _ = lax.scan(step, part0, (feats_t[1:], mask_t[1:]))
    final = jax.nn.logsumexp(part[:, :, None] + transitions[None, :, :], axis=1)
    return final[:, stop].sum()


def _crf_gold_score(feats, mask, tags, transitions):
    B, L, Tg = feats.shape
    start, stop = Tg - 2, Tg - 1
    tags = tags.astype(jnp.int32)
    prev_tags = jnp.concatenate(
        [jnp.full((B, 1), start, jnp.int32), tags[:, :-1]], axis=1)  # (B, L)
    emit = jnp.take_along_axis(feats, tags[..., None], axis=2)[..., 0]
    trans_sc = transitions[prev_tags, tags]
    tg_energy = jnp.where(mask, emit + trans_sc, 0.0).sum()
    lens = mask.sum(axis=1).astype(jnp.int32)
    end_ids = jnp.take_along_axis(tags, (lens - 1)[:, None], axis=1)[:, 0]
    end_energy = transitions[end_ids, stop].sum()
    return tg_energy + end_energy


def crf_neg_log_likelihood(feats, mask, tags, transitions):
    B = feats.shape[0]
    fwd = _crf_forward_score(feats, mask, transitions)
    gold = _crf_gold_score(feats, mask, tags, transitions)
    return (fwd - gold) / B                              # average_batch=True


def crf_viterbi(feats, mask, transitions):
    B, L, Tg = feats.shape
    start, stop = Tg - 2, Tg - 1
    feats_t = jnp.transpose(feats, (1, 0, 2))            # (L, B, Tg)
    mask_t = jnp.transpose(mask, (1, 0))                 # (L, B)
    lens = mask.sum(axis=1).astype(jnp.int32)

    part0 = feats_t[0] + transitions[start][None, :]     # (B, Tg)

    def step(part, inp):
        f_t, minv_t = inp
        cur = f_t[:, None, :] + transitions[None, :, :] + part[:, :, None]
        new_part = jnp.max(cur, axis=1)
        bp = jnp.argmax(cur, axis=1).astype(jnp.int32)
        bp = jnp.where(minv_t[:, None], 0, bp)
        return new_part, (new_part, bp)

    _, (part_hist_rest, bps) = lax.scan(
        step, part0, (feats_t[1:], jnp.logical_not(mask_t[1:])))

    part_hist = jnp.concatenate([part0[None], part_hist_rest], axis=0)  # (L,B,Tg)
    part_hist = jnp.transpose(part_hist, (1, 0, 2))                      # (B,L,Tg)
    last_pos = lens - 1
    gather_idx = jnp.broadcast_to(last_pos[:, None, None], (B, 1, Tg))
    last_partition = jnp.take_along_axis(part_hist, gather_idx, axis=1)[:, 0, :]
    last_values = last_partition[:, :, None] + transitions[None, :, :]
    last_bp = jnp.argmax(last_values, axis=1).astype(jnp.int32)          # (B,Tg)
    pointer = last_bp[:, stop]                                           # (B,)

    pad_zero = jnp.zeros((1, B, Tg), jnp.int32)
    back_points = jnp.concatenate([bps, pad_zero], axis=0)               # (L,B,Tg)
    back_points = jnp.transpose(back_points, (1, 0, 2))                  # (B,L,Tg)
    b_idx = jnp.arange(B)
    back_points = back_points.at[b_idx, last_pos, :].set(
        jnp.broadcast_to(pointer[:, None], (B, Tg)))
    back_points = jnp.transpose(back_points, (1, 0, 2))                  # (L,B,Tg)

    def bt_step(ptr, bp_t):
        new_ptr = jnp.take_along_axis(bp_t, ptr[:, None], axis=1)[:, 0]
        return new_ptr, new_ptr

    _, dec_rev = lax.scan(bt_step, pointer, back_points[:-1][::-1])
    decode = jnp.concatenate([dec_rev[::-1], pointer[None]], axis=0)     # (L, B)
    return jnp.transpose(decode, (1, 0))                                  # (B, L)


# ---------------------------------------------------------------------------
# Parameter construction (deterministic, matching the module's init scopes)
# ---------------------------------------------------------------------------
def _uniform(key, shape, scale):
    return jax.random.uniform(key, shape, jnp.float32, -scale, scale)


def init_bilstm_params(key, d_in, hidden):
    """Per-direction fused weights: w_ih (2, D, 4H), w_hh (2, H, 4H), b (2, 1, 4H)."""
    def one_dir(k):
        k1, k2 = jax.random.split(k)
        scope_i = math.sqrt(6.0 / (hidden + d_in))        # sqrt(6 / (4H/4 + D))
        scope_h = math.sqrt(6.0 / (hidden + hidden))
        w_ih = _uniform(k1, (d_in, 4 * hidden), scope_i)  # gate order i, f, g, o
        w_hh = _uniform(k2, (hidden, 4 * hidden), scope_h)
        b = jnp.zeros((1, 4 * hidden), jnp.float32)
        b = b.at[:, hidden:2 * hidden].set(2.0)           # bias_ih + bias_hh (forget)
        return w_ih, w_hh, b
    kf, kb = jax.random.split(key)
    wf, hf, bf = one_dir(kf)
    wb, hb, bb = one_dir(kb)
    return (jnp.stack([wf, wb]), jnp.stack([hf, hb]), jnp.stack([bf, bb]))


def init_linear_params(key, d_in, d_out):
    scope = math.sqrt(6.0 / (d_in + d_out))
    w = _uniform(key, (d_in, d_out), scope)               # stored as W^T
    b = jnp.zeros((1, d_out), jnp.float32)
    return w, b


# ---------------------------------------------------------------------------
# WordLSTM + CRF forward (embeddings / sort glue in JAX; hot paths in Pallas)
# ---------------------------------------------------------------------------
def word_lstm_forward(params, x0, x1, x2, x3, hidden_key):
    B = x0.shape[0]
    max_len = x1.shape[1]

    # ---------------- CharLSTM ----------------
    char_ids = x1.reshape(B * max_len, -1)                # (N, Tc)
    N = char_ids.shape[0]
    char_mask = char_ids > 0
    char_emb = jnp.take(params["pretrain_embed"], char_ids, axis=0)
    Hc = params["char_lstm"][0].shape[-1] // 4
    zeros_h = jnp.zeros((2, N, Hc), jnp.float32)
    _, char_fin = bilstm(char_emb, char_mask, *params["char_lstm"],
                         zeros_h, zeros_h)
    rep = jnp.concatenate([char_fin[0], char_fin[1]], axis=-1)
    rep = rep.reshape(B, max_len, -1)                     # (B, max_len, n_out)

    # ---------------- word level ----------------
    mask2 = x0 > 0
    lens1 = mask2.sum(axis=1).astype(jnp.int32)
    indices1 = jnp.argsort(-lens1)                        # descending
    inverse_indices1 = jnp.argsort(indices1)
    # TODO(synk): static max_len is used instead of max_l1 = int(max(lens1)) to
    # avoid a host sync; padded positions are masked downstream by the CRF.

    word = jnp.take(params["embed1"], x0, axis=0)
    word_seg = jnp.take(params["embed3"], x2, axis=0)
    inp = jnp.concatenate([word, rep, word_seg], axis=2)
    # TODO(synk): nn.Dropout(drop1/drop2) treated as eval-mode identity.

    H1 = params["word_lstm"][0].shape[-1] // 4
    kh, kc = jax.random.split(hidden_key)
    h0 = jax.random.normal(kh, (2, B, H1), jnp.float32)   # init_hidden(): randn
    c0 = jax.random.normal(kc, (2, B, H1), jnp.float32)
    # torch assigns the j-th random hidden to the j-th *sorted* sequence
    h0 = h0[:, inverse_indices1, :]
    c0 = c0[:, inverse_indices1, :]

    seq, _ = bilstm(inp, mask2, *params["word_lstm"], h0, c0)   # (2, T, B, H)
    T = seq.shape[1]
    lstm_out = jnp.transpose(seq, (2, 1, 0, 3)).reshape(B, T, 2 * H1)

    feats = atten_tag(lstm_out, mask2,
                      params["w1"], params["b1"], params["w2"], params["b2"],
                      params["wta"], params["wtx"], params["bta"])
    return feats, mask2, x3


def bilstm_crf_forward(params, x0, x1, x2, x3, hidden_key):
    feats, mask2, tags = word_lstm_forward(params, x0, x1, x2, x3, hidden_key)
    transitions = params["transitions"]
    loss = crf_neg_log_likelihood(feats, mask2, tags, transitions)
    best_path = crf_viterbi(feats, mask2, transitions)
    return loss, mask2, best_path


# ---------------------------------------------------------------------------
if __name__ == "__main__":
    # small configuration consistent with the module
    n_char, n_embed = 20, 16
    n_out, n_out1 = 32, 32            # char-LSTM out dim / word-LSTM out dim
    seg_num, seg_dim = 4, 8
    taget_size = 14
    target_out = taget_size + 2       # 16 (tag_size + 2, incl. START/STOP)
    max_len = 8
    char_len = 6
    B = 2

    keys = jax.random.split(jax.random.PRNGKey(0), 20)

    params = {
        "pretrain_embed": _uniform(keys[0], (n_char, n_embed),
                                   math.sqrt(3.0 / n_embed)),
        "embed3": _uniform(keys[1], (seg_num, seg_dim),
                           math.sqrt(3.0 / seg_dim)),
        "char_lstm": init_bilstm_params(keys[2], n_embed, n_out // 2),
        "word_lstm": init_bilstm_params(keys[4], n_embed + n_out + seg_dim,
                                        n_out1 // 2),
        "transitions": jnp.zeros((target_out, target_out), jnp.float32),
    }
    params["embed1"] = params["pretrain_embed"]       # use_pretrain=True
    params["w1"], params["b1"] = init_linear_params(keys[6], n_out1, n_out1)
    params["w2"], params["b2"] = init_linear_params(keys[7], n_out1, n_out1)
    watt = _uniform(keys[8], (2 * n_out1, target_out),
                    math.sqrt(6.0 / (2 * n_out1 + target_out)))
    params["wta"] = watt[:n_out1]
    params["wtx"] = watt[n_out1:]
    params["bta"] = jnp.zeros((1, target_out), jnp.float32)
    # note: hidden2tag is created by the module but unused in forward().

    # deterministic example inputs
    x0 = jax.random.randint(keys[10], (B, max_len), 1, n_char)
    x0 = x0.at[1, 5:].set(0)                                  # item 1 padded
    x1 = jax.random.randint(keys[11], (B, max_len, char_len), 1, n_char)
    drop_mask = jax.random.bernoulli(keys[12], 0.5, (B, max_len, char_len - 4))
    x1 = x1.at[:, :, 4:].set(jnp.where(drop_mask, x1[:, :, 4:], 0))
    x2 = jax.random.randint(keys[13], (B, max_len), 0, seg_num)
    x3 = jax.random.randint(keys[14], (B, max_len), 0, taget_size)

    forward = jax.jit(bilstm_crf_forward)
    loss, mask_out, best_path = forward(params, x0, x1, x2, x3, keys[15])

    jax.block_until_ready(loss)
    jax.block_until_ready(mask_out)
    jax.block_until_ready(best_path)

    assert mask_out.shape == (B, max_len)
    assert best_path.shape == (B, max_len)
    assert bool(jnp.isfinite(loss))
    print("KERNEL_OK")
</pallas_src>

<mosaic_0001>
module attributes {stable_mosaic.version = 11 : i64} {
  func.func @_bilstm_kernel(%arg0: i32, %arg1: memref<6x16x16xf32, #tpu.memory_space<vmem>>, %arg2: memref<6x16x1xf32, #tpu.memory_space<vmem>>, %arg3: memref<1x16x64xf32, #tpu.memory_space<vmem>>, %arg4: memref<1x16x64xf32, #tpu.memory_space<vmem>>, %arg5: memref<1x1x64xf32, #tpu.memory_space<vmem>>, %arg6: memref<1x16x16xf32, #tpu.memory_space<vmem>>, %arg7: memref<1x16x16xf32, #tpu.memory_space<vmem>>, %arg8: memref<1x6x16x16xf32, #tpu.memory_space<vmem>>, %arg9: memref<1x16x16xf32, #tpu.memory_space<vmem>>, %arg10: memref<16x16xf32, #tpu.memory_space<vmem>>, %arg11: memref<16x16xf32, #tpu.memory_space<vmem>>) attributes {dimension_semantics = [#tpu.dimension_semantics<parallel>], iteration_bounds = array<i64: 2>, scalar_prefetch = 0 : i64, scratch_operands = 2 : i64, tpu.core_type = #tpu.core_type<tc>, window_params = [{pipeline_mode = #tpu.pipeline_mode<synchronous>, transform_indices = @transform_0, window_bounds = array<i64: 6, 16, 16>}, {pipeline_mode = #tpu.pipeline_mode<synchronous>, transform_indices = @transform_1, window_bounds = array<i64: 6, 16, 1>}, {transform_indices = @transform_2, window_bounds = array<i64: 1, 16, 64>}, {transform_indices = @transform_3, window_bounds = array<i64: 1, 16, 64>}, {transform_indices = @transform_4, window_bounds = array<i64: 1, 1, 64>}, {transform_indices = @transform_5, window_bounds = array<i64: 1, 16, 16>}, {transform_indices = @transform_6, window_bounds = array<i64: 1, 16, 16>}, {transform_indices = @transform_7, window_bounds = array<i64: 1, 6, 16, 16>}, {transform_indices = @transform_8, window_bounds = array<i64: 1, 16, 16>}]} {
    %c0 = arith.constant 0 : index
    %c0_0 = arith.constant 0 : index
    %c0_1 = arith.constant 0 : index
    %0 = vector.load %arg6[%c0, %c0_0, %c0_1] : memref<1x16x16xf32, #tpu.memory_space<vmem>>, vector<1x16x16xf32>
    %1 = vector.shape_cast %0 : vector<1x16x16xf32> to vector<16x16xf32>
    %c0_2 = arith.constant 0 : index
    %c0_3 = arith.constant 0 : index
    %2 = vector.load %arg10[%c0_2, %c0_3] : memref<16x16xf32, #tpu.memory_space<vmem>>, vector<16x16xf32>
    tpu.vector_store %arg10[%c0_2, %c0_3], %1 {strides = array<i32>} : memref<16x16xf32, #tpu.memory_space<vmem>>, vector<16x16xf32>,
    %c0_4 = arith.constant 0 : index
    %c0_5 = arith.constant 0 : index
    %c0_6 = arith.constant 0 : index
    %3 = vector.load %arg7[%c0_4, %c0_5, %c0_6] : memref<1x16x16xf32, #tpu.memory_space<vmem>>, vector<1x16x16xf32>
    %4 = vector.shape_cast %3 : vector<1x16x16xf32> to vector<16x16xf32>
    %c0_7 = arith.constant 0 : index
    %c0_8 = arith.constant 0 : index
    %5 = vector.load %arg11[%c0_7, %c0_8] : memref<16x16xf32, #tpu.memory_space<vmem>>, vector<16x16xf32>
    tpu.vector_store %arg11[%c0_7, %c0_8], %4 {strides = array<i32>} : memref<16x16xf32, #tpu.memory_space<vmem>>, vector<16x16xf32>,
    %c0_9 = arith.constant 0 : index
    %c0_10 = arith.constant 0 : index
    %c0_11 = arith.constant 0 : index
    %6 = vector.load %arg3[%c0_9, %c0_10, %c0_11] : memref<1x16x64xf32, #tpu.memory_space<vmem>>, vector<1x16x64xf32>
    %7 = vector.shape_cast %6 : vector<1x16x64xf32> to vector<16x64xf32>
    %c0_12 = arith.constant 0 : index
    %c0_13 = arith.constant 0 : index
    %c0_14 = arith.constant 0 : index
    %8 = vector.load %arg4[%c0_12, %c0_13, %c0_14] : memref<1x16x64xf32, #tpu.memory_space<vmem>>, vector<1x16x64xf32>
    %9 = vector.shape_cast %8 : vector<1x16x64xf32> to vector<16x64xf32>
    %c0_15 = arith.constant 0 : index
    %c0_16 = arith.constant 0 : index
    %c0_17 = arith.constant 0 : index
    %10 = vector.load %arg5[%c0_15, %c0_16, %c0_17] : memref<1x1x64xf32, #tpu.memory_space<vmem>>, vector<1x1x64xf32>
    %11 = vector.shape_cast %10 : vector<1x1x64xf32> to vector<1x64xf32>
    %c0_i32 = arith.constant 0 : i32
    %c0_i32_18 = arith.constant 0 : i32
    %12 = arith.cmpi eq, %arg0, %c0_i32_18 : i32
    %c5_i32 = arith.constant 5 : i32
    %13 = arith.subi %c5_i32, %c0_i32 : i32
    %14 = arith.select %12, %c0_i32, %13 : i32
    %15 = arith.index_cast %14 : i32 to index
    %c0_19 = arith.constant 0 : index
    %c0_20 = arith.constant 0 : index
    %16 = vector.load %arg1[%15, %c0_19, %c0_20] : memref<6x16x16xf32, #tpu.memory_space<vmem>>, vector<1x16x16xf32>
    %17 = vector.shape_cast %16 : vector<1x16x16xf32> to vector<16x16xf32>
    %18 = arith.index_cast %14 : i32 to index
    %c0_21 = arith.constant 0 : index
    %c0_22 = arith.constant 0 : index
    %19 = vector.load %arg2[%18, %c0_21, %c0_22] : memref<6x16x1xf32, #tpu.memory_space<vmem>>, vector<1x16x1xf32>
    %20 = vector.shape_cast %19 : vector<1x16x1xf32> to vector<16x1xf32>
    %c0_23 = arith.constant 0 : index
    %c0_24 = arith.constant 0 : index
    %21 = vector.load %arg10[%c0_23, %c0_24] : memref<16x16xf32, #tpu.memory_space<vmem>>, vector<16x16xf32>
    %c0_25 = arith.constant 0 : index
    %c0_26 = arith.constant 0 : index
    %22 = vector.load %arg11[%c0_25, %c0_26] : memref<16x16xf32, #tpu.memory_space<vmem>>, vector<16x16xf32>
    %cst = arith.constant dense<0.000000e+00> : vector<16x64xf32>
    %23 = tpu.matmul %17, %7, %cst {dimension_numbers = #tpu.dot_dimension_numbers<[1], [0], [0], [1], [0, 0, 1, 1], [], []>} : vector<16x16xf32>, vector<16x64xf32>, vector<16x64xf32> -> vector<16x64xf32>
    %cst_27 = arith.constant dense<0.000000e+00> : vector<16x64xf32>
    %24 = tpu.matmul %21, %9, %cst_27 {dimension_numbers = #tpu.dot_dimension_numbers<[1], [0], [0], [1], [0, 0, 1, 1], [], []>} : vector<16x16xf32>, vector<16x64xf32>, vector<16x64xf32> -> vector<16x64xf32>
    %25 = arith.addf %23, %24 : vector<16x64xf32>
    %26 = vector.broadcast %11 : vector<1x64xf32> to vector<16x64xf32>
    %27 = arith.addf %25, %26 : vector<16x64xf32>
    %28 = vector.extract_strided_slice %27 {offsets = [0, 0], sizes = [16, 16], strides = [1, 1]} : vector<16x64xf32> to vector<16x16xf32>
    %cst_28 = arith.constant 5.000000e-01 : f32
    %29 = vector.broadcast %cst_28 : f32 to vector<16x16xf32>
    %30 = arith.mulf %29, %28 : vector<16x16xf32>
    %31 = math.tanh %30 : vector<16x16xf32>
    %cst_29 = arith.constant 1.000000e+00 : f32
    %32 = vector.broadcast %cst_29 : f32 to vector<16x16xf32>
    %33 = arith.addf %31, %32 : vector<16x16xf32>
    %cst_30 = arith.constant 5.000000e-01 : f32
    %34 = vector.broadcast %cst_30 : f32 to vector<16x16xf32>
    %35 = arith.mulf %34, %33 : vector<16x16xf32>
    %36 = vector.extract_strided_slice %27 {offsets = [0, 16], sizes = [16, 16], strides = [1, 1]} : vector<16x64xf32> to vector<16x16xf32>
    %cst_31 = arith.constant 5.000000e-01 : f32
    %37 = vector.broadcast %cst_31 : f32 to vector<16x16xf32>
    %38 = arith.mulf %37, %36 : vector<16x16xf32>
    %39 = math.tanh %38 : vector<16x16xf32>
    %cst_32 = arith.constant 1.000000e+00 : f32
    %40 = vector.broadcast %cst_32 : f32 to vector<16x16xf32>
    %41 = arith.addf %39, %40 : vector<16x16xf32>
    %cst_33 = arith.constant 5.000000e-01 : f32
    %42 = vector.broadcast %cst_33 : f32 to vector<16x16xf32>
    %43 = arith.mulf %42, %41 : vector<16x16xf32>
    %44 = vector.extract_strided_slice %27 {offsets = [0, 32], sizes = [16, 16], strides = [1, 1]} : vector<16x64xf32> to vector<16x16xf32>
    %45 = math.tanh %44 : vector<16x16xf32>
    %46 = vector.extract_strided_slice %27 {offsets = [0, 48], sizes = [16, 16], strides = [1, 1]} : vector<16x64xf32> to vector<16x16xf32>
    %cst_34 = arith.constant 5.000000e-01 : f32
    %47 = vector.broadcast %cst_34 : f32 to vector<16x16xf32>
    %48 = arith.mulf %47, %46 : vector<16x16xf32>
    %49 = math.tanh %48 : vector<16x16xf32>
    %cst_35 = arith.constant 1.000000e+00 : f32
    %50 = vector.broadcast %cst_35 : f32 to vector<16x16xf32>
    %51 = arith.addf %49, %50 : vector<16x16xf32>
    %cst_36 = arith.constant 5.000000e-01 : f32
    %52 = vector.broadcast %cst_36 : f32 to vector<16x16xf32>
    %53 = arith.mulf %52, %51 : vector<16x16xf32>
    %54 = arith.mulf %43, %22 : vector<16x16xf32>
    %55 = arith.mulf %35, %45 : vector<16x16xf32>
    %56 = arith.addf %54, %55 : vector<16x16xf32>
    %57 = math.tanh %56 : vector<16x16xf32>
    %58 = arith.mulf %53, %57 : vector<16x16xf32>
    %59 = vector.broadcast %20 : vector<16x1xf32> to vector<16x16xf32>
    %60 = arith.mulf %59, %58 : vector<16x16xf32>
    %cst_37 = arith.constant 1.000000e+00 : f32
    %61 = vector.broadcast %cst_37 : f32 to vector<16x1xf32>
    %62 = arith.subf %61, %20 : vector<16x1xf32>
    %63 = vector.broadcast %62 : vector<16x1xf32> to vector<16x16xf32>
    %64 = arith.mulf %63, %21 : vector<16x16xf32>
    %65 = arith.addf %60, %64 : vector<16x16xf32>
    %66 = vector.broadcast %20 : vector<16x1xf32> to vector<16x16xf32>
    %67 = arith.mulf %66, %56 : vector<16x16xf32>
    %cst_38 = arith.constant 1.000000e+00 : f32
    %68 = vector.broadcast %cst_38 : f32 to vector<16x1xf32>
    %69 = arith.subf %68, %20 : vector<16x1xf32>
    %70 = vector.broadcast %69 : vector<16x1xf32> to vector<16x16xf32>
    %71 = arith.mulf %70, %22 : vector<16x16xf32>
    %72 = arith.addf %67, %71 : vector<16x16xf32>
    %c0_39 = arith.constant 0 : index
    %c0_40 = arith.constant 0 : index
    %73 = vector.load %arg10[%c0_39, %c0_40] : memref<16x16xf32, #tpu.memory_space<vmem>>, vector<16x16xf32>
    tpu.vector_store %arg10[%c0_39, %c0_40], %65 {strides = array<i32>} : memref<16x16xf32, #tpu.memory_space<vmem>>, vector<16x16xf32>,
    %c0_41 = arith.constant 0 : index
    %c0_42 = arith.constant 0 : index
    %74 = vector.load %arg11[%c0_41, %c0_42] : memref<16x16xf32, #tpu.memory_space<vmem>>, vector<16x16xf32>
    tpu.vector_store %arg11[%c0_41, %c0_42], %72 {strides = array<i32>} : memref<16x16xf32, #tpu.memory_space<vmem>>, vector<16x16xf32>,
    %75 = vector.broadcast %20 : vector<16x1xf32> to vector<16x16xf32>
    %76 = arith.mulf %65, %75 : vector<16x16xf32>
    %c0_43 = arith.constant 0 : index
    %77 = arith.index_cast %14 : i32 to index
    %c0_44 = arith.constant 0 : index
    %c0_45 = arith.constant 0 : index
    %78 = vector.load %arg8[%c0_43, %77, %c0_44, %c0_45] : memref<1x6x16x16xf32, #tpu.memory_space<vmem>>, vector<1x1x16x16xf32>
    %79 = vector.shape_cast %78 : vector<1x1x16x16xf32> to vector<16x16xf32>
    %80 = vector.shape_cast %76 : vector<16x16xf32> to vector<1x1x16x16xf32>
    tpu.vector_store %arg8[%c0_43, %77, %c0_44, %c0_45], %80 {strides = array<i32>} : memref<1x6x16x16xf32, #tpu.memory_space<vmem>>, vector<1x1x16x16xf32>,
    %c1_i32 = arith.constant 1 : i32
    %c0_i32_46 = arith.constant 0 : i32
    %81 = arith.cmpi eq, %arg0, %c0_i32_46 : i32
    %c5_i32_47 = arith.constant 5 : i32
    %82 = arith.subi %c5_i32_47, %c1_i32 : i32
    %83 = arith.select %81, %c1_i32, %82 : i32
    %84 = arith.index_cast %83 : i32 to index
    %c0_48 = arith.constant 0 : index
    %c0_49 = arith.constant 0 : index
    %85 = vector.load %arg1[%84, %c0_48, %c0_49] : memref<6x16x16xf32, #tpu.memory_space<vmem>>, vector<1x16x16xf32>
    %86 = vector.shape_cast %85 : vector<1x16x16xf32> to vector<16x16xf32>
    %87 = arith.index_cast %83 : i32 to index
    %c0_50 = arith.constant 0 : index
    %c0_51 = arith.constant 0 : index
    %88 = vector.load %arg2[%87, %c0_50, %c0_51] : memref<6x16x1xf32, #tpu.memory_space<vmem>>, vector<1x16x1xf32>
    %89 = vector.shape_cast %88 : vector<1x16x1xf32> to vector<16x1xf32>
    %c0_52 = arith.constant 0 : index
    %c0_53 = arith.constant 0 : index
    %90 = vector.load %arg10[%c0_52, %c0_53] : memref<16x16xf32, #tpu.memory_space<vmem>>, vector<16x16xf32>
    %c0_54 = arith.constant 0 : index
    %c0_55 = arith.constant 0 : index
    %91 = vector.load %arg11[%c0_54, %c0_55] : memref<16x16xf32, #tpu.memory_space<vmem>>, vector<16x16xf32>
    %cst_56 = arith.constant dense<0.000000e+00> : vector<16x64xf32>
    %92 = tpu.matmul %86, %7, %cst_56 {dimension_numbers = #tpu.dot_dimension_numbers<[1], [0], [0], [1], [0, 0, 1, 1], [], []>} : vector<16x16xf32>, vector<16x64xf32>, vector<16x64xf32> -> vector<16x64xf32>
    %cst_57 = arith.constant dense<0.000000e+00> : vector<16x64xf32>
    %93 = tpu.matmul %90, %9, %cst_57 {dimension_numbers = #tpu.dot_dimension_numbers<[1], [0], [0], [1], [0, 0, 1, 1], [], []>} : vector<16x16xf32>, vector<16x64xf32>, vector<16x64xf32> -> vector<16x64xf32>
    %94 = arith.addf %92, %93 : vector<16x64xf32>
    %95 = vector.broadcast %11 : vector<1x64xf32> to vector<16x64xf32>
    %96 = arith.addf %94, %95 : vector<16x64xf32>
    %97 = vector.extract_strided_slice %96 {offsets = [0, 0], sizes = [16, 16], strides = [1, 1]} : vector<16x64xf32> to vector<16x16xf32>
    %cst_58 = arith.constant 5.000000e-01 : f32
    %98 = vector.broadcast %cst_58 : f32 to vector<16x16xf32>
    %99 = arith.mulf %98, %97 : vector<16x16xf32>
    %100 = math.tanh %99 : vector<16x16xf32>
    %cst_59 = arith.constant 1.000000e+00 : f32
    %101 = vector.broadcast %cst_59 : f32 to vector<16x16xf32>
    %102 = arith.addf %100, %101 : vector<16x16xf32>
    %cst_60 = arith.constant 5.000000e-01 : f32
    %103 = vector.broadcast %cst_60 : f32 to vector<16x16xf32>
    %104 = arith.mulf %103, %102 : vector<16x16xf32>
    %105 = vector.extract_strided_slice %96 {offsets = [0, 16], sizes = [16, 16], strides = [1, 1]} : vector<16x64xf32> to vector<16x16xf32>
    %cst_61 = arith.constant 5.000000e-01 : f32
    %106 = vector.broadcast %cst_61 : f32 to vector<16x16xf32>
    %107 = arith.mulf %106, %105 : vector<16x16xf32>
    %108 = math.tanh %107 : vector<16x16xf32>
    %cst_62 = arith.constant 1.000000e+00 : f32
    %109 = vector.broadcast %cst_62 : f32 to vector<16x16xf32>
    %110 = arith.addf %108, %109 : vector<16x16xf32>
    %cst_63 = arith.constant 5.000000e-01 : f32
    %111 = vector.broadcast %cst_63 : f32 to vector<16x16xf32>
    %112 = arith.mulf %111, %110 : vector<16x16xf32>
    %113 = vector.extract_strided_slice %96 {offsets = [0, 32], sizes = [16, 16], strides = [1, 1]} : vector<16x64xf32> to vector<16x16xf32>
    %114 = math.tanh %113 : vector<16x16xf32>
    %115 = vector.extract_strided_slice %96 {offsets = [0, 48], sizes = [16, 16], strides = [1, 1]} : vector<16x64xf32> to vector<16x16xf32>
    %cst_64 = arith.constant 5.000000e-01 : f32
    %116 = vector.broadcast %cst_64 : f32 to vector<16x16xf32>
    %117 = arith.mulf %116, %115 : vector<16x16xf32>
    %118 = math.tanh %117 : vector<16x16xf32>
    %cst_65 = arith.constant 1.000000e+00 : f32
    %119 = vector.broadcast %cst_65 : f32 to vector<16x16xf32>
    %120 = arith.addf %118, %119 : vector<16x16xf32>
    %cst_66 = arith.constant 5.000000e-01 : f32
    %121 = vector.broadcast %cst_66 : f32 to vector<16x16xf32>
    %122 = arith.mulf %121, %120 : vector<16x16xf32>
    %123 = arith.mulf %112, %91 : vector<16x16xf32>
    %124 = arith.mulf %104, %114 : vector<16x16xf32>
    %125 = arith.addf %123, %124 : vector<16x16xf32>
    %126 = math.tanh %125 : vector<16x16xf32>
    %127 = arith.mulf %122, %126 : vector<16x16xf32>
    %128 = vector.broadcast %89 : vector<16x1xf32> to vector<16x16xf32>
    %129 = arith.mulf %128, %127 : vector<16x16xf32>
    %cst_67 = arith.constant 1.000000e+00 : f32
    %130 = vector.broadcast %cst_67 : f32 to vector<16x1xf32>
    %131 = arith.subf %130, %89 : vector<16x1xf32>
    %132 = vector.broadcast %131 : vector<16x1xf32> to vector<16x16xf32>
    %133 = arith.mulf %132, %90 : vector<16x16xf32>
    %134 = arith.addf %129, %133 : vector<16x16xf32>
    %135 = vector.broadcast %89 : vector<16x1xf32> to vector<16x16xf32>
    %136 = arith.mulf %135, %125 : vector<16x16xf32>
    %cst_68 = arith.constant 1.000000e+00 : f32
    %137 = vector.broadcast %cst_68 : f32 to vector<16x1xf32>
    %138 = arith.subf %137, %89 : vector<16x1xf32>
    %139 = vector.broadcast %138 : vector<16x1xf32> to vector<16x16xf32>
    %140 = arith.mulf %139, %91 : vector<16x16xf32>
    %141 = arith.addf %136, %140 : vector<16x16xf32>
    %c0_69 = arith.constant 0 : index
    %c0_70 = arith.constant 0 : index
    %142 = vector.load %arg10[%c0_69, %c0_70] : memref<16x16xf32, #tpu.memory_space<vmem>>, vector<16x16xf32>
    tpu.vector_store %arg10[%c0_69, %c0_70], %134 {strides = array<i32>} : memref<16x16xf32, #tpu.memory_space<vmem>>, vector<16x16xf32>,
    %c0_71 = arith.constant 0 : index
    %c0_72 = arith.constant 0 : index
    %143 = vector.load %arg11[%c0_71, %c0_72] : memref<16x16xf32, #tpu.memory_space<vmem>>, vector<16x16xf32>
    tpu.vector_store %arg11[%c0_71, %c0_72], %141 {strides = array<i32>} : memref<16x16xf32, #tpu.memory_space<vmem>>, vector<16x16xf32>,
    %144 = vector.broadcast %89 : vector<16x1xf32> to vector<16x16xf32>
    %145 = arith.mulf %134, %144 : vector<16x16xf32>
    %c0_73 = arith.constant 0 : index
    %146 = arith.index_cast %83 : i32 to index
    %c0_74 = arith.constant 0 : index
    %c0_75 = arith.constant 0 : index
    %147 = vector.load %arg8[%c0_73, %146, %c0_74, %c0_75] : memref<1x6x16x16xf32, #tpu.memory_space<vmem>>, vector<1x1x16x16xf32>
    %148 = vector.shape_cast %147 : vector<1x1x16x16xf32> to vector<16x16xf32>
    %149 = vector.shape_cast %145 : vector<16x16xf32> to vector<1x1x16x16xf32>
    tpu.vector_store %arg8[%c0_73, %146, %c0_74, %c0_75], %149 {strides = array<i32>} : memref<1x6x16x16xf32, #tpu.memory_space<vmem>>, vector<1x1x16x16xf32>,
    %c2_i32 = arith.constant 2 : i32
    %c0_i32_76 = arith.constant 0 : i32
    %150 = arith.cmpi eq, %arg0, %c0_i32_76 : i32
    %c5_i32_77 = arith.constant 5 : i32
    %151 = arith.subi %c5_i32_77, %c2_i32 : i32
    %152 = arith.select %150, %c2_i32, %151 : i32
    %153 = arith.index_cast %152 : i32 to index
    %c0_78 = arith.constant 0 : index
    %c0_79 = arith.constant 0 : index
    %154 = vector.load %arg1[%153, %c0_78, %c0_79] : memref<6x16x16xf32, #tpu.memory_space<vmem>>, vector<1x16x16xf32>
    %155 = vector.shape_cast %154 : vector<1x16x16xf32> to vector<16x16xf32>
    %156 = arith.index_cast %152 : i32 to index
    %c0_80 = arith.constant 0 : index
    %c0_81 = arith.constant 0 : index
    %157 = vector.load %arg2[%156, %c0_80, %c0_81] : memref<6x16x1xf32, #tpu.memory_space<vmem>>, vector<1x16x1xf32>
    %158 = vector.shape_cast %157 : vector<1x16x1xf32> to vector<16x1xf32>
    %c0_82 = arith.constant 0 : index
    %c0_83 = arith.constant 0 : index
    %159 = vector.load %arg10[%c0_82, %c0_83] : memref<16x16xf32, #tpu.memory_space<vmem>>, vector<16x16xf32>
    %c0_84 = arith.constant 0 : index
    %c0_85 = arith.constant 0 : index
    %160 = vector.load %arg11[%c0_84, %c0_85] : memref<16x16xf32, #tpu.memory_space<vmem>>, vector<16x16xf32>
    %cst_86 = arith.constant dense<0.000000e+00> : vector<16x64xf32>
    %161 = tpu.matmul %155, %7, %cst_86 {dimension_numbers = #tpu.dot_dimension_numbers<[1], [0], [0], [1], [0, 0, 1, 1], [], []>} : vector<16x16xf32>, vector<16x64xf32>, vector<16x64xf32> -> vector<16x64xf32>
    %cst_87 = arith.constant dense<0.000000e+00> : vector<16x64xf32>
    %162 = tpu.matmul %159, %9, %cst_87 {dimension_numbers = #tpu.dot_dimension_numbers<[1], [0], [0], [1], [0, 0, 1, 1], [], []>} : vector<16x16xf32>, vector<16x64xf32>, vector<16x64xf32> -> vector<16x64xf32>
    %163 = arith.addf %161, %162 : vector<16x64xf32>
    %164 = vector.broadcast %11 : vector<1x64xf32> to vector<16x64xf32>
    %165 = arith.addf %163, %164 : vector<16x64xf32>
    %166 = vector.extract_strided_slice %165 {offsets = [0, 0], sizes = [16, 16], strides = [1, 1]} : vector<16x64xf32> to vector<16x16xf32>
    %cst_88 = arith.constant 5.000000e-01 : f32
    %167 = vector.broadcast %cst_88 : f32 to vector<16x16xf32>
    %168 = arith.mulf %167, %166 : vector<16x16xf32>
    %169 = math.tanh %168 : vector<16x16xf32>
    %cst_89 = arith.constant 1.000000e+00 : f32
    %170 = vector.broadcast %cst_89 : f32 to vector<16x16xf32>
    %171 = arith.addf %169, %170 : vector<16x16xf32>
    %cst_90 = arith.constant 5.000000e-01 : f32
    %172 = vector.broadcast %cst_90 : f32 to vector<16x16xf32>
    %173 = arith.mulf %172, %171 : vector<16x16xf32>
    %174 = vector.extract_strided_slice %165 {offsets = [0, 16], sizes = [16, 16], strides = [1, 1]} : vector<16x64xf32> to vector<16x16xf32>
    %cst_91 = arith.constant 5.000000e-01 : f32
    %175 = vector.broadcast %cst_91 : f32 to vector<16x16xf32>
    %176 = arith.mulf %175, %174 : vector<16x16xf32>
    %177 = math.tanh %176 : vector<16x16xf32>
    %cst_92 = arith.constant 1.000000e+00 : f32
    %178 = vector.broadcast %cst_92 : f32 to vector<16x16xf32>
    %179 = arith.addf %177, %178 : vector<16x16xf32>
    %cst_93 = arith.constant 5.000000e-01 : f32
    %180 = vector.broadcast %cst_93 : f32 to vector<16x16xf32>
    %181 = arith.mulf %180, %179 : vector<16x16xf32>
    %182 = vector.extract_strided_slice %165 {offsets = [0, 32], sizes = [16, 16], strides = [1, 1]} : vector<16x64xf32> to vector<16x16xf32>
    %183 = math.tanh %182 : vector<16x16xf32>
    %184 = vector.extract_strided_slice %165 {offsets = [0, 48], sizes = [16, 16], strides = [1, 1]} : vector<16x64xf32> to vector<16x16xf32>
    %cst_94 = arith.constant 5.000000e-01 : f32
    %185 = vector.broadcast %cst_94 : f32 to vector<16x16xf32>
    %186 = arith.mulf %185, %184 : vector<16x16xf32>
    %187 = math.tanh %186 : vector<16x16xf32>
    %cst_95 = arith.constant 1.000000e+00 : f32
    %188 = vector.broadcast %cst_95 : f32 to vector<16x16xf32>
    %189 = arith.addf %187, %188 : vector<16x16xf32>
    %cst_96 = arith.constant 5.000000e-01 : f32
    %190 = vector.broadcast %cst_96 : f32 to vector<16x16xf32>
    %191 = arith.mulf %190, %189 : vector<16x16xf32>
    %192 = arith.mulf %181, %160 : vector<16x16xf32>
    %193 = arith.mulf %173, %183 : vector<16x16xf32>
    %194 = arith.addf %192, %193 : vector<16x16xf32>
    %195 = math.tanh %194 : vector<16x16xf32>
    %196 = arith.mulf %191, %195 : vector<16x16xf32>
    %197 = vector.broadcast %158 : vector<16x1xf32> to vector<16x16xf32>
    %198 = arith.mulf %197, %196 : vector<16x16xf32>
    %cst_97 = arith.constant 1.000000e+00 : f32
    %199 = vector.broadcast %cst_97 : f32 to vector<16x1xf32>
    %200 = arith.subf %199, %158 : vector<16x1xf32>
    %201 = vector.broadcast %200 : vector<16x1xf32> to vector<16x16xf32>
    %202 = arith.mulf %201, %159 : vector<16x16xf32>
    %203 = arith.addf %198, %202 : vector<16x16xf32>
    %204 = vector.broadcast %158 : vector<16x1xf32> to vector<16x16xf32>
    %205 = arith.mulf %204, %194 : vector<16x16xf32>
    %cst_98 = arith.constant 1.000000e+00 : f32
    %206 = vector.broadcast %cst_98 : f32 to vector<16x1xf32>
    %207 = arith.subf %206, %158 : vector<16x1xf32>
    %208 = vector.broadcast %207 : vector<16x1xf32> to vector<16x16xf32>
    %209 = arith.mulf %208, %160 : vector<16x16xf32>
    %210 = arith.addf %205, %209 : vector<16x16xf32>
    %c0_99 = arith.constant 0 : index
    %c0_100 = arith.constant 0 : index
    %211 = vector.load %arg10[%c0_99, %c0_100] : memref<16x16xf32, #tpu.memory_space<vmem>>, vector<16x16xf32>
    tpu.vector_store %arg10[%c0_99, %c0_100], %203 {strides = array<i32>} : memref<16x16xf32, #tpu.memory_space<vmem>>, vector<16x16xf32>,
    %c0_101 = arith.constant 0 : index
    %c0_102 = arith.constant 0 : index
    %212 = vector.load %arg11[%c0_101, %c0_102] : memref<16x16xf32, #tpu.memory_space<vmem>>, vector<16x16xf32>
    tpu.vector_store %arg11[%c0_101, %c0_102], %210 {strides = array<i32>} : memref<16x16xf32, #tpu.memory_space<vmem>>, vector<16x16xf32>,
    %213 = vector.broadcast %158 : vector<16x1xf32> to vector<16x16xf32>
    %214 = arith.mulf %203, %213 : vector<16x16xf32>
    %c0_103 = arith.constant 0 : index
    %215 = arith.index_cast %152 : i32 to index
    %c0_104 = arith.constant 0 : index
    %c0_105 = arith.constant 0 : index
    %216 = vector.load %arg8[%c0_103, %215, %c0_104, %c0_105] : memref<1x6x16x16xf32, #tpu.memory_space<vmem>>, vector<1x1x16x16xf32>
    %217 = vector.shape_cast %216 : vector<1x1x16x16xf32> to vector<16x16xf32>
    %218 = vector.shape_cast %214 : vector<16x16xf32> to vector<1x1x16x16xf32>
    tpu.vector_store %arg8[%c0_103, %215, %c0_104, %c0_105], %218 {strides = array<i32>} : memref<1x6x16x16xf32, #tpu.memory_space<vmem>>, vector<1x1x16x16xf32>,
    %c3_i32 = arith.constant 3 : i32
    %c0_i32_106 = arith.constant 0 : i32
    %219 = arith.cmpi eq, %arg0, %c0_i32_106 : i32
    %c5_i32_107 = arith.constant 5 : i32
    %220 = arith.subi %c5_i32_107, %c3_i32 : i32
    %221 = arith.select %219, %c3_i32, %220 : i32
    %222 = arith.index_cast %221 : i32 to index
    %c0_108 = arith.constant 0 : index
    %c0_109 = arith.constant 0 : index
    %223 = vector.load %arg1[%222, %c0_108, %c0_109] : memref<6x16x16xf32, #tpu.memory_space<vmem>>, vector<1x16x16xf32>
    %224 = vector.shape_cast %223 : vector<1x16x16xf32> to vector<16x16xf32>
    %225 = arith.index_cast %221 : i32 to index
    %c0_110 = arith.constant 0 : index
    %c0_111 = arith.constant 0 : index
    %226 = vector.load %arg2[%225, %c0_110, %c0_111] : memref<6x16x1xf32, #tpu.memory_space<vmem>>, vector<1x16x1xf32>
    %227 = vector.shape_cast %226 : vector<1x16x1xf32> to vector<16x1xf32>
    %c0_112 = arith.constant 0 : index
    %c0_113 = arith.constant 0 : index
    %228 = vector.load %arg10[%c0_112, %c0_113] : memref<16x16xf32, #tpu.memory_space<vmem>>, vector<16x16xf32>
    %c0_114 = arith.constant 0 : index
    %c0_115 = arith.constant 0 : index
    %229 = vector.load %arg11[%c0_114, %c0_115] : memref<16x16xf32, #tpu.memory_space<vmem>>, vector<16x16xf32>
    %cst_116 = arith.constant dense<0.000000e+00> : vector<16x64xf32>
    %230 = tpu.matmul %224, %7, %cst_116 {dimension_numbers = #tpu.dot_dimension_numbers<[1], [0], [0], [1], [0, 0, 1, 1], [], []>} : vector<16x16xf32>, vector<16x64xf32>, vector<16x64xf32> -> vector<16x64xf32>
    %cst_117 = arith.constant dense<0.000000e+00> : vector<16x64xf32>
    %231 = tpu.matmul %228, %9, %cst_117 {dimension_numbers = #tpu.dot_dimension_numbers<[1], [0], [0], [1], [0, 0, 1, 1], [], []>} : vector<16x16xf32>, vector<16x64xf32>, vector<16x64xf32> -> vector<16x64xf32>
    %232 = arith.addf %230, %231 : vector<16x64xf32>
    %233 = vector.broadcast %11 : vector<1x64xf32> to vector<16x64xf32>
    %234 = arith.addf %232, %233 : vector<16x64xf32>
    %235 = vector.extract_strided_slice %234 {offsets = [0, 0], sizes = [16, 16], strides = [1, 1]} : vector<16x64xf32> to vector<16x16xf32>
    %cst_118 = arith.constant 5.000000e-01 : f32
    %236 = vector.broadcast %cst_118 : f32 to vector<16x16xf32>
    %237 = arith.mulf %236, %235 : vector<16x16xf32>
    %238 = math.tanh %237 : vector<16x16xf32>
    %cst_119 = arith.constant 1.000000e+00 : f32
    %239 = vector.broadcast %cst_119 : f32 to vector<16x16xf32>
    %240 = arith.addf %238, %239 : vector<16x16xf32>
    %cst_120 = arith.constant 5.000000e-01 : f32
    %241 = vector.broadcast %cst_120 : f32 to vector<16x16xf32>
    %242 = arith.mulf %241, %240 : vector<16x16xf32>
    %243 = vector.extract_strided_slice %234 {offsets = [0, 16], sizes = [16, 16], strides = [1, 1]} : vector<16x64xf32> to vector<16x16xf32>
    %cst_121 = arith.constant 5.000000e-01 : f32
    %244 = vector.broadcast %cst_121 : f32 to vector<16x16xf32>
    %245 = arith.mulf %244, %243 : vector<16x16xf32>
    %246 = math.tanh %245 : vector<16x16xf32>
    %cst_122 = arith.constant 1.000000e+00 : f32
    %247 = vector.broadcast %cst_122 : f32 to vector<16x16xf32>
    %248 = arith.addf %246, %247 : vector<16x16xf32>
    %cst_123 = arith.constant 5.000000e-01 : f32
    %249 = vector.broadcast %cst_123 : f32 to vector<16x16xf32>
    %250 = arith.mulf %249, %248 : vector<16x16xf32>
    %251 = vector.extract_strided_slice %234 {offsets = [0, 32], sizes = [16, 16], strides = [1, 1]} : vector<16x64xf32> to vector<16x16xf32>
    %252 = math.tanh %251 : vector<16x16xf32>
    %253 = vector.extract_strided_slice %234 {offsets = [0, 48], sizes = [16, 16], strides = [1, 1]} : vector<16x64xf32> to vector<16x16xf32>
    %cst_124 = arith.constant 5.000000e-01 : f32
    %254 = vector.broadcast %cst_124 : f32 to vector<16x16xf32>
    %255 = arith.mulf %254, %253 : vector<16x16xf32>
    %256 = math.tanh %255 : vector<16x16xf32>
    %cst_125 = arith.constant 1.000000e+00 : f32
    %257 = vector.broadcast %cst_125 : f32 to vector<16x16xf32>
    %258 = arith.addf %256, %257 : vector<16x16xf32>
    %cst_126 = arith.constant 5.000000e-01 : f32
    %259 = vector.broadcast %cst_126 : f32 to vector<16x16xf32>
    %260 = arith.mulf %259, %258 : vector<16x16xf32>
    %261 = arith.mulf %250, %229 : vector<16x16xf32>
    %262 = arith.mulf %242, %252 : vector<16x16xf32>
    %263 = arith.addf %261, %262 : vector<16x16xf32>
    %264 = math.tanh %263 : vector<16x16xf32>
    %265 = arith.mulf %260, %264 : vector<16x16xf32>
    %266 = vector.broadcast %227 : vector<16x1xf32> to vector<16x16xf32>
    %267 = arith.mulf %266, %265 : vector<16x16xf32>
    %cst_127 = arith.constant 1.000000e+00 : f32
    %268 = vector.broadcast %cst_127 : f32 to vector<16x1xf32>
    %269 = arith.subf %268, %227 : vector<16x1xf32>
    %270 = vector.broadcast %269 : vector<16x1xf32> to vector<16x16xf32>
    %271 = arith.mulf %270, %228 : vector<16x16xf32>
    %272 = arith.addf %267, %271 : vector<16x16xf32>
    %273 = vector.broadcast %227 : vector<16x1xf32> to vector<16x16xf32>
    %274 = arith.mulf %273, %263 : vector<16x16xf32>
    %cst_128 = arith.constant 1.000000e+00 : f32
    %275 = vector.broadcast %cst_128 : f32 to vector<16x1xf32>
    %276 = arith.subf %275, %227 : vector<16x1xf32>
    %277 = vector.broadcast %276 : vector<16x1xf32> to vector<16x16xf32>
    %278 = arith.mulf %277, %229 : vector<16x16xf32>
    %279 = arith.addf %274, %278 : vector<16x16xf32>
    %c0_129 = arith.constant 0 : index
    %c0_130 = arith.constant 0 : index
    %280 = vector.load %arg10[%c0_129, %c0_130] : memref<16x16xf32, #tpu.memory_space<vmem>>, vector<16x16xf32>
    tpu.vector_store %arg10[%c0_129, %c0_130], %272 {strides = array<i32>} : memref<16x16xf32, #tpu.memory_space<vmem>>, vector<16x16xf32>,
    %c0_131 = arith.constant 0 : index
    %c0_132 = arith.constant 0 : index
    %281 = vector.load %arg11[%c0_131, %c0_132] : memref<16x16xf32, #tpu.memory_space<vmem>>, vector<16x16xf32>
    tpu.vector_store %arg11[%c0_131, %c0_132], %279 {strides = array<i32>} : memref<16x16xf32, #tpu.memory_space<vmem>>, vector<16x16xf32>,
    %282 = vector.broadcast %227 : vector<16x1xf32> to vector<16x16xf32>
    %283 = arith.mulf %272, %282 : vector<16x16xf32>
    %c0_133 = arith.constant 0 : index
    %284 = arith.index_cast %221 : i32 to index
    %c0_134 = arith.constant 0 : index
    %c0_135 = arith.constant 0 : index
    %285 = vector.load %arg8[%c0_133, %284, %c0_134, %c0_135] : memref<1x6x16x16xf32, #tpu.memory_space<vmem>>, vector<1x1x16x16xf32>
    %286 = vector.shape_cast %285 : vector<1x1x16x16xf32> to vector<16x16xf32>
    %287 = vector.shape_cast %283 : vector<16x16xf32> to vector<1x1x16x16xf32>
    tpu.vector_store %arg8[%c0_133, %284, %c0_134, %c0_135], %287 {strides = array<i32>} : memref<1x6x16x16xf32, #tpu.memory_space<vmem>>, vector<1x1x16x16xf32>,
    %c4_i32 = arith.constant 4 : i32
    %c0_i32_136 = arith.constant 0 : i32
    %288 = arith.cmpi eq, %arg0, %c0_i32_136 : i32
    %c5_i32_137 = arith.constant 5 : i32
    %289 = arith.subi %c5_i32_137, %c4_i32 : i32
    %290 = arith.select %288, %c4_i32, %289 : i32
    %291 = arith.index_cast %290 : i32 to index
    %c0_138 = arith.constant 0 : index
    %c0_139 = arith.constant 0 : index
    %292 = vector.load %arg1[%291, %c0_138, %c0_139] : memref<6x16x16xf32, #tpu.memory_space<vmem>>, vector<1x16x16xf32>
    %293 = vector.shape_cast %292 : vector<1x16x16xf32> to vector<16x16xf32>
    %294 = arith.index_cast %290 : i32 to index
    %c0_140 = arith.constant 0 : index
    %c0_141 = arith.constant 0 : index
    %295 = vector.load %arg2[%294, %c0_140, %c0_141] : memref<6x16x1xf32, #tpu.memory_space<vmem>>, vector<1x16x1xf32>
    %296 = vector.shape_cast %295 : vector<1x16x1xf32> to vector<16x1xf32>
    %c0_142 = arith.constant 0 : index
    %c0_143 = arith.constant 0 : index
    %297 = vector.load %arg10[%c0_142, %c0_143] : memref<16x16xf32, #tpu.memory_space<vmem>>, vector<16x16xf32>
    %c0_144 = arith.constant 0 : index
    %c0_145 = arith.constant 0 : index
    %298 = vector.load %arg11[%c0_144, %c0_145] : memref<16x16xf32, #tpu.memory_space<vmem>>, vector<16x16xf32>
    %cst_146 = arith.constant dense<0.000000e+00> : vector<16x64xf32>
    %299 = tpu.matmul %293, %7, %cst_146 {dimension_numbers = #tpu.dot_dimension_numbers<[1], [0], [0], [1], [0, 0, 1, 1], [], []>} : vector<16x16xf32>, vector<16x64xf32>, vector<16x64xf32> -> vector<16x64xf32>
    %cst_147 = arith.constant dense<0.000000e+00> : vector<16x64xf32>
    %300 = tpu.matmul %297, %9, %cst_147 {dimension_numbers = #tpu.dot_dimension_numbers<[1], [0], [0], [1], [0, 0, 1, 1], [], []>} : vector<16x16xf32>, vector<16x64xf32>, vector<16x64xf32> -> vector<16x64xf32>
    %301 = arith.addf %299, %300 : vector<16x64xf32>
    %302 = vector.broadcast %11 : vector<1x64xf32> to vector<16x64xf32>
    %303 = arith.addf %301, %302 : vector<16x64xf32>
    %304 = vector.extract_strided_slice %303 {offsets = [0, 0], sizes = [16, 16], strides = [1, 1]} : vector<16x64xf32> to vector<16x16xf32>
    %cst_148 = arith.constant 5.000000e-01 : f32
    %305 = vector.broadcast %cst_148 : f32 to vector<16x16xf32>
    %306 = arith.mulf %305, %304 : vector<16x16xf32>
    %307 = math.tanh %306 : vector<16x16xf32>
    %cst_149 = arith.constant 1.000000e+00 : f32
    %308 = vector.broadcast %cst_149 : f32 to vector<16x16xf32>
    %309 = arith.addf %307, %308 : vector<16x16xf32>
    %cst_150 = arith.constant 5.000000e-01 : f32
    %310 = vector.broadcast %cst_150 : f32 to vector<16x16xf32>
    %311 = arith.mulf %310, %309 : vector<16x16xf32>
    %312 = vector.extract_strided_slice %303 {offsets = [0, 16], sizes = [16, 16], strides = [1, 1]} : vector<16x64xf32> to vector<16x16xf32>
    %cst_151 = arith.constant 5.000000e-01 : f32
    %313 = vector.broadcast %cst_151 : f32 to vector<16x16xf32>
    %314 = arith.mulf %313, %312 : vector<16x16xf32>
    %315 = math.tanh %314 : vector<16x16xf32>
    %cst_152 = arith.constant 1.000000e+00 : f32
    %316 = vector.broadcast %cst_152 : f32 to vector<16x16xf32>
    %317 = arith.addf %315, %316 : vector<16x16xf32>
    %cst_153 = arith.constant 5.000000e-01 : f32
    %318 = vector.broadcast %cst_153 : f32 to vector<16x16xf32>
    %319 = arith.mulf %318, %317 : vector<16x16xf32>
    %320 = vector.extract_strided_slice %303 {offsets = [0, 32], sizes = [16, 16], strides = [1, 1]} : vector<16x64xf32> to vector<16x16xf32>
    %321 = math.tanh %320 : vector<16x16xf32>
    %322 = vector.extract_strided_slice %303 {offsets = [0, 48], sizes = [16, 16], strides = [1, 1]} : vector<16x64xf32> to vector<16x16xf32>
    %cst_154 = arith.constant 5.000000e-01 : f32
    %323 = vector.broadcast %cst_154 : f32 to vector<16x16xf32>
    %324 = arith.mulf %323, %322 : vector<16x16xf32>
    %325 = math.tanh %324 : vector<16x16xf32>
    %cst_155 = arith.constant 1.000000e+00 : f32
    %326 = vector.broadcast %cst_155 : f32 to vector<16x16xf32>
    %327 = arith.addf %325, %326 : vector<16x16xf32>
    %cst_156 = arith.constant 5.000000e-01 : f32
    %328 = vector.broadcast %cst_156 : f32 to vector<16x16xf32>
    %329 = arith.mulf %328, %327 : vector<16x16xf32>
    %330 = arith.mulf %319, %298 : vector<16x16xf32>
    %331 = arith.mulf %311, %321 : vector<16x16xf32>
    %332 = arith.addf %330, %331 : vector<16x16xf32>
    %333 = math.tanh %332 : vector<16x16xf32>
    %334 = arith.mulf %329, %333 : vector<16x16xf32>
    %335 = vector.broadcast %296 : vector<16x1xf32> to vector<16x16xf32>
    %336 = arith.mulf %335, %334 : vector<16x16xf32>
    %cst_157 = arith.constant 1.000000e+00 : f32
    %337 = vector.broadcast %cst_157 : f32 to vector<16x1xf32>
    %338 = arith.subf %337, %296 : vector<16x1xf32>
    %339 = vector.broadcast %338 : vector<16x1xf32> to vector<16x16xf32>
    %340 = arith.mulf %339, %297 : vector<16x16xf32>
    %341 = arith.addf %336, %340 : vector<16x16xf32>
    %342 = vector.broadcast %296 : vector<16x1xf32> to vector<16x16xf32>
    %343 = arith.mulf %342, %332 : vector<16x16xf32>
    %cst_158 = arith.constant 1.000000e+00 : f32
    %344 = vector.broadcast %cst_158 : f32 to vector<16x1xf32>
    %345 = arith.subf %344, %296 : vector<16x1xf32>
    %346 = vector.broadcast %345 : vector<16x1xf32> to vector<16x16xf32>
    %347 = arith.mulf %346, %298 : vector<16x16xf32>
    %348 = arith.addf %343, %347 : vector<16x16xf32>
    %c0_159 = arith.constant 0 : index
    %c0_160 = arith.constant 0 : index
    %349 = vector.load %arg10[%c0_159, %c0_160] : memref<16x16xf32, #tpu.memory_space<vmem>>, vector<16x16xf32>
    tpu.vector_store %arg10[%c0_159, %c0_160], %341 {strides = array<i32>} : memref<16x16xf32, #tpu.memory_space<vmem>>, vector<16x16xf32>,
    %c0_161 = arith.constant 0 : index
    %c0_162 = arith.constant 0 : index
    %350 = vector.load %arg11[%c0_161, %c0_162] : memref<16x16xf32, #tpu.memory_space<vmem>>, vector<16x16xf32>
    tpu.vector_store %arg11[%c0_161, %c0_162], %348 {strides = array<i32>} : memref<16x16xf32, #tpu.memory_space<vmem>>, vector<16x16xf32>,
    %351 = vector.broadcast %296 : vector<16x1xf32> to vector<16x16xf32>
    %352 = arith.mulf %341, %351 : vector<16x16xf32>
    %c0_163 = arith.constant 0 : index
    %353 = arith.index_cast %290 : i32 to index
    %c0_164 = arith.constant 0 : index
    %c0_165 = arith.constant 0 : index
    %354 = vector.load %arg8[%c0_163, %353, %c0_164, %c0_165] : memref<1x6x16x16xf32, #tpu.memory_space<vmem>>, vector<1x1x16x16xf32>
    %355 = vector.shape_cast %354 : vector<1x1x16x16xf32> to vector<16x16xf32>
    %356 = vector.shape_cast %352 : vector<16x16xf32> to vector<1x1x16x16xf32>
    tpu.vector_store %arg8[%c0_163, %353, %c0_164, %c0_165], %356 {strides = array<i32>} : memref<1x6x16x16xf32, #tpu.memory_space<vmem>>, vector<1x1x16x16xf32>,
    %c5_i32_166 = arith.constant 5 : i32
    %c0_i32_167 = arith.constant 0 : i32
    %357 = arith.cmpi eq, %arg0, %c0_i32_167 : i32
    %c5_i32_168 = arith.constant 5 : i32
    %358 = arith.subi %c5_i32_168, %c5_i32_166 : i32
    %359 = arith.select %357, %c5_i32_166, %358 : i32
    %360 = arith.index_cast %359 : i32 to index
    %c0_169 = arith.constant 0 : index
    %c0_170 = arith.constant 0 : index
    %361 = vector.load %arg1[%360, %c0_169, %c0_170] : memref<6x16x16xf32, #tpu.memory_space<vmem>>, vector<1x16x16xf32>
    %362 = vector.shape_cast %361 : vector<1x16x16xf32> to vector<16x16xf32>
    %363 = arith.index_cast %359 : i32 to index
    %c0_171 = arith.constant 0 : index
    %c0_172 = arith.constant 0 : index
    %364 = vector.load %arg2[%363, %c0_171, %c0_172] : memref<6x16x1xf32, #tpu.memory_space<vmem>>, vector<1x16x1xf32>
    %365 = vector.shape_cast %364 : vector<1x16x1xf32> to vector<16x1xf32>
    %c0_173 = arith.constant 0 : index
    %c0_174 = arith.constant 0 : index
    %366 = vector.load %arg10[%c0_173, %c0_174] : memref<16x16xf32, #tpu.memory_space<vmem>>, vector<16x16xf32>
    %c0_175 = arith.constant 0 : index
    %c0_176 = arith.constant 0 : index
    %367 = vector.load %arg11[%c0_175, %c0_176] : memref<16x16xf32, #tpu.memory_space<vmem>>, vector<16x16xf32>
    %cst_177 = arith.constant dense<0.000000e+00> : vector<16x64xf32>
    %368 = tpu.matmul %362, %7, %cst_177 {dimension_numbers = #tpu.dot_dimension_numbers<[1], [0], [0], [1], [0, 0, 1, 1], [], []>} : vector<16x16xf32>, vector<16x64xf32>, vector<16x64xf32> -> vector<16x64xf32>
    %cst_178 = arith.constant dense<0.000000e+00> : vector<16x64xf32>
    %369 = tpu.matmul %366, %9, %cst_178 {dimension_numbers = #tpu.dot_dimension_numbers<[1], [0], [0], [1], [0, 0, 1, 1], [], []>} : vector<16x16xf32>, vector<16x64xf32>, vector<16x64xf32> -> vector<16x64xf32>
    %370 = arith.addf %368, %369 : vector<16x64xf32>
    %371 = vector.broadcast %11 : vector<1x64xf32> to vector<16x64xf32>
    %372 = arith.addf %370, %371 : vector<16x64xf32>
    %373 = vector.extract_strided_slice %372 {offsets = [0, 0], sizes = [16, 16], strides = [1, 1]} : vector<16x64xf32> to vector<16x16xf32>
    %cst_179 = arith.constant 5.000000e-01 : f32
    %374 = vector.broadcast %cst_179 : f32 to vector<16x16xf32>
    %375 = arith.mulf %374, %373 : vector<16x16xf32>
    %376 = math.tanh %375 : vector<16x16xf32>
    %cst_180 = arith.constant 1.000000e+00 : f32
    %377 = vector.broadcast %cst_180 : f32 to vector<16x16xf32>
    %378 = arith.addf %376, %377 : vector<16x16xf32>
    %cst_181 = arith.constant 5.000000e-01 : f32
    %379 = vector.broadcast %cst_181 : f32 to vector<16x16xf32>
    %380 = arith.mulf %379, %378 : vector<16x16xf32>
    %381 = vector.extract_strided_slice %372 {offsets = [0, 16], sizes = [16, 16], strides = [1, 1]} : vector<16x64xf32> to vector<16x16xf32>
    %cst_182 = arith.constant 5.000000e-01 : f32
    %382 = vector.broadcast %cst_182 : f32 to vector<16x16xf32>
    %383 = arith.mulf %382, %381 : vector<16x16xf32>
    %384 = math.tanh %383 : vector<16x16xf32>
    %cst_183 = arith.constant 1.000000e+00 : f32
    %385 = vector.broadcast %cst_183 : f32 to vector<16x16xf32>
    %386 = arith.addf %384, %385 : vector<16x16xf32>
    %cst_184 = arith.constant 5.000000e-01 : f32
    %387 = vector.broadcast %cst_184 : f32 to vector<16x16xf32>
    %388 = arith.mulf %387, %386 : vector<16x16xf32>
    %389 = vector.extract_strided_slice %372 {offsets = [0, 32], sizes = [16, 16], strides = [1, 1]} : vector<16x64xf32> to vector<16x16xf32>
    %390 = math.tanh %389 : vector<16x16xf32>
    %391 = vector.extract_strided_slice %372 {offsets = [0, 48], sizes = [16, 16], strides = [1, 1]} : vector<16x64xf32> to vector<16x16xf32>
    %cst_185 = arith.constant 5.000000e-01 : f32
    %392 = vector.broadcast %cst_185 : f32 to vector<16x16xf32>
    %393 = arith.mulf %392, %391 : vector<16x16xf32>
    %394 = math.tanh %393 : vector<16x16xf32>
    %cst_186 = arith.constant 1.000000e+00 : f32
    %395 = vector.broadcast %cst_186 : f32 to vector<16x16xf32>
    %396 = arith.addf %394, %395 : vector<16x16xf32>
    %cst_187 = arith.constant 5.000000e-01 : f32
    %397 = vector.broadcast %cst_187 : f32 to vector<16x16xf32>
    %398 = arith.mulf %397, %396 : vector<16x16xf32>
    %399 = arith.mulf %388, %367 : vector<16x16xf32>
    %400 = arith.mulf %380, %390 : vector<16x16xf32>
    %401 = arith.addf %399, %400 : vector<16x16xf32>
    %402 = math.tanh %401 : vector<16x16xf32>
    %403 = arith.mulf %398, %402 : vector<16x16xf32>
    %404 = vector.broadcast %365 : vector<16x1xf32> to vector<16x16xf32>
    %405 = arith.mulf %404, %403 : vector<16x16xf32>
    %cst_188 = arith.constant 1.000000e+00 : f32
    %406 = vector.broadcast %cst_188 : f32 to vector<16x1xf32>
    %407 = arith.subf %406, %365 : vector<16x1xf32>
    %408 = vector.broadcast %407 : vector<16x1xf32> to vector<16x16xf32>
    %409 = arith.mulf %408, %366 : vector<16x16xf32>
    %410 = arith.addf %405, %409 : vector<16x16xf32>
    %411 = vector.broadcast %365 : vector<16x1xf32> to vector<16x16xf32>
    %412 = arith.mulf %411, %401 : vector<16x16xf32>
    %cst_189 = arith.constant 1.000000e+00 : f32
    %413 = vector.broadcast %cst_189 : f32 to vector<16x1xf32>
    %414 = arith.subf %413, %365 : vector<16x1xf32>
    %415 = vector.broadcast %414 : vector<16x1xf32> to vector<16x16xf32>
    %416 = arith.mulf %415, %367 : vector<16x16xf32>
    %417 = arith.addf %412, %416 : vector<16x16xf32>
    %c0_190 = arith.constant 0 : index
    %c0_191 = arith.constant 0 : index
    %418 = vector.load %arg10[%c0_190, %c0_191] : memref<16x16xf32, #tpu.memory_space<vmem>>, vector<16x16xf32>
    tpu.vector_store %arg10[%c0_190, %c0_191], %410 {strides = array<i32>} : memref<16x16xf32, #tpu.memory_space<vmem>>, vector<16x16xf32>,
    %c0_192 = arith.constant 0 : index
    %c0_193 = arith.constant 0 : index
    %419 = vector.load %arg11[%c0_192, %c0_193] : memref<16x16xf32, #tpu.memory_space<vmem>>, vector<16x16xf32>
    tpu.vector_store %arg11[%c0_192, %c0_193], %417 {strides = array<i32>} : memref<16x16xf32, #tpu.memory_space<vmem>>, vector<16x16xf32>,
    %420 = vector.broadcast %365 : vector<16x1xf32> to vector<16x16xf32>
    %421 = arith.mulf %410, %420 : vector<16x16xf32>
    %c0_194 = arith.constant 0 : index
    %422 = arith.index_cast %359 : i32 to index
    %c0_195 = arith.constant 0 : index
    %c0_196 = arith.constant 0 : index
    %423 = vector.load %arg8[%c0_194, %422, %c0_195, %c0_196] : memref<1x6x16x16xf32, #tpu.memory_space<vmem>>, vector<1x1x16x16xf32>
    %424 = vector.shape_cast %423 : vector<1x1x16x16xf32> to vector<16x16xf32>
    %425 = vector.shape_cast %421 : vector<16x16xf32> to vector<1x1x16x16xf32>
    tpu.vector_store %arg8[%c0_194, %422, %c0_195, %c0_196], %425 {strides = array<i32>} : memref<1x6x16x16xf32, #tpu.memory_space<vmem>>, vector<1x1x16x16xf32>,
    %c6_i32 = arith.constant 6 : i32
    %c0_197 = arith.constant 0 : index
    %c0_198 = arith.constant 0 : index
    %426 = vector.load %arg10[%c0_197, %c0_198] : memref<16x16xf32, #tpu.memory_space<vmem>>, vector<16x16xf32>
    %c0_199 = arith.constant 0 : index
    %c0_200 = arith.constant 0 : index
    %c0_201 = arith.constant 0 : index
    %427 = vector.load %arg9[%c0_199, %c0_200, %c0_201] : memref<1x16x16xf32, #tpu.memory_space<vmem>>, vector<1x16x16xf32>
    %428 = vector.shape_cast %427 : vector<1x16x16xf32> to vector<16x16xf32>
    %429 = vector.shape_cast %426 : vector<16x16xf32> to vector<1x16x16xf32>
    tpu.vector_store %arg9[%c0_199, %c0_200, %c0_201], %429 {strides = array<i32>} : memref<1x16x16xf32, #tpu.memory_space<vmem>>, vector<1x16x16xf32>,
    return
  }
  func.func @transform_0(%arg0: i32) -> (i32, i32, i32) {
    %c0_i32 = arith.constant 0 : i32
    %c0_i32_0 = arith.constant 0 : i32
    %c0_i32_1 = arith.constant 0 : i32
    %c0_i32_2 = arith.constant 0 : i32
    return %c0_i32, %c0_i32_0, %c0_i32_1 : i32, i32, i32
  }
  func.func @transform_1(%arg0: i32) -> (i32, i32, i32) {
    %c0_i32 = arith.constant 0 : i32
    %c0_i32_0 = arith.constant 0 : i32
    %c0_i32_1 = arith.constant 0 : i32
    %c0_i32_2 = arith.constant 0 : i32
    return %c0_i32, %c0_i32_0, %c0_i32_1 : i32, i32, i32
  }
  func.func @transform_2(%arg0: i32) -> (i32, i32, i32) {
    %c0_i32 = arith.constant 0 : i32
    %c0_i32_0 = arith.constant 0 : i32
    %c0_i32_1 = arith.constant 0 : i32
    return %arg0, %c0_i32, %c0_i32_0 : i32, i32, i32
  }
  func.func @transform_3(%arg0: i32) -> (i32, i32, i32) {
    %c0_i32 = arith.constant 0 : i32
    %c0_i32_0 = arith.constant 0 : i32
    %c0_i32_1 = arith.constant 0 : i32
    return %arg0, %c0_i32, %c0_i32_0 : i32, i32, i32
  }
  func.func @transform_4(%arg0: i32) -> (i32, i32, i32) {
    %c0_i32 = arith.constant 0 : i32
    %c0_i32_0 = arith.constant 0 : i32
    %c0_i32_1 = arith.constant 0 : i32
    return %arg0, %c0_i32, %c0_i32_0 : i32, i32, i32
  }
  func.func @transform_5(%arg0: i32) -> (i32, i32, i32) {
    %c0_i32 = arith.constant 0 : i32
    %c0_i32_0 = arith.constant 0 : i32
    %c0_i32_1 = arith.constant 0 : i32
    return %arg0, %c0_i32, %c0_i32_0 : i32, i32, i32
  }
  func.func @transform_6(%arg0: i32) -> (i32, i32, i32) {
    %c0_i32 = arith.constant 0 : i32
    %c0_i32_0 = arith.constant 0 : i32
    %c0_i32_1 = arith.constant 0 : i32
    return %arg0, %c0_i32, %c0_i32_0 : i32, i32, i32
  }
  func.func @transform_7(%arg0: i32) -> (i32, i32, i32, i32) {
    %c0_i32 = arith.constant 0 : i32
    %c0_i32_0 = arith.constant 0 : i32
    %c0_i32_1 = arith.constant 0 : i32
    %c0_i32_2 = arith.constant 0 : i32
    return %arg0, %c0_i32, %c0_i32_0, %c0_i32_1 : i32, i32, i32, i32
  }
  func.func @transform_8(%arg0: i32) -> (i32, i32, i32) {
    %c0_i32 = arith.constant 0 : i32
    %c0_i32_0 = arith.constant 0 : i32
    %c0_i32_1 = arith.constant 0 : i32
    return %arg0, %c0_i32, %c0_i32_0 : i32, i32, i32
  }
}

module attributes {stable_mosaic.version = 11 : i64} {
  func.func @_bilstm_kernel(%arg0: i32, %arg1: memref<8x2x56xf32, #tpu.memory_space<vmem>>, %arg2: memref<8x2x1xf32, #tpu.memory_space<vmem>>, %arg3: memref<1x56x64xf32, #tpu.memory_space<vmem>>, %arg4: memref<1x16x64xf32, #tpu.memory_space<vmem>>, %arg5: memref<1x1x64xf32, #tpu.memory_space<vmem>>, %arg6: memref<1x2x16xf32, #tpu.memory_space<vmem>>, %arg7: memref<1x2x16xf32, #tpu.memory_space<vmem>>, %arg8: memref<1x8x2x16xf32, #tpu.memory_space<vmem>>, %arg9: memref<1x2x16xf32, #tpu.memory_space<vmem>>, %arg10: memref<2x16xf32, #tpu.memory_space<vmem>>, %arg11: memref<2x16xf32, #tpu.memory_space<vmem>>) attributes {dimension_semantics = [#tpu.dimension_semantics<parallel>], iteration_bounds = array<i64: 2>, scalar_prefetch = 0 : i64, scratch_operands = 2 : i64, tpu.core_type = #tpu.core_type<tc>, window_params = [{pipeline_mode = #tpu.pipeline_mode<synchronous>, transform_indices = @transform_0, window_bounds = array<i64: 8, 2, 56>}, {pipeline_mode = #tpu.pipeline_mode<synchronous>, transform_indices = @transform_1, window_bounds = array<i64: 8, 2, 1>}, {transform_indices = @transform_2, window_bounds = array<i64: 1, 56, 64>}, {transform_indices = @transform_3, window_bounds = array<i64: 1, 16, 64>}, {transform_indices = @transform_4, window_bounds = array<i64: 1, 1, 64>}, {transform_indices = @transform_5, window_bounds = array<i64: 1, 2, 16>}, {transform_indices = @transform_6, window_bounds = array<i64: 1, 2, 16>}, {transform_indices = @transform_7, window_bounds = array<i64: 1, 8, 2, 16>}, {transform_indices = @transform_8, window_bounds = array<i64: 1, 2, 16>}]} {
    %c0 = arith.constant 0 : index
    %c0_0 = arith.constant 0 : index
    %c0_1 = arith.constant 0 : index
    %0 = vector.load %arg6[%c0, %c0_0, %c0_1] : memref<1x2x16xf32, #tpu.memory_space<vmem>>, vector<1x2x16xf32>
    %1 = vector.shape_cast %0 : vector<1x2x16xf32> to vector<2x16xf32>
    %c0_2 = arith.constant 0 : index
    %c0_3 = arith.constant 0 : index
    %2 = vector.load %arg10[%c0_2, %c0_3] : memref<2x16xf32, #tpu.memory_space<vmem>>, vector<2x16xf32>
    tpu.vector_store %arg10[%c0_2, %c0_3], %1 {strides = array<i32>} : memref<2x16xf32, #tpu.memory_space<vmem>>, vector<2x16xf32>,
    %c0_4 = arith.constant 0 : index
    %c0_5 = arith.constant 0 : index
    %c0_6 = arith.constant 0 : index
    %3 = vector.load %arg7[%c0_4, %c0_5, %c0_6] : memref<1x2x16xf32, #tpu.memory_space<vmem>>, vector<1x2x16xf32>
    %4 = vector.shape_cast %3 : vector<1x2x16xf32> to vector<2x16xf32>
    %c0_7 = arith.constant 0 : index
    %c0_8 = arith.constant 0 : index
    %5 = vector.load %arg11[%c0_7, %c0_8] : memref<2x16xf32, #tpu.memory_space<vmem>>, vector<2x16xf32>
    tpu.vector_store %arg11[%c0_7, %c0_8], %4 {strides = array<i32>} : memref<2x16xf32, #tpu.memory_space<vmem>>, vector<2x16xf32>,
    %c0_9 = arith.constant 0 : index
    %c0_10 = arith.constant 0 : index
    %c0_11 = arith.constant 0 : index
    %6 = vector.load %arg3[%c0_9, %c0_10, %c0_11] : memref<1x56x64xf32, #tpu.memory_space<vmem>>, vector<1x56x64xf32>
    %7 = vector.shape_cast %6 : vector<1x56x64xf32> to vector<56x64xf32>
    %c0_12 = arith.constant 0 : index
    %c0_13 = arith.constant 0 : index
    %c0_14 = arith.constant 0 : index
    %8 = vector.load %arg4[%c0_12, %c0_13, %c0_14] : memref<1x16x64xf32, #tpu.memory_space<vmem>>, vector<1x16x64xf32>
    %9 = vector.shape_cast %8 : vector<1x16x64xf32> to vector<16x64xf32>
    %c0_15 = arith.constant 0 : index
    %c0_16 = arith.constant 0 : index
    %c0_17 = arith.constant 0 : index
    %10 = vector.load %arg5[%c0_15, %c0_16, %c0_17] : memref<1x1x64xf32, #tpu.memory_space<vmem>>, vector<1x1x64xf32>
    %11 = vector.shape_cast %10 : vector<1x1x64xf32> to vector<1x64xf32>
    %c0_i32 = arith.constant 0 : i32
    %c0_i32_18 = arith.constant 0 : i32
    %12 = arith.cmpi eq, %arg0, %c0_i32_18 : i32
    %c7_i32 = arith.constant 7 : i32
    %13 = arith.subi %c7_i32, %c0_i32 : i32
    %14 = arith.select %12, %c0_i32, %13 : i32
    %15 = arith.index_cast %14 : i32 to index
    %c0_19 = arith.constant 0 : index
    %c0_20 = arith.constant 0 : index
    %16 = vector.load %arg1[%15, %c0_19, %c0_20] : memref<8x2x56xf32, #tpu.memory_space<vmem>>, vector<1x2x56xf32>
    %17 = vector.shape_cast %16 : vector<1x2x56xf32> to vector<2x56xf32>
    %18 = arith.index_cast %14 : i32 to index
    %c0_21 = arith.constant 0 : index
    %c0_22 = arith.constant 0 : index
    %19 = vector.load %arg2[%18, %c0_21, %c0_22] : memref<8x2x1xf32, #tpu.memory_space<vmem>>, vector<1x2x1xf32>
    %20 = vector.shape_cast %19 : vector<1x2x1xf32> to vector<2x1xf32>
    %c0_23 = arith.constant 0 : index
    %c0_24 = arith.constant 0 : index
    %21 = vector.load %arg10[%c0_23, %c0_24] : memref<2x16xf32, #tpu.memory_space<vmem>>, vector<2x16xf32>
    %c0_25 = arith.constant 0 : index
    %c0_26 = arith.constant 0 : index
    %22 = vector.load %arg11[%c0_25, %c0_26] : memref<2x16xf32, #tpu.memory_space<vmem>>, vector<2x16xf32>
    %cst = arith.constant dense<0.000000e+00> : vector<2x64xf32>
    %23 = tpu.matmul %17, %7, %cst {dimension_numbers = #tpu.dot_dimension_numbers<[1], [0], [0], [1], [0, 0, 1, 1], [], []>} : vector<2x56xf32>, vector<56x64xf32>, vector<2x64xf32> -> vector<2x64xf32>
    %cst_27 = arith.constant dense<0.000000e+00> : vector<2x64xf32>
    %24 = tpu.matmul %21, %9, %cst_27 {dimension_numbers = #tpu.dot_dimension_numbers<[1], [0], [0], [1], [0, 0, 1, 1], [], []>} : vector<2x16xf32>, vector<16x64xf32>, vector<2x64xf32> -> vector<2x64xf32>
    %25 = arith.addf %23, %24 : vector<2x64xf32>
    %26 = vector.broadcast %11 : vector<1x64xf32> to vector<2x64xf32>
    %27 = arith.addf %25, %26 : vector<2x64xf32>
    %28 = vector.extract_strided_slice %27 {offsets = [0, 0], sizes = [2, 16], strides = [1, 1]} : vector<2x64xf32> to vector<2x16xf32>
    %cst_28 = arith.constant 5.000000e-01 : f32
    %29 = vector.broadcast %cst_28 : f32 to vector<2x16xf32>
    %30 = arith.mulf %29, %28 : vector<2x16xf32>
    %31 = math.tanh %30 : vector<2x16xf32>
    %cst_29 = arith.constant 1.000000e+00 : f32
    %32 = vector.broadcast %cst_29 : f32 to vector<2x16xf32>
    %33 = arith.addf %31, %32 : vector<2x16xf32>
    %cst_30 = arith.constant 5.000000e-01 : f32
    %34 = vector.broadcast %cst_30 : f32 to vector<2x16xf32>
    %35 = arith.mulf %34, %33 : vector<2x16xf32>
    %36 = vector.extract_strided_slice %27 {offsets = [0, 16], sizes = [2, 16], strides = [1, 1]} : vector<2x64xf32> to vector<2x16xf32>
    %cst_31 = arith.constant 5.000000e-01 : f32
    %37 = vector.broadcast %cst_31 : f32 to vector<2x16xf32>
    %38 = arith.mulf %37, %36 : vector<2x16xf32>
    %39 = math.tanh %38 : vector<2x16xf32>
    %cst_32 = arith.constant 1.000000e+00 : f32
    %40 = vector.broadcast %cst_32 : f32 to vector<2x16xf32>
    %41 = arith.addf %39, %40 : vector<2x16xf32>
    %cst_33 = arith.constant 5.000000e-01 : f32
    %42 = vector.broadcast %cst_33 : f32 to vector<2x16xf32>
    %43 = arith.mulf %42, %41 : vector<2x16xf32>
    %44 = vector.extract_strided_slice %27 {offsets = [0, 32], sizes = [2, 16], strides = [1, 1]} : vector<2x64xf32> to vector<2x16xf32>
    %45 = math.tanh %44 : vector<2x16xf32>
    %46 = vector.extract_strided_slice %27 {offsets = [0, 48], sizes = [2, 16], strides = [1, 1]} : vector<2x64xf32> to vector<2x16xf32>
    %cst_34 = arith.constant 5.000000e-01 : f32
    %47 = vector.broadcast %cst_34 : f32 to vector<2x16xf32>
    %48 = arith.mulf %47, %46 : vector<2x16xf32>
    %49 = math.tanh %48 : vector<2x16xf32>
    %cst_35 = arith.constant 1.000000e+00 : f32
    %50 = vector.broadcast %cst_35 : f32 to vector<2x16xf32>
    %51 = arith.addf %49, %50 : vector<2x16xf32>
    %cst_36 = arith.constant 5.000000e-01 : f32
    %52 = vector.broadcast %cst_36 : f32 to vector<2x16xf32>
    %53 = arith.mulf %52, %51 : vector<2x16xf32>
    %54 = arith.mulf %43, %22 : vector<2x16xf32>
    %55 = arith.mulf %35, %45 : vector<2x16xf32>
    %56 = arith.addf %54, %55 : vector<2x16xf32>
    %57 = math.tanh %56 : vector<2x16xf32>
    %58 = arith.mulf %53, %57 : vector<2x16xf32>
    %59 = vector.broadcast %20 : vector<2x1xf32> to vector<2x16xf32>
    %60 = arith.mulf %59, %58 : vector<2x16xf32>
    %cst_37 = arith.constant 1.000000e+00 : f32
    %61 = vector.broadcast %cst_37 : f32 to vector<2x1xf32>
    %62 = arith.subf %61, %20 : vector<2x1xf32>
    %63 = vector.broadcast %62 : vector<2x1xf32> to vector<2x16xf32>
    %64 = arith.mulf %63, %21 : vector<2x16xf32>
    %65 = arith.addf %60, %64 : vector<2x16xf32>
    %66 = vector.broadcast %20 : vector<2x1xf32> to vector<2x16xf32>
    %67 = arith.mulf %66, %56 : vector<2x16xf32>
    %cst_38 = arith.constant 1.000000e+00 : f32
    %68 = vector.broadcast %cst_38 : f32 to vector<2x1xf32>
    %69 = arith.subf %68, %20 : vector<2x1xf32>
    %70 = vector.broadcast %69 : vector<2x1xf32> to vector<2x16xf32>
    %71 = arith.mulf %70, %22 : vector<2x16xf32>
    %72 = arith.addf %67, %71 : vector<2x16xf32>
    %c0_39 = arith.constant 0 : index
    %c0_40 = arith.constant 0 : index
    %73 = vector.load %arg10[%c0_39, %c0_40] : memref<2x16xf32, #tpu.memory_space<vmem>>, vector<2x16xf32>
    tpu.vector_store %arg10[%c0_39, %c0_40], %65 {strides = array<i32>} : memref<2x16xf32, #tpu.memory_space<vmem>>, vector<2x16xf32>,
    %c0_41 = arith.constant 0 : index
    %c0_42 = arith.constant 0 : index
    %74 = vector.load %arg11[%c0_41, %c0_42] : memref<2x16xf32, #tpu.memory_space<vmem>>, vector<2x16xf32>
    tpu.vector_store %arg11[%c0_41, %c0_42], %72 {strides = array<i32>} : memref<2x16xf32, #tpu.memory_space<vmem>>, vector<2x16xf32>,
    %75 = vector.broadcast %20 : vector<2x1xf32> to vector<2x16xf32>
    %76 = arith.mulf %65, %75 : vector<2x16xf32>
    %c0_43 = arith.constant 0 : index
    %77 = arith.index_cast %14 : i32 to index
    %c0_44 = arith.constant 0 : index
    %c0_45 = arith.constant 0 : index
    %78 = vector.load %arg8[%c0_43, %77, %c0_44, %c0_45] : memref<1x8x2x16xf32, #tpu.memory_space<vmem>>, vector<1x1x2x16xf32>
    %79 = vector.shape_cast %78 : vector<1x1x2x16xf32> to vector<2x16xf32>
    %80 = vector.shape_cast %76 : vector<2x16xf32> to vector<1x1x2x16xf32>
    tpu.vector_store %arg8[%c0_43, %77, %c0_44, %c0_45], %80 {strides = array<i32>} : memref<1x8x2x16xf32, #tpu.memory_space<vmem>>, vector<1x1x2x16xf32>,
    %c1_i32 = arith.constant 1 : i32
    %c0_i32_46 = arith.constant 0 : i32
    %81 = arith.cmpi eq, %arg0, %c0_i32_46 : i32
    %c7_i32_47 = arith.constant 7 : i32
    %82 = arith.subi %c7_i32_47, %c1_i32 : i32
    %83 = arith.select %81, %c1_i32, %82 : i32
    %84 = arith.index_cast %83 : i32 to index
    %c0_48 = arith.constant 0 : index
    %c0_49 = arith.constant 0 : index
    %85 = vector.load %arg1[%84, %c0_48, %c0_49] : memref<8x2x56xf32, #tpu.memory_space<vmem>>, vector<1x2x56xf32>
    %86 = vector.shape_cast %85 : vector<1x2x56xf32> to vector<2x56xf32>
    %87 = arith.index_cast %83 : i32 to index
    %c0_50 = arith.constant 0 : index
    %c0_51 = arith.constant 0 : index
    %88 = vector.load %arg2[%87, %c0_50, %c0_51] : memref<8x2x1xf32, #tpu.memory_space<vmem>>, vector<1x2x1xf32>
    %89 = vector.shape_cast %88 : vector<1x2x1xf32> to vector<2x1xf32>
    %c0_52 = arith.constant 0 : index
    %c0_53 = arith.constant 0 : index
    %90 = vector.load %arg10[%c0_52, %c0_53] : memref<2x16xf32, #tpu.memory_space<vmem>>, vector<2x16xf32>
    %c0_54 = arith.constant 0 : index
    %c0_55 = arith.constant 0 : index
    %91 = vector.load %arg11[%c0_54, %c0_55] : memref<2x16xf32, #tpu.memory_space<vmem>>, vector<2x16xf32>
    %cst_56 = arith.constant dense<0.000000e+00> : vector<2x64xf32>
    %92 = tpu.matmul %86, %7, %cst_56 {dimension_numbers = #tpu.dot_dimension_numbers<[1], [0], [0], [1], [0, 0, 1, 1], [], []>} : vector<2x56xf32>, vector<56x64xf32>, vector<2x64xf32> -> vector<2x64xf32>
    %cst_57 = arith.constant dense<0.000000e+00> : vector<2x64xf32>
    %93 = tpu.matmul %90, %9, %cst_57 {dimension_numbers = #tpu.dot_dimension_numbers<[1], [0], [0], [1], [0, 0, 1, 1], [], []>} : vector<2x16xf32>, vector<16x64xf32>, vector<2x64xf32> -> vector<2x64xf32>
    %94 = arith.addf %92, %93 : vector<2x64xf32>
    %95 = vector.broadcast %11 : vector<1x64xf32> to vector<2x64xf32>
    %96 = arith.addf %94, %95 : vector<2x64xf32>
    %97 = vector.extract_strided_slice %96 {offsets = [0, 0], sizes = [2, 16], strides = [1, 1]} : vector<2x64xf32> to vector<2x16xf32>
    %cst_58 = arith.constant 5.000000e-01 : f32
    %98 = vector.broadcast %cst_58 : f32 to vector<2x16xf32>
    %99 = arith.mulf %98, %97 : vector<2x16xf32>
    %100 = math.tanh %99 : vector<2x16xf32>
    %cst_59 = arith.constant 1.000000e+00 : f32
    %101 = vector.broadcast %cst_59 : f32 to vector<2x16xf32>
    %102 = arith.addf %100, %101 : vector<2x16xf32>
    %cst_60 = arith.constant 5.000000e-01 : f32
    %103 = vector.broadcast %cst_60 : f32 to vector<2x16xf32>
    %104 = arith.mulf %103, %102 : vector<2x16xf32>
    %105 = vector.extract_strided_slice %96 {offsets = [0, 16], sizes = [2, 16], strides = [1, 1]} : vector<2x64xf32> to vector<2x16xf32>
    %cst_61 = arith.constant 5.000000e-01 : f32
    %106 = vector.broadcast %cst_61 : f32 to vector<2x16xf32>
    %107 = arith.mulf %106, %105 : vector<2x16xf32>
    %108 = math.tanh %107 : vector<2x16xf32>
    %cst_62 = arith.constant 1.000000e+00 : f32
    %109 = vector.broadcast %cst_62 : f32 to vector<2x16xf32>
    %110 = arith.addf %108, %109 : vector<2x16xf32>
    %cst_63 = arith.constant 5.000000e-01 : f32
    %111 = vector.broadcast %cst_63 : f32 to vector<2x16xf32>
    %112 = arith.mulf %111, %110 : vector<2x16xf32>
    %113 = vector.extract_strided_slice %96 {offsets = [0, 32], sizes = [2, 16], strides = [1, 1]} : vector<2x64xf32> to vector<2x16xf32>
    %114 = math.tanh %113 : vector<2x16xf32>
    %115 = vector.extract_strided_slice %96 {offsets = [0, 48], sizes = [2, 16], strides = [1, 1]} : vector<2x64xf32> to vector<2x16xf32>
    %cst_64 = arith.constant 5.000000e-01 : f32
    %116 = vector.broadcast %cst_64 : f32 to vector<2x16xf32>
    %117 = arith.mulf %116, %115 : vector<2x16xf32>
    %118 = math.tanh %117 : vector<2x16xf32>
    %cst_65 = arith.constant 1.000000e+00 : f32
    %119 = vector.broadcast %cst_65 : f32 to vector<2x16xf32>
    %120 = arith.addf %118, %119 : vector<2x16xf32>
    %cst_66 = arith.constant 5.000000e-01 : f32
    %121 = vector.broadcast %cst_66 : f32 to vector<2x16xf32>
    %122 = arith.mulf %121, %120 : vector<2x16xf32>
    %123 = arith.mulf %112, %91 : vector<2x16xf32>
    %124 = arith.mulf %104, %114 : vector<2x16xf32>
    %125 = arith.addf %123, %124 : vector<2x16xf32>
    %126 = math.tanh %125 : vector<2x16xf32>
    %127 = arith.mulf %122, %126 : vector<2x16xf32>
    %128 = vector.broadcast %89 : vector<2x1xf32> to vector<2x16xf32>
    %129 = arith.mulf %128, %127 : vector<2x16xf32>
    %cst_67 = arith.constant 1.000000e+00 : f32
    %130 = vector.broadcast %cst_67 : f32 to vector<2x1xf32>
    %131 = arith.subf %130, %89 : vector<2x1xf32>
    %132 = vector.broadcast %131 : vector<2x1xf32> to vector<2x16xf32>
    %133 = arith.mulf %132, %90 : vector<2x16xf32>
    %134 = arith.addf %129, %133 : vector<2x16xf32>
    %135 = vector.broadcast %89 : vector<2x1xf32> to vector<2x16xf32>
    %136 = arith.mulf %135, %125 : vector<2x16xf32>
    %cst_68 = arith.constant 1.000000e+00 : f32
    %137 = vector.broadcast %cst_68 : f32 to vector<2x1xf32>
    %138 = arith.subf %137, %89 : vector<2x1xf32>
    %139 = vector.broadcast %138 : vector<2x1xf32> to vector<2x16xf32>
    %140 = arith.mulf %139, %91 : vector<2x16xf32>
    %141 = arith.addf %136, %140 : vector<2x16xf32>
    %c0_69 = arith.constant 0 : index
    %c0_70 = arith.constant 0 : index
    %142 = vector.load %arg10[%c0_69, %c0_70] : memref<2x16xf32, #tpu.memory_space<vmem>>, vector<2x16xf32>
    tpu.vector_store %arg10[%c0_69, %c0_70], %134 {strides = array<i32>} : memref<2x16xf32, #tpu.memory_space<vmem>>, vector<2x16xf32>,
    %c0_71 = arith.constant 0 : index
    %c0_72 = arith.constant 0 : index
    %143 = vector.load %arg11[%c0_71, %c0_72] : memref<2x16xf32, #tpu.memory_space<vmem>>, vector<2x16xf32>
    tpu.vector_store %arg11[%c0_71, %c0_72], %141 {strides = array<i32>} : memref<2x16xf32, #tpu.memory_space<vmem>>, vector<2x16xf32>,
    %144 = vector.broadcast %89 : vector<2x1xf32> to vector<2x16xf32>
    %145 = arith.mulf %134, %144 : vector<2x16xf32>
    %c0_73 = arith.constant 0 : index
    %146 = arith.index_cast %83 : i32 to index
    %c0_74 = arith.constant 0 : index
    %c0_75 = arith.constant 0 : index
    %147 = vector.load %arg8[%c0_73, %146, %c0_74, %c0_75] : memref<1x8x2x16xf32, #tpu.memory_space<vmem>>, vector<1x1x2x16xf32>
    %148 = vector.shape_cast %147 : vector<1x1x2x16xf32> to vector<2x16xf32>
    %149 = vector.shape_cast %145 : vector<2x16xf32> to vector<1x1x2x16xf32>
    tpu.vector_store %arg8[%c0_73, %146, %c0_74, %c0_75], %149 {strides = array<i32>} : memref<1x8x2x16xf32, #tpu.memory_space<vmem>>, vector<1x1x2x16xf32>,
    %c2_i32 = arith.constant 2 : i32
    %c0_i32_76 = arith.constant 0 : i32
    %150 = arith.cmpi eq, %arg0, %c0_i32_76 : i32
    %c7_i32_77 = arith.constant 7 : i32
    %151 = arith.subi %c7_i32_77, %c2_i32 : i32
    %152 = arith.select %150, %c2_i32, %151 : i32
    %153 = arith.index_cast %152 : i32 to index
    %c0_78 = arith.constant 0 : index
    %c0_79 = arith.constant 0 : index
    %154 = vector.load %arg1[%153, %c0_78, %c0_79] : memref<8x2x56xf32, #tpu.memory_space<vmem>>, vector<1x2x56xf32>
    %155 = vector.shape_cast %154 : vector<1x2x56xf32> to vector<2x56xf32>
    %156 = arith.index_cast %152 : i32 to index
    %c0_80 = arith.constant 0 : index
    %c0_81 = arith.constant 0 : index
    %157 = vector.load %arg2[%156, %c0_80, %c0_81] : memref<8x2x1xf32, #tpu.memory_space<vmem>>, vector<1x2x1xf32>
    %158 = vector.shape_cast %157 : vector<1x2x1xf32> to vector<2x1xf32>
    %c0_82 = arith.constant 0 : index
    %c0_83 = arith.constant 0 : index
    %159 = vector.load %arg10[%c0_82, %c0_83] : memref<2x16xf32, #tpu.memory_space<vmem>>, vector<2x16xf32>
    %c0_84 = arith.constant 0 : index
    %c0_85 = arith.constant 0 : index
    %160 = vector.load %arg11[%c0_84, %c0_85] : memref<2x16xf32, #tpu.memory_space<vmem>>, vector<2x16xf32>
    %cst_86 = arith.constant dense<0.000000e+00> : vector<2x64xf32>
    %161 = tpu.matmul %155, %7, %cst_86 {dimension_numbers = #tpu.dot_dimension_numbers<[1], [0], [0], [1], [0, 0, 1, 1], [], []>} : vector<2x56xf32>, vector<56x64xf32>, vector<2x64xf32> -> vector<2x64xf32>
    %cst_87 = arith.constant dense<0.000000e+00> : vector<2x64xf32>
    %162 = tpu.matmul %159, %9, %cst_87 {dimension_numbers = #tpu.dot_dimension_numbers<[1], [0], [0], [1], [0, 0, 1, 1], [], []>} : vector<2x16xf32>, vector<16x64xf32>, vector<2x64xf32> -> vector<2x64xf32>
    %163 = arith.addf %161, %162 : vector<2x64xf32>
    %164 = vector.broadcast %11 : vector<1x64xf32> to vector<2x64xf32>
    %165 = arith.addf %163, %164 : vector<2x64xf32>
    %166 = vector.extract_strided_slice %165 {offsets = [0, 0], sizes = [2, 16], strides = [1, 1]} : vector<2x64xf32> to vector<2x16xf32>
    %cst_88 = arith.constant 5.000000e-01 : f32
    %167 = vector.broadcast %cst_88 : f32 to vector<2x16xf32>
    %168 = arith.mulf %167, %166 : vector<2x16xf32>
    %169 = math.tanh %168 : vector<2x16xf32>
    %cst_89 = arith.constant 1.000000e+00 : f32
    %170 = vector.broadcast %cst_89 : f32 to vector<2x16xf32>
    %171 = arith.addf %169, %170 : vector<2x16xf32>
    %cst_90 = arith.constant 5.000000e-01 : f32
    %172 = vector.broadcast %cst_90 : f32 to vector<2x16xf32>
    %173 = arith.mulf %172, %171 : vector<2x16xf32>
    %174 = vector.extract_strided_slice %165 {offsets = [0, 16], sizes = [2, 16], strides = [1, 1]} : vector<2x64xf32> to vector<2x16xf32>
    %cst_91 = arith.constant 5.000000e-01 : f32
    %175 = vector.broadcast %cst_91 : f32 to vector<2x16xf32>
    %176 = arith.mulf %175, %174 : vector<2x16xf32>
    %177 = math.tanh %176 : vector<2x16xf32>
    %cst_92 = arith.constant 1.000000e+00 : f32
    %178 = vector.broadcast %cst_92 : f32 to vector<2x16xf32>
    %179 = arith.addf %177, %178 : vector<2x16xf32>
    %cst_93 = arith.constant 5.000000e-01 : f32
    %180 = vector.broadcast %cst_93 : f32 to vector<2x16xf32>
    %181 = arith.mulf %180, %179 : vector<2x16xf32>
    %182 = vector.extract_strided_slice %165 {offsets = [0, 32], sizes = [2, 16], strides = [1, 1]} : vector<2x64xf32> to vector<2x16xf32>
    %183 = math.tanh %182 : vector<2x16xf32>
    %184 = vector.extract_strided_slice %165 {offsets = [0, 48], sizes = [2, 16], strides = [1, 1]} : vector<2x64xf32> to vector<2x16xf32>
    %cst_94 = arith.constant 5.000000e-01 : f32
    %185 = vector.broadcast %cst_94 : f32 to vector<2x16xf32>
    %186 = arith.mulf %185, %184 : vector<2x16xf32>
    %187 = math.tanh %186 : vector<2x16xf32>
    %cst_95 = arith.constant 1.000000e+00 : f32
    %188 = vector.broadcast %cst_95 : f32 to vector<2x16xf32>
    %189 = arith.addf %187, %188 : vector<2x16xf32>
    %cst_96 = arith.constant 5.000000e-01 : f32
    %190 = vector.broadcast %cst_96 : f32 to vector<2x16xf32>
    %191 = arith.mulf %190, %189 : vector<2x16xf32>
    %192 = arith.mulf %181, %160 : vector<2x16xf32>
    %193 = arith.mulf %173, %183 : vector<2x16xf32>
    %194 = arith.addf %192, %193 : vector<2x16xf32>
    %195 = math.tanh %194 : vector<2x16xf32>
    %196 = arith.mulf %191, %195 : vector<2x16xf32>
    %197 = vector.broadcast %158 : vector<2x1xf32> to vector<2x16xf32>
    %198 = arith.mulf %197, %196 : vector<2x16xf32>
    %cst_97 = arith.constant 1.000000e+00 : f32
    %199 = vector.broadcast %cst_97 : f32 to vector<2x1xf32>
    %200 = arith.subf %199, %158 : vector<2x1xf32>
    %201 = vector.broadcast %200 : vector<2x1xf32> to vector<2x16xf32>
    %202 = arith.mulf %201, %159 : vector<2x16xf32>
    %203 = arith.addf %198, %202 : vector<2x16xf32>
    %204 = vector.broadcast %158 : vector<2x1xf32> to vector<2x16xf32>
    %205 = arith.mulf %204, %194 : vector<2x16xf32>
    %cst_98 = arith.constant 1.000000e+00 : f32
    %206 = vector.broadcast %cst_98 : f32 to vector<2x1xf32>
    %207 = arith.subf %206, %158 : vector<2x1xf32>
    %208 = vector.broadcast %207 : vector<2x1xf32> to vector<2x16xf32>
    %209 = arith.mulf %208, %160 : vector<2x16xf32>
    %210 = arith.addf %205, %209 : vector<2x16xf32>
    %c0_99 = arith.constant 0 : index
    %c0_100 = arith.constant 0 : index
    %211 = vector.load %arg10[%c0_99, %c0_100] : memref<2x16xf32, #tpu.memory_space<vmem>>, vector<2x16xf32>
    tpu.vector_store %arg10[%c0_99, %c0_100], %203 {strides = array<i32>} : memref<2x16xf32, #tpu.memory_space<vmem>>, vector<2x16xf32>,
    %c0_101 = arith.constant 0 : index
    %c0_102 = arith.constant 0 : index
    %212 = vector.load %arg11[%c0_101, %c0_102] : memref<2x16xf32, #tpu.memory_space<vmem>>, vector<2x16xf32>
    tpu.vector_store %arg11[%c0_101, %c0_102], %210 {strides = array<i32>} : memref<2x16xf32, #tpu.memory_space<vmem>>, vector<2x16xf32>,
    %213 = vector.broadcast %158 : vector<2x1xf32> to vector<2x16xf32>
    %214 = arith.mulf %203, %213 : vector<2x16xf32>
    %c0_103 = arith.constant 0 : index
    %215 = arith.index_cast %152 : i32 to index
    %c0_104 = arith.constant 0 : index
    %c0_105 = arith.constant 0 : index
    %216 = vector.load %arg8[%c0_103, %215, %c0_104, %c0_105] : memref<1x8x2x16xf32, #tpu.memory_space<vmem>>, vector<1x1x2x16xf32>
    %217 = vector.shape_cast %216 : vector<1x1x2x16xf32> to vector<2x16xf32>
    %218 = vector.shape_cast %214 : vector<2x16xf32> to vector<1x1x2x16xf32>
    tpu.vector_store %arg8[%c0_103, %215, %c0_104, %c0_105], %218 {strides = array<i32>} : memref<1x8x2x16xf32, #tpu.memory_space<vmem>>, vector<1x1x2x16xf32>,
    %c3_i32 = arith.constant 3 : i32
    %c0_i32_106 = arith.constant 0 : i32
    %219 = arith.cmpi eq, %arg0, %c0_i32_106 : i32
    %c7_i32_107 = arith.constant 7 : i32
    %220 = arith.subi %c7_i32_107, %c3_i32 : i32
    %221 = arith.select %219, %c3_i32, %220 : i32
    %222 = arith.index_cast %221 : i32 to index
    %c0_108 = arith.constant 0 : index
    %c0_109 = arith.constant 0 : index
    %223 = vector.load %arg1[%222, %c0_108, %c0_109] : memref<8x2x56xf32, #tpu.memory_space<vmem>>, vector<1x2x56xf32>
    %224 = vector.shape_cast %223 : vector<1x2x56xf32> to vector<2x56xf32>
    %225 = arith.index_cast %221 : i32 to index
    %c0_110 = arith.constant 0 : index
    %c0_111 = arith.constant 0 : index
    %226 = vector.load %arg2[%225, %c0_110, %c0_111] : memref<8x2x1xf32, #tpu.memory_space<vmem>>, vector<1x2x1xf32>
    %227 = vector.shape_cast %226 : vector<1x2x1xf32> to vector<2x1xf32>
    %c0_112 = arith.constant 0 : index
    %c0_113 = arith.constant 0 : index
    %228 = vector.load %arg10[%c0_112, %c0_113] : memref<2x16xf32, #tpu.memory_space<vmem>>, vector<2x16xf32>
    %c0_114 = arith.constant 0 : index
    %c0_115 = arith.constant 0 : index
    %229 = vector.load %arg11[%c0_114, %c0_115] : memref<2x16xf32, #tpu.memory_space<vmem>>, vector<2x16xf32>
    %cst_116 = arith.constant dense<0.000000e+00> : vector<2x64xf32>
    %230 = tpu.matmul %224, %7, %cst_116 {dimension_numbers = #tpu.dot_dimension_numbers<[1], [0], [0], [1], [0, 0, 1, 1], [], []>} : vector<2x56xf32>, vector<56x64xf32>, vector<2x64xf32> -> vector<2x64xf32>
    %cst_117 = arith.constant dense<0.000000e+00> : vector<2x64xf32>
    %231 = tpu.matmul %228, %9, %cst_117 {dimension_numbers = #tpu.dot_dimension_numbers<[1], [0], [0], [1], [0, 0, 1, 1], [], []>} : vector<2x16xf32>, vector<16x64xf32>, vector<2x64xf32> -> vector<2x64xf32>
    %232 = arith.addf %230, %231 : vector<2x64xf32>
    %233 = vector.broadcast %11 : vector<1x64xf32> to vector<2x64xf32>
    %234 = arith.addf %232, %233 : vector<2x64xf32>
    %235 = vector.extract_strided_slice %234 {offsets = [0, 0], sizes = [2, 16], strides = [1, 1]} : vector<2x64xf32> to vector<2x16xf32>
    %cst_118 = arith.constant 5.000000e-01 : f32
    %236 = vector.broadcast %cst_118 : f32 to vector<2x16xf32>
    %237 = arith.mulf %236, %235 : vector<2x16xf32>
    %238 = math.tanh %237 : vector<2x16xf32>
    %cst_119 = arith.constant 1.000000e+00 : f32
    %239 = vector.broadcast %cst_119 : f32 to vector<2x16xf32>
    %240 = arith.addf %238, %239 : vector<2x16xf32>
    %cst_120 = arith.constant 5.000000e-01 : f32
    %241 = vector.broadcast %cst_120 : f32 to vector<2x16xf32>
    %242 = arith.mulf %241, %240 : vector<2x16xf32>
    %243 = vector.extract_strided_slice %234 {offsets = [0, 16], sizes = [2, 16], strides = [1, 1]} : vector<2x64xf32> to vector<2x16xf32>
    %cst_121 = arith.constant 5.000000e-01 : f32
    %244 = vector.broadcast %cst_121 : f32 to vector<2x16xf32>
    %245 = arith.mulf %244, %243 : vector<2x16xf32>
    %246 = math.tanh %245 : vector<2x16xf32>
    %cst_122 = arith.constant 1.000000e+00 : f32
    %247 = vector.broadcast %cst_122 : f32 to vector<2x16xf32>
    %248 = arith.addf %246, %247 : vector<2x16xf32>
    %cst_123 = arith.constant 5.000000e-01 : f32
    %249 = vector.broadcast %cst_123 : f32 to vector<2x16xf32>
    %250 = arith.mulf %249, %248 : vector<2x16xf32>
    %251 = vector.extract_strided_slice %234 {offsets = [0, 32], sizes = [2, 16], strides = [1, 1]} : vector<2x64xf32> to vector<2x16xf32>
    %252 = math.tanh %251 : vector<2x16xf32>
    %253 = vector.extract_strided_slice %234 {offsets = [0, 48], sizes = [2, 16], strides = [1, 1]} : vector<2x64xf32> to vector<2x16xf32>
    %cst_124 = arith.constant 5.000000e-01 : f32
    %254 = vector.broadcast %cst_124 : f32 to vector<2x16xf32>
    %255 = arith.mulf %254, %253 : vector<2x16xf32>
    %256 = math.tanh %255 : vector<2x16xf32>
    %cst_125 = arith.constant 1.000000e+00 : f32
    %257 = vector.broadcast %cst_125 : f32 to vector<2x16xf32>
    %258 = arith.addf %256, %257 : vector<2x16xf32>
    %cst_126 = arith.constant 5.000000e-01 : f32
    %259 = vector.broadcast %cst_126 : f32 to vector<2x16xf32>
    %260 = arith.mulf %259, %258 : vector<2x16xf32>
    %261 = arith.mulf %250, %229 : vector<2x16xf32>
    %262 = arith.mulf %242, %252 : vector<2x16xf32>
    %263 = arith.addf %261, %262 : vector<2x16xf32>
    %264 = math.tanh %263 : vector<2x16xf32>
    %265 = arith.mulf %260, %264 : vector<2x16xf32>
    %266 = vector.broadcast %227 : vector<2x1xf32> to vector<2x16xf32>
    %267 = arith.mulf %266, %265 : vector<2x16xf32>
    %cst_127 = arith.constant 1.000000e+00 : f32
    %268 = vector.broadcast %cst_127 : f32 to vector<2x1xf32>
    %269 = arith.subf %268, %227 : vector<2x1xf32>
    %270 = vector.broadcast %269 : vector<2x1xf32> to vector<2x16xf32>
    %271 = arith.mulf %270, %228 : vector<2x16xf32>
    %272 = arith.addf %267, %271 : vector<2x16xf32>
    %273 = vector.broadcast %227 : vector<2x1xf32> to vector<2x16xf32>
    %274 = arith.mulf %273, %263 : vector<2x16xf32>
    %cst_128 = arith.constant 1.000000e+00 : f32
    %275 = vector.broadcast %cst_128 : f32 to vector<2x1xf32>
    %276 = arith.subf %275, %227 : vector<2x1xf32>
    %277 = vector.broadcast %276 : vector<2x1xf32> to vector<2x16xf32>
    %278 = arith.mulf %277, %229 : vector<2x16xf32>
    %279 = arith.addf %274, %278 : vector<2x16xf32>
    %c0_129 = arith.constant 0 : index
    %c0_130 = arith.constant 0 : index
    %280 = vector.load %arg10[%c0_129, %c0_130] : memref<2x16xf32, #tpu.memory_space<vmem>>, vector<2x16xf32>
    tpu.vector_store %arg10[%c0_129, %c0_130], %272 {strides = array<i32>} : memref<2x16xf32, #tpu.memory_space<vmem>>, vector<2x16xf32>,
    %c0_131 = arith.constant 0 : index
    %c0_132 = arith.constant 0 : index
    %281 = vector.load %arg11[%c0_131, %c0_132] : memref<2x16xf32, #tpu.memory_space<vmem>>, vector<2x16xf32>
    tpu.vector_store %arg11[%c0_131, %c0_132], %279 {strides = array<i32>} : memref<2x16xf32, #tpu.memory_space<vmem>>, vector<2x16xf32>,
    %282 = vector.broadcast %227 : vector<2x1xf32> to vector<2x16xf32>
    %283 = arith.mulf %272, %282 : vector<2x16xf32>
    %c0_133 = arith.constant 0 : index
    %284 = arith.index_cast %221 : i32 to index
    %c0_134 = arith.constant 0 : index
    %c0_135 = arith.constant 0 : index
    %285 = vector.load %arg8[%c0_133, %284, %c0_134, %c0_135] : memref<1x8x2x16xf32, #tpu.memory_space<vmem>>, vector<1x1x2x16xf32>
    %286 = vector.shape_cast %285 : vector<1x1x2x16xf32> to vector<2x16xf32>
    %287 = vector.shape_cast %283 : vector<2x16xf32> to vector<1x1x2x16xf32>
    tpu.vector_store %arg8[%c0_133, %284, %c0_134, %c0_135], %287 {strides = array<i32>} : memref<1x8x2x16xf32, #tpu.memory_space<vmem>>, vector<1x1x2x16xf32>,
    %c4_i32 = arith.constant 4 : i32
    %c0_i32_136 = arith.constant 0 : i32
    %288 = arith.cmpi eq, %arg0, %c0_i32_136 : i32
    %c7_i32_137 = arith.constant 7 : i32
    %289 = arith.subi %c7_i32_137, %c4_i32 : i32
    %290 = arith.select %288, %c4_i32, %289 : i32
    %291 = arith.index_cast %290 : i32 to index
    %c0_138 = arith.constant 0 : index
    %c0_139 = arith.constant 0 : index
    %292 = vector.load %arg1[%291, %c0_138, %c0_139] : memref<8x2x56xf32, #tpu.memory_space<vmem>>, vector<1x2x56xf32>
    %293 = vector.shape_cast %292 : vector<1x2x56xf32> to vector<2x56xf32>
    %294 = arith.index_cast %290 : i32 to index
    %c0_140 = arith.constant 0 : index
    %c0_141 = arith.constant 0 : index
    %295 = vector.load %arg2[%294, %c0_140, %c0_141] : memref<8x2x1xf32, #tpu.memory_space<vmem>>, vector<1x2x1xf32>
    %296 = vector.shape_cast %295 : vector<1x2x1xf32> to vector<2x1xf32>
    %c0_142 = arith.constant 0 : index
    %c0_143 = arith.constant 0 : index
    %297 = vector.load %arg10[%c0_142, %c0_143] : memref<2x16xf32, #tpu.memory_space<vmem>>, vector<2x16xf32>
    %c0_144 = arith.constant 0 : index
    %c0_145 = arith.constant 0 : index
    %298 = vector.load %arg11[%c0_144, %c0_145] : memref<2x16xf32, #tpu.memory_space<vmem>>, vector<2x16xf32>
    %cst_146 = arith.constant dense<0.000000e+00> : vector<2x64xf32>
    %299 = tpu.matmul %293, %7, %cst_146 {dimension_numbers = #tpu.dot_dimension_numbers<[1], [0], [0], [1], [0, 0, 1, 1], [], []>} : vector<2x56xf32>, vector<56x64xf32>, vector<2x64xf32> -> vector<2x64xf32>
    %cst_147 = arith.constant dense<0.000000e+00> : vector<2x64xf32>
    %300 = tpu.matmul %297, %9, %cst_147 {dimension_numbers = #tpu.dot_dimension_numbers<[1], [0], [0], [1], [0, 0, 1, 1], [], []>} : vector<2x16xf32>, vector<16x64xf32>, vector<2x64xf32> -> vector<2x64xf32>
    %301 = arith.addf %299, %300 : vector<2x64xf32>
    %302 = vector.broadcast %11 : vector<1x64xf32> to vector<2x64xf32>
    %303 = arith.addf %301, %302 : vector<2x64xf32>
    %304 = vector.extract_strided_slice %303 {offsets = [0, 0], sizes = [2, 16], strides = [1, 1]} : vector<2x64xf32> to vector<2x16xf32>
    %cst_148 = arith.constant 5.000000e-01 : f32
    %305 = vector.broadcast %cst_148 : f32 to vector<2x16xf32>
    %306 = arith.mulf %305, %304 : vector<2x16xf32>
    %307 = math.tanh %306 : vector<2x16xf32>
    %cst_149 = arith.constant 1.000000e+00 : f32
    %308 = vector.broadcast %cst_149 : f32 to vector<2x16xf32>
    %309 = arith.addf %307, %308 : vector<2x16xf32>
    %cst_150 = arith.constant 5.000000e-01 : f32
    %310 = vector.broadcast %cst_150 : f32 to vector<2x16xf32>
    %311 = arith.mulf %310, %309 : vector<2x16xf32>
    %312 = vector.extract_strided_slice %303 {offsets = [0, 16], sizes = [2, 16], strides = [1, 1]} : vector<2x64xf32> to vector<2x16xf32>
    %cst_151 = arith.constant 5.000000e-01 : f32
    %313 = vector.broadcast %cst_151 : f32 to vector<2x16xf32>
    %314 = arith.mulf %313, %312 : vector<2x16xf32>
    %315 = math.tanh %314 : vector<2x16xf32>
    %cst_152 = arith.constant 1.000000e+00 : f32
    %316 = vector.broadcast %cst_152 : f32 to vector<2x16xf32>
    %317 = arith.addf %315, %316 : vector<2x16xf32>
    %cst_153 = arith.constant 5.000000e-01 : f32
    %318 = vector.broadcast %cst_153 : f32 to vector<2x16xf32>
    %319 = arith.mulf %318, %317 : vector<2x16xf32>
    %320 = vector.extract_strided_slice %303 {offsets = [0, 32], sizes = [2, 16], strides = [1, 1]} : vector<2x64xf32> to vector<2x16xf32>
    %321 = math.tanh %320 : vector<2x16xf32>
    %322 = vector.extract_strided_slice %303 {offsets = [0, 48], sizes = [2, 16], strides = [1, 1]} : vector<2x64xf32> to vector<2x16xf32>
    %cst_154 = arith.constant 5.000000e-01 : f32
    %323 = vector.broadcast %cst_154 : f32 to vector<2x16xf32>
    %324 = arith.mulf %323, %322 : vector<2x16xf32>
    %325 = math.tanh %324 : vector<2x16xf32>
    %cst_155 = arith.constant 1.000000e+00 : f32
    %326 = vector.broadcast %cst_155 : f32 to vector<2x16xf32>
    %327 = arith.addf %325, %326 : vector<2x16xf32>
    %cst_156 = arith.constant 5.000000e-01 : f32
    %328 = vector.broadcast %cst_156 : f32 to vector<2x16xf32>
    %329 = arith.mulf %328, %327 : vector<2x16xf32>
    %330 = arith.mulf %319, %298 : vector<2x16xf32>
    %331 = arith.mulf %311, %321 : vector<2x16xf32>
    %332 = arith.addf %330, %331 : vector<2x16xf32>
    %333 = math.tanh %332 : vector<2x16xf32>
    %334 = arith.mulf %329, %333 : vector<2x16xf32>
    %335 = vector.broadcast %296 : vector<2x1xf32> to vector<2x16xf32>
    %336 = arith.mulf %335, %334 : vector<2x16xf32>
    %cst_157 = arith.constant 1.000000e+00 : f32
    %337 = vector.broadcast %cst_157 : f32 to vector<2x1xf32>
    %338 = arith.subf %337, %296 : vector<2x1xf32>
    %339 = vector.broadcast %338 : vector<2x1xf32> to vector<2x16xf32>
    %340 = arith.mulf %339, %297 : vector<2x16xf32>
    %341 = arith.addf %336, %340 : vector<2x16xf32>
    %342 = vector.broadcast %296 : vector<2x1xf32> to vector<2x16xf32>
    %343 = arith.mulf %342, %332 : vector<2x16xf32>
    %cst_158 = arith.constant 1.000000e+00 : f32
    %344 = vector.broadcast %cst_158 : f32 to vector<2x1xf32>
    %345 = arith.subf %344, %296 : vector<2x1xf32>
    %346 = vector.broadcast %345 : vector<2x1xf32> to vector<2x16xf32>
    %347 = arith.mulf %346, %298 : vector<2x16xf32>
    %348 = arith.addf %343, %347 : vector<2x16xf32>
    %c0_159 = arith.constant 0 : index
    %c0_160 = arith.constant 0 : index
    %349 = vector.load %arg10[%c0_159, %c0_160] : memref<2x16xf32, #tpu.memory_space<vmem>>, vector<2x16xf32>
    tpu.vector_store %arg10[%c0_159, %c0_160], %341 {strides = array<i32>} : memref<2x16xf32, #tpu.memory_space<vmem>>, vector<2x16xf32>,
    %c0_161 = arith.constant 0 : index
    %c0_162 = arith.constant 0 : index
    %350 = vector.load %arg11[%c0_161, %c0_162] : memref<2x16xf32, #tpu.memory_space<vmem>>, vector<2x16xf32>
    tpu.vector_store %arg11[%c0_161, %c0_162], %348 {strides = array<i32>} : memref<2x16xf32, #tpu.memory_space<vmem>>, vector<2x16xf32>,
    %351 = vector.broadcast %296 : vector<2x1xf32> to vector<2x16xf32>
    %352 = arith.mulf %341, %351 : vector<2x16xf32>
    %c0_163 = arith.constant 0 : index
    %353 = arith.index_cast %290 : i32 to index
    %c0_164 = arith.constant 0 : index
    %c0_165 = arith.constant 0 : index
    %354 = vector.load %arg8[%c0_163, %353, %c0_164, %c0_165] : memref<1x8x2x16xf32, #tpu.memory_space<vmem>>, vector<1x1x2x16xf32>
    %355 = vector.shape_cast %354 : vector<1x1x2x16xf32> to vector<2x16xf32>
    %356 = vector.shape_cast %352 : vector<2x16xf32> to vector<1x1x2x16xf32>
    tpu.vector_store %arg8[%c0_163, %353, %c0_164, %c0_165], %356 {strides = array<i32>} : memref<1x8x2x16xf32, #tpu.memory_space<vmem>>, vector<1x1x2x16xf32>,
    %c5_i32 = arith.constant 5 : i32
    %c0_i32_166 = arith.constant 0 : i32
    %357 = arith.cmpi eq, %arg0, %c0_i32_166 : i32
    %c7_i32_167 = arith.constant 7 : i32
    %358 = arith.subi %c7_i32_167, %c5_i32 : i32
    %359 = arith.select %357, %c5_i32, %358 : i32
    %360 = arith.index_cast %359 : i32 to index
    %c0_168 = arith.constant 0 : index
    %c0_169 = arith.constant 0 : index
    %361 = vector.load %arg1[%360, %c0_168, %c0_169] : memref<8x2x56xf32, #tpu.memory_space<vmem>>, vector<1x2x56xf32>
    %362 = vector.shape_cast %361 : vector<1x2x56xf32> to vector<2x56xf32>
    %363 = arith.index_cast %359 : i32 to index
    %c0_170 = arith.constant 0 : index
    %c0_171 = arith.constant 0 : index
    %364 = vector.load %arg2[%363, %c0_170, %c0_171] : memref<8x2x1xf32, #tpu.memory_space<vmem>>, vector<1x2x1xf32>
    %365 = vector.shape_cast %364 : vector<1x2x1xf32> to vector<2x1xf32>
    %c0_172 = arith.constant 0 : index
    %c0_173 = arith.constant 0 : index
    %366 = vector.load %arg10[%c0_172, %c0_173] : memref<2x16xf32, #tpu.memory_space<vmem>>, vector<2x16xf32>
    %c0_174 = arith.constant 0 : index
    %c0_175 = arith.constant 0 : index
    %367 = vector.load %arg11[%c0_174, %c0_175] : memref<2x16xf32, #tpu.memory_space<vmem>>, vector<2x16xf32>
    %cst_176 = arith.constant dense<0.000000e+00> : vector<2x64xf32>
    %368 = tpu.matmul %362, %7, %cst_176 {dimension_numbers = #tpu.dot_dimension_numbers<[1], [0], [0], [1], [0, 0, 1, 1], [], []>} : vector<2x56xf32>, vector<56x64xf32>, vector<2x64xf32> -> vector<2x64xf32>
    %cst_177 = arith.constant dense<0.000000e+00> : vector<2x64xf32>
    %369 = tpu.matmul %366, %9, %cst_177 {dimension_numbers = #tpu.dot_dimension_numbers<[1], [0], [0], [1], [0, 0, 1, 1], [], []>} : vector<2x16xf32>, vector<16x64xf32>, vector<2x64xf32> -> vector<2x64xf32>
    %370 = arith.addf %368, %369 : vector<2x64xf32>
    %371 = vector.broadcast %11 : vector<1x64xf32> to vector<2x64xf32>
    %372 = arith.addf %370, %371 : vector<2x64xf32>
    %373 = vector.extract_strided_slice %372 {offsets = [0, 0], sizes = [2, 16], strides = [1, 1]} : vector<2x64xf32> to vector<2x16xf32>
    %cst_178 = arith.constant 5.000000e-01 : f32
    %374 = vector.broadcast %cst_178 : f32 to vector<2x16xf32>
    %375 = arith.mulf %374, %373 : vector<2x16xf32>
    %376 = math.tanh %375 : vector<2x16xf32>
    %cst_179 = arith.constant 1.000000e+00 : f32
    %377 = vector.broadcast %cst_179 : f32 to vector<2x16xf32>
    %378 = arith.addf %376, %377 : vector<2x16xf32>
    %cst_180 = arith.constant 5.000000e-01 : f32
    %379 = vector.broadcast %cst_180 : f32 to vector<2x16xf32>
    %380 = arith.mulf %379, %378 : vector<2x16xf32>
    %381 = vector.extract_strided_slice %372 {offsets = [0, 16], sizes = [2, 16], strides = [1, 1]} : vector<2x64xf32> to vector<2x16xf32>
    %cst_181 = arith.constant 5.000000e-01 : f32
    %382 = vector.broadcast %cst_181 : f32 to vector<2x16xf32>
    %383 = arith.mulf %382, %381 : vector<2x16xf32>
    %384 = math.tanh %383 : vector<2x16xf32>
    %cst_182 = arith.constant 1.000000e+00 : f32
    %385 = vector.broadcast %cst_182 : f32 to vector<2x16xf32>
    %386 = arith.addf %384, %385 : vector<2x16xf32>
    %cst_183 = arith.constant 5.000000e-01 : f32
    %387 = vector.broadcast %cst_183 : f32 to vector<2x16xf32>
    %388 = arith.mulf %387, %386 : vector<2x16xf32>
    %389 = vector.extract_strided_slice %372 {offsets = [0, 32], sizes = [2, 16], strides = [1, 1]} : vector<2x64xf32> to vector<2x16xf32>
    %390 = math.tanh %389 : vector<2x16xf32>
    %391 = vector.extract_strided_slice %372 {offsets = [0, 48], sizes = [2, 16], strides = [1, 1]} : vector<2x64xf32> to vector<2x16xf32>
    %cst_184 = arith.constant 5.000000e-01 : f32
    %392 = vector.broadcast %cst_184 : f32 to vector<2x16xf32>
    %393 = arith.mulf %392, %391 : vector<2x16xf32>
    %394 = math.tanh %393 : vector<2x16xf32>
    %cst_185 = arith.constant 1.000000e+00 : f32
    %395 = vector.broadcast %cst_185 : f32 to vector<2x16xf32>
    %396 = arith.addf %394, %395 : vector<2x16xf32>
    %cst_186 = arith.constant 5.000000e-01 : f32
    %397 = vector.broadcast %cst_186 : f32 to vector<2x16xf32>
    %398 = arith.mulf %397, %396 : vector<2x16xf32>
    %399 = arith.mulf %388, %367 : vector<2x16xf32>
    %400 = arith.mulf %380, %390 : vector<2x16xf32>
    %401 = arith.addf %399, %400 : vector<2x16xf32>
    %402 = math.tanh %401 : vector<2x16xf32>
    %403 = arith.mulf %398, %402 : vector<2x16xf32>
    %404 = vector.broadcast %365 : vector<2x1xf32> to vector<2x16xf32>
    %405 = arith.mulf %404, %403 : vector<2x16xf32>
    %cst_187 = arith.constant 1.000000e+00 : f32
    %406 = vector.broadcast %cst_187 : f32 to vector<2x1xf32>
    %407 = arith.subf %406, %365 : vector<2x1xf32>
    %408 = vector.broadcast %407 : vector<2x1xf32> to vector<2x16xf32>
    %409 = arith.mulf %408, %366 : vector<2x16xf32>
    %410 = arith.addf %405, %409 : vector<2x16xf32>
    %411 = vector.broadcast %365 : vector<2x1xf32> to vector<2x16xf32>
    %412 = arith.mulf %411, %401 : vector<2x16xf32>
    %cst_188 = arith.constant 1.000000e+00 : f32
    %413 = vector.broadcast %cst_188 : f32 to vector<2x1xf32>
    %414 = arith.subf %413, %365 : vector<2x1xf32>
    %415 = vector.broadcast %414 : vector<2x1xf32> to vector<2x16xf32>
    %416 = arith.mulf %415, %367 : vector<2x16xf32>
    %417 = arith.addf %412, %416 : vector<2x16xf32>
    %c0_189 = arith.constant 0 : index
    %c0_190 = arith.constant 0 : index
    %418 = vector.load %arg10[%c0_189, %c0_190] : memref<2x16xf32, #tpu.memory_space<vmem>>, vector<2x16xf32>
    tpu.vector_store %arg10[%c0_189, %c0_190], %410 {strides = array<i32>} : memref<2x16xf32, #tpu.memory_space<vmem>>, vector<2x16xf32>,
    %c0_191 = arith.constant 0 : index
    %c0_192 = arith.constant 0 : index
    %419 = vector.load %arg11[%c0_191, %c0_192] : memref<2x16xf32, #tpu.memory_space<vmem>>, vector<2x16xf32>
    tpu.vector_store %arg11[%c0_191, %c0_192], %417 {strides = array<i32>} : memref<2x16xf32, #tpu.memory_space<vmem>>, vector<2x16xf32>,
    %420 = vector.broadcast %365 : vector<2x1xf32> to vector<2x16xf32>
    %421 = arith.mulf %410, %420 : vector<2x16xf32>
    %c0_193 = arith.constant 0 : index
    %422 = arith.index_cast %359 : i32 to index
    %c0_194 = arith.constant 0 : index
    %c0_195 = arith.constant 0 : index
    %423 = vector.load %arg8[%c0_193, %422, %c0_194, %c0_195] : memref<1x8x2x16xf32, #tpu.memory_space<vmem>>, vector<1x1x2x16xf32>
    %424 = vector.shape_cast %423 : vector<1x1x2x16xf32> to vector<2x16xf32>
    %425 = vector.shape_cast %421 : vector<2x16xf32> to vector<1x1x2x16xf32>
    tpu.vector_store %arg8[%c0_193, %422, %c0_194, %c0_195], %425 {strides = array<i32>} : memref<1x8x2x16xf32, #tpu.memory_space<vmem>>, vector<1x1x2x16xf32>,
    %c6_i32 = arith.constant 6 : i32
    %c0_i32_196 = arith.constant 0 : i32
    %426 = arith.cmpi eq, %arg0, %c0_i32_196 : i32
    %c7_i32_197 = arith.constant 7 : i32
    %427 = arith.subi %c7_i32_197, %c6_i32 : i32
    %428 = arith.select %426, %c6_i32, %427 : i32
    %429 = arith.index_cast %428 : i32 to index
    %c0_198 = arith.constant 0 : index
    %c0_199 = arith.constant 0 : index
    %430 = vector.load %arg1[%429, %c0_198, %c0_199] : memref<8x2x56xf32, #tpu.memory_space<vmem>>, vector<1x2x56xf32>
    %431 = vector.shape_cast %430 : vector<1x2x56xf32> to vector<2x56xf32>
    %432 = arith.index_cast %428 : i32 to index
    %c0_200 = arith.constant 0 : index
    %c0_201 = arith.constant 0 : index
    %433 = vector.load %arg2[%432, %c0_200, %c0_201] : memref<8x2x1xf32, #tpu.memory_space<vmem>>, vector<1x2x1xf32>
    %434 = vector.shape_cast %433 : vector<1x2x1xf32> to vector<2x1xf32>
    %c0_202 = arith.constant 0 : index
    %c0_203 = arith.constant 0 : index
    %435 = vector.load %arg10[%c0_202, %c0_203] : memref<2x16xf32, #tpu.memory_space<vmem>>, vector<2x16xf32>
    %c0_204 = arith.constant 0 : index
    %c0_205 = arith.constant 0 : index
    %436 = vector.load %arg11[%c0_204, %c0_205] : memref<2x16xf32, #tpu.memory_space<vmem>>, vector<2x16xf32>
    %cst_206 = arith.constant dense<0.000000e+00> : vector<2x64xf32>
    %437 = tpu.matmul %431, %7, %cst_206 {dimension_numbers = #tpu.dot_dimension_numbers<[1], [0], [0], [1], [0, 0, 1, 1], [], []>} : vector<2x56xf32>, vector<56x64xf32>, vector<2x64xf32> -> vector<2x64xf32>
    %cst_207 = arith.constant dense<0.000000e+00> : vector<2x64xf32>
    %438 = tpu.matmul %435, %9, %cst_207 {dimension_numbers = #tpu.dot_dimension_numbers<[1], [0], [0], [1], [0, 0, 1, 1], [], []>} : vector<2x16xf32>, vector<16x64xf32>, vector<2x64xf32> -> vector<2x64xf32>
    %439 = arith.addf %437, %438 : vector<2x64xf32>
    %440 = vector.broadcast %11 : vector<1x64xf32> to vector<2x64xf32>
    %441 = arith.addf %439, %440 : vector<2x64xf32>
    %442 = vector.extract_strided_slice %441 {offsets = [0, 0], sizes = [2, 16], strides = [1, 1]} : vector<2x64xf32> to vector<2x16xf32>
    %cst_208 = arith.constant 5.000000e-01 : f32
    %443 = vector.broadcast %cst_208 : f32 to vector<2x16xf32>
    %444 = arith.mulf %443, %442 : vector<2x16xf32>
    %445 = math.tanh %444 : vector<2x16xf32>
    %cst_209 = arith.constant 1.000000e+00 : f32
    %446 = vector.broadcast %cst_209 : f32 to vector<2x16xf32>
    %447 = arith.addf %445, %446 : vector<2x16xf32>
    %cst_210 = arith.constant 5.000000e-01 : f32
    %448 = vector.broadcast %cst_210 : f32 to vector<2x16xf32>
    %449 = arith.mulf %448, %447 : vector<2x16xf32>
    %450 = vector.extract_strided_slice %441 {offsets = [0, 16], sizes = [2, 16], strides = [1, 1]} : vector<2x64xf32> to vector<2x16xf32>
    %cst_211 = arith.constant 5.000000e-01 : f32
    %451 = vector.broadcast %cst_211 : f32 to vector<2x16xf32>
    %452 = arith.mulf %451, %450 : vector<2x16xf32>
    %453 = math.tanh %452 : vector<2x16xf32>
    %cst_212 = arith.constant 1.000000e+00 : f32
    %454 = vector.broadcast %cst_212 : f32 to vector<2x16xf32>
    %455 = arith.addf %453, %454 : vector<2x16xf32>
    %cst_213 = arith.constant 5.000000e-01 : f32
    %456 = vector.broadcast %cst_213 : f32 to vector<2x16xf32>
    %457 = arith.mulf %456, %455 : vector<2x16xf32>
    %458 = vector.extract_strided_slice %441 {offsets = [0, 32], sizes = [2, 16], strides = [1, 1]} : vector<2x64xf32> to vector<2x16xf32>
    %459 = math.tanh %458 : vector<2x16xf32>
    %460 = vector.extract_strided_slice %441 {offsets = [0, 48], sizes = [2, 16], strides = [1, 1]} : vector<2x64xf32> to vector<2x16xf32>
    %cst_214 = arith.constant 5.000000e-01 : f32
    %461 = vector.broadcast %cst_214 : f32 to vector<2x16xf32>
    %462 = arith.mulf %461, %460 : vector<2x16xf32>
    %463 = math.tanh %462 : vector<2x16xf32>
    %cst_215 = arith.constant 1.000000e+00 : f32
    %464 = vector.broadcast %cst_215 : f32 to vector<2x16xf32>
    %465 = arith.addf %463, %464 : vector<2x16xf32>
    %cst_216 = arith.constant 5.000000e-01 : f32
    %466 = vector.broadcast %cst_216 : f32 to vector<2x16xf32>
    %467 = arith.mulf %466, %465 : vector<2x16xf32>
    %468 = arith.mulf %457, %436 : vector<2x16xf32>
    %469 = arith.mulf %449, %459 : vector<2x16xf32>
    %470 = arith.addf %468, %469 : vector<2x16xf32>
    %471 = math.tanh %470 : vector<2x16xf32>
    %472 = arith.mulf %467, %471 : vector<2x16xf32>
    %473 = vector.broadcast %434 : vector<2x1xf32> to vector<2x16xf32>
    %474 = arith.mulf %473, %472 : vector<2x16xf32>
    %cst_217 = arith.constant 1.000000e+00 : f32
    %475 = vector.broadcast %cst_217 : f32 to vector<2x1xf32>
    %476 = arith.subf %475, %434 : vector<2x1xf32>
    %477 = vector.broadcast %476 : vector<2x1xf32> to vector<2x16xf32>
    %478 = arith.mulf %477, %435 : vector<2x16xf32>
    %479 = arith.addf %474, %478 : vector<2x16xf32>
    %480 = vector.broadcast %434 : vector<2x1xf32> to vector<2x16xf32>
    %481 = arith.mulf %480, %470 : vector<2x16xf32>
    %cst_218 = arith.constant 1.000000e+00 : f32
    %482 = vector.broadcast %cst_218 : f32 to vector<2x1xf32>
    %483 = arith.subf %482, %434 : vector<2x1xf32>
    %484 = vector.broadcast %483 : vector<2x1xf32> to vector<2x16xf32>
    %485 = arith.mulf %484, %436 : vector<2x16xf32>
    %486 = arith.addf %481, %485 : vector<2x16xf32>
    %c0_219 = arith.constant 0 : index
    %c0_220 = arith.constant 0 : index
    %487 = vector.load %arg10[%c0_219, %c0_220] : memref<2x16xf32, #tpu.memory_space<vmem>>, vector<2x16xf32>
    tpu.vector_store %arg10[%c0_219, %c0_220], %479 {strides = array<i32>} : memref<2x16xf32, #tpu.memory_space<vmem>>, vector<2x16xf32>,
    %c0_221 = arith.constant 0 : index
    %c0_222 = arith.constant 0 : index
    %488 = vector.load %arg11[%c0_221, %c0_222] : memref<2x16xf32, #tpu.memory_space<vmem>>, vector<2x16xf32>
    tpu.vector_store %arg11[%c0_221, %c0_222], %486 {strides = array<i32>} : memref<2x16xf32, #tpu.memory_space<vmem>>, vector<2x16xf32>,
    %489 = vector.broadcast %434 : vector<2x1xf32> to vector<2x16xf32>
    %490 = arith.mulf %479, %489 : vector<2x16xf32>
    %c0_223 = arith.constant 0 : index
    %491 = arith.index_cast %428 : i32 to index
    %c0_224 = arith.constant 0 : index
    %c0_225 = arith.constant 0 : index
    %492 = vector.load %arg8[%c0_223, %491, %c0_224, %c0_225] : memref<1x8x2x16xf32, #tpu.memory_space<vmem>>, vector<1x1x2x16xf32>
    %493 = vector.shape_cast %492 : vector<1x1x2x16xf32> to vector<2x16xf32>
    %494 = vector.shape_cast %490 : vector<2x16xf32> to vector<1x1x2x16xf32>
    tpu.vector_store %arg8[%c0_223, %491, %c0_224, %c0_225], %494 {strides = array<i32>} : memref<1x8x2x16xf32, #tpu.memory_space<vmem>>, vector<1x1x2x16xf32>,
    %c7_i32_226 = arith.constant 7 : i32
    %c0_i32_227 = arith.constant 0 : i32
    %495 = arith.cmpi eq, %arg0, %c0_i32_227 : i32
    %c7_i32_228 = arith.constant 7 : i32
    %496 = arith.subi %c7_i32_228, %c7_i32_226 : i32
    %497 = arith.select %495, %c7_i32_226, %496 : i32
    %498 = arith.index_cast %497 : i32 to index
    %c0_229 = arith.constant 0 : index
    %c0_230 = arith.constant 0 : index
    %499 = vector.load %arg1[%498, %c0_229, %c0_230] : memref<8x2x56xf32, #tpu.memory_space<vmem>>, vector<1x2x56xf32>
    %500 = vector.shape_cast %499 : vector<1x2x56xf32> to vector<2x56xf32>
    %501 = arith.index_cast %497 : i32 to index
    %c0_231 = arith.constant 0 : index
    %c0_232 = arith.constant 0 : index
    %502 = vector.load %arg2[%501, %c0_231, %c0_232] : memref<8x2x1xf32, #tpu.memory_space<vmem>>, vector<1x2x1xf32>
    %503 = vector.shape_cast %502 : vector<1x2x1xf32> to vector<2x1xf32>
    %c0_233 = arith.constant 0 : index
    %c0_234 = arith.constant 0 : index
    %504 = vector.load %arg10[%c0_233, %c0_234] : memref<2x16xf32, #tpu.memory_space<vmem>>, vector<2x16xf32>
    %c0_235 = arith.constant 0 : index
    %c0_236 = arith.constant 0 : index
    %505 = vector.load %arg11[%c0_235, %c0_236] : memref<2x16xf32, #tpu.memory_space<vmem>>, vector<2x16xf32>
    %cst_237 = arith.constant dense<0.000000e+00> : vector<2x64xf32>
    %506 = tpu.matmul %500, %7, %cst_237 {dimension_numbers = #tpu.dot_dimension_numbers<[1], [0], [0], [1], [0, 0, 1, 1], [], []>} : vector<2x56xf32>, vector<56x64xf32>, vector<2x64xf32> -> vector<2x64xf32>
    %cst_238 = arith.constant dense<0.000000e+00> : vector<2x64xf32>
    %507 = tpu.matmul %504, %9, %cst_238 {dimension_numbers = #tpu.dot_dimension_numbers<[1], [0], [0], [1], [0, 0, 1, 1], [], []>} : vector<2x16xf32>, vector<16x64xf32>, vector<2x64xf32> -> vector<2x64xf32>
    %508 = arith.addf %506, %507 : vector<2x64xf32>
    %509 = vector.broadcast %11 : vector<1x64xf32> to vector<2x64xf32>
    %510 = arith.addf %508, %509 : vector<2x64xf32>
    %511 = vector.extract_strided_slice %510 {offsets = [0, 0], sizes = [2, 16], strides = [1, 1]} : vector<2x64xf32> to vector<2x16xf32>
    %cst_239 = arith.constant 5.000000e-01 : f32
    %512 = vector.broadcast %cst_239 : f32 to vector<2x16xf32>
    %513 = arith.mulf %512, %511 : vector<2x16xf32>
    %514 = math.tanh %513 : vector<2x16xf32>
    %cst_240 = arith.constant 1.000000e+00 : f32
    %515 = vector.broadcast %cst_240 : f32 to vector<2x16xf32>
    %516 = arith.addf %514, %515 : vector<2x16xf32>
    %cst_241 = arith.constant 5.000000e-01 : f32
    %517 = vector.broadcast %cst_241 : f32 to vector<2x16xf32>
    %518 = arith.mulf %517, %516 : vector<2x16xf32>
    %519 = vector.extract_strided_slice %510 {offsets = [0, 16], sizes = [2, 16], strides = [1, 1]} : vector<2x64xf32> to vector<2x16xf32>
    %cst_242 = arith.constant 5.000000e-01 : f32
    %520 = vector.broadcast %cst_242 : f32 to vector<2x16xf32>
    %521 = arith.mulf %520, %519 : vector<2x16xf32>
    %522 = math.tanh %521 : vector<2x16xf32>
    %cst_243 = arith.constant 1.000000e+00 : f32
    %523 = vector.broadcast %cst_243 : f32 to vector<2x16xf32>
    %524 = arith.addf %522, %523 : vector<2x16xf32>
    %cst_244 = arith.constant 5.000000e-01 : f32
    %525 = vector.broadcast %cst_244 : f32 to vector<2x16xf32>
    %526 = arith.mulf %525, %524 : vector<2x16xf32>
    %527 = vector.extract_strided_slice %510 {offsets = [0, 32], sizes = [2, 16], strides = [1, 1]} : vector<2x64xf32> to vector<2x16xf32>
    %528 = math.tanh %527 : vector<2x16xf32>
    %529 = vector.extract_strided_slice %510 {offsets = [0, 48], sizes = [2, 16], strides = [1, 1]} : vector<2x64xf32> to vector<2x16xf32>
    %cst_245 = arith.constant 5.000000e-01 : f32
    %530 = vector.broadcast %cst_245 : f32 to vector<2x16xf32>
    %531 = arith.mulf %530, %529 : vector<2x16xf32>
    %532 = math.tanh %531 : vector<2x16xf32>
    %cst_246 = arith.constant 1.000000e+00 : f32
    %533 = vector.broadcast %cst_246 : f32 to vector<2x16xf32>
    %534 = arith.addf %532, %533 : vector<2x16xf32>
    %cst_247 = arith.constant 5.000000e-01 : f32
    %535 = vector.broadcast %cst_247 : f32 to vector<2x16xf32>
    %536 = arith.mulf %535, %534 : vector<2x16xf32>
    %537 = arith.mulf %526, %505 : vector<2x16xf32>
    %538 = arith.mulf %518, %528 : vector<2x16xf32>
    %539 = arith.addf %537, %538 : vector<2x16xf32>
    %540 = math.tanh %539 : vector<2x16xf32>
    %541 = arith.mulf %536, %540 : vector<2x16xf32>
    %542 = vector.broadcast %503 : vector<2x1xf32> to vector<2x16xf32>
    %543 = arith.mulf %542, %541 : vector<2x16xf32>
    %cst_248 = arith.constant 1.000000e+00 : f32
    %544 = vector.broadcast %cst_248 : f32 to vector<2x1xf32>
    %545 = arith.subf %544, %503 : vector<2x1xf32>
    %546 = vector.broadcast %545 : vector<2x1xf32> to vector<2x16xf32>
    %547 = arith.mulf %546, %504 : vector<2x16xf32>
    %548 = arith.addf %543, %547 : vector<2x16xf32>
    %549 = vector.broadcast %503 : vector<2x1xf32> to vector<2x16xf32>
    %550 = arith.mulf %549, %539 : vector<2x16xf32>
    %cst_249 = arith.constant 1.000000e+00 : f32
    %551 = vector.broadcast %cst_249 : f32 to vector<2x1xf32>
    %552 = arith.subf %551, %503 : vector<2x1xf32>
    %553 = vector.broadcast %552 : vector<2x1xf32> to vector<2x16xf32>
    %554 = arith.mulf %553, %505 : vector<2x16xf32>
    %555 = arith.addf %550, %554 : vector<2x16xf32>
    %c0_250 = arith.constant 0 : index
    %c0_251 = arith.constant 0 : index
    %556 = vector.load %arg10[%c0_250, %c0_251] : memref<2x16xf32, #tpu.memory_space<vmem>>, vector<2x16xf32>
    tpu.vector_store %arg10[%c0_250, %c0_251], %548 {strides = array<i32>} : memref<2x16xf32, #tpu.memory_space<vmem>>, vector<2x16xf32>,
    %c0_252 = arith.constant 0 : index
    %c0_253 = arith.constant 0 : index
    %557 = vector.load %arg11[%c0_252, %c0_253] : memref<2x16xf32, #tpu.memory_space<vmem>>, vector<2x16xf32>
    tpu.vector_store %arg11[%c0_252, %c0_253], %555 {strides = array<i32>} : memref<2x16xf32, #tpu.memory_space<vmem>>, vector<2x16xf32>,
    %558 = vector.broadcast %503 : vector<2x1xf32> to vector<2x16xf32>
    %559 = arith.mulf %548, %558 : vector<2x16xf32>
    %c0_254 = arith.constant 0 : index
    %560 = arith.index_cast %497 : i32 to index
    %c0_255 = arith.constant 0 : index
    %c0_256 = arith.constant 0 : index
    %561 = vector.load %arg8[%c0_254, %560, %c0_255, %c0_256] : memref<1x8x2x16xf32, #tpu.memory_space<vmem>>, vector<1x1x2x16xf32>
    %562 = vector.shape_cast %561 : vector<1x1x2x16xf32> to vector<2x16xf32>
    %563 = vector.shape_cast %559 : vector<2x16xf32> to vector<1x1x2x16xf32>
    tpu.vector_store %arg8[%c0_254, %560, %c0_255, %c0_256], %563 {strides = array<i32>} : memref<1x8x2x16xf32, #tpu.memory_space<vmem>>, vector<1x1x2x16xf32>,
    %c8_i32 = arith.constant 8 : i32
    %c0_257 = arith.constant 0 : index
    %c0_258 = arith.constant 0 : index
    %564 = vector.load %arg10[%c0_257, %c0_258] : memref<2x16xf32, #tpu.memory_space<vmem>>, vector<2x16xf32>
    %c0_259 = arith.constant 0 : index
    %c0_260 = arith.constant 0 : index
    %c0_261 = arith.constant 0 : index
    %565 = vector.load %arg9[%c0_259, %c0_260, %c0_261] : memref<1x2x16xf32, #tpu.memory_space<vmem>>, vector<1x2x16xf32>
    %566 = vector.shape_cast %565 : vector<1x2x16xf32> to vector<2x16xf32>
    %567 = vector.shape_cast %564 : vector<2x16xf32> to vector<1x2x16xf32>
    tpu.vector_store %arg9[%c0_259, %c0_260, %c0_261], %567 {strides = array<i32>} : memref<1x2x16xf32, #tpu.memory_space<vmem>>, vector<1x2x16xf32>,
    return
  }
  func.func @transform_0(%arg0: i32) -> (i32, i32, i32) {
    %c0_i32 = arith.constant 0 : i32
    %c0_i32_0 = arith.constant 0 : i32
    %c0_i32_1 = arith.constant 0 : i32
    %c0_i32_2 = arith.constant 0 : i32
    return %c0_i32, %c0_i32_0, %c0_i32_1 : i32, i32, i32
  }
  func.func @transform_1(%arg0: i32) -> (i32, i32, i32) {
    %c0_i32 = arith.constant 0 : i32
    %c0_i32_0 = arith.constant 0 : i32
    %c0_i32_1 = arith.constant 0 : i32
    %c0_i32_2 = arith.constant 0 : i32
    return %c0_i32, %c0_i32_0, %c0_i32_1 : i32, i32, i32
  }
  func.func @transform_2(%arg0: i32) -> (i32, i32, i32) {
    %c0_i32 = arith.constant 0 : i32
    %c0_i32_0 = arith.constant 0 : i32
    %c0_i32_1 = arith.constant 0 : i32
    return %arg0, %c0_i32, %c0_i32_0 : i32, i32, i32
  }
  func.func @transform_3(%arg0: i32) -> (i32, i32, i32) {
    %c0_i32 = arith.constant 0 : i32
    %c0_i32_0 = arith.constant 0 : i32
    %c0_i32_1 = arith.constant 0 : i32
    return %arg0, %c0_i32, %c0_i32_0 : i32, i32, i32
  }
  func.func @transform_4(%arg0: i32) -> (i32, i32, i32) {
    %c0_i32 = arith.constant 0 : i32
    %c0_i32_0 = arith.constant 0 : i32
    %c0_i32_1 = arith.constant 0 : i32
    return %arg0, %c0_i32, %c0_i32_0 : i32, i32, i32
  }
  func.func @transform_5(%arg0: i32) -> (i32, i32, i32) {
    %c0_i32 = arith.constant 0 : i32
    %c0_i32_0 = arith.constant 0 : i32
    %c0_i32_1 = arith.constant 0 : i32
    return %arg0, %c0_i32, %c0_i32_0 : i32, i32, i32
  }
  func.func @transform_6(%arg0: i32) -> (i32, i32, i32) {
    %c0_i32 = arith.constant 0 : i32
    %c0_i32_0 = arith.constant 0 : i32
    %c0_i32_1 = arith.constant 0 : i32
    return %arg0, %c0_i32, %c0_i32_0 : i32, i32, i32
  }
  func.func @transform_7(%arg0: i32) -> (i32, i32, i32, i32) {
    %c0_i32 = arith.constant 0 : i32
    %c0_i32_0 = arith.constant 0 : i32
    %c0_i32_1 = arith.constant 0 : i32
    %c0_i32_2 = arith.constant 0 : i32
    return %arg0, %c0_i32, %c0_i32_0, %c0_i32_1 : i32, i32, i32, i32
  }
  func.func @transform_8(%arg0: i32) -> (i32, i32, i32) {
    %c0_i32 = arith.constant 0 : i32
    %c0_i32_0 = arith.constant 0 : i32
    %c0_i32_1 = arith.constant 0 : i32
    return %arg0, %c0_i32, %c0_i32_0 : i32, i32, i32
  }
}

module attributes {stable_mosaic.version = 11 : i64} {
  func.func @_atten_tag_kernel(%arg0: i32, %arg1: memref<2x8x32xf32, #tpu.memory_space<vmem>>, %arg2: memref<2x1x8xf32, #tpu.memory_space<vmem>>, %arg3: memref<32x32xf32, #tpu.memory_space<vmem>>, %arg4: memref<1x32xf32, #tpu.memory_space<vmem>>, %arg5: memref<32x32xf32, #tpu.memory_space<vmem>>, %arg6: memref<1x32xf32, #tpu.memory_space<vmem>>, %arg7: memref<32x16xf32, #tpu.memory_space<vmem>>, %arg8: memref<32x16xf32, #tpu.memory_space<vmem>>, %arg9: memref<1x16xf32, #tpu.memory_space<vmem>>, %arg10: memref<2x8x16xf32, #tpu.memory_space<vmem>>) attributes {dimension_semantics = [#tpu.dimension_semantics<arbitrary>], iteration_bounds = array<i64: 1>, scalar_prefetch = 0 : i64, scratch_operands = 0 : i64, tpu.core_type = #tpu.core_type<tc>, window_params = [{pipeline_mode = #tpu.pipeline_mode<synchronous>, transform_indices = @transform_0, window_bounds = array<i64: 2, 8, 32>}, {pipeline_mode = #tpu.pipeline_mode<synchronous>, transform_indices = @transform_1, window_bounds = array<i64: 2, 1, 8>}, {pipeline_mode = #tpu.pipeline_mode<synchronous>, transform_indices = @transform_2, window_bounds = array<i64: 32, 32>}, {pipeline_mode = #tpu.pipeline_mode<synchronous>, transform_indices = @transform_3, window_bounds = array<i64: 1, 32>}, {pipeline_mode = #tpu.pipeline_mode<synchronous>, transform_indices = @transform_4, window_bounds = array<i64: 32, 32>}, {pipeline_mode = #tpu.pipeline_mode<synchronous>, transform_indices = @transform_5, window_bounds = array<i64: 1, 32>}, {pipeline_mode = #tpu.pipeline_mode<synchronous>, transform_indices = @transform_6, window_bounds = array<i64: 32, 16>}, {pipeline_mode = #tpu.pipeline_mode<synchronous>, transform_indices = @transform_7, window_bounds = array<i64: 32, 16>}, {pipeline_mode = #tpu.pipeline_mode<synchronous>, transform_indices = @transform_8, window_bounds = array<i64: 1, 16>}, {pipeline_mode = #tpu.pipeline_mode<synchronous>, transform_indices = @transform_9, window_bounds = array<i64: 2, 8, 16>}]} {
    %c0 = arith.constant 0 : index
    %c0_0 = arith.constant 0 : index
    %0 = vector.load %arg3[%c0, %c0_0] : memref<32x32xf32, #tpu.memory_space<vmem>>, vector<32x32xf32>
    %c0_1 = arith.constant 0 : index
    %c0_2 = arith.constant 0 : index
    %1 = vector.load %arg4[%c0_1, %c0_2] : memref<1x32xf32, #tpu.memory_space<vmem>>, vector<1x32xf32>
    %c0_3 = arith.constant 0 : index
    %c0_4 = arith.constant 0 : index
    %2 = vector.load %arg5[%c0_3, %c0_4] : memref<32x32xf32, #tpu.memory_space<vmem>>, vector<32x32xf32>
    %c0_5 = arith.constant 0 : index
    %c0_6 = arith.constant 0 : index
    %3 = vector.load %arg6[%c0_5, %c0_6] : memref<1x32xf32, #tpu.memory_space<vmem>>, vector<1x32xf32>
    %c0_7 = arith.constant 0 : index
    %c0_8 = arith.constant 0 : index
    %4 = vector.load %arg7[%c0_7, %c0_8] : memref<32x16xf32, #tpu.memory_space<vmem>>, vector<32x16xf32>
    %c0_9 = arith.constant 0 : index
    %c0_10 = arith.constant 0 : index
    %5 = vector.load %arg8[%c0_9, %c0_10] : memref<32x16xf32, #tpu.memory_space<vmem>>, vector<32x16xf32>
    %c0_11 = arith.constant 0 : index
    %c0_12 = arith.constant 0 : index
    %6 = vector.load %arg9[%c0_11, %c0_12] : memref<1x16xf32, #tpu.memory_space<vmem>>, vector<1x16xf32>
    %7 = tpu.iota {dimensions = array<i32: 0>} : vector<8x8xi32>
    %8 = tpu.iota {dimensions = array<i32: 1>} : vector<8x8xi32>
    %9 = arith.cmpi eq, %7, %8 : vector<8x8xi32>
    %c0_13 = arith.constant 0 : index
    %c0_14 = arith.constant 0 : index
    %c0_15 = arith.constant 0 : index
    %10 = vector.load %arg1[%c0_13, %c0_14, %c0_15] : memref<2x8x32xf32, #tpu.memory_space<vmem>>, vector<1x8x32xf32>
    %11 = vector.shape_cast %10 : vector<1x8x32xf32> to vector<8x32xf32>
    %c0_16 = arith.constant 0 : index
    %c0_17 = arith.constant 0 : index
    %c0_18 = arith.constant 0 : index
    %12 = vector.load %arg2[%c0_16, %c0_17, %c0_18] : memref<2x1x8xf32, #tpu.memory_space<vmem>>, vector<1x1x8xf32>
    %13 = vector.shape_cast %12 : vector<1x1x8xf32> to vector<1x8xf32>
    %cst = arith.constant dense<0.000000e+00> : vector<8x32xf32>
    %14 = tpu.matmul %11, %0, %cst {dimension_numbers = #tpu.dot_dimension_numbers<[1], [0], [0], [1], [0, 0, 1, 1], [], []>} : vector<8x32xf32>, vector<32x32xf32>, vector<8x32xf32> -> vector<8x32xf32>
    %15 = vector.broadcast %1 : vector<1x32xf32> to vector<8x32xf32>
    %16 = arith.addf %14, %15 : vector<8x32xf32>
    %17 = math.tanh %16 : vector<8x32xf32>
    %cst_19 = arith.constant dense<0.000000e+00> : vector<8x32xf32>
    %18 = tpu.matmul %11, %2, %cst_19 {dimension_numbers = #tpu.dot_dimension_numbers<[1], [0], [0], [1], [0, 0, 1, 1], [], []>} : vector<8x32xf32>, vector<32x32xf32>, vector<8x32xf32> -> vector<8x32xf32>
    %19 = vector.broadcast %3 : vector<1x32xf32> to vector<8x32xf32>
    %20 = arith.addf %18, %19 : vector<8x32xf32>
    %21 = math.tanh %20 : vector<8x32xf32>
    %cst_20 = arith.constant dense<0.000000e+00> : vector<8x8xf32>
    %22 = tpu.matmul %17, %21, %cst_20 {dimension_numbers = #tpu.dot_dimension_numbers<[1], [1], [0], [0], [0, 0, 1, 0], [], []>} : vector<8x32xf32>, vector<8x32xf32>, vector<8x8xf32> -> vector<8x8xf32>
    %cst_21 = arith.constant 0.000000e+00 : f32
    %23 = vector.broadcast %cst_21 : f32 to vector<1x8xf32>
    %24 = arith.cmpf ogt, %13, %23 : vector<1x8xf32>
    %cst_22 = arith.constant -1.000000e+30 : f32
    %25 = vector.shape_cast %24 : vector<1x8xi1> to vector<1x8xi1>
    %26 = vector.broadcast %25 : vector<1x8xi1> to vector<8x8xi1>
    %27 = vector.broadcast %cst_22 : f32 to vector<8x8xf32>
    %28 = arith.select %26, %22, %27 : vector<8x8xi1>, vector<8x8xf32>
    %cst_23 = arith.constant dense<0xFF800000> : vector<8xf32>
    %29 = vector.multi_reduction <maximumf>, %28, %cst_23 [1] : vector<8x8xf32> to vector<8xf32>
    %30 = vector.shape_cast %29 : vector<8xf32> to vector<8x1xf32>
    %31 = vector.broadcast %30 : vector<8x1xf32> to vector<8x8xf32>
    %32 = arith.subf %28, %31 : vector<8x8xf32>
    %33 = math.exp %32 : vector<8x8xf32>
    %cst_24 = arith.constant dense<0.000000e+00> : vector<8xf32>
    %34 = vector.multi_reduction <add>, %33, %cst_24 [1] : vector<8x8xf32> to vector<8xf32>
    %35 = vector.shape_cast %34 : vector<8xf32> to vector<8x1xf32>
    %36 = tpu.reciprocal %35 {approx = true} : vector<8x1xf32> -> vector<8x1xf32>
    %37 = vector.broadcast %36 : vector<8x1xf32> to vector<8x8xf32>
    %38 = arith.mulf %33, %37 : vector<8x8xf32>
    %cst_25 = arith.constant 0.000000e+00 : f32
    %39 = vector.broadcast %cst_25 : f32 to vector<8x8xf32>
    %40 = arith.select %9, %39, %38 : vector<8x8xi1>, vector<8x8xf32>
    %cst_26 = arith.constant dense<0.000000e+00> : vector<8x32xf32>
    %41 = tpu.matmul %40, %11, %cst_26 {dimension_numbers = #tpu.dot_dimension_numbers<[1], [0], [0], [1], [0, 0, 1, 1], [], []>} : vector<8x8xf32>, vector<8x32xf32>, vector<8x32xf32> -> vector<8x32xf32>
    %cst_27 = arith.constant dense<0.000000e+00> : vector<8x16xf32>
    %42 = tpu.matmul %41, %4, %cst_27 {dimension_numbers = #tpu.dot_dimension_numbers<[1], [0], [0], [1], [0, 0, 1, 1], [], []>} : vector<8x32xf32>, vector<32x16xf32>, vector<8x16xf32> -> vector<8x16xf32>
    %cst_28 = arith.constant dense<0.000000e+00> : vector<8x16xf32>
    %43 = tpu.matmul %11, %5, %cst_28 {dimension_numbers = #tpu.dot_dimension_numbers<[1], [0], [0], [1], [0, 0, 1, 1], [], []>} : vector<8x32xf32>, vector<32x16xf32>, vector<8x16xf32> -> vector<8x16xf32>
    %44 = arith.addf %42, %43 : vector<8x16xf32>
    %45 = vector.broadcast %6 : vector<1x16xf32> to vector<8x16xf32>
    %46 = arith.addf %44, %45 : vector<8x16xf32>
    %c0_29 = arith.constant 0 : index
    %c0_30 = arith.constant 0 : index
    %c0_31 = arith.constant 0 : index
    %47 = vector.load %arg10[%c0_29, %c0_30, %c0_31] : memref<2x8x16xf32, #tpu.memory_space<vmem>>, vector<1x8x16xf32>
    %48 = vector.shape_cast %47 : vector<1x8x16xf32> to vector<8x16xf32>
    %49 = vector.shape_cast %46 : vector<8x16xf32> to vector<1x8x16xf32>
    tpu.vector_store %arg10[%c0_29, %c0_30, %c0_31], %49 {strides = array<i32>} : memref<2x8x16xf32, #tpu.memory_space<vmem>>, vector<1x8x16xf32>,
    %c1 = arith.constant 1 : index
    %c0_32 = arith.constant 0 : index
    %c0_33 = arith.constant 0 : index
    %50 = vector.load %arg1[%c1, %c0_32, %c0_33] : memref<2x8x32xf32, #tpu.memory_space<vmem>>, vector<1x8x32xf32>
    %51 = vector.shape_cast %50 : vector<1x8x32xf32> to vector<8x32xf32>
    %c1_34 = arith.constant 1 : index
    %c0_35 = arith.constant 0 : index
    %c0_36 = arith.constant 0 : index
    %52 = vector.load %arg2[%c1_34, %c0_35, %c0_36] : memref<2x1x8xf32, #tpu.memory_space<vmem>>, vector<1x1x8xf32>
    %53 = vector.shape_cast %52 : vector<1x1x8xf32> to vector<1x8xf32>
    %cst_37 = arith.constant dense<0.000000e+00> : vector<8x32xf32>
    %54 = tpu.matmul %51, %0, %cst_37 {dimension_numbers = #tpu.dot_dimension_numbers<[1], [0], [0], [1], [0, 0, 1, 1], [], []>} : vector<8x32xf32>, vector<32x32xf32>, vector<8x32xf32> -> vector<8x32xf32>
    %55 = vector.broadcast %1 : vector<1x32xf32> to vector<8x32xf32>
    %56 = arith.addf %54, %55 : vector<8x32xf32>
    %57 = math.tanh %56 : vector<8x32xf32>
    %cst_38 = arith.constant dense<0.000000e+00> : vector<8x32xf32>
    %58 = tpu.matmul %51, %2, %cst_38 {dimension_numbers = #tpu.dot_dimension_numbers<[1], [0], [0], [1], [0, 0, 1, 1], [], []>} : vector<8x32xf32>, vector<32x32xf32>, vector<8x32xf32> -> vector<8x32xf32>
    %59 = vector.broadcast %3 : vector<1x32xf32> to vector<8x32xf32>
    %60 = arith.addf %58, %59 : vector<8x32xf32>
    %61 = math.tanh %60 : vector<8x32xf32>
    %cst_39 = arith.constant dense<0.000000e+00> : vector<8x8xf32>
    %62 = tpu.matmul %57, %61, %cst_39 {dimension_numbers = #tpu.dot_dimension_numbers<[1], [1], [0], [0], [0, 0, 1, 0], [], []>} : vector<8x32xf32>, vector<8x32xf32>, vector<8x8xf32> -> vector<8x8xf32>
    %cst_40 = arith.constant 0.000000e+00 : f32
    %63 = vector.broadcast %cst_40 : f32 to vector<1x8xf32>
    %64 = arith.cmpf ogt, %53, %63 : vector<1x8xf32>
    %cst_41 = arith.constant -1.000000e+30 : f32
    %65 = vector.shape_cast %64 : vector<1x8xi1> to vector<1x8xi1>
    %66 = vector.broadcast %65 : vector<1x8xi1> to vector<8x8xi1>
    %67 = vector.broadcast %cst_41 : f32 to vector<8x8xf32>
    %68 = arith.select %66, %62, %67 : vector<8x8xi1>, vector<8x8xf32>
    %cst_42 = arith.constant dense<0xFF800000> : vector<8xf32>
    %69 = vector.multi_reduction <maximumf>, %68, %cst_42 [1] : vector<8x8xf32> to vector<8xf32>
    %70 = vector.shape_cast %69 : vector<8xf32> to vector<8x1xf32>
    %71 = vector.broadcast %70 : vector<8x1xf32> to vector<8x8xf32>
    %72 = arith.subf %68, %71 : vector<8x8xf32>
    %73 = math.exp %72 : vector<8x8xf32>
    %cst_43 = arith.constant dense<0.000000e+00> : vector<8xf32>
    %74 = vector.multi_reduction <add>, %73, %cst_43 [1] : vector<8x8xf32> to vector<8xf32>
    %75 = vector.shape_cast %74 : vector<8xf32> to vector<8x1xf32>
    %76 = tpu.reciprocal %75 {approx = true} : vector<8x1xf32> -> vector<8x1xf32>
    %77 = vector.broadcast %76 : vector<8x1xf32> to vector<8x8xf32>
    %78 = arith.mulf %73, %77 : vector<8x8xf32>
    %cst_44 = arith.constant 0.000000e+00 : f32
    %79 = vector.broadcast %cst_44 : f32 to vector<8x8xf32>
    %80 = arith.select %9, %79, %78 : vector<8x8xi1>, vector<8x8xf32>
    %cst_45 = arith.constant dense<0.000000e+00> : vector<8x32xf32>
    %81 = tpu.matmul %80, %51, %cst_45 {dimension_numbers = #tpu.dot_dimension_numbers<[1], [0], [0], [1], [0, 0, 1, 1], [], []>} : vector<8x8xf32>, vector<8x32xf32>, vector<8x32xf32> -> vector<8x32xf32>
    %cst_46 = arith.constant dense<0.000000e+00> : vector<8x16xf32>
    %82 = tpu.matmul %81, %4, %cst_46 {dimension_numbers = #tpu.dot_dimension_numbers<[1], [0], [0], [1], [0, 0, 1, 1], [], []>} : vector<8x32xf32>, vector<32x16xf32>, vector<8x16xf32> -> vector<8x16xf32>
    %cst_47 = arith.constant dense<0.000000e+00> : vector<8x16xf32>
    %83 = tpu.matmul %51, %5, %cst_47 {dimension_numbers = #tpu.dot_dimension_numbers<[1], [0], [0], [1], [0, 0, 1, 1], [], []>} : vector<8x32xf32>, vector<32x16xf32>, vector<8x16xf32> -> vector<8x16xf32>
    %84 = arith.addf %82, %83 : vector<8x16xf32>
    %85 = vector.broadcast %6 : vector<1x16xf32> to vector<8x16xf32>
    %86 = arith.addf %84, %85 : vector<8x16xf32>
    %c1_48 = arith.constant 1 : index
    %c0_49 = arith.constant 0 : index
    %c0_50 = arith.constant 0 : index
    %87 = vector.load %arg10[%c1_48, %c0_49, %c0_50] : memref<2x8x16xf32, #tpu.memory_space<vmem>>, vector<1x8x16xf32>
    %88 = vector.shape_cast %87 : vector<1x8x16xf32> to vector<8x16xf32>
    %89 = vector.shape_cast %86 : vector<8x16xf32> to vector<1x8x16xf32>
    tpu.vector_store %arg10[%c1_48, %c0_49, %c0_50], %89 {strides = array<i32>} : memref<2x8x16xf32, #tpu.memory_space<vmem>>, vector<1x8x16xf32>,
    return
  }
  func.func @transform_0(%arg0: i32) -> (i32, i32, i32) {
    %c0_i32 = arith.constant 0 : i32
    %c0_i32_0 = arith.constant 0 : i32
    %c0_i32_1 = arith.constant 0 : i32
    %c0_i32_2 = arith.constant 0 : i32
    return %c0_i32, %c0_i32_0, %c0_i32_1 : i32, i32, i32
  }
  func.func @transform_1(%arg0: i32) -> (i32, i32, i32) {
    %c0_i32 = arith.constant 0 : i32
    %c0_i32_0 = arith.constant 0 : i32
    %c0_i32_1 = arith.constant 0 : i32
    %c0_i32_2 = arith.constant 0 : i32
    return %c0_i32, %c0_i32_0, %c0_i32_1 : i32, i32, i32
  }
  func.func @transform_2(%arg0: i32) -> (i32, i32) {
    %c0_i32 = arith.constant 0 : i32
    %c0_i32_0 = arith.constant 0 : i32
    %c0_i32_1 = arith.constant 0 : i32
    return %c0_i32, %c0_i32_0 : i32, i32
  }
  func.func @transform_3(%arg0: i32) -> (i32, i32) {
    %c0_i32 = arith.constant 0 : i32
    %c0_i32_0 = arith.constant 0 : i32
    %c0_i32_1 = arith.constant 0 : i32
    return %c0_i32, %c0_i32_0 : i32, i32
  }
  func.func @transform_4(%arg0: i32) -> (i32, i32) {
    %c0_i32 = arith.constant 0 : i32
    %c0_i32_0 = arith.constant 0 : i32
    %c0_i32_1 = arith.constant 0 : i32
    return %c0_i32, %c0_i32_0 : i32, i32
  }
  func.func @transform_5(%arg0: i32) -> (i32, i32) {
    %c0_i32 = arith.constant 0 : i32
    %c0_i32_0 = arith.constant 0 : i32
    %c0_i32_1 = arith.constant 0 : i32
    return %c0_i32, %c0_i32_0 : i32, i32
  }
  func.func @transform_6(%arg0: i32) -> (i32, i32) {
    %c0_i32 = arith.constant 0 : i32
    %c0_i32_0 = arith.constant 0 : i32
    %c0_i32_1 = arith.constant 0 : i32
    return %c0_i32, %c0_i32_0 : i32, i32
  }
  func.func @transform_7(%arg0: i32) -> (i32, i32) {
    %c0_i32 = arith.constant 0 : i32
    %c0_i32_0 = arith.constant 0 : i32
    %c0_i32_1 = arith.constant 0 : i32
    return %c0_i32, %c0_i32_0 : i32, i32
  }
  func.func @transform_8(%arg0: i32) -> (i32, i32) {
    %c0_i32 = arith.constant 0 : i32
    %c0_i32_0 = arith.constant 0 : i32
    %c0_i32_1 = arith.constant 0 : i32
    return %c0_i32, %c0_i32_0 : i32, i32
  }
  func.func @transform_9(%arg0: i32) -> (i32, i32, i32) {
    %c0_i32 = arith.constant 0 : i32
    %c0_i32_0 = arith.constant 0 : i32
    %c0_i32_1 = arith.constant 0 : i32
    %c0_i32_2 = arith.constant 0 : i32
    return %c0_i32, %c0_i32_0, %c0_i32_1 : i32, i32, i32
  }
}

</mosaic_0001>

<llo_original>
// kernel: custom-call.25
$region0: #{custom-call.25}
  %s0 = inlined_call_operand.vmem [shape: s32[7,2,16], index: 0, kind: output, shape index: {}]

// kernel: custom-call.24
$region0: #{custom-call.24}
  %s0 = inlined_call_operand.vmem [shape: f32[7,2,16], index: 0, kind: output, shape index: {}]

// kernel: bilstm_crf_forward.5
$region0: #{bilstm_crf_forward.5}
  #allocation0 [shape = 'u32[]', space=smem, size = 0x4, offset = 0x4, fixed_abs, tag = 'smem constant byte address 0x4 - core index']
  #allocation1 [shape = 'u32[144,128]{1,0:T(1,128)}', space=vmem, size = 0x12000, scoped, tag = 'internal scratch']
  %s0 = inlined_call_operand.vmem [shape: f32[2,8,32], index: 0, kind: input, shape index: {}]
  %s1 = inlined_call_operand.vmem [shape: f32[2,1,8], index: 1, kind: input, shape index: {}]
  %s2 = inlined_call_operand.vmem [shape: f32[32,32], index: 2, kind: input, shape index: {}]
  %s3 = inlined_call_operand.vmem [shape: f32[1,32], index: 3, kind: input, shape index: {}]
  %s4 = inlined_call_operand.vmem [shape: f32[32,32], index: 4, kind: input, shape index: {}]
  %s5 = inlined_call_operand.vmem [shape: f32[1,32], index: 5, kind: input, shape index: {}]
  %s6 = inlined_call_operand.vmem [shape: f32[32,16], index: 6, kind: input, shape index: {}]
  %s7 = inlined_call_operand.vmem [shape: f32[32,16], index: 7, kind: input, shape index: {}]
  %s8 = inlined_call_operand.vmem [shape: f32[1,16], index: 8, kind: input, shape index: {}]
  %s9 = inlined_call_operand.vmem [shape: f32[2,8,16], index: 9, kind: output, shape index: {}]
  %s10 = sld [smem:[#allocation0]]
  $region46: #{bilstm_crf_forward.5} parent=0
    _
  %s12 = ssub.s32 1, %s10
  %s13 = scalar_select 0, %s12, %s10
  // Predicated region
  $region2: #{bilstm_crf_forward.5} parent=0 // pred_check
    _
  $region3: #{bilstm_crf_forward.5} parent=0 // pred_check_branch
    %15 = sbr.rel (0) target = $region5
  $region4: #{bilstm_crf_forward.5} parent=0 // pred_region
    _
  $region5: #{bilstm_crf_forward.5} parent=0 // pred_fallthru
    _
  // Predicated region
  $region6: #{bilstm_crf_forward.5} parent=0 // pred_check
    _
  $region7: #{bilstm_crf_forward.5} parent=0 // pred_check_branch
    %17 = sbr.rel (0) target = $region9
  $region8: #{bilstm_crf_forward.5} parent=0 // pred_region
    _
  $region9: #{bilstm_crf_forward.5} parent=0 // pred_fallthru
    _
  // Predicated region
  $region10: #{bilstm_crf_forward.5} parent=0 // pred_check
    _
  $region11: #{bilstm_crf_forward.5} parent=0 // pred_check_branch
    %19 = sbr.rel (0) target = $region13
  $region12: #{bilstm_crf_forward.5} parent=0 // pred_region
    _
  $region13: #{bilstm_crf_forward.5} parent=0 // pred_fallthru
    _
  // Predicated region
  $region14: #{bilstm_crf_forward.5} parent=0 // pred_check
    _
  $region15: #{bilstm_crf_forward.5} parent=0 // pred_check_branch
    %21 = sbr.rel (0) target = $region17
  $region16: #{bilstm_crf_forward.5} parent=0 // pred_region
    _
  $region17: #{bilstm_crf_forward.5} parent=0 // pred_fallthru
    _
  // Predicated region
  $region18: #{bilstm_crf_forward.5} parent=0 // pred_check
    _
  $region19: #{bilstm_crf_forward.5} parent=0 // pred_check_branch
    %23 = sbr.rel (0) target = $region21
  $region20: #{bilstm_crf_forward.5} parent=0 // pred_region
    _
  $region21: #{bilstm_crf_forward.5} parent=0 // pred_fallthru
    _
  // Predicated region
  $region22: #{bilstm_crf_forward.5} parent=0 // pred_check
    _
  $region23: #{bilstm_crf_forward.5} parent=0 // pred_check_branch
    %25 = sbr.rel (0) target = $region25
  $region24: #{bilstm_crf_forward.5} parent=0 // pred_region
    _
  $region25: #{bilstm_crf_forward.5} parent=0 // pred_fallthru
    _
  // Predicated region
  $region26: #{bilstm_crf_forward.5} parent=0 // pred_check
    _
  $region27: #{bilstm_crf_forward.5} parent=0 // pred_check_branch
    %27 = sbr.rel (0) target = $region29
  $region28: #{bilstm_crf_forward.5} parent=0 // pred_region
    _
  $region29: #{bilstm_crf_forward.5} parent=0 // pred_fallthru
    _
  // Predicated region
  $region30: #{bilstm_crf_forward.5} parent=0 // pred_check
    _
  $region31: #{bilstm_crf_forward.5} parent=0 // pred_check_branch
    %29 = sbr.rel (0) target = $region33
  $region32: #{bilstm_crf_forward.5} parent=0 // pred_region
    _
  $region33: #{bilstm_crf_forward.5} parent=0 // pred_fallthru
    _
  // Predicated region
  $region34: #{bilstm_crf_forward.5} parent=0 // pred_check
    _
  $region35: #{bilstm_crf_forward.5} parent=0 // pred_check_branch
    %31 = sbr.rel (0) target = $region37
  $region36: #{bilstm_crf_forward.5} parent=0 // pred_region
    _
  $region37: #{bilstm_crf_forward.5} parent=0 // pred_fallthru
    _
  %v32 = vld [vmem:[%s2] sm:$0xff]
  %v33 = vld [vmem:[%s2 + $0x8] sm:$0xff]
  %v34 = vld [vmem:[%s2 + $0x10] sm:$0xff]
  %v35 = vld [vmem:[%s2 + $0x18] sm:$0xff]
  %v36 = vld [vmem:[%s3] sm:$0x1]
  %v37 = vld [vmem:[%s4] sm:$0xff]
  %v38 = vld [vmem:[%s4 + $0x8] sm:$0xff]
  %v39 = vld [vmem:[%s4 + $0x10] sm:$0xff]
  %v40 = vld [vmem:[%s4 + $0x18] sm:$0xff]
  %v41 = vld [vmem:[%s5] sm:$0x1]
  %v42 = vld [vmem:[%s6] sm:$0xff]
  %v43 = vld [vmem:[%s6 + $0x8] sm:$0xff]
  %v44 = vld [vmem:[%s6 + $0x10] sm:$0xff]
  %v45 = vld [vmem:[%s6 + $0x18] sm:$0xff]
  %v46 = vld [vmem:[%s7] sm:$0xff]
  %v47 = vld [vmem:[%s7 + $0x8] sm:$0xff]
  %v48 = vld [vmem:[%s7 + $0x10] sm:$0xff]
  %v49 = vld [vmem:[%s7 + $0x18] sm:$0xff]
  %v50 = vld [vmem:[%s8] sm:$0x1]
  %v51 = vlaneseq
  %v52 = vshrl.u32 %v51, 7
  %v53 = vlaneseq
  %v54 = vand.u32 %v53, 127
  %vm55 = vcmp.eq.s32.totalorder %v52, %v54
  %v56 = vld [vmem:[%s0] sm:$0xff]
  %v57 = vld [vmem:[%s1] sm:$0x1]
  %v59 = vlaneseq
  %v60 = vshrl.u32 %v59, 7
  %v61 = vsub.s32 0, %v60
  %v62 = vrot.slane %v36, %v61
  %vm64 = vcmask 261120
  %v66 = vsel %vm64, %v56, 0
  %68 = vmatprep.subr.mxu0 0.0
  %69 = vmatpush1.msra.mxu0 0.0
  %70 = vmatprep.subr.mxu0 0.0
  %71 = vmatpush1.msra.mxu0 0.0
  %72 = vmatprep.subr.mxu0 0.0
  %73 = vmatpush1.msra.mxu0 0.0
  %74 = vmatprep.subr.mxu0 0.0
  %75 = vmatpush1.msra.mxu0 0.0
  %76 = vmatprep.subr.mxu0 0.0
  %77 = vmatpush1.msra.mxu0 0.0
  %78 = vmatprep.subr.mxu0 0.0
  %79 = vmatpush1.msra.mxu0 0.0
  %80 = vmatprep.subr.mxu0 0.0
  %81 = vmatpush1.msra.mxu0 0.0
  %82 = vmatprep.subr.mxu0 0.0
  %83 = vmatpush1.msra.mxu0 0.0
  %84 = vmatprep.subr.mxu0 0.0
  %85 = vmatpush1.msra.mxu0 0.0
  %86 = vmatprep.subr.mxu0 0.0
  %87 = vmatpush1.msra.mxu0 0.0
  %88 = vmatprep.subr.mxu0 0.0
  %89 = vmatpush1.msra.mxu0 0.0
  %90 = vmatprep.subr.mxu0 0.0
  %91 = vmatpush1.msra.mxu0 0.0
  %92 = vmatprep.subr.mxu0 0.0
  %93 = vmatpush1.msra.mxu0 %v35
  %94 = vmatprep.subr.mxu0 0.0
  %95 = vmatpush1.msra.mxu0 %v34
  %96 = vmatprep.subr.mxu0 0.0
  %97 = vmatpush1.msra.mxu0 %v33
  %98 = vmatprep.subr.mxu0 0.0
  %99 = vmatpush1.msra.mxu0 %v32
  %100 = vmatprep.subr.mxu0 0.0
  %101 = vmatpush2.msra.mxu0 0.0
  %102 = vmatprep.subr.mxu0 0.0
  %103 = vmatpush2.msra.mxu0 0.0
  %104 = vmatprep.subr.mxu0 0.0
  %105 = vmatpush2.msra.mxu0 0.0
  %106 = vmatprep.subr.mxu0 0.0
  %107 = vmatpush2.msra.mxu0 0.0
  %108 = vmatprep.subr.mxu0 0.0
  %109 = vmatpush2.msra.mxu0 0.0
  %110 = vmatprep.subr.mxu0 0.0
  %111 = vmatpush2.msra.mxu0 0.0
  %112 = vmatprep.subr.mxu0 0.0
  %113 = vmatpush2.msra.mxu0 0.0
  %114 = vmatprep.subr.mxu0 0.0
  %115 = vmatpush2.msra.mxu0 0.0
  %116 = vmatprep.subr.mxu0 0.0
  %117 = vmatpush2.msra.mxu0 0.0
  %118 = vmatprep.subr.mxu0 0.0
  %119 = vmatpush2.msra.mxu0 0.0
  %120 = vmatprep.subr.mxu0 0.0
  %121 = vmatpush2.msra.mxu0 0.0
  %122 = vmatprep.subr.mxu0 0.0
  %123 = vmatpush2.msra.mxu0 0.0
  %124 = vmatprep.subr.mxu0 0.0
  %125 = vmatpush2.msra.mxu0 0.0
  %126 = vmatprep.subr.mxu0 0.0
  %127 = vmatpush2.msra.mxu0 0.0
  %128 = vmatprep.subr.mxu0 0.0
  %129 = vmatpush2.msra.mxu0 0.0
  %130 = vmatprep.subr.mxu0 0.0
  %131 = vmatpush2.msra.mxu0 0.0
  %132 = vmatprep.mubr.f32.mxu0 0.0
  %133 = vmatmul.mubr.f32.gmra.mxu0 %v66
  %v134 = vpop.f32.mrf.mxu0
  %v135 = vadd.f32 %v62, %v134
  %v136 = vpop.f32.mrf.mxu0
  %137 = vdwg.mxu0
  %v138 = vtanh.pop %v135
  %v140 = vlaneseq
  %v141 = vshrl.u32 %v140, 7
  %v142 = vsub.s32 0, %v141
  %v143 = vrot.slane %v41, %v142
  %145 = vmatprep.subr.mxu0 0.0
  %146 = vmatpush1.msra.mxu0 0.0
  %147 = vmatprep.subr.mxu0 0.0
  %148 = vmatpush1.msra.mxu0 0.0
  %149 = vmatprep.subr.mxu0 0.0
  %150 = vmatpush1.msra.mxu0 0.0
  %151 = vmatprep.subr.mxu0 0.0
  %152 = vmatpush1.msra.mxu0 0.0
  %153 = vmatprep.subr.mxu0 0.0
  %154 = vmatpush1.msra.mxu0 0.0
  %155 = vmatprep.subr.mxu0 0.0
  %156 = vmatpush1.msra.mxu0 0.0
  %157 = vmatprep.subr.mxu0 0.0
  %158 = vmatpush1.msra.mxu0 0.0
  %159 = vmatprep.subr.mxu0 0.0
  %160 = vmatpush1.msra.mxu0 0.0
  %161 = vmatprep.subr.mxu0 0.0
  %162 = vmatpush1.msra.mxu0 0.0
  %163 = vmatprep.subr.mxu0 0.0
  %164 = vmatpush1.msra.mxu0 0.0
  %165 = vmatprep.subr.mxu0 0.0
  %166 = vmatpush1.msra.mxu0 0.0
  %167 = vmatprep.subr.mxu0 0.0
  %168 = vmatpush1.msra.mxu0 0.0
  %169 = vmatprep.subr.mxu0 0.0
  %170 = vmatpush1.msra.mxu0 %v40
  %171 = vmatprep.subr.mxu0 0.0
  %172 = vmatpush1.msra.mxu0 %v39
  %173 = vmatprep.subr.mxu0 0.0
  %174 = vmatpush1.msra.mxu0 %v38
  %175 = vmatprep.subr.mxu0 0.0
  %176 = vmatpush1.msra.mxu0 %v37
  %177 = vmatprep.subr.mxu0 0.0
  %178 = vmatpush2.msra.mxu0 0.0
  %179 = vmatprep.subr.mxu0 0.0
  %180 = vmatpush2.msra.mxu0 0.0
  %181 = vmatprep.subr.mxu0 0.0
  %182 = vmatpush2.msra.mxu0 0.0
  %183 = vmatprep.subr.mxu0 0.0
  %184 = vmatpush2.msra.mxu0 0.0
  %185 = vmatprep.subr.mxu0 0.0
  %186 = vmatpush2.msra.mxu0 0.0
  %187 = vmatprep.subr.mxu0 0.0
  %188 = vmatpush2.msra.mxu0 0.0
  %189 = vmatprep.subr.mxu0 0.0
  %190 = vmatpush2.msra.mxu0 0.0
  %191 = vmatprep.subr.mxu0 0.0
  %192 = vmatpush2.msra.mxu0 0.0
  %193 = vmatprep.subr.mxu0 0.0
  %194 = vmatpush2.msra.mxu0 0.0
  %195 = vmatprep.subr.mxu0 0.0
  %196 = vmatpush2.msra.mxu0 0.0
  %197 = vmatprep.subr.mxu0 0.0
  %198 = vmatpush2.msra.mxu0 0.0
  %199 = vmatprep.subr.mxu0 0.0
  %200 = vmatpush2.msra.mxu0 0.0
  %201 = vmatprep.subr.mxu0 0.0
  %202 = vmatpush2.msra.mxu0 0.0
  %203 = vmatprep.subr.mxu0 0.0
  %204 = vmatpush2.msra.mxu0 0.0
  %205 = vmatprep.subr.mxu0 0.0
  %206 = vmatpush2.msra.mxu0 0.0
  %207 = vmatprep.subr.mxu0 0.0
  %208 = vmatpush2.msra.mxu0 0.0
  %209 = vmatprep.mubr.f32.mxu0 0.0
  %210 = vmatmul.mubr.f32.gmra.mxu0 %v66
  %v211 = vpop.f32.mrf.mxu0
  %v212 = vadd.f32 %v143, %v211
  %v213 = vpop.f32.mrf.mxu0
  %214 = vdwg.mxu0
  %v215 = vtanh.pop %v212
  %v217 = vsel %vm64, %v138, 0
  %v220 = vsel %vm64, %v215, 0
  %222 = vmatprep.subr.mxu0 0.0
  %223 = vmatpush1.xpose.msra.mxu0 0.0
  %224 = vmatprep.subr.mxu0 0.0
  %225 = vmatpush1.xpose.msra.mxu0 0.0
  %226 = vmatprep.subr.mxu0 0.0
  %227 = vmatpush1.xpose.msra.mxu0 0.0
  %228 = vmatprep.subr.mxu0 0.0
  %229 = vmatpush1.xpose.msra.mxu0 0.0
  %230 = vmatprep.subr.mxu0 0.0
  %231 = vmatpush1.xpose.msra.mxu0 0.0
  %232 = vmatprep.subr.mxu0 0.0
  %233 = vmatpush1.xpose.msra.mxu0 0.0
  %234 = vmatprep.subr.mxu0 0.0
  %235 = vmatpush1.xpose.msra.mxu0 0.0
  %236 = vmatprep.subr.mxu0 0.0
  %237 = vmatpush1.xpose.msra.mxu0 0.0
  %238 = vmatprep.subr.mxu0 0.0
  %239 = vmatpush1.xpose.msra.mxu0 0.0
  %240 = vmatprep.subr.mxu0 0.0
  %241 = vmatpush1.xpose.msra.mxu0 0.0
  %242 = vmatprep.subr.mxu0 0.0
  %243 = vmatpush1.xpose.msra.mxu0 0.0
  %244 = vmatprep.subr.mxu0 0.0
  %245 = vmatpush1.xpose.msra.mxu0 0.0
  %246 = vmatprep.subr.mxu0 0.0
  %247 = vmatpush1.xpose.msra.mxu0 0.0
  %248 = vmatprep.subr.mxu0 0.0
  %249 = vmatpush1.xpose.msra.mxu0 0.0
  %250 = vmatprep.subr.mxu0 0.0
  %251 = vmatpush1.xpose.msra.mxu0 0.0
  %252 = vmatprep.subr.mxu0 0.0
  %253 = vmatpush1.xpose.msra.mxu0 %v220
  %254 = vmatprep.subr.mxu0 0.0
  %255 = vmatpush2.xpose.msra.mxu0 0.0
  %256 = vmatprep.subr.mxu0 0.0
  %257 = vmatpush2.xpose.msra.mxu0 0.0
  %258 = vmatprep.subr.mxu0 0.0
  %259 = vmatpush2.xpose.msra.mxu0 0.0
  %260 = vmatprep.subr.mxu0 0.0
  %261 = vmatpush2.xpose.msra.mxu0 0.0
  %262 = vmatprep.subr.mxu0 0.0
  %263 = vmatpush2.xpose.msra.mxu0 0.0
  %264 = vmatprep.subr.mxu0 0.0
  %265 = vmatpush2.xpose.msra.mxu0 0.0
  %266 = vmatprep.subr.mxu0 0.0
  %267 = vmatpush2.xpose.msra.mxu0 0.0
  %268 = vmatprep.subr.mxu0 0.0
  %269 = vmatpush2.xpose.msra.mxu0 0.0
  %270 = vmatprep.subr.mxu0 0.0
  %271 = vmatpush2.xpose.msra.mxu0 0.0
  %272 = vmatprep.subr.mxu0 0.0
  %273 = vmatpush2.xpose.msra.mxu0 0.0
  %274 = vmatprep.subr.mxu0 0.0
  %275 = vmatpush2.xpose.msra.mxu0 0.0
  %276 = vmatprep.subr.mxu0 0.0
  %277 = vmatpush2.xpose.msra.mxu0 0.0
  %278 = vmatprep.subr.mxu0 0.0
  %279 = vmatpush2.xpose.msra.mxu0 0.0
  %280 = vmatprep.subr.mxu0 0.0
  %281 = vmatpush2.xpose.msra.mxu0 0.0
  %282 = vmatprep.subr.mxu0 0.0
  %283 = vmatpush2.xpose.msra.mxu0 0.0
  %284 = vmatprep.subr.mxu0 0.0
  %285 = vmatpush2.xpose.msra.mxu0 0.0
  %286 = vmatprep.mubr.f32.mxu0 0.0
  %287 = vmatmul.mubr.f32.gmra.mxu0 %v217
  %v288 = vpop.f32.mrf.mxu0
  %v289 = vadd.f32 0.0, %v288
  %v290 = vpop.f32.mrf.mxu0
  %291 = vdwg.mxu0
  %vm292 = vcmp.gt.f32.partialorder %v57, 0.0
  %v293 = vsel %vm292, 1, 0
  %v294 = vlaneseq
  %v295 = vshrl.u32 %v294, 7
  %v296 = vsub.s32 0, %v295
  %v297 = vrot.slane %v293, %v296
  %vm298 = vcmp.eq.s32.totalorder %v297, 1
  %v299 = vsel %vm298, %v289, -1e+30
  %vm300 = vcmask 64512
  %v301 = vsel %vm300, %v299, -inf
  %302 = vmax.xlane.f32.xlu0 %v301
  %v303 = vpop.xlane.xlu0 %302
  %v304 = vsub.f32 %v299, %v303
  %v305 = vmul.f32 %v304, 1.442695
  %v306 = vpow.pop %v305
  %v307 = vsel %vm300, %v306, 0.0
  %308 = vadd.xlane.f32.xlu0 %v307
  %v309 = vpop.xlane.xlu0 %308
  %v310 = vrcp.pop %v309
  %v311 = vmul.f32 %v306, %v310
  %v312 = vsel %vm55, 0.0, %v311
  %v314 = vsel %vm300, %v312, 0
  %316 = vmatprep.subr.mxu0 0.0
  %317 = vmatpush1.msra.mxu0 0.0
  %318 = vmatprep.subr.mxu0 0.0
  %319 = vmatpush1.msra.mxu0 0.0
  %320 = vmatprep.subr.mxu0 0.0
  %321 = vmatpush1.msra.mxu0 0.0
  %322 = vmatprep.subr.mxu0 0.0
  %323 = vmatpush1.msra.mxu0 0.0
  %324 = vmatprep.subr.mxu0 0.0
  %325 = vmatpush1.msra.mxu0 0.0
  %326 = vmatprep.subr.mxu0 0.0
  %327 = vmatpush1.msra.mxu0 0.0
  %328 = vmatprep.subr.mxu0 0.0
  %329 = vmatpush1.msra.mxu0 0.0
  %330 = vmatprep.subr.mxu0 0.0
  %331 = vmatpush1.msra.mxu0 0.0
  %332 = vmatprep.subr.mxu0 0.0
  %333 = vmatpush1.msra.mxu0 0.0
  %334 = vmatprep.subr.mxu0 0.0
  %335 = vmatpush1.msra.mxu0 0.0
  %336 = vmatprep.subr.mxu0 0.0
  %337 = vmatpush1.msra.mxu0 0.0
  %338 = vmatprep.subr.mxu0 0.0
  %339 = vmatpush1.msra.mxu0 0.0
  %340 = vmatprep.subr.mxu0 0.0
  %341 = vmatpush1.msra.mxu0 0.0
  %342 = vmatprep.subr.mxu0 0.0
  %343 = vmatpush1.msra.mxu0 0.0
  %344 = vmatprep.subr.mxu0 0.0
  %345 = vmatpush1.msra.mxu0 0.0
  %346 = vmatprep.subr.mxu0 0.0
  %347 = vmatpush1.msra.mxu0 %v56
  %348 = vmatprep.subr.mxu0 0.0
  %349 = vmatpush2.msra.mxu0 0.0
  %350 = vmatprep.subr.mxu0 0.0
  %351 = vmatpush2.msra.mxu0 0.0
  %352 = vmatprep.subr.mxu0 0.0
  %353 = vmatpush2.msra.mxu0 0.0
  %354 = vmatprep.subr.mxu0 0.0
  %355 = vmatpush2.msra.mxu0 0.0
  %356 = vmatprep.subr.mxu0 0.0
  %357 = vmatpush2.msra.mxu0 0.0
  %358 = vmatprep.subr.mxu0 0.0
  %359 = vmatpush2.msra.mxu0 0.0
  %360 = vmatprep.subr.mxu0 0.0
  %361 = vmatpush2.msra.mxu0 0.0
  %362 = vmatprep.subr.mxu0 0.0
  %363 = vmatpush2.msra.mxu0 0.0
  %364 = vmatprep.subr.mxu0 0.0
  %365 = vmatpush2.msra.mxu0 0.0
  %366 = vmatprep.subr.mxu0 0.0
  %367 = vmatpush2.msra.mxu0 0.0
  %368 = vmatprep.subr.mxu0 0.0
  %369 = vmatpush2.msra.mxu0 0.0
  %370 = vmatprep.subr.mxu0 0.0
  %371 = vmatpush2.msra.mxu0 0.0
  %372 = vmatprep.subr.mxu0 0.0
  %373 = vmatpush2.msra.mxu0 0.0
  %374 = vmatprep.subr.mxu0 0.0
  %375 = vmatpush2.msra.mxu0 0.0
  %376 = vmatprep.subr.mxu0 0.0
  %377 = vmatpush2.msra.mxu0 0.0
  %378 = vmatprep.subr.mxu0 0.0
  %379 = vmatpush2.msra.mxu0 0.0
  %380 = vmatprep.mubr.f32.mxu0 0.0
  %381 = vmatmul.mubr.f32.gmra.mxu0 %v314
  %v382 = vpop.f32.mrf.mxu0
  %v383 = vadd.f32 0.0, %v382
  %v384 = vpop.f32.mrf.mxu0
  %385 = vdwg.mxu0
  %386 = vmatprep.subr.mxu0 0.0
  %387 = vmatpush1.msra.mxu0 0.0
  %388 = vmatprep.subr.mxu0 0.0
  %389 = vmatpush1.msra.mxu0 0.0
  %390 = vmatprep.subr.mxu0 0.0
  %391 = vmatpush1.msra.mxu0 0.0
  %392 = vmatprep.subr.mxu0 0.0
  %393 = vmatpush1.msra.mxu0 0.0
  %394 = vmatprep.subr.mxu0 0.0
  %395 = vmatpush1.msra.mxu0 0.0
  %396 = vmatprep.subr.mxu0 0.0
  %397 = vmatpush1.msra.mxu0 0.0
  %398 = vmatprep.subr.mxu0 0.0
  %399 = vmatpush1.msra.mxu0 0.0
  %400 = vmatprep.subr.mxu0 0.0
  %401 = vmatpush1.msra.mxu0 0.0
  %402 = vmatprep.subr.mxu0 0.0
  %403 = vmatpush1.msra.mxu0 0.0
  %404 = vmatprep.subr.mxu0 0.0
  %405 = vmatpush1.msra.mxu0 0.0
  %406 = vmatprep.subr.mxu0 0.0
  %407 = vmatpush1.msra.mxu0 0.0
  %408 = vmatprep.subr.mxu0 0.0
  %409 = vmatpush1.msra.mxu0 0.0
  %410 = vmatprep.subr.mxu0 0.0
  %411 = vmatpush1.msra.mxu0 %v49
  %412 = vmatprep.subr.mxu0 0.0
  %413 = vmatpush1.msra.mxu0 %v48
  %414 = vmatprep.subr.mxu0 0.0
  %415 = vmatpush1.msra.mxu0 %v47
  %416 = vmatprep.subr.mxu0 0.0
  %417 = vmatpush1.msra.mxu0 %v46
  %418 = vmatprep.subr.mxu0 0.0
  %419 = vmatpush2.msra.mxu0 0.0
  %420 = vmatprep.subr.mxu0 0.0
  %421 = vmatpush2.msra.mxu0 0.0
  %422 = vmatprep.subr.mxu0 0.0
  %423 = vmatpush2.msra.mxu0 0.0
  %424 = vmatprep.subr.mxu0 0.0
  %425 = vmatpush2.msra.mxu0 0.0
  %426 = vmatprep.subr.mxu0 0.0
  %427 = vmatpush2.msra.mxu0 0.0
  %428 = vmatprep.subr.mxu0 0.0
  %429 = vmatpush2.msra.mxu0 0.0
  %430 = vmatprep.subr.mxu0 0.0
  %431 = vmatpush2.msra.mxu0 0.0
  %432 = vmatprep.subr.mxu0 0.0
  %433 = vmatpush2.msra.mxu0 0.0
  %434 = vmatprep.subr.mxu0 0.0
  %435 = vmatpush2.msra.mxu0 0.0
  %436 = vmatprep.subr.mxu0 0.0
  %437 = vmatpush2.msra.mxu0 0.0
  %438 = vmatprep.subr.mxu0 0.0
  %439 = vmatpush2.msra.mxu0 0.0
  %440 = vmatprep.subr.mxu0 0.0
  %441 = vmatpush2.msra.mxu0 0.0
  %442 = vmatprep.subr.mxu0 0.0
  %443 = vmatpush2.msra.mxu0 0.0
  %444 = vmatprep.subr.mxu0 0.0
  %445 = vmatpush2.msra.mxu0 0.0
  %446 = vmatprep.subr.mxu0 0.0
  %447 = vmatpush2.msra.mxu0 0.0
  %448 = vmatprep.subr.mxu0 0.0
  %449 = vmatpush2.msra.mxu0 0.0
  %450 = vmatprep.mubr.f32.mxu0 0.0
  %451 = vmatmul.mubr.f32.gmra.mxu0 %v66
  %v452 = vpop.f32.mrf.mxu0
  %v453 = vadd.f32 0.0, %v452
  %v454 = vpop.f32.mrf.mxu0
  %455 = vdwg.mxu0
  %v457 = vsel %vm64, %v383, 0
  %459 = vmatprep.subr.mxu0 0.0
  %460 = vmatpush1.msra.mxu0 0.0
  %461 = vmatprep.subr.mxu0 0.0
  %462 = vmatpush1.msra.mxu0 0.0
  %463 = vmatprep.subr.mxu0 0.0
  %464 = vmatpush1.msra.mxu0 0.0
  %465 = vmatprep.subr.mxu0 0.0
  %466 = vmatpush1.msra.mxu0 0.0
  %467 = vmatprep.subr.mxu0 0.0
  %468 = vmatpush1.msra.mxu0 0.0
  %469 = vmatprep.subr.mxu0 0.0
  %470 = vmatpush1.msra.mxu0 0.0
  %471 = vmatprep.subr.mxu0 0.0
  %472 = vmatpush1.msra.mxu0 0.0
  %473 = vmatprep.subr.mxu0 0.0
  %474 = vmatpush1.msra.mxu0 0.0
  %475 = vmatprep.subr.mxu0 0.0
  %476 = vmatpush1.msra.mxu0 0.0
  %477 = vmatprep.subr.mxu0 0.0
  %478 = vmatpush1.msra.mxu0 0.0
  %479 = vmatprep.subr.mxu0 0.0
  %480 = vmatpush1.msra.mxu0 0.0
  %481 = vmatprep.subr.mxu0 0.0
  %482 = vmatpush1.msra.mxu0 0.0
  %483 = vmatprep.subr.mxu0 0.0
  %484 = vmatpush1.msra.mxu0 %v45
  %485 = vmatprep.subr.mxu0 0.0
  %486 = vmatpush1.msra.mxu0 %v44
  %487 = vmatprep.subr.mxu0 0.0
  %488 = vmatpush1.msra.mxu0 %v43
  %489 = vmatprep.subr.mxu0 0.0
  %490 = vmatpush1.msra.mxu0 %v42
  %491 = vmatprep.subr.mxu0 0.0
  %492 = vmatpush2.msra.mxu0 0.0
  %493 = vmatprep.subr.mxu0 0.0
  %494 = vmatpush2.msra.mxu0 0.0
  %495 = vmatprep.subr.mxu0 0.0
  %496 = vmatpush2.msra.mxu0 0.0
  %497 = vmatprep.subr.mxu0 0.0
  %498 = vmatpush2.msra.mxu0 0.0
  %499 = vmatprep.subr.mxu0 0.0
  %500 = vmatpush2.msra.mxu0 0.0
  %501 = vmatprep.subr.mxu0 0.0
  %502 = vmatpush2.msra.mxu0 0.0
  %503 = vmatprep.subr.mxu0 0.0
  %504 = vmatpush2.msra.mxu0 0.0
  %505 = vmatprep.subr.mxu0 0.0
  %506 = vmatpush2.msra.mxu0 0.0
  %507 = vmatprep.subr.mxu0 0.0
  %508 = vmatpush2.msra.mxu0 0.0
  %509 = vmatprep.subr.mxu0 0.0
  %510 = vmatpush2.msra.mxu0 0.0
  %511 = vmatprep.subr.mxu0 0.0
  %512 = vmatpush2.msra.mxu0 0.0
  %513 = vmatprep.subr.mxu0 0.0
  %514 = vmatpush2.msra.mxu0 0.0
  %515 = vmatprep.subr.mxu0 0.0
  %516 = vmatpush2.msra.mxu0 0.0
  %517 = vmatprep.subr.mxu0 0.0
  %518 = vmatpush2.msra.mxu0 0.0
  %519 = vmatprep.subr.mxu0 0.0
  %520 = vmatpush2.msra.mxu0 0.0
  %521 = vmatprep.subr.mxu0 0.0
  %522 = vmatpush2.msra.mxu0 0.0
  %523 = vmatprep.mubr.f32.mxu0 0.0
  %524 = vmatmul.mubr.f32.gmra.mxu0 %v457
  %v525 = vpop.f32.mrf.mxu0
  %v526 = vadd.f32 %v453, %v525
  %v527 = vpop.f32.mrf.mxu0
  %528 = vdwg.mxu0
  %v530 = vlaneseq
  %v531 = vshrl.u32 %v530, 7
  %v532 = vsub.s32 0, %v531
  %v533 = vrot.slane %v50, %v532
  %v535 = vadd.f32 %v526, %v533
  %vm536 = vcmask 130048
  %537 = vst.msk [vmem:[%s9] sm:$0xff] %vm536, %v535
  %s538 = scalar_lea.vmem %s0, 8
  %v539 = vld [vmem:[%s538] sm:$0xff]
  %s540 = scalar_lea.vmem %s1, 1
  %v541 = vld [vmem:[%s540] sm:$0x1]
  %v543 = vsel %vm64, %v539, 0
  %545 = vmatprep.subr.mxu0 0.0
  %546 = vmatpush1.msra.mxu0 0.0
  %547 = vmatprep.subr.mxu0 0.0
  %548 = vmatpush1.msra.mxu0 0.0
  %549 = vmatprep.subr.mxu0 0.0
  %550 = vmatpush1.msra.mxu0 0.0
  %551 = vmatprep.subr.mxu0 0.0
  %552 = vmatpush1.msra.mxu0 0.0
  %553 = vmatprep.subr.mxu0 0.0
  %554 = vmatpush1.msra.mxu0 0.0
  %555 = vmatprep.subr.mxu0 0.0
  %556 = vmatpush1.msra.mxu0 0.0
  %557 = vmatprep.subr.mxu0 0.0
  %558 = vmatpush1.msra.mxu0 0.0
  %559 = vmatprep.subr.mxu0 0.0
  %560 = vmatpush1.msra.mxu0 0.0
  %561 = vmatprep.subr.mxu0 0.0
  %562 = vmatpush1.msra.mxu0 0.0
  %563 = vmatprep.subr.mxu0 0.0
  %564 = vmatpush1.msra.mxu0 0.0
  %565 = vmatprep.subr.mxu0 0.0
  %566 = vmatpush1.msra.mxu0 0.0
  %567 = vmatprep.subr.mxu0 0.0
  %568 = vmatpush1.msra.mxu0 0.0
  %569 = vmatprep.subr.mxu0 0.0
  %570 = vmatpush1.msra.mxu0 %v35
  %571 = vmatprep.subr.mxu0 0.0
  %572 = vmatpush1.msra.mxu0 %v34
  %573 = vmatprep.subr.mxu0 0.0
  %574 = vmatpush1.msra.mxu0 %v33
  %575 = vmatprep.subr.mxu0 0.0
  %576 = vmatpush1.msra.mxu0 %v32
  %577 = vmatprep.subr.mxu0 0.0
  %578 = vmatpush2.msra.mxu0 0.0
  %579 = vmatprep.subr.mxu0 0.0
  %580 = vmatpush2.msra.mxu0 0.0
  %581 = vmatprep.subr.mxu0 0.0
  %582 = vmatpush2.msra.mxu0 0.0
  %583 = vmatprep.subr.mxu0 0.0
  %584 = vmatpush2.msra.mxu0 0.0
  %585 = vmatprep.subr.mxu0 0.0
  %586 = vmatpush2.msra.mxu0 0.0
  %587 = vmatprep.subr.mxu0 0.0
  %588 = vmatpush2.msra.mxu0 0.0
  %589 = vmatprep.subr.mxu0 0.0
  %590 = vmatpush2.msra.mxu0 0.0
  %591 = vmatprep.subr.mxu0 0.0
  %592 = vmatpush2.msra.mxu0 0.0
  %593 = vmatprep.subr.mxu0 0.0
  %594 = vmatpush2.msra.mxu0 0.0
  %595 = vmatprep.subr.mxu0 0.0
  %596 = vmatpush2.msra.mxu0 0.0
  %597 = vmatprep.subr.mxu0 0.0
  %598 = vmatpush2.msra.mxu0 0.0
  %599 = vmatprep.subr.mxu0 0.0
  %600 = vmatpush2.msra.mxu0 0.0
  %601 = vmatprep.subr.mxu0 0.0
  %602 = vmatpush2.msra.mxu0 0.0
  %603 = vmatprep.subr.mxu0 0.0
  %604 = vmatpush2.msra.mxu0 0.0
  %605 = vmatprep.subr.mxu0 0.0
  %606 = vmatpush2.msra.mxu0 0.0
  %607 = vmatprep.subr.mxu0 0.0
  %608 = vmatpush2.msra.mxu0 0.0
  %609 = vmatprep.mubr.f32.mxu0 0.0
  %610 = vmatmul.mubr.f32.gmra.mxu0 %v543
  %v611 = vpop.f32.mrf.mxu0
  %v612 = vadd.f32 %v62, %v611
  %v613 = vpop.f32.mrf.mxu0
  %614 = vdwg.mxu0
  %v615 = vtanh.pop %v612
  %616 = vmatprep.subr.mxu0 0.0
  %617 = vmatpush1.msra.mxu0 0.0
  %618 = vmatprep.subr.mxu0 0.0
  %619 = vmatpush1.msra.mxu0 0.0
  %620 = vmatprep.subr.mxu0 0.0
  %621 = vmatpush1.msra.mxu0 0.0
  %622 = vmatprep.subr.mxu0 0.0
  %623 = vmatpush1.msra.mxu0 0.0
  %624 = vmatprep.subr.mxu0 0.0
  %625 = vmatpush1.msra.mxu0 0.0
  %626 = vmatprep.subr.mxu0 0.0
  %627 = vmatpush1.msra.mxu0 0.0
  %628 = vmatprep.subr.mxu0 0.0
  %629 = vmatpush1.msra.mxu0 0.0
  %630 = vmatprep.subr.mxu0 0.0
  %631 = vmatpush1.msra.mxu0 0.0
  %632 = vmatprep.subr.mxu0 0.0
  %633 = vmatpush1.msra.mxu0 0.0
  %634 = vmatprep.subr.mxu0 0.0
  %635 = vmatpush1.msra.mxu0 0.0
  %636 = vmatprep.subr.mxu0 0.0
  %637 = vmatpush1.msra.mxu0 0.0
  %638 = vmatprep.subr.mxu0 0.0
  %639 = vmatpush1.msra.mxu0 0.0
  %640 = vmatprep.subr.mxu0 0.0
  %641 = vmatpush1.msra.mxu0 %v40
  %642 = vmatprep.subr.mxu0 0.0
  %643 = vmatpush1.msra.mxu0 %v39
  %644 = vmatprep.subr.mxu0 0.0
  %645 = vmatpush1.msra.mxu0 %v38
  %646 = vmatprep.subr.mxu0 0.0
  %647 = vmatpush1.msra.mxu0 %v37
  %648 = vmatprep.subr.mxu0 0.0
  %649 = vmatpush2.msra.mxu0 0.0
  %650 = vmatprep.subr.mxu0 0.0
  %651 = vmatpush2.msra.mxu0 0.0
  %652 = vmatprep.subr.mxu0 0.0
  %653 = vmatpush2.msra.mxu0 0.0
  %654 = vmatprep.subr.mxu0 0.0
  %655 = vmatpush2.msra.mxu0 0.0
  %656 = vmatprep.subr.mxu0 0.0
  %657 = vmatpush2.msra.mxu0 0.0
  %658 = vmatprep.subr.mxu0 0.0
  %659 = vmatpush2.msra.mxu0 0.0
  %660 = vmatprep.subr.mxu0 0.0
  %661 = vmatpush2.msra.mxu0 0.0
  %662 = vmatprep.subr.mxu0 0.0
  %663 = vmatpush2.msra.mxu0 0.0
  %664 = vmatprep.subr.mxu0 0.0
  %665 = vmatpush2.msra.mxu0 0.0
  %666 = vmatprep.subr.mxu0 0.0
  %667 = vmatpush2.msra.mxu0 0.0
  %668 = vmatprep.subr.mxu0 0.0
  %669 = vmatpush2.msra.mxu0 0.0
  %670 = vmatprep.subr.mxu0 0.0
  %671 = vmatpush2.msra.mxu0 0.0
  %672 = vmatprep.subr.mxu0 0.0
  %673 = vmatpush2.msra.mxu0 0.0
  %674 = vmatprep.subr.mxu0 0.0
  %675 = vmatpush2.msra.mxu0 0.0
  %676 = vmatprep.subr.mxu0 0.0
  %677 = vmatpush2.msra.mxu0 0.0
  %678 = vmatprep.subr.mxu0 0.0
  %679 = vmatpush2.msra.mxu0 0.0
  %680 = vmatprep.mubr.f32.mxu0 0.0
  %681 = vmatmul.mubr.f32.gmra.mxu0 %v543
  %v682 = vpop.f32.mrf.mxu0
  %v683 = vadd.f32 %v143, %v682
  %v684 = vpop.f32.mrf.mxu0
  %685 = vdwg.mxu0
  %v686 = vtanh.pop %v683
  %v688 = vsel %vm64, %v615, 0
  %v691 = vsel %vm64, %v686, 0
  %693 = vmatprep.subr.mxu0 0.0
  %694 = vmatpush1.xpose.msra.mxu0 0.0
  %695 = vmatprep.subr.mxu0 0.0
  %696 = vmatpush1.xpose.msra.mxu0 0.0
  %697 = vmatprep.subr.mxu0 0.0
  %698 = vmatpush1.xpose.msra.mxu0 0.0
  %699 = vmatprep.subr.mxu0 0.0
  %700 = vmatpush1.xpose.msra.mxu0 0.0
  %701 = vmatprep.subr.mxu0 0.0
  %702 = vmatpush1.xpose.msra.mxu0 0.0
  %703 = vmatprep.subr.mxu0 0.0
  %704 = vmatpush1.xpose.msra.mxu0 0.0
  %705 = vmatprep.subr.mxu0 0.0
  %706 = vmatpush1.xpose.msra.mxu0 0.0
  %707 = vmatprep.subr.mxu0 0.0
  %708 = vmatpush1.xpose.msra.mxu0 0.0
  %709 = vmatprep.subr.mxu0 0.0
  %710 = vmatpush1.xpose.msra.mxu0 0.0
  %711 = vmatprep.subr.mxu0 0.0
  %712 = vmatpush1.xpose.msra.mxu0 0.0
  %713 = vmatprep.subr.mxu0 0.0
  %714 = vmatpush1.xpose.msra.mxu0 0.0
  %715 = vmatprep.subr.mxu0 0.0
  %716 = vmatpush1.xpose.msra.mxu0 0.0
  %717 = vmatprep.subr.mxu0 0.0
  %718 = vmatpush1.xpose.msra.mxu0 0.0
  %719 = vmatprep.subr.mxu0 0.0
  %720 = vmatpush1.xpose.msra.mxu0 0.0
  %721 = vmatprep.subr.mxu0 0.0
  %722 = vmatpush1.xpose.msra.mxu0 0.0
  %723 = vmatprep.subr.mxu0 0.0
  %724 = vmatpush1.xpose.msra.mxu0 %v691
  %725 = vmatprep.subr.mxu0 0.0
  %726 = vmatpush2.xpose.msra.mxu0 0.0
  %727 = vmatprep.subr.mxu0 0.0
  %728 = vmatpush2.xpose.msra.mxu0 0.0
  %729 = vmatprep.subr.mxu0 0.0
  %730 = vmatpush2.xpose.msra.mxu0 0.0
  %731 = vmatprep.subr.mxu0 0.0
  %732 = vmatpush2.xpose.msra.mxu0 0.0
  %733 = vmatprep.subr.mxu0 0.0
  %734 = vmatpush2.xpose.msra.mxu0 0.0
  %735 = vmatprep.subr.mxu0 0.0
  %736 = vmatpush2.xpose.msra.mxu0 0.0
  %737 = vmatprep.subr.mxu0 0.0
  %738 = vmatpush2.xpose.msra.mxu0 0.0
  %739 = vmatprep.subr.mxu0 0.0
  %740 = vmatpush2.xpose.msra.mxu0 0.0
  %741 = vmatprep.subr.mxu0 0.0
  %742 = vmatpush2.xpose.msra.mxu0 0.0
  %743 = vmatprep.subr.mxu0 0.0
  %744 = vmatpush2.xpose.msra.mxu0 0.0
  %745 = vmatprep.subr.mxu0 0.0
  %746 = vmatpush2.xpose.msra.mxu0 0.0
  %747 = vmatprep.subr.mxu0 0.0
  %748 = vmatpush2.xpose.msra.mxu0 0.0
  %749 = vmatprep.subr.mxu0 0.0
  %750 = vmatpush2.xpose.msra.mxu0 0.0
  %751 = vmatprep.subr.mxu0 0.0
  %752 = vmatpush2.xpose.msra.mxu0 0.0
  %753 = vmatprep.subr.mxu0 0.0
  %754 = vmatpush2.xpose.msra.mxu0 0.0
  %755 = vmatprep.subr.mxu0 0.0
  %756 = vmatpush2.xpose.msra.mxu0 0.0
  %757 = vmatprep.mubr.f32.mxu0 0.0
  %758 = vmatmul.mubr.f32.gmra.mxu0 %v688
  %v759 = vpop.f32.mrf.mxu0
  %v760 = vadd.f32 0.0, %v759
  %v761 = vpop.f32.mrf.mxu0
  %762 = vdwg.mxu0
  %vm763 = vcmp.gt.f32.partialorder %v541, 0.0
  %v764 = vsel %vm763, 1, 0
  %v765 = vlaneseq
  %v766 = vshrl.u32 %v765, 7
  %v767 = vsub.s32 0, %v766
  %v768 = vrot.slane %v764, %v767
  %vm769 = vcmp.eq.s32.totalorder %v768, 1
  %v770 = vsel %vm769, %v760, -1e+30
  %v771 = vsel %vm300, %v770, -inf
  %772 = vmax.xlane.f32.xlu0 %v771
  %v773 = vpop.xlane.xlu0 %772
  %v774 = vsub.f32 %v770, %v773
  %v775 = vmul.f32 %v774, 1.442695
  %v776 = vpow.pop %v775
  %v777 = vsel %vm300, %v776, 0.0
  %778 = vadd.xlane.f32.xlu0 %v777
  %v779 = vpop.xlane.xlu0 %778
  %v780 = vrcp.pop %v779
  %v781 = vmul.f32 %v776, %v780
  %v782 = vsel %vm55, 0.0, %v781
  %v784 = vsel %vm300, %v782, 0
  %786 = vmatprep.subr.mxu0 0.0
  %787 = vmatpush1.msra.mxu0 0.0
  %788 = vmatprep.subr.mxu0 0.0
  %789 = vmatpush1.msra.mxu0 0.0
  %790 = vmatprep.subr.mxu0 0.0
  %791 = vmatpush1.msra.mxu0 0.0
  %792 = vmatprep.subr.mxu0 0.0
  %793 = vmatpush1.msra.mxu0 0.0
  %794 = vmatprep.subr.mxu0 0.0
  %795 = vmatpush1.msra.mxu0 0.0
  %796 = vmatprep.subr.mxu0 0.0
  %797 = vmatpush1.msra.mxu0 0.0
  %798 = vmatprep.subr.mxu0 0.0
  %799 = vmatpush1.msra.mxu0 0.0
  %800 = vmatprep.subr.mxu0 0.0
  %801 = vmatpush1.msra.mxu0 0.0
  %802 = vmatprep.subr.mxu0 0.0
  %803 = vmatpush1.msra.mxu0 0.0
  %804 = vmatprep.subr.mxu0 0.0
  %805 = vmatpush1.msra.mxu0 0.0
  %806 = vmatprep.subr.mxu0 0.0
  %807 = vmatpush1.msra.mxu0 0.0
  %808 = vmatprep.subr.mxu0 0.0
  %809 = vmatpush1.msra.mxu0 0.0
  %810 = vmatprep.subr.mxu0 0.0
  %811 = vmatpush1.msra.mxu0 0.0
  %812 = vmatprep.subr.mxu0 0.0
  %813 = vmatpush1.msra.mxu0 0.0
  %814 = vmatprep.subr.mxu0 0.0
  %815 = vmatpush1.msra.mxu0 0.0
  %816 = vmatprep.subr.mxu0 0.0
  %817 = vmatpush1.msra.mxu0 %v539
  %818 = vmatprep.subr.mxu0 0.0
  %819 = vmatpush2.msra.mxu0 0.0
  %820 = vmatprep.subr.mxu0 0.0
  %821 = vmatpush2.msra.mxu0 0.0
  %822 = vmatprep.subr.mxu0 0.0
  %823 = vmatpush2.msra.mxu0 0.0
  %824 = vmatprep.subr.mxu0 0.0
  %825 = vmatpush2.msra.mxu0 0.0
  %826 = vmatprep.subr.mxu0 0.0
  %827 = vmatpush2.msra.mxu0 0.0
  %828 = vmatprep.subr.mxu0 0.0
  %829 = vmatpush2.msra.mxu0 0.0
  %830 = vmatprep.subr.mxu0 0.0
  %831 = vmatpush2.msra.mxu0 0.0
  %832 = vmatprep.subr.mxu0 0.0
  %833 = vmatpush2.msra.mxu0 0.0
  %834 = vmatprep.subr.mxu0 0.0
  %835 = vmatpush2.msra.mxu0 0.0
  %836 = vmatprep.subr.mxu0 0.0
  %837 = vmatpush2.msra.mxu0 0.0
  %838 = vmatprep.subr.mxu0 0.0
  %839 = vmatpush2.msra.mxu0 0.0
  %840 = vmatprep.subr.mxu0 0.0
  %841 = vmatpush2.msra.mxu0 0.0
  %842 = vmatprep.subr.mxu0 0.0
  %843 = vmatpush2.msra.mxu0 0.0
  %844 = vmatprep.subr.mxu0 0.0
  %845 = vmatpush2.msra.mxu0 0.0
  %846 = vmatprep.subr.mxu0 0.0
  %847 = vmatpush2.msra.mxu0 0.0
  %848 = vmatprep.subr.mxu0 0.0
  %849 = vmatpush2.msra.mxu0 0.0
  %850 = vmatprep.mubr.f32.mxu0 0.0
  %851 = vmatmul.mubr.f32.gmra.mxu0 %v784
  %v852 = vpop.f32.mrf.mxu0
  %v853 = vadd.f32 0.0, %v852
  %v854 = vpop.f32.mrf.mxu0
  %855 = vdwg.mxu0
  %856 = vmatprep.subr.mxu0 0.0
  %857 = vmatpush1.msra.mxu0 0.0
  %858 = vmatprep.subr.mxu0 0.0
  %859 = vmatpush1.msra.mxu0 0.0
  %860 = vmatprep.subr.mxu0 0.0
  %861 = vmatpush1.msra.mxu0 0.0
  %862 = vmatprep.subr.mxu0 0.0
  %863 = vmatpush1.msra.mxu0 0.0
  %864 = vmatprep.subr.mxu0 0.0
  %865 = vmatpush1.msra.mxu0 0.0
  %866 = vmatprep.subr.mxu0 0.0
  %867 = vmatpush1.msra.mxu0 0.0
  %868 = vmatprep.subr.mxu0 0.0
  %869 = vmatpush1.msra.mxu0 0.0
  %870 = vmatprep.subr.mxu0 0.0
  %871 = vmatpush1.msra.mxu0 0.0
  %872 = vmatprep.subr.mxu0 0.0
  %873 = vmatpush1.msra.mxu0 0.0
  %874 = vmatprep.subr.mxu0 0.0
  %875 = vmatpush1.msra.mxu0 0.0
  %876 = vmatprep.subr.mxu0 0.0
  %877 = vmatpush1.msra.mxu0 0.0
  %878 = vmatprep.subr.mxu0 0.0
  %879 = vmatpush1.msra.mxu0 0.0
  %880 = vmatprep.subr.mxu0 0.0
  %881 = vmatpush1.msra.mxu0 %v49
  %882 = vmatprep.subr.mxu0 0.0
  %883 = vmatpush1.msra.mxu0 %v48
  %884 = vmatprep.subr.mxu0 0.0
  %885 = vmatpush1.msra.mxu0 %v47
  %886 = vmatprep.subr.mxu0 0.0
  %887 = vmatpush1.msra.mxu0 %v46
  %888 = vmatprep.subr.mxu0 0.0
  %889 = vmatpush2.msra.mxu0 0.0
  %890 = vmatprep.subr.mxu0 0.0
  %891 = vmatpush2.msra.mxu0 0.0
  %892 = vmatprep.subr.mxu0 0.0
  %893 = vmatpush2.msra.mxu0 0.0
  %894 = vmatprep.subr.mxu0 0.0
  %895 = vmatpush2.msra.mxu0 0.0
  %896 = vmatprep.subr.mxu0 0.0
  %897 = vmatpush2.msra.mxu0 0.0
  %898 = vmatprep.subr.mxu0 0.0
  %899 = vmatpush2.msra.mxu0 0.0
  %900 = vmatprep.subr.mxu0 0.0
  %901 = vmatpush2.msra.mxu0 0.0
  %902 = vmatprep.subr.mxu0 0.0
  %903 = vmatpush2.msra.mxu0 0.0
  %904 = vmatprep.subr.mxu0 0.0
  %905 = vmatpush2.msra.mxu0 0.0
  %906 = vmatprep.subr.mxu0 0.0
  %907 = vmatpush2.msra.mxu0 0.0
  %908 = vmatprep.subr.mxu0 0.0
  %909 = vmatpush2.msra.mxu0 0.0
  %910 = vmatprep.subr.mxu0 0.0
  %911 = vmatpush2.msra.mxu0 0.0
  %912 = vmatprep.subr.mxu0 0.0
  %913 = vmatpush2.msra.mxu0 0.0
  %914 = vmatprep.subr.mxu0 0.0
  %915 = vmatpush2.msra.mxu0 0.0
  %916 = vmatprep.subr.mxu0 0.0
  %917 = vmatpush2.msra.mxu0 0.0
  %918 = vmatprep.subr.mxu0 0.0
  %919 = vmatpush2.msra.mxu0 0.0
  %920 = vmatprep.mubr.f32.mxu0 0.0
  %921 = vmatmul.mubr.f32.gmra.mxu0 %v543
  %v922 = vpop.f32.mrf.mxu0
  %v923 = vadd.f32 0.0, %v922
  %v924 = vpop.f32.mrf.mxu0
  %925 = vdwg.mxu0
  %v927 = vsel %vm64, %v853, 0
  %929 = vmatprep.subr.mxu0 0.0
  %930 = vmatpush1.msra.mxu0 0.0
  %931 = vmatprep.subr.mxu0 0.0
  %932 = vmatpush1.msra.mxu0 0.0
  %933 = vmatprep.subr.mxu0 0.0
  %934 = vmatpush1.msra.mxu0 0.0
  %935 = vmatprep.subr.mxu0 0.0
  %936 = vmatpush1.msra.mxu0 0.0
  %937 = vmatprep.subr.mxu0 0.0
  %938 = vmatpush1.msra.mxu0 0.0
  %939 = vmatprep.subr.mxu0 0.0
  %940 = vmatpush1.msra.mxu0 0.0
  %941 = vmatprep.subr.mxu0 0.0
  %942 = vmatpush1.msra.mxu0 0.0
  %943 = vmatprep.subr.mxu0 0.0
  %944 = vmatpush1.msra.mxu0 0.0
  %945 = vmatprep.subr.mxu0 0.0
  %946 = vmatpush1.msra.mxu0 0.0
  %947 = vmatprep.subr.mxu0 0.0
  %948 = vmatpush1.msra.mxu0 0.0
  %949 = vmatprep.subr.mxu0 0.0
  %950 = vmatpush1.msra.mxu0 0.0
  %951 = vmatprep.subr.mxu0 0.0
  %952 = vmatpush1.msra.mxu0 0.0
  %953 = vmatprep.subr.mxu0 0.0
  %954 = vmatpush1.msra.mxu0 %v45
  %955 = vmatprep.subr.mxu0 0.0
  %956 = vmatpush1.msra.mxu0 %v44
  %957 = vmatprep.subr.mxu0 0.0
  %958 = vmatpush1.msra.mxu0 %v43
  %959 = vmatprep.subr.mxu0 0.0
  %960 = vmatpush1.msra.mxu0 %v42
  %961 = vmatprep.subr.mxu0 0.0
  %962 = vmatpush2.msra.mxu0 0.0
  %963 = vmatprep.subr.mxu0 0.0
  %964 = vmatpush2.msra.mxu0 0.0
  %965 = vmatprep.subr.mxu0 0.0
  %966 = vmatpush2.msra.mxu0 0.0
  %967 = vmatprep.subr.mxu0 0.0
  %968 = vmatpush2.msra.mxu0 0.0
  %969 = vmatprep.subr.mxu0 0.0
  %970 = vmatpush2.msra.mxu0 0.0
  %971 = vmatprep.subr.mxu0 0.0
  %972 = vmatpush2.msra.mxu0 0.0
  %973 = vmatprep.subr.mxu0 0.0
  %974 = vmatpush2.msra.mxu0 0.0
  %975 = vmatprep.subr.mxu0 0.0
  %976 = vmatpush2.msra.mxu0 0.0
  %977 = vmatprep.subr.mxu0 0.0
  %978 = vmatpush2.msra.mxu0 0.0
  %979 = vmatprep.subr.mxu0 0.0
  %980 = vmatpush2.msra.mxu0 0.0
  %981 = vmatprep.subr.mxu0 0.0
  %982 = vmatpush2.msra.mxu0 0.0
  %983 = vmatprep.subr.mxu0 0.0
  %984 = vmatpush2.msra.mxu0 0.0
  %985 = vmatprep.subr.mxu0 0.0
  %986 = vmatpush2.msra.mxu0 0.0
  %987 = vmatprep.subr.mxu0 0.0
  %988 = vmatpush2.msra.mxu0 0.0
  %989 = vmatprep.subr.mxu0 0.0
  %990 = vmatpush2.msra.mxu0 0.0
  %991 = vmatprep.subr.mxu0 0.0
  %992 = vmatpush2.msra.mxu0 0.0
  %993 = vmatprep.mubr.f32.mxu0 0.0
  %994 = vmatmul.mubr.f32.gmra.mxu0 %v927
  %v995 = vpop.f32.mrf.mxu0
  %v996 = vadd.f32 %v923, %v995
  %v997 = vpop.f32.mrf.mxu0
  %998 = vdwg.mxu0
  %v999 = vadd.f32 %v996, %v533
  %s1000 = scalar_lea.vmem %s9, 8
  %1001 = vst.msk [vmem:[%s1000] sm:$0xff] %vm536, %v999
  // Predicated region
  $region38: #{bilstm_crf_forward.5} parent=0 // pred_check
    _
  $region39: #{bilstm_crf_forward.5} parent=0 // pred_check_branch
    %1003 = sbr.rel (0) target = $region41
  $region40: #{bilstm_crf_forward.5} parent=0 // pred_region
    _
  $region41: #{bilstm_crf_forward.5} parent=0 // pred_fallthru
    _
  // Predicated region
  $region42: #{bilstm_crf_forward.5} parent=0 // pred_check
    _
  $region43: #{bilstm_crf_forward.5} parent=0 // pred_check_branch
    %1005 = sbr.rel (0) target = $region45
  $region44: #{bilstm_crf_forward.5} parent=0 // pred_region
    _
  $region45: #{bilstm_crf_forward.5} parent=0 // pred_fallthru
    _

// kernel: bilstm_crf_forward.3
$region0: #{bilstm_crf_forward.3}
  #allocation0 [shape = 'u32[]', space=smem, size = 0x4, offset = 0x4, fixed_abs, tag = 'smem constant byte address 0x4 - core index']
  #allocation1 [shape = 'u32[144,128]{1,0:T(1,128)}', space=vmem, size = 0x12000, scoped, tag = 'internal scratch']
  #allocation2 [shape = 'f32[16,16]{1,0:T(8,128)}', space=vmem, size = 0x2000, scoped, tag = 'scratch operand']
  #allocation3 [shape = 'f32[16,16]{1,0:T(8,128)}', space=vmem, size = 0x2000, scoped, tag = 'scratch operand']
  %s0 = inlined_call_operand.vmem [shape: f32[6,16,16], index: 0, kind: input, shape index: {}]
  %s1 = inlined_call_operand.vmem [shape: f32[6,16,1], index: 1, kind: input, shape index: {}]
  %s2 = inlined_call_operand.vmem [shape: f32[2,16,64], index: 2, kind: input, shape index: {}]
  %s3 = inlined_call_operand.vmem [shape: f32[2,16,64], index: 3, kind: input, shape index: {}]
  %s4 = inlined_call_operand.vmem [shape: f32[2,1,64], index: 4, kind: input, shape index: {}]
  %s5 = inlined_call_operand.vmem [shape: f32[2,16,16], index: 5, kind: input, shape index: {}, may-alias: {5,6}]
  %s6 = inlined_call_operand.vmem [shape: f32[2,16,16], index: 6, kind: input, shape index: {}, may-alias: {5,6}]
  %s7 = inlined_call_operand.hbm [shape: f32[2,6,16,16], index: 7, kind: output, shape index: {0}]
  %s8 = inlined_call_operand.vmem [shape: f32[2,16,16], index: 8, kind: output, shape index: {1}]
  %9 = xla_tuple %s7, %s8
  %s10 = sld [smem:[#allocation0]]
  $region69: #{bilstm_crf_forward.3} parent=0
    _
  %s12 = ssub.s32 1, %s10
  %s13 = scalar_select 0, %s12, %s10
  $region1: #{bilstm_crf_forward.3} parent=0
    #allocation4 [shape = 'u8[98304]{0}', space=vmem, size = 0x18000, scoped, tag = 'output window, operand 0']
    #allocation5 [shape = 's32[2]{0}', space=sflag, size = 0x8, scoped, tag = 'scoped memory for bilstm_crf_forward.3']
    %14 = vsyncpa [#allocation5], 0
    %s15 = scalar_lea.sflag [#allocation5], 1
    %16 = vsyncpa %s15, 0
    loop: start=0, step=1, limit=4
    $region2: #{bilstm_crf_forward.3} parent=1 // loop_pre_header
      _
    $region3: #{bilstm_crf_forward.3} parent=1 // loop_header
      %s18 = sphi 0, %s22
      %p19 = scmp.ge.s32.totalorder %s18, 4
      %s26 = sphi 0, %s26
      %s28 = sphi 0, %s26
      %s29 = sphi 0, %s28
      %s43 = sphi 0, %s29
      %s47 = sphi 0, %s47
      %s49 = sphi 0, %s47
      %s50 = sphi 0, %s49
      %s64 = sphi 0, %s50
      %s70 = sphi 0, %s72
      %s73 = sphi 0, %s70
      %s74 = sphi 0, %s73
      %s90 = sphi 0, %s74
      %s96 = sphi 0, %s98
      %s99 = sphi 0, %s96
      %s100 = sphi 0, %s99
      %s116 = sphi 0, %s100
      %s122 = sphi 0, %s124
      %s125 = sphi 0, %s122
      %s126 = sphi 0, %s125
      %s142 = sphi 0, %s126
      %s148 = sphi 0, %s150
      %s151 = sphi 0, %s148
      %s152 = sphi 0, %s151
      %s168 = sphi 0, %s152
      %s174 = sphi 0, %s176
      %s177 = sphi 0, %s174
      %s178 = sphi 0, %s177
      %s194 = sphi 0, %s178
      %s200 = sphi 0, %s202
      %s203 = sphi 0, %s200
      %s204 = sphi 0, %s203
      %s220 = sphi 0, %s204
      %s226 = sphi 0, %s228
      %s229 = sphi 0, %s226
      %s230 = sphi 0, %s229
      %s246 = sphi 0, %s230
    $region4: #{bilstm_crf_forward.3} parent=1 // loop_header_branch
      %21 = sbr.rel (%p19) target = $region8
    $region5: #{bilstm_crf_forward.3} parent=1 // loop_body
      %s23 = ssub.s32 %s18, 1
      %s24 = ssub.s32 %s18, 2
      %s25 = sadd.s32 %s18, 1
      %s27 = sadd.s32 %s26, 1
      %p30 = scmp.eq.s32.totalorder %s18, 1
      %p31 = scmp.ne.s32.totalorder %s26, %s28
      %p32 = scmp.eq.s32.totalorder %s18, 0
      %p33 = por %p31, %p32
      %p34 = scmp.ne.s32.totalorder %s26, %s28
      %p35 = scmp.eq.s32.totalorder %s23, 1
      %p36 = por %p34, %p35
      %p37 = scmp.ne.s32.totalorder %s28, %s29
      %p38 = scmp.eq.s32.totalorder %s23, 0
      %p39 = por %p37, %p38
      %p40 = scmp.ne.s32.totalorder %s28, %s29
      %p41 = scmp.eq.s32.totalorder %s24, 1
      %p42 = por %p40, %p41
      %p44 = scmp.ne.s32.totalorder %s29, %s43
      %p45 = scmp.eq.s32.totalorder %s24, 0
      %p46 = por %p44, %p45
      %s48 = sadd.s32 %s47, 1
      %p51 = scmp.eq.s32.totalorder %s18, 1
      %p52 = scmp.ne.s32.totalorder %s47, %s49
      %p53 = scmp.eq.s32.totalorder %s18, 0
      %p54 = por %p52, %p53
      %p55 = scmp.ne.s32.totalorder %s47, %s49
      %p56 = scmp.eq.s32.totalorder %s23, 1
      %p57 = por %p55, %p56
      %p58 = scmp.ne.s32.totalorder %s49, %s50
      %p59 = scmp.eq.s32.totalorder %s23, 0
      %p60 = por %p58, %p59
      %p61 = scmp.ne.s32.totalorder %s49, %s50
      %p62 = scmp.eq.s32.totalorder %s24, 1
      %p63 = por %p61, %p62
      %p65 = scmp.ne.s32.totalorder %s50, %s64
      %p66 = scmp.eq.s32.totalorder %s24, 0
      %p67 = por %p65, %p66
      %s68 = ssub.s32 %s18, %s25
      %p69 = scmp.eq.s32.totalorder %s68, 0
      %s71 = sadd.s32 %s70, 1
      %s72 = scalar_select %p69, %s70, %s71
      %p75 = pneg %p69
      %p76 = scmp.eq.s32.totalorder %s18, 1
      %p77 = por %p75, %p76
      %p78 = scmp.ne.s32.totalorder %s70, %s73
      %p79 = scmp.eq.s32.totalorder %s18, 0
      %p80 = por %p78, %p79
      %p81 = scmp.ne.s32.totalorder %s70, %s73
      %p82 = scmp.eq.s32.totalorder %s23, 1
      %p83 = por %p81, %p82
      %p84 = scmp.ne.s32.totalorder %s73, %s74
      %p85 = scmp.eq.s32.totalorder %s23, 0
      %p86 = por %p84, %p85
      %p87 = scmp.ne.s32.totalorder %s73, %s74
      %p88 = scmp.eq.s32.totalorder %s24, 1
      %p89 = por %p87, %p88
      %p91 = scmp.ne.s32.totalorder %s74, %s90
      %p92 = scmp.eq.s32.totalorder %s24, 0
      %p93 = por %p91, %p92
      %s94 = ssub.s32 %s18, %s25
      %p95 = scmp.eq.s32.totalorder %s94, 0
      %s97 = sadd.s32 %s96, 1
      %s98 = scalar_select %p95, %s96, %s97
      %p101 = pneg %p95
      %p102 = scmp.eq.s32.totalorder %s18, 1
      %p103 = por %p101, %p102
      %p104 = scmp.ne.s32.totalorder %s96, %s99
      %p105 = scmp.eq.s32.totalorder %s18, 0
      %p106 = por %p104, %p105
      %p107 = scmp.ne.s32.totalorder %s96, %s99
      %p108 = scmp.eq.s32.totalorder %s23, 1
      %p109 = por %p107, %p108
      %p110 = scmp.ne.s32.totalorder %s99, %s100
      %p111 = scmp.eq.s32.totalorder %s23, 0
      %p112 = por %p110, %p111
      %p113 = scmp.ne.s32.totalorder %s99, %s100
      %p114 = scmp.eq.s32.totalorder %s24, 1
      %p115 = por %p113, %p114
      %p117 = scmp.ne.s32.totalorder %s100, %s116
      %p118 = scmp.eq.s32.totalorder %s24, 0
      %p119 = por %p117, %p118
      %s120 = ssub.s32 %s18, %s25
      %p121 = scmp.eq.s32.totalorder %s120, 0
      %s123 = sadd.s32 %s122, 1
      %s124 = scalar_select %p121, %s122, %s123
      %p127 = pneg %p121
      %p128 = scmp.eq.s32.totalorder %s18, 1
      %p129 = por %p127, %p128
      %p130 = scmp.ne.s32.totalorder %s122, %s125
      %p131 = scmp.eq.s32.totalorder %s18, 0
      %p132 = por %p130, %p131
      %p133 = scmp.ne.s32.totalorder %s122, %s125
      %p134 = scmp.eq.s32.totalorder %s23, 1
      %p135 = por %p133, %p134
      %p136 = scmp.ne.s32.totalorder %s125, %s126
      %p137 = scmp.eq.s32.totalorder %s23, 0
      %p138 = por %p136, %p137
      %p139 = scmp.ne.s32.totalorder %s125, %s126
      %p140 = scmp.eq.s32.totalorder %s24, 1
      %p141 = por %p139, %p140
      %p143 = scmp.ne.s32.totalorder %s126, %s142
      %p144 = scmp.eq.s32.totalorder %s24, 0
      %p145 = por %p143, %p144
      %s146 = ssub.s32 %s18, %s25
      %p147 = scmp.eq.s32.totalorder %s146, 0
      %s149 = sadd.s32 %s148, 1
      %s150 = scalar_select %p147, %s148, %s149
      %p153 = pneg %p147
      %p154 = scmp.eq.s32.totalorder %s18, 1
      %p155 = por %p153, %p154
      %p156 = scmp.ne.s32.totalorder %s148, %s151
      %p157 = scmp.eq.s32.totalorder %s18, 0
      %p158 = por %p156, %p157
      %p159 = scmp.ne.s32.totalorder %s148, %s151
      %p160 = scmp.eq.s32.totalorder %s23, 1
      %p161 = por %p159, %p160
      %p162 = scmp.ne.s32.totalorder %s151, %s152
      %p163 = scmp.eq.s32.totalorder %s23, 0
      %p164 = por %p162, %p163
      %p165 = scmp.ne.s32.totalorder %s151, %s152
      %p166 = scmp.eq.s32.totalorder %s24, 1
      %p167 = por %p165, %p166
      %p169 = scmp.ne.s32.totalorder %s152, %s168
      %p170 = scmp.eq.s32.totalorder %s24, 0
      %p171 = por %p169, %p170
      %s172 = ssub.s32 %s18, %s25
      %p173 = scmp.eq.s32.totalorder %s172, 0
      %s175 = sadd.s32 %s174, 1
      %s176 = scalar_select %p173, %s174, %s175
      %p179 = pneg %p173
      %p180 = scmp.eq.s32.totalorder %s18, 1
      %p181 = por %p179, %p180
      %p182 = scmp.ne.s32.totalorder %s174, %s177
      %p183 = scmp.eq.s32.totalorder %s18, 0
      %p184 = por %p182, %p183
      %p185 = scmp.ne.s32.totalorder %s174, %s177
      %p186 = scmp.eq.s32.totalorder %s23, 1
      %p187 = por %p185, %p186
      %p188 = scmp.ne.s32.totalorder %s177, %s178
      %p189 = scmp.eq.s32.totalorder %s23, 0
      %p190 = por %p188, %p189
      %p191 = scmp.ne.s32.totalorder %s177, %s178
      %p192 = scmp.eq.s32.totalorder %s24, 1
      %p193 = por %p191, %p192
      %p195 = scmp.ne.s32.totalorder %s178, %s194
      %p196 = scmp.eq.s32.totalorder %s24, 0
      %p197 = por %p195, %p196
      %s198 = ssub.s32 %s18, %s25
      %p199 = scmp.eq.s32.totalorder %s198, 0
      %s201 = sadd.s32 %s200, 1
      %s202 = scalar_select %p199, %s200, %s201
      %p205 = pneg %p199
      %p206 = scmp.eq.s32.totalorder %s18, 1
      %p207 = por %p205, %p206
      %p208 = scmp.ne.s32.totalorder %s200, %s203
      %p209 = scmp.eq.s32.totalorder %s18, 0
      %p210 = por %p208, %p209
      %p211 = scmp.ne.s32.totalorder %s200, %s203
      %p212 = scmp.eq.s32.totalorder %s23, 1
      %p213 = por %p211, %p212
      %p214 = scmp.ne.s32.totalorder %s203, %s204
      %p215 = scmp.eq.s32.totalorder %s23, 0
      %p216 = por %p214, %p215
      %p217 = scmp.ne.s32.totalorder %s203, %s204
      %p218 = scmp.eq.s32.totalorder %s24, 1
      %p219 = por %p217, %p218
      %p221 = scmp.ne.s32.totalorder %s204, %s220
      %p222 = scmp.eq.s32.totalorder %s24, 0
      %p223 = por %p221, %p222
      %s224 = ssub.s32 %s18, %s25
      %p225 = scmp.eq.s32.totalorder %s224, 0
      %s227 = sadd.s32 %s226, 1
      %s228 = scalar_select %p225, %s226, %s227
      %p231 = pneg %p225
      %p232 = scmp.eq.s32.totalorder %s18, 1
      %p233 = por %p231, %p232
      %p234 = scmp.ne.s32.totalorder %s226, %s229
      %p235 = scmp.eq.s32.totalorder %s18, 0
      %p236 = por %p234, %p235
      %p237 = scmp.ne.s32.totalorder %s226, %s229
      %p238 = scmp.eq.s32.totalorder %s23, 1
      %p239 = por %p237, %p238
      %p240 = scmp.ne.s32.totalorder %s229, %s230
      %p241 = scmp.eq.s32.totalorder %s23, 0
      %p242 = por %p240, %p241
      %p243 = scmp.ne.s32.totalorder %s229, %s230
      %p244 = scmp.eq.s32.totalorder %s24, 1
      %p245 = por %p243, %p244
      %p247 = scmp.ne.s32.totalorder %s230, %s246
      %p248 = scmp.eq.s32.totalorder %s24, 0
      %p249 = por %p247, %p248
      %p250 = scmp.le.s32.totalorder 1, %s18
      %p251 = scmp.lt.s32.totalorder %s18, 3
      %p252 = pnand %p250, %p251
      %p253 = pneg %p252
      // Predicated region
      $region9: #{bilstm_crf_forward.3} parent=5 // pred_check
        _
      $region10: #{bilstm_crf_forward.3} parent=5 // pred_check_branch
        %255 = sbr.rel (%p252) target = $region12
      $region11: #{bilstm_crf_forward.3} parent=5 // pred_region
        %s256 = ssub.s32 %s18, 1
        // Predicated region
        $region13: #{bilstm_crf_forward.3} parent=11 // pred_check
          %p257 = pneg %p39
        $region14: #{bilstm_crf_forward.3} parent=11 // pred_check_branch
          %259 = sbr.rel (%p257) target = $region16
        $region15: #{bilstm_crf_forward.3} parent=11 // pred_region
          _
        $region16: #{bilstm_crf_forward.3} parent=11 // pred_fallthru
          _
        // Predicated region
        $region17: #{bilstm_crf_forward.3} parent=11 // pred_check
          %p260 = pneg %p60
        $region18: #{bilstm_crf_forward.3} parent=11 // pred_check_branch
          %262 = sbr.rel (%p260) target = $region20
        $region19: #{bilstm_crf_forward.3} parent=11 // pred_region
          _
        $region20: #{bilstm_crf_forward.3} parent=11 // pred_fallthru
          _
      $region12: #{bilstm_crf_forward.3} parent=5 // pred_fallthru
        _
      %p263 = scmp.lt.s32.totalorder %s18, 2
      // Predicated region
      $region21: #{bilstm_crf_forward.3} parent=5 // pred_check
        %p264 = pneg %p263
      $region22: #{bilstm_crf_forward.3} parent=5 // pred_check_branch
        %266 = sbr.rel (%p264) target = $region24
      $region23: #{bilstm_crf_forward.3} parent=5 // pred_region
        // Predicated region
        $region25: #{bilstm_crf_forward.3} parent=23 // pred_check
          %p267 = pneg %p80
        $region26: #{bilstm_crf_forward.3} parent=23 // pred_check_branch
          %269 = sbr.rel (%p267) target = $region28
        $region27: #{bilstm_crf_forward.3} parent=23 // pred_region
          %p270 = scmp.lt.s32.totalorder %s18, 1
          %s271 = scalar_select %p270, %s18, 1
          %s272 = smul.addr %s271, 2
          %s273 = smul.addr %s272, 8
          %s274 = scalar_lea.vmem %s2, %s273
        $region28: #{bilstm_crf_forward.3} parent=23 // pred_fallthru
          _
        // Predicated region
        $region29: #{bilstm_crf_forward.3} parent=23 // pred_check
          %p275 = pneg %p106
        $region30: #{bilstm_crf_forward.3} parent=23 // pred_check_branch
          %277 = sbr.rel (%p275) target = $region32
        $region31: #{bilstm_crf_forward.3} parent=23 // pred_region
          %p278 = scmp.lt.s32.totalorder %s18, 1
          %s279 = scalar_select %p278, %s18, 1
          %s280 = smul.addr %s279, 2
          %s281 = smul.addr %s280, 8
          %s282 = scalar_lea.vmem %s3, %s281
        $region32: #{bilstm_crf_forward.3} parent=23 // pred_fallthru
          _
        // Predicated region
        $region33: #{bilstm_crf_forward.3} parent=23 // pred_check
          %p283 = pneg %p132
        $region34: #{bilstm_crf_forward.3} parent=23 // pred_check_branch
          %285 = sbr.rel (%p283) target = $region36
        $region35: #{bilstm_crf_forward.3} parent=23 // pred_region
          %p286 = scmp.lt.s32.totalorder %s18, 1
          %s287 = scalar_select %p286, %s18, 1
          %s288 = scalar_lea.vmem %s4, %s287
        $region36: #{bilstm_crf_forward.3} parent=23 // pred_fallthru
          _
        // Predicated region
        $region37: #{bilstm_crf_forward.3} parent=23 // pred_check
          %p289 = pneg %p158
        $region38: #{bilstm_crf_forward.3} parent=23 // pred_check_branch
          %291 = sbr.rel (%p289) target = $region40
        $region39: #{bilstm_crf_forward.3} parent=23 // pred_region
          %p292 = scmp.lt.s32.totalorder %s18, 1
          %s293 = scalar_select %p292, %s18, 1
          %s294 = smul.addr %s293, 2
          %s295 = smul.addr %s294, 8
          %s296 = scalar_lea.vmem %s5, %s295
        $region40: #{bilstm_crf_forward.3} parent=23 // pred_fallthru
          _
        // Predicated region
        $region41: #{bilstm_crf_forward.3} parent=23 // pred_check
          %p297 = pneg %p184
        $region42: #{bilstm_crf_forward.3} parent=23 // pred_check_branch
          %299 = sbr.rel (%p297) target = $region44
        $region43: #{bilstm_crf_forward.3} parent=23 // pred_region
          %p300 = scmp.lt.s32.totalorder %s18, 1
          %s301 = scalar_select %p300, %s18, 1
          %s302 = smul.addr %s301, 2
          %s303 = smul.addr %s302, 8
          %s304 = scalar_lea.vmem %s6, %s303
        $region44: #{bilstm_crf_forward.3} parent=23 // pred_fallthru
          _
      $region24: #{bilstm_crf_forward.3} parent=5 // pred_fallthru
        _
      %p305 = scmp.le.s32.totalorder 1, %s18
      %p306 = scmp.lt.s32.totalorder %s18, 3
      %p307 = pnand %p305, %p306
      %p308 = pneg %p307
      // Predicated region
      $region45: #{bilstm_crf_forward.3} parent=5 // pred_check
        _
      $region46: #{bilstm_crf_forward.3} parent=5 // pred_check_branch
        %310 = sbr.rel (%p307) target = $region48
      $region47: #{bilstm_crf_forward.3} parent=5 // pred_region
        %s311 = ssub.s32 %s18, 1
        %p312 = pneg %p39
        %p313 = pneg %p36
        %p314 = pneg %p60
        %p315 = pneg %p57
        %p316 = scmp.lt.s32.totalorder %s23, 1
        %s317 = scalar_select %p316, %s23, 1
        %s318 = smul.addr %s317, 2
        %s319 = smul.addr %s318, 8
        %s320 = scalar_lea.vmem %s2, %s319
        %p321 = pneg %p86
        %p322 = pneg %p83
        %p323 = scmp.lt.s32.totalorder %s23, 1
        %s324 = scalar_select %p323, %s23, 1
        %s325 = smul.addr %s324, 2
        %s326 = smul.addr %s325, 8
        %s327 = scalar_lea.vmem %s3, %s326
        %p328 = pneg %p112
        %p329 = pneg %p109
        %p330 = scmp.lt.s32.totalorder %s23, 1
        %s331 = scalar_select %p330, %s23, 1
        %s332 = scalar_lea.vmem %s4, %s331
        %p333 = pneg %p138
        %p334 = pneg %p135
        %p335 = scmp.lt.s32.totalorder %s23, 1
        %s336 = scalar_select %p335, %s23, 1
        %s337 = smul.addr %s336, 2
        %s338 = smul.addr %s337, 8
        %s339 = scalar_lea.vmem %s5, %s338
        %p340 = pneg %p164
        %p341 = pneg %p161
        %p342 = scmp.lt.s32.totalorder %s23, 1
        %s343 = scalar_select %p342, %s23, 1
        %s344 = smul.addr %s343, 2
        %s345 = smul.addr %s344, 8
        %s346 = scalar_lea.vmem %s6, %s345
        %p347 = pneg %p190
        %p348 = pneg %p187
        %p349 = pneg %p216
        %p350 = pneg %p213
        %s351 = sand.u32 %s203, 1
        %s352 = scalar_lea.sflag [#allocation5], %s351
        %s353 = sand.u32 %s203, 1
        %s354 = smul.addr %s353, 96
        %s355 = scalar_lea.vmem [#allocation4], %s354
        %p356 = pneg %p242
        %p357 = pneg %p239
        %p358 = scmp.lt.s32.totalorder %s23, 1
        %s359 = scalar_select %p358, %s23, 1
        %s360 = smul.addr %s359, 2
        %s361 = smul.addr %s360, 8
        %s362 = scalar_lea.vmem %s8, %s361
        %p363 = scmp.lt.s32.totalorder %s23, 1
        %s364 = scalar_select %p363, %s23, 1
        %s365 = smul.addr %s364, 2
        %s366 = smul.addr %s365, 8
        %s367 = scalar_lea.vmem %s2, %s366
        %p368 = scmp.lt.s32.totalorder %s23, 1
        %s369 = scalar_select %p368, %s23, 1
        %s370 = smul.addr %s369, 2
        %s371 = smul.addr %s370, 8
        %s372 = scalar_lea.vmem %s3, %s371
        %p373 = scmp.lt.s32.totalorder %s23, 1
        %s374 = scalar_select %p373, %s23, 1
        %s375 = scalar_lea.vmem %s4, %s374
        %p376 = scmp.lt.s32.totalorder %s23, 1
        %s377 = scalar_select %p376, %s23, 1
        %s378 = smul.addr %s377, 2
        %s379 = smul.addr %s378, 8
        %s380 = scalar_lea.vmem %s5, %s379
        %p381 = scmp.lt.s32.totalorder %s23, 1
        %s382 = scalar_select %p381, %s23, 1
        %s383 = smul.addr %s382, 2
        %s384 = smul.addr %s383, 8
        %s385 = scalar_lea.vmem %s6, %s384
        %p386 = scmp.lt.s32.totalorder %s23, 1
        %s387 = scalar_select %p386, %s23, 1
        %s388 = smul.addr %s387, 2
        %s389 = smul.addr %s388, 8
        %s390 = scalar_lea.vmem %s8, %s389
        %v391 = vld [vmem:[%s380] sm:$0xff]
        %v392 = vld [vmem:[%s380 + $0x8] sm:$0xff]
        %vm393 = vcmask 130048
        %394 = vst.msk [vmem:[#allocation2] sm:$0xff] %vm393, %v391
        %395 = vst.msk [vmem:[#allocation2 + $0x8] sm:$0xff] %vm393, %v392
        %v396 = vld [vmem:[%s385] sm:$0xff]
        %v397 = vld [vmem:[%s385 + $0x8] sm:$0xff]
        %398 = vst.msk [vmem:[#allocation3] sm:$0xff] %vm393, %v396
        %399 = vst.msk [vmem:[#allocation3 + $0x8] sm:$0xff] %vm393, %v397
        %v400 = vld [vmem:[%s367] sm:$0xff]
        %v401 = vld [vmem:[%s367 + $0x8] sm:$0xff]
        %v402 = vld [vmem:[%s372] sm:$0xff]
        %v403 = vld [vmem:[%s372 + $0x8] sm:$0xff]
        %v404 = vld [vmem:[%s375] sm:$0x1]
        %p405 = scmp.eq.s32.totalorder %s23, 0
        %s406 = scalar_select %p405, 0, 5
        %s407 = smul.u32 %s406, 16
        %s408 = scalar_lea.vmem %s0, %s407
        %v409 = vld [vmem:[%s408] sm:$0xff]
        %v410 = vld [vmem:[%s408 + $0x8] sm:$0xff]
        %s411 = scalar_lea.vmem %s1, %s407
        %v412 = vld [vmem:[%s411] sm:$0xff]
        %v413 = vld [vmem:[%s411 + $0x8] sm:$0xff]
        %v414 = vld [vmem:[#allocation2] sm:$0xff]
        %v415 = vld [vmem:[#allocation2 + $0x8] sm:$0xff]
        %v416 = vld [vmem:[#allocation3] sm:$0xff]
        %v417 = vld [vmem:[#allocation3 + $0x8] sm:$0xff]
        %v419 = vsel %vm393, %v414, 0
        %v422 = vsel %vm393, %v415, 0
        %424 = vmatprep.subr.mxu0 0.0
        %425 = vmatpush1.msra.mxu0 0.0
        %426 = vmatprep.subr.mxu0 0.0
        %427 = vmatpush1.msra.mxu0 0.0
        %428 = vmatprep.subr.mxu0 0.0
        %429 = vmatpush1.msra.mxu0 0.0
        %430 = vmatprep.subr.mxu0 0.0
        %431 = vmatpush1.msra.mxu0 0.0
        %432 = vmatprep.subr.mxu0 0.0
        %433 = vmatpush1.msra.mxu0 0.0
        %434 = vmatprep.subr.mxu0 0.0
        %435 = vmatpush1.msra.mxu0 0.0
        %436 = vmatprep.subr.mxu0 0.0
        %437 = vmatpush1.msra.mxu0 0.0
        %438 = vmatprep.subr.mxu0 0.0
        %439 = vmatpush1.msra.mxu0 0.0
        %440 = vmatprep.subr.mxu0 0.0
        %441 = vmatpush1.msra.mxu0 0.0
        %442 = vmatprep.subr.mxu0 0.0
        %443 = vmatpush1.msra.mxu0 0.0
        %444 = vmatprep.subr.mxu0 0.0
        %445 = vmatpush1.msra.mxu0 0.0
        %446 = vmatprep.subr.mxu0 0.0
        %447 = vmatpush1.msra.mxu0 0.0
        %448 = vmatprep.subr.mxu0 0.0
        %449 = vmatpush1.msra.mxu0 0.0
        %450 = vmatprep.subr.mxu0 0.0
        %451 = vmatpush1.msra.mxu0 0.0
        %452 = vmatprep.subr.mxu0 0.0
        %453 = vmatpush1.msra.mxu0 %v403
        %454 = vmatprep.subr.mxu0 0.0
        %455 = vmatpush1.msra.mxu0 %v402
        %456 = vmatprep.subr.mxu0 0.0
        %457 = vmatpush2.msra.mxu0 0.0
        %458 = vmatprep.subr.mxu0 0.0
        %459 = vmatpush2.msra.mxu0 0.0
        %460 = vmatprep.subr.mxu0 0.0
        %461 = vmatpush2.msra.mxu0 0.0
        %462 = vmatprep.subr.mxu0 0.0
        %463 = vmatpush2.msra.mxu0 0.0
        %464 = vmatprep.subr.mxu0 0.0
        %465 = vmatpush2.msra.mxu0 0.0
        %466 = vmatprep.subr.mxu0 0.0
        %467 = vmatpush2.msra.mxu0 0.0
        %468 = vmatprep.subr.mxu0 0.0
        %469 = vmatpush2.msra.mxu0 0.0
        %470 = vmatprep.subr.mxu0 0.0
        %471 = vmatpush2.msra.mxu0 0.0
        %472 = vmatprep.subr.mxu0 0.0
        %473 = vmatpush2.msra.mxu0 0.0
        %474 = vmatprep.subr.mxu0 0.0
        %475 = vmatpush2.msra.mxu0 0.0
        %476 = vmatprep.subr.mxu0 0.0
        %477 = vmatpush2.msra.mxu0 0.0
        %478 = vmatprep.subr.mxu0 0.0
        %479 = vmatpush2.msra.mxu0 0.0
        %480 = vmatprep.subr.mxu0 0.0
        %481 = vmatpush2.msra.mxu0 0.0
        %482 = vmatprep.subr.mxu0 0.0
        %483 = vmatpush2.msra.mxu0 0.0
        %484 = vmatprep.subr.mxu0 0.0
        %485 = vmatpush2.msra.mxu0 0.0
        %486 = vmatprep.subr.mxu0 0.0
        %487 = vmatpush2.msra.mxu0 0.0
        %488 = vmatprep.mubr.f32.mxu0 0.0
        %489 = vmatmul.mubr.f32.gmra.mxu0 %v419
        %v490 = vpop.f32.mrf.mxu0
        %v491 = vadd.f32 0.0, %v490
        %v492 = vpop.f32.mrf.mxu0
        %493 = vmatprep.mubr.f32.mxu0 0.0
        %494 = vmatmul.mubr.f32.gmra.mxu0 %v422
        %v495 = vpop.f32.mrf.mxu0
        %v496 = vadd.f32 0.0, %v495
        %v497 = vpop.f32.mrf.mxu0
        %498 = vdwg.mxu0
        %v500 = vsel %vm393, %v409, 0
        %v503 = vsel %vm393, %v410, 0
        %505 = vmatprep.subr.mxu0 0.0
        %506 = vmatpush1.msra.mxu0 0.0
        %507 = vmatprep.subr.mxu0 0.0
        %508 = vmatpush1.msra.mxu0 0.0
        %509 = vmatprep.subr.mxu0 0.0
        %510 = vmatpush1.msra.mxu0 0.0
        %511 = vmatprep.subr.mxu0 0.0
        %512 = vmatpush1.msra.mxu0 0.0
        %513 = vmatprep.subr.mxu0 0.0
        %514 = vmatpush1.msra.mxu0 0.0
        %515 = vmatprep.subr.mxu0 0.0
        %516 = vmatpush1.msra.mxu0 0.0
        %517 = vmatprep.subr.mxu0 0.0
        %518 = vmatpush1.msra.mxu0 0.0
        %519 = vmatprep.subr.mxu0 0.0
        %520 = vmatpush1.msra.mxu0 0.0
        %521 = vmatprep.subr.mxu0 0.0
        %522 = vmatpush1.msra.mxu0 0.0
        %523 = vmatprep.subr.mxu0 0.0
        %524 = vmatpush1.msra.mxu0 0.0
        %525 = vmatprep.subr.mxu0 0.0
        %526 = vmatpush1.msra.mxu0 0.0
        %527 = vmatprep.subr.mxu0 0.0
        %528 = vmatpush1.msra.mxu0 0.0
        %529 = vmatprep.subr.mxu0 0.0
        %530 = vmatpush1.msra.mxu0 0.0
        %531 = vmatprep.subr.mxu0 0.0
        %532 = vmatpush1.msra.mxu0 0.0
        %533 = vmatprep.subr.mxu0 0.0
        %534 = vmatpush1.msra.mxu0 %v401
        %535 = vmatprep.subr.mxu0 0.0
        %536 = vmatpush1.msra.mxu0 %v400
        %537 = vmatprep.subr.mxu0 0.0
        %538 = vmatpush2.msra.mxu0 0.0
        %539 = vmatprep.subr.mxu0 0.0
        %540 = vmatpush2.msra.mxu0 0.0
        %541 = vmatprep.subr.mxu0 0.0
        %542 = vmatpush2.msra.mxu0 0.0
        %543 = vmatprep.subr.mxu0 0.0
        %544 = vmatpush2.msra.mxu0 0.0
        %545 = vmatprep.subr.mxu0 0.0
        %546 = vmatpush2.msra.mxu0 0.0
        %547 = vmatprep.subr.mxu0 0.0
        %548 = vmatpush2.msra.mxu0 0.0
        %549 = vmatprep.subr.mxu0 0.0
        %550 = vmatpush2.msra.mxu0 0.0
        %551 = vmatprep.subr.mxu0 0.0
        %552 = vmatpush2.msra.mxu0 0.0
        %553 = vmatprep.subr.mxu0 0.0
        %554 = vmatpush2.msra.mxu0 0.0
        %555 = vmatprep.subr.mxu0 0.0
        %556 = vmatpush2.msra.mxu0 0.0
        %557 = vmatprep.subr.mxu0 0.0
        %558 = vmatpush2.msra.mxu0 0.0
        %559 = vmatprep.subr.mxu0 0.0
        %560 = vmatpush2.msra.mxu0 0.0
        %561 = vmatprep.subr.mxu0 0.0
        %562 = vmatpush2.msra.mxu0 0.0
        %563 = vmatprep.subr.mxu0 0.0
        %564 = vmatpush2.msra.mxu0 0.0
        %565 = vmatprep.subr.mxu0 0.0
        %566 = vmatpush2.msra.mxu0 0.0
        %567 = vmatprep.subr.mxu0 0.0
        %568 = vmatpush2.msra.mxu0 0.0
        %569 = vmatprep.mubr.f32.mxu0 0.0
        %570 = vmatmul.mubr.f32.gmra.mxu0 %v500
        %v571 = vpop.f32.mrf.mxu0
        %v572 = vadd.f32 %v491, %v571
        %v573 = vpop.f32.mrf.mxu0
        %574 = vmatprep.mubr.f32.mxu0 0.0
        %575 = vmatmul.mubr.f32.gmra.mxu0 %v503
        %v576 = vpop.f32.mrf.mxu0
        %v577 = vadd.f32 %v496, %v576
        %v578 = vpop.f32.mrf.mxu0
        %579 = vdwg.mxu0
        %v581 = vlaneseq
        %v582 = vshrl.u32 %v581, 7
        %v583 = vsub.s32 0, %v582
        %v584 = vrot.slane %v404, %v583
        %v586 = vadd.f32 %v572, %v584
        %v587 = vadd.f32 %v577, %v584
        %v588 = vmul.f32 %v586, 0.5
        %v589 = vmul.f32 %v587, 0.5
        %v590 = vtanh.pop %v588
        %v591 = vtanh.pop %v589
        %v592 = vadd.f32 %v590, 1.0
        %v593 = vadd.f32 %v591, 1.0
        %v594 = vmul.f32 %v592, 0.5
        %v595 = vmul.f32 %v593, 0.5
        %v596 = vtanh.pop %v586
        %v597 = vtanh.pop %v587
        %600 = vrot.lane.b32.xlu0 %v416, 16
        %v601 = vpop.permute.xlu0 %600
        %602 = vrot.lane.b32.xlu0 %v417, 16
        %v603 = vpop.permute.xlu0 %602
        %v606 = vmul.f32 %v594, %v601
        %v607 = vmul.f32 %v595, %v603
        %610 = vrot.lane.b32.xlu0 %v596, 96
        %v611 = vpop.permute.xlu0 %610
        %612 = vrot.lane.b32.xlu0 %v597, 96
        %v613 = vpop.permute.xlu0 %612
        %v616 = vmul.f32 %v594, %v611
        %v617 = vmul.f32 %v595, %v613
        %620 = vrot.lane.b32.xlu0 %v616, 16
        %v621 = vpop.permute.xlu0 %620
        %622 = vrot.lane.b32.xlu0 %v617, 16
        %v623 = vpop.permute.xlu0 %622
        %v626 = vadd.f32 %v606, %v621
        %v627 = vadd.f32 %v607, %v623
        %v628 = vtanh.pop %v626
        %v629 = vtanh.pop %v627
        %632 = vrot.lane.b32.xlu0 %v628, 32
        %v633 = vpop.permute.xlu0 %632
        %634 = vrot.lane.b32.xlu0 %v629, 32
        %v635 = vpop.permute.xlu0 %634
        %v638 = vmul.f32 %v594, %v633
        %v639 = vmul.f32 %v595, %v635
        %641 = vset.pattern.permute.xlu0 0
        %642 = vperm.xlu0 %641, %v412
        %v643 = vpop.permute.xlu0 %642
        %646 = vset.pattern.permute.xlu0 0
        %647 = vperm.xlu0 %646, %v413
        %v648 = vpop.permute.xlu0 %647
        %v650 = vmul.f32 %v643, %v638
        %v651 = vmul.f32 %v648, %v639
        %v652 = vsub.f32 1.0, %v412
        %v653 = vsub.f32 1.0, %v413
        %655 = vset.pattern.permute.xlu0 0
        %656 = vperm.xlu0 %655, %v652
        %v657 = vpop.permute.xlu0 %656
        %660 = vset.pattern.permute.xlu0 0
        %661 = vperm.xlu0 %660, %v653
        %v662 = vpop.permute.xlu0 %661
        %v664 = vmul.f32 %v657, %v414
        %v665 = vmul.f32 %v662, %v415
        %668 = vrot.lane.b32.xlu0 %v664, 48
        %v669 = vpop.permute.xlu0 %668
        %670 = vrot.lane.b32.xlu0 %v665, 48
        %v671 = vpop.permute.xlu0 %670
        %v674 = vadd.f32 %v650, %v669
        %v675 = vadd.f32 %v651, %v671
        %v676 = vmul.f32 %v643, %v626
        %v677 = vmul.f32 %v648, %v627
        %v678 = vmul.f32 %v657, %v416
        %v679 = vmul.f32 %v662, %v417
        %682 = vrot.lane.b32.xlu0 %v678, 16
        %v683 = vpop.permute.xlu0 %682
        %684 = vrot.lane.b32.xlu0 %v679, 16
        %v685 = vpop.permute.xlu0 %684
        %v688 = vadd.f32 %v676, %v683
        %v689 = vadd.f32 %v677, %v685
        %692 = vrot.lane.b32.xlu0 %v674, 80
        %v693 = vpop.permute.xlu0 %692
        %694 = vrot.lane.b32.xlu0 %v675, 80
        %v695 = vpop.permute.xlu0 %694
        %698 = vst.msk [vmem:[#allocation2] sm:$0xff] %vm393, %v693
        %699 = vst.msk [vmem:[#allocation2 + $0x8] sm:$0xff] %vm393, %v695
        %702 = vrot.lane.b32.xlu0 %v688, 112
        %v703 = vpop.permute.xlu0 %702
        %704 = vrot.lane.b32.xlu0 %v689, 112
        %v705 = vpop.permute.xlu0 %704
        %708 = vst.msk [vmem:[#allocation3] sm:$0xff] %vm393, %v703
        %709 = vst.msk [vmem:[#allocation3 + $0x8] sm:$0xff] %vm393, %v705
        %v710 = vmul.f32 %v674, %v643
        %v711 = vmul.f32 %v675, %v648
        %714 = vrot.lane.b32.xlu0 %v710, 80
        %v715 = vpop.permute.xlu0 %714
        %716 = vrot.lane.b32.xlu0 %v711, 80
        %v717 = vpop.permute.xlu0 %716
        %s720 = scalar_lea.vmem %s355, %s407 [#allocation4]
        %721 = vst.msk [vmem:[%s720] sm:$0xff] %vm393, %v715
        %722 = vst.msk [vmem:[%s720 + $0x8] sm:$0xff] %vm393, %v717
        %s723 = scalar_select %p405, 1, 4
        %s724 = smul.u32 %s723, 16
        %s725 = scalar_lea.vmem %s0, %s724
        %v726 = vld [vmem:[%s725] sm:$0xff]
        %v727 = vld [vmem:[%s725 + $0x8] sm:$0xff]
        %s728 = scalar_lea.vmem %s1, %s724
        %v729 = vld [vmem:[%s728] sm:$0xff]
        %v730 = vld [vmem:[%s728 + $0x8] sm:$0xff]
        %v731 = vld [vmem:[#allocation2] sm:$0xff]
        %v732 = vld [vmem:[#allocation2 + $0x8] sm:$0xff]
        %v733 = vld [vmem:[#allocation3] sm:$0xff]
        %v734 = vld [vmem:[#allocation3 + $0x8] sm:$0xff]
        %v736 = vsel %vm393, %v731, 0
        %v739 = vsel %vm393, %v732, 0
        %741 = vmatprep.subr.mxu0 0.0
        %742 = vmatpush1.msra.mxu0 0.0
        %743 = vmatprep.subr.mxu0 0.0
        %744 = vmatpush1.msra.mxu0 0.0
        %745 = vmatprep.subr.mxu0 0.0
        %746 = vmatpush1.msra.mxu0 0.0
        %747 = vmatprep.subr.mxu0 0.0
        %748 = vmatpush1.msra.mxu0 0.0
        %749 = vmatprep.subr.mxu0 0.0
        %750 = vmatpush1.msra.mxu0 0.0
        %751 = vmatprep.subr.mxu0 0.0
        %752 = vmatpush1.msra.mxu0 0.0
        %753 = vmatprep.subr.mxu0 0.0
        %754 = vmatpush1.msra.mxu0 0.0
        %755 = vmatprep.subr.mxu0 0.0
        %756 = vmatpush1.msra.mxu0 0.0
        %757 = vmatprep.subr.mxu0 0.0
        %758 = vmatpush1.msra.mxu0 0.0
        %759 = vmatprep.subr.mxu0 0.0
        %760 = vmatpush1.msra.mxu0 0.0
        %761 = vmatprep.subr.mxu0 0.0
        %762 = vmatpush1.msra.mxu0 0.0
        %763 = vmatprep.subr.mxu0 0.0
        %764 = vmatpush1.msra.mxu0 0.0
        %765 = vmatprep.subr.mxu0 0.0
        %766 = vmatpush1.msra.mxu0 0.0
        %767 = vmatprep.subr.mxu0 0.0
        %768 = vmatpush1.msra.mxu0 0.0
        %769 = vmatprep.subr.mxu0 0.0
        %770 = vmatpush1.msra.mxu0 %v403
        %771 = vmatprep.subr.mxu0 0.0
        %772 = vmatpush1.msra.mxu0 %v402
        %773 = vmatprep.subr.mxu0 0.0
        %774 = vmatpush2.msra.mxu0 0.0
        %775 = vmatprep.subr.mxu0 0.0
        %776 = vmatpush2.msra.mxu0 0.0
        %777 = vmatprep.subr.mxu0 0.0
        %778 = vmatpush2.msra.mxu0 0.0
        %779 = vmatprep.subr.mxu0 0.0
        %780 = vmatpush2.msra.mxu0 0.0
        %781 = vmatprep.subr.mxu0 0.0
        %782 = vmatpush2.msra.mxu0 0.0
        %783 = vmatprep.subr.mxu0 0.0
        %784 = vmatpush2.msra.mxu0 0.0
        %785 = vmatprep.subr.mxu0 0.0
        %786 = vmatpush2.msra.mxu0 0.0
        %787 = vmatprep.subr.mxu0 0.0
        %788 = vmatpush2.msra.mxu0 0.0
        %789 = vmatprep.subr.mxu0 0.0
        %790 = vmatpush2.msra.mxu0 0.0
        %791 = vmatprep.subr.mxu0 0.0
        %792 = vmatpush2.msra.mxu0 0.0
        %793 = vmatprep.subr.mxu0 0.0
        %794 = vmatpush2.msra.mxu0 0.0
        %795 = vmatprep.subr.mxu0 0.0
        %796 = vmatpush2.msra.mxu0 0.0
        %797 = vmatprep.subr.mxu0 0.0
        %798 = vmatpush2.msra.mxu0 0.0
        %799 = vmatprep.subr.mxu0 0.0
        %800 = vmatpush2.msra.mxu0 0.0
        %801 = vmatprep.subr.mxu0 0.0
        %802 = vmatpush2.msra.mxu0 0.0
        %803 = vmatprep.subr.mxu0 0.0
        %804 = vmatpush2.msra.mxu0 0.0
        %805 = vmatprep.mubr.f32.mxu0 0.0
        %806 = vmatmul.mubr.f32.gmra.mxu0 %v736
        %v807 = vpop.f32.mrf.mxu0
        %v808 = vadd.f32 0.0, %v807
        %v809 = vpop.f32.mrf.mxu0
        %810 = vmatprep.mubr.f32.mxu0 0.0
        %811 = vmatmul.mubr.f32.gmra.mxu0 %v739
        %v812 = vpop.f32.mrf.mxu0
        %v813 = vadd.f32 0.0, %v812
        %v814 = vpop.f32.mrf.mxu0
        %815 = vdwg.mxu0
        %v817 = vsel %vm393, %v726, 0
        %v820 = vsel %vm393, %v727, 0
        %822 = vmatprep.subr.mxu0 0.0
        %823 = vmatpush1.msra.mxu0 0.0
        %824 = vmatprep.subr.mxu0 0.0
        %825 = vmatpush1.msra.mxu0 0.0
        %826 = vmatprep.subr.mxu0 0.0
        %827 = vmatpush1.msra.mxu0 0.0
        %828 = vmatprep.subr.mxu0 0.0
        %829 = vmatpush1.msra.mxu0 0.0
        %830 = vmatprep.subr.mxu0 0.0
        %831 = vmatpush1.msra.mxu0 0.0
        %832 = vmatprep.subr.mxu0 0.0
        %833 = vmatpush1.msra.mxu0 0.0
        %834 = vmatprep.subr.mxu0 0.0
        %835 = vmatpush1.msra.mxu0 0.0
        %836 = vmatprep.subr.mxu0 0.0
        %837 = vmatpush1.msra.mxu0 0.0
        %838 = vmatprep.subr.mxu0 0.0
        %839 = vmatpush1.msra.mxu0 0.0
        %840 = vmatprep.subr.mxu0 0.0
        %841 = vmatpush1.msra.mxu0 0.0
        %842 = vmatprep.subr.mxu0 0.0
        %843 = vmatpush1.msra.mxu0 0.0
        %844 = vmatprep.subr.mxu0 0.0
        %845 = vmatpush1.msra.mxu0 0.0
        %846 = vmatprep.subr.mxu0 0.0
        %847 = vmatpush1.msra.mxu0 0.0
        %848 = vmatprep.subr.mxu0 0.0
        %849 = vmatpush1.msra.mxu0 0.0
        %850 = vmatprep.subr.mxu0 0.0
        %851 = vmatpush1.msra.mxu0 %v401
        %852 = vmatprep.subr.mxu0 0.0
        %853 = vmatpush1.msra.mxu0 %v400
        %854 = vmatprep.subr.mxu0 0.0
        %855 = vmatpush2.msra.mxu0 0.0
        %856 = vmatprep.subr.mxu0 0.0
        %857 = vmatpush2.msra.mxu0 0.0
        %858 = vmatprep.subr.mxu0 0.0
        %859 = vmatpush2.msra.mxu0 0.0
        %860 = vmatprep.subr.mxu0 0.0
        %861 = vmatpush2.msra.mxu0 0.0
        %862 = vmatprep.subr.mxu0 0.0
        %863 = vmatpush2.msra.mxu0 0.0
        %864 = vmatprep.subr.mxu0 0.0
        %865 = vmatpush2.msra.mxu0 0.0
        %866 = vmatprep.subr.mxu0 0.0
        %867 = vmatpush2.msra.mxu0 0.0
        %868 = vmatprep.subr.mxu0 0.0
        %869 = vmatpush2.msra.mxu0 0.0
        %870 = vmatprep.subr.mxu0 0.0
        %871 = vmatpush2.msra.mxu0 0.0
        %872 = vmatprep.subr.mxu0 0.0
        %873 = vmatpush2.msra.mxu0 0.0
        %874 = vmatprep.subr.mxu0 0.0
        %875 = vmatpush2.msra.mxu0 0.0
        %876 = vmatprep.subr.mxu0 0.0
        %877 = vmatpush2.msra.mxu0 0.0
        %878 = vmatprep.subr.mxu0 0.0
        %879 = vmatpush2.msra.mxu0 0.0
        %880 = vmatprep.subr.mxu0 0.0
        %881 = vmatpush2.msra.mxu0 0.0
        %882 = vmatprep.subr.mxu0 0.0
        %883 = vmatpush2.msra.mxu0 0.0
        %884 = vmatprep.subr.mxu0 0.0
        %885 = vmatpush2.msra.mxu0 0.0
        %886 = vmatprep.mubr.f32.mxu0 0.0
        %887 = vmatmul.mubr.f32.gmra.mxu0 %v817
        %v888 = vpop.f32.mrf.mxu0
        %v889 = vadd.f32 %v808, %v888
        %v890 = vpop.f32.mrf.mxu0
        %891 = vmatprep.mubr.f32.mxu0 0.0
        %892 = vmatmul.mubr.f32.gmra.mxu0 %v820
        %v893 = vpop.f32.mrf.mxu0
        %v894 = vadd.f32 %v813, %v893
        %v895 = vpop.f32.mrf.mxu0
        %896 = vdwg.mxu0
        %v897 = vadd.f32 %v889, %v584
        %v898 = vadd.f32 %v894, %v584
        %v899 = vmul.f32 %v897, 0.5
        %v900 = vmul.f32 %v898, 0.5
        %v901 = vtanh.pop %v899
        %v902 = vtanh.pop %v900
        %v903 = vadd.f32 %v901, 1.0
        %v904 = vadd.f32 %v902, 1.0
        %v905 = vmul.f32 %v903, 0.5
        %v906 = vmul.f32 %v904, 0.5
        %v907 = vtanh.pop %v897
        %v908 = vtanh.pop %v898
        %911 = vrot.lane.b32.xlu0 %v733, 16
        %v912 = vpop.permute.xlu0 %911
        %913 = vrot.lane.b32.xlu0 %v734, 16
        %v914 = vpop.permute.xlu0 %913
        %v917 = vmul.f32 %v905, %v912
        %v918 = vmul.f32 %v906, %v914
        %921 = vrot.lane.b32.xlu0 %v907, 96
        %v922 = vpop.permute.xlu0 %921
        %923 = vrot.lane.b32.xlu0 %v908, 96
        %v924 = vpop.permute.xlu0 %923
        %v927 = vmul.f32 %v905, %v922
        %v928 = vmul.f32 %v906, %v924
        %931 = vrot.lane.b32.xlu0 %v927, 16
        %v932 = vpop.permute.xlu0 %931
        %933 = vrot.lane.b32.xlu0 %v928, 16
        %v934 = vpop.permute.xlu0 %933
        %v937 = vadd.f32 %v917, %v932
        %v938 = vadd.f32 %v918, %v934
        %v939 = vtanh.pop %v937
        %v940 = vtanh.pop %v938
        %943 = vrot.lane.b32.xlu0 %v939, 32
        %v944 = vpop.permute.xlu0 %943
        %945 = vrot.lane.b32.xlu0 %v940, 32
        %v946 = vpop.permute.xlu0 %945
        %v949 = vmul.f32 %v905, %v944
        %v950 = vmul.f32 %v906, %v946
        %952 = vset.pattern.permute.xlu0 0
        %953 = vperm.xlu0 %952, %v729
        %v954 = vpop.permute.xlu0 %953
        %957 = vset.pattern.permute.xlu0 0
        %958 = vperm.xlu0 %957, %v730
        %v959 = vpop.permute.xlu0 %958
        %v961 = vmul.f32 %v954, %v949
        %v962 = vmul.f32 %v959, %v950
        %v963 = vsub.f32 1.0, %v729
        %v964 = vsub.f32 1.0, %v730
        %966 = vset.pattern.permute.xlu0 0
        %967 = vperm.xlu0 %966, %v963
        %v968 = vpop.permute.xlu0 %967
        %971 = vset.pattern.permute.xlu0 0
        %972 = vperm.xlu0 %971, %v964
        %v973 = vpop.permute.xlu0 %972
        %v975 = vmul.f32 %v968, %v731
        %v976 = vmul.f32 %v973, %v732
        %979 = vrot.lane.b32.xlu0 %v975, 48
        %v980 = vpop.permute.xlu0 %979
        %981 = vrot.lane.b32.xlu0 %v976, 48
        %v982 = vpop.permute.xlu0 %981
        %v985 = vadd.f32 %v961, %v980
        %v986 = vadd.f32 %v962, %v982
        %v987 = vmul.f32 %v954, %v937
        %v988 = vmul.f32 %v959, %v938
        %v989 = vmul.f32 %v968, %v733
        %v990 = vmul.f32 %v973, %v734
        %993 = vrot.lane.b32.xlu0 %v989, 16
        %v994 = vpop.permute.xlu0 %993
        %995 = vrot.lane.b32.xlu0 %v990, 16
        %v996 = vpop.permute.xlu0 %995
        %v999 = vadd.f32 %v987, %v994
        %v1000 = vadd.f32 %v988, %v996
        %1003 = vrot.lane.b32.xlu0 %v985, 80
        %v1004 = vpop.permute.xlu0 %1003
        %1005 = vrot.lane.b32.xlu0 %v986, 80
        %v1006 = vpop.permute.xlu0 %1005
        %1009 = vst.msk [vmem:[#allocation2] sm:$0xff] %vm393, %v1004
        %1010 = vst.msk [vmem:[#allocation2 + $0x8] sm:$0xff] %vm393, %v1006
        %1013 = vrot.lane.b32.xlu0 %v999, 112
        %v1014 = vpop.permute.xlu0 %1013
        %1015 = vrot.lane.b32.xlu0 %v1000, 112
        %v1016 = vpop.permute.xlu0 %1015
        %1019 = vst.msk [vmem:[#allocation3] sm:$0xff] %vm393, %v1014
        %1020 = vst.msk [vmem:[#allocation3 + $0x8] sm:$0xff] %vm393, %v1016
        %v1021 = vmul.f32 %v985, %v954
        %v1022 = vmul.f32 %v986, %v959
        %1025 = vrot.lane.b32.xlu0 %v1021, 80
        %v1026 = vpop.permute.xlu0 %1025
        %1027 = vrot.lane.b32.xlu0 %v1022, 80
        %v1028 = vpop.permute.xlu0 %1027
        %s1031 = scalar_lea.vmem %s355, %s724 [#allocation4]
        %1032 = vst.msk [vmem:[%s1031] sm:$0xff] %vm393, %v1026
        %1033 = vst.msk [vmem:[%s1031 + $0x8] sm:$0xff] %vm393, %v1028
        %s1034 = scalar_select %p405, 2, 3
        %s1035 = smul.u32 %s1034, 16
        %s1036 = scalar_lea.vmem %s0, %s1035
        %v1037 = vld [vmem:[%s1036] sm:$0xff]
        %v1038 = vld [vmem:[%s1036 + $0x8] sm:$0xff]
        %s1039 = scalar_lea.vmem %s1, %s1035
        %v1040 = vld [vmem:[%s1039] sm:$0xff]
        %v1041 = vld [vmem:[%s1039 + $0x8] sm:$0xff]
        %v1042 = vld [vmem:[#allocation2] sm:$0xff]
        %v1043 = vld [vmem:[#allocation2 + $0x8] sm:$0xff]
        %v1044 = vld [vmem:[#allocation3] sm:$0xff]
        %v1045 = vld [vmem:[#allocation3 + $0x8] sm:$0xff]
        %v1047 = vsel %vm393, %v1042, 0
        %v1050 = vsel %vm393, %v1043, 0
        %1052 = vmatprep.subr.mxu0 0.0
        %1053 = vmatpush1.msra.mxu0 0.0
        %1054 = vmatprep.subr.mxu0 0.0
        %1055 = vmatpush1.msra.mxu0 0.0
        %1056 = vmatprep.subr.mxu0 0.0
        %1057 = vmatpush1.msra.mxu0 0.0
        %1058 = vmatprep.subr.mxu0 0.0
        %1059 = vmatpush1.msra.mxu0 0.0
        %1060 = vmatprep.subr.mxu0 0.0
        %1061 = vmatpush1.msra.mxu0 0.0
        %1062 = vmatprep.subr.mxu0 0.0
        %1063 = vmatpush1.msra.mxu0 0.0
        %1064 = vmatprep.subr.mxu0 0.0
        %1065 = vmatpush1.msra.mxu0 0.0
        %1066 = vmatprep.subr.mxu0 0.0
        %1067 = vmatpush1.msra.mxu0 0.0
        %1068 = vmatprep.subr.mxu0 0.0
        %1069 = vmatpush1.msra.mxu0 0.0
        %1070 = vmatprep.subr.mxu0 0.0
        %1071 = vmatpush1.msra.mxu0 0.0
        %1072 = vmatprep.subr.mxu0 0.0
        %1073 = vmatpush1.msra.mxu0 0.0
        %1074 = vmatprep.subr.mxu0 0.0
        %1075 = vmatpush1.msra.mxu0 0.0
        %1076 = vmatprep.subr.mxu0 0.0
        %1077 = vmatpush1.msra.mxu0 0.0
        %1078 = vmatprep.subr.mxu0 0.0
        %1079 = vmatpush1.msra.mxu0 0.0
        %1080 = vmatprep.subr.mxu0 0.0
        %1081 = vmatpush1.msra.mxu0 %v403
        %1082 = vmatprep.subr.mxu0 0.0
        %1083 = vmatpush1.msra.mxu0 %v402
        %1084 = vmatprep.subr.mxu0 0.0
        %1085 = vmatpush2.msra.mxu0 0.0
        %1086 = vmatprep.subr.mxu0 0.0
        %1087 = vmatpush2.msra.mxu0 0.0
        %1088 = vmatprep.subr.mxu0 0.0
        %1089 = vmatpush2.msra.mxu0 0.0
        %1090 = vmatprep.subr.mxu0 0.0
        %1091 = vmatpush2.msra.mxu0 0.0
        %1092 = vmatprep.subr.mxu0 0.0
        %1093 = vmatpush2.msra.mxu0 0.0
        %1094 = vmatprep.subr.mxu0 0.0
        %1095 = vmatpush2.msra.mxu0 0.0
        %1096 = vmatprep.subr.mxu0 0.0
        %1097 = vmatpush2.msra.mxu0 0.0
        %1098 = vmatprep.subr.mxu0 0.0
        %1099 = vmatpush2.msra.mxu0 0.0
        %1100 = vmatprep.subr.mxu0 0.0
        %1101 = vmatpush2.msra.mxu0 0.0
        %1102 = vmatprep.subr.mxu0 0.0
        %1103 = vmatpush2.msra.mxu0 0.0
        %1104 = vmatprep.subr.mxu0 0.0
        %1105 = vmatpush2.msra.mxu0 0.0
        %1106 = vmatprep.subr.mxu0 0.0
        %1107 = vmatpush2.msra.mxu0 0.0
        %1108 = vmatprep.subr.mxu0 0.0
        %1109 = vmatpush2.msra.mxu0 0.0
        %1110 = vmatprep.subr.mxu0 0.0
        %1111 = vmatpush2.msra.mxu0 0.0
        %1112 = vmatprep.subr.mxu0 0.0
        %1113 = vmatpush2.msra.mxu0 0.0
        %1114 = vmatprep.subr.mxu0 0.0
        %1115 = vmatpush2.msra.mxu0 0.0
        %1116 = vmatprep.mubr.f32.mxu0 0.0
        %1117 = vmatmul.mubr.f32.gmra.mxu0 %v1047
        %v1118 = vpop.f32.mrf.mxu0
        %v1119 = vadd.f32 0.0, %v1118
        %v1120 = vpop.f32.mrf.mxu0
        %1121 = vmatprep.mubr.f32.mxu0 0.0
        %1122 = vmatmul.mubr.f32.gmra.mxu0 %v1050
        %v1123 = vpop.f32.mrf.mxu0
        %v1124 = vadd.f32 0.0, %v1123
        %v1125 = vpop.f32.mrf.mxu0
        %1126 = vdwg.mxu0
        %v1128 = vsel %vm393, %v1037, 0
        %v1131 = vsel %vm393, %v1038, 0
        %1133 = vmatprep.subr.mxu0 0.0
        %1134 = vmatpush1.msra.mxu0 0.0
        %1135 = vmatprep.subr.mxu0 0.0
        %1136 = vmatpush1.msra.mxu0 0.0
        %1137 = vmatprep.subr.mxu0 0.0
        %1138 = vmatpush1.msra.mxu0 0.0
        %1139 = vmatprep.subr.mxu0 0.0
        %1140 = vmatpush1.msra.mxu0 0.0
        %1141 = vmatprep.subr.mxu0 0.0
        %1142 = vmatpush1.msra.mxu0 0.0
        %1143 = vmatprep.subr.mxu0 0.0
        %1144 = vmatpush1.msra.mxu0 0.0
        %1145 = vmatprep.subr.mxu0 0.0
        %1146 = vmatpush1.msra.mxu0 0.0
        %1147 = vmatprep.subr.mxu0 0.0
        %1148 = vmatpush1.msra.mxu0 0.0
        %1149 = vmatprep.subr.mxu0 0.0
        %1150 = vmatpush1.msra.mxu0 0.0
        %1151 = vmatprep.subr.mxu0 0.0
        %1152 = vmatpush1.msra.mxu0 0.0
        %1153 = vmatprep.subr.mxu0 0.0
        %1154 = vmatpush1.msra.mxu0 0.0
        %1155 = vmatprep.subr.mxu0 0.0
        %1156 = vmatpush1.msra.mxu0 0.0
        %1157 = vmatprep.subr.mxu0 0.0
        %1158 = vmatpush1.msra.mxu0 0.0
        %1159 = vmatprep.subr.mxu0 0.0
        %1160 = vmatpush1.msra.mxu0 0.0
        %1161 = vmatprep.subr.mxu0 0.0
        %1162 = vmatpush1.msra.mxu0 %v401
        %1163 = vmatprep.subr.mxu0 0.0
        %1164 = vmatpush1.msra.mxu0 %v400
        %1165 = vmatprep.subr.mxu0 0.0
        %1166 = vmatpush2.msra.mxu0 0.0
        %1167 = vmatprep.subr.mxu0 0.0
        %1168 = vmatpush2.msra.mxu0 0.0
        %1169 = vmatprep.subr.mxu0 0.0
        %1170 = vmatpush2.msra.mxu0 0.0
        %1171 = vmatprep.subr.mxu0 0.0
        %1172 = vmatpush2.msra.mxu0 0.0
        %1173 = vmatprep.subr.mxu0 0.0
        %1174 = vmatpush2.msra.mxu0 0.0
        %1175 = vmatprep.subr.mxu0 0.0
        %1176 = vmatpush2.msra.mxu0 0.0
        %1177 = vmatprep.subr.mxu0 0.0
        %1178 = vmatpush2.msra.mxu0 0.0
        %1179 = vmatprep.subr.mxu0 0.0
        %1180 = vmatpush2.msra.mxu0 0.0
        %1181 = vmatprep.subr.mxu0 0.0
        %1182 = vmatpush2.msra.mxu0 0.0
        %1183 = vmatprep.subr.mxu0 0.0
        %1184 = vmatpush2.msra.mxu0 0.0
        %1185 = vmatprep.subr.mxu0 0.0
        %1186 = vmatpush2.msra.mxu0 0.0
        %1187 = vmatprep.subr.mxu0 0.0
        %1188 = vmatpush2.msra.mxu0 0.0
        %1189 = vmatprep.subr.mxu0 0.0
        %1190 = vmatpush2.msra.mxu0 0.0
        %1191 = vmatprep.subr.mxu0 0.0
        %1192 = vmatpush2.msra.mxu0 0.0
        %1193 = vmatprep.subr.mxu0 0.0
        %1194 = vmatpush2.msra.mxu0 0.0
        %1195 = vmatprep.subr.mxu0 0.0
        %1196 = vmatpush2.msra.mxu0 0.0
        %1197 = vmatprep.mubr.f32.mxu0 0.0
        %1198 = vmatmul.mubr.f32.gmra.mxu0 %v1128
        %v1199 = vpop.f32.mrf.mxu0
        %v1200 = vadd.f32 %v1119, %v1199
        %v1201 = vpop.f32.mrf.mxu0
        %1202 = vmatprep.mubr.f32.mxu0 0.0
        %1203 = vmatmul.mubr.f32.gmra.mxu0 %v1131
        %v1204 = vpop.f32.mrf.mxu0
        %v1205 = vadd.f32 %v1124, %v1204
        %v1206 = vpop.f32.mrf.mxu0
        %1207 = vdwg.mxu0
        %v1208 = vadd.f32 %v1200, %v584
        %v1209 = vadd.f32 %v1205, %v584
        %v1210 = vmul.f32 %v1208, 0.5
        %v1211 = vmul.f32 %v1209, 0.5
        %v1212 = vtanh.pop %v1210
        %v1213 = vtanh.pop %v1211
        %v1214 = vadd.f32 %v1212, 1.0
        %v1215 = vadd.f32 %v1213, 1.0
        %v1216 = vmul.f32 %v1214, 0.5
        %v1217 = vmul.f32 %v1215, 0.5
        %v1218 = vtanh.pop %v1208
        %v1219 = vtanh.pop %v1209
        %1222 = vrot.lane.b32.xlu0 %v1044, 16
        %v1223 = vpop.permute.xlu0 %1222
        %1224 = vrot.lane.b32.xlu0 %v1045, 16
        %v1225 = vpop.permute.xlu0 %1224
        %v1228 = vmul.f32 %v1216, %v1223
        %v1229 = vmul.f32 %v1217, %v1225
        %1232 = vrot.lane.b32.xlu0 %v1218, 96
        %v1233 = vpop.permute.xlu0 %1232
        %1234 = vrot.lane.b32.xlu0 %v1219, 96
        %v1235 = vpop.permute.xlu0 %1234
        %v1238 = vmul.f32 %v1216, %v1233
        %v1239 = vmul.f32 %v1217, %v1235
        %1242 = vrot.lane.b32.xlu0 %v1238, 16
        %v1243 = vpop.permute.xlu0 %1242
        %1244 = vrot.lane.b32.xlu0 %v1239, 16
        %v1245 = vpop.permute.xlu0 %1244
        %v1248 = vadd.f32 %v1228, %v1243
        %v1249 = vadd.f32 %v1229, %v1245
        %v1250 = vtanh.pop %v1248
        %v1251 = vtanh.pop %v1249
        %1254 = vrot.lane.b32.xlu0 %v1250, 32
        %v1255 = vpop.permute.xlu0 %1254
        %1256 = vrot.lane.b32.xlu0 %v1251, 32
        %v1257 = vpop.permute.xlu0 %1256
        %v1260 = vmul.f32 %v1216, %v1255
        %v1261 = vmul.f32 %v1217, %v1257
        %1263 = vset.pattern.permute.xlu0 0
        %1264 = vperm.xlu0 %1263, %v1040
        %v1265 = vpop.permute.xlu0 %1264
        %1268 = vset.pattern.permute.xlu0 0
        %1269 = vperm.xlu0 %1268, %v1041
        %v1270 = vpop.permute.xlu0 %1269
        %v1272 = vmul.f32 %v1265, %v1260
        %v1273 = vmul.f32 %v1270, %v1261
        %v1274 = vsub.f32 1.0, %v1040
        %v1275 = vsub.f32 1.0, %v1041
        %1277 = vset.pattern.permute.xlu0 0
        %1278 = vperm.xlu0 %1277, %v1274
        %v1279 = vpop.permute.xlu0 %1278
        %1282 = vset.pattern.permute.xlu0 0
        %1283 = vperm.xlu0 %1282, %v1275
        %v1284 = vpop.permute.xlu0 %1283
        %v1286 = vmul.f32 %v1279, %v1042
        %v1287 = vmul.f32 %v1284, %v1043
        %1290 = vrot.lane.b32.xlu0 %v1286, 48
        %v1291 = vpop.permute.xlu0 %1290
        %1292 = vrot.lane.b32.xlu0 %v1287, 48
        %v1293 = vpop.permute.xlu0 %1292
        %v1296 = vadd.f32 %v1272, %v1291
        %v1297 = vadd.f32 %v1273, %v1293
        %v1298 = vmul.f32 %v1265, %v1248
        %v1299 = vmul.f32 %v1270, %v1249
        %v1300 = vmul.f32 %v1279, %v1044
        %v1301 = vmul.f32 %v1284, %v1045
        %1304 = vrot.lane.b32.xlu0 %v1300, 16
        %v1305 = vpop.permute.xlu0 %1304
        %1306 = vrot.lane.b32.xlu0 %v1301, 16
        %v1307 = vpop.permute.xlu0 %1306
        %v1310 = vadd.f32 %v1298, %v1305
        %v1311 = vadd.f32 %v1299, %v1307
        %1314 = vrot.lane.b32.xlu0 %v1296, 80
        %v1315 = vpop.permute.xlu0 %1314
        %1316 = vrot.lane.b32.xlu0 %v1297, 80
        %v1317 = vpop.permute.xlu0 %1316
        %1320 = vst.msk [vmem:[#allocation2] sm:$0xff] %vm393, %v1315
        %1321 = vst.msk [vmem:[#allocation2 + $0x8] sm:$0xff] %vm393, %v1317
        %1324 = vrot.lane.b32.xlu0 %v1310, 112
        %v1325 = vpop.permute.xlu0 %1324
        %1326 = vrot.lane.b32.xlu0 %v1311, 112
        %v1327 = vpop.permute.xlu0 %1326
        %1330 = vst.msk [vmem:[#allocation3] sm:$0xff] %vm393, %v1325
        %1331 = vst.msk [vmem:[#allocation3 + $0x8] sm:$0xff] %vm393, %v1327
        %v1332 = vmul.f32 %v1296, %v1265
        %v1333 = vmul.f32 %v1297, %v1270
        %1336 = vrot.lane.b32.xlu0 %v1332, 80
        %v1337 = vpop.permute.xlu0 %1336
        %1338 = vrot.lane.b32.xlu0 %v1333, 80
        %v1339 = vpop.permute.xlu0 %1338
        %s1342 = scalar_lea.vmem %s355, %s1035 [#allocation4]
        %1343 = vst.msk [vmem:[%s1342] sm:$0xff] %vm393, %v1337
        %1344 = vst.msk [vmem:[%s1342 + $0x8] sm:$0xff] %vm393, %v1339
        %s1345 = scalar_select %p405, 3, 2
        %s1346 = smul.u32 %s1345, 16
        %s1347 = scalar_lea.vmem %s0, %s1346
        %v1348 = vld [vmem:[%s1347] sm:$0xff]
        %v1349 = vld [vmem:[%s1347 + $0x8] sm:$0xff]
        %s1350 = scalar_lea.vmem %s1, %s1346
        %v1351 = vld [vmem:[%s1350] sm:$0xff]
        %v1352 = vld [vmem:[%s1350 + $0x8] sm:$0xff]
        %v1353 = vld [vmem:[#allocation2] sm:$0xff]
        %v1354 = vld [vmem:[#allocation2 + $0x8] sm:$0xff]
        %v1355 = vld [vmem:[#allocation3] sm:$0xff]
        %v1356 = vld [vmem:[#allocation3 + $0x8] sm:$0xff]
        %v1358 = vsel %vm393, %v1353, 0
        %v1361 = vsel %vm393, %v1354, 0
        %1363 = vmatprep.subr.mxu0 0.0
        %1364 = vmatpush1.msra.mxu0 0.0
        %1365 = vmatprep.subr.mxu0 0.0
        %1366 = vmatpush1.msra.mxu0 0.0
        %1367 = vmatprep.subr.mxu0 0.0
        %1368 = vmatpush1.msra.mxu0 0.0
        %1369 = vmatprep.subr.mxu0 0.0
        %1370 = vmatpush1.msra.mxu0 0.0
        %1371 = vmatprep.subr.mxu0 0.0
        %1372 = vmatpush1.msra.mxu0 0.0
        %1373 = vmatprep.subr.mxu0 0.0
        %1374 = vmatpush1.msra.mxu0 0.0
        %1375 = vmatprep.subr.mxu0 0.0
        %1376 = vmatpush1.msra.mxu0 0.0
        %1377 = vmatprep.subr.mxu0 0.0
        %1378 = vmatpush1.msra.mxu0 0.0
        %1379 = vmatprep.subr.mxu0 0.0
        %1380 = vmatpush1.msra.mxu0 0.0
        %1381 = vmatprep.subr.mxu0 0.0
        %1382 = vmatpush1.msra.mxu0 0.0
        %1383 = vmatprep.subr.mxu0 0.0
        %1384 = vmatpush1.msra.mxu0 0.0
        %1385 = vmatprep.subr.mxu0 0.0
        %1386 = vmatpush1.msra.mxu0 0.0
        %1387 = vmatprep.subr.mxu0 0.0
        %1388 = vmatpush1.msra.mxu0 0.0
        %1389 = vmatprep.subr.mxu0 0.0
        %1390 = vmatpush1.msra.mxu0 0.0
        %1391 = vmatprep.subr.mxu0 0.0
        %1392 = vmatpush1.msra.mxu0 %v403
        %1393 = vmatprep.subr.mxu0 0.0
        %1394 = vmatpush1.msra.mxu0 %v402
        %1395 = vmatprep.subr.mxu0 0.0
        %1396 = vmatpush2.msra.mxu0 0.0
        %1397 = vmatprep.subr.mxu0 0.0
        %1398 = vmatpush2.msra.mxu0 0.0
        %1399 = vmatprep.subr.mxu0 0.0
        %1400 = vmatpush2.msra.mxu0 0.0
        %1401 = vmatprep.subr.mxu0 0.0
        %1402 = vmatpush2.msra.mxu0 0.0
        %1403 = vmatprep.subr.mxu0 0.0
        %1404 = vmatpush2.msra.mxu0 0.0
        %1405 = vmatprep.subr.mxu0 0.0
        %1406 = vmatpush2.msra.mxu0 0.0
        %1407 = vmatprep.subr.mxu0 0.0
        %1408 = vmatpush2.msra.mxu0 0.0
        %1409 = vmatprep.subr.mxu0 0.0
        %1410 = vmatpush2.msra.mxu0 0.0
        %1411 = vmatprep.subr.mxu0 0.0
        %1412 = vmatpush2.msra.mxu0 0.0
        %1413 = vmatprep.subr.mxu0 0.0
        %1414 = vmatpush2.msra.mxu0 0.0
        %1415 = vmatprep.subr.mxu0 0.0
        %1416 = vmatpush2.msra.mxu0 0.0
        %1417 = vmatprep.subr.mxu0 0.0
        %1418 = vmatpush2.msra.mxu0 0.0
        %1419 = vmatprep.subr.mxu0 0.0
        %1420 = vmatpush2.msra.mxu0 0.0
        %1421 = vmatprep.subr.mxu0 0.0
        %1422 = vmatpush2.msra.mxu0 0.0
        %1423 = vmatprep.subr.mxu0 0.0
        %1424 = vmatpush2.msra.mxu0 0.0
        %1425 = vmatprep.subr.mxu0 0.0
        %1426 = vmatpush2.msra.mxu0 0.0
        %1427 = vmatprep.mubr.f32.mxu0 0.0
        %1428 = vmatmul.mubr.f32.gmra.mxu0 %v1358
        %v1429 = vpop.f32.mrf.mxu0
        %v1430 = vadd.f32 0.0, %v1429
        %v1431 = vpop.f32.mrf.mxu0
        %1432 = vmatprep.mubr.f32.mxu0 0.0
        %1433 = vmatmul.mubr.f32.gmra.mxu0 %v1361
        %v1434 = vpop.f32.mrf.mxu0
        %v1435 = vadd.f32 0.0, %v1434
        %v1436 = vpop.f32.mrf.mxu0
        %1437 = vdwg.mxu0
        %v1439 = vsel %vm393, %v1348, 0
        %v1442 = vsel %vm393, %v1349, 0
        %1444 = vmatprep.subr.mxu0 0.0
        %1445 = vmatpush1.msra.mxu0 0.0
        %1446 = vmatprep.subr.mxu0 0.0
        %1447 = vmatpush1.msra.mxu0 0.0
        %1448 = vmatprep.subr.mxu0 0.0
        %1449 = vmatpush1.msra.mxu0 0.0
        %1450 = vmatprep.subr.mxu0 0.0
        %1451 = vmatpush1.msra.mxu0 0.0
        %1452 = vmatprep.subr.mxu0 0.0
        %1453 = vmatpush1.msra.mxu0 0.0
        %1454 = vmatprep.subr.mxu0 0.0
        %1455 = vmatpush1.msra.mxu0 0.0
        %1456 = vmatprep.subr.mxu0 0.0
        %1457 = vmatpush1.msra.mxu0 0.0
        %1458 = vmatprep.subr.mxu0 0.0
        %1459 = vmatpush1.msra.mxu0 0.0
        %1460 = vmatprep.subr.mxu0 0.0
        %1461 = vmatpush1.msra.mxu0 0.0
        %1462 = vmatprep.subr.mxu0 0.0
        %1463 = vmatpush1.msra.mxu0 0.0
        %1464 = vmatprep.subr.mxu0 0.0
        %1465 = vmatpush1.msra.mxu0 0.0
        %1466 = vmatprep.subr.mxu0 0.0
        %1467 = vmatpush1.msra.mxu0 0.0
        %1468 = vmatprep.subr.mxu0 0.0
        %1469 = vmatpush1.msra.mxu0 0.0
        %1470 = vmatprep.subr.mxu0 0.0
        %1471 = vmatpush1.msra.mxu0 0.0
        %1472 = vmatprep.subr.mxu0 0.0
        %1473 = vmatpush1.msra.mxu0 %v401
        %1474 = vmatprep.subr.mxu0 0.0
        %1475 = vmatpush1.msra.mxu0 %v400
        %1476 = vmatprep.subr.mxu0 0.0
        %1477 = vmatpush2.msra.mxu0 0.0
        %1478 = vmatprep.subr.mxu0 0.0
        %1479 = vmatpush2.msra.mxu0 0.0
        %1480 = vmatprep.subr.mxu0 0.0
        %1481 = vmatpush2.msra.mxu0 0.0
        %1482 = vmatprep.subr.mxu0 0.0
        %1483 = vmatpush2.msra.mxu0 0.0
        %1484 = vmatprep.subr.mxu0 0.0
        %1485 = vmatpush2.msra.mxu0 0.0
        %1486 = vmatprep.subr.mxu0 0.0
        %1487 = vmatpush2.msra.mxu0 0.0
        %1488 = vmatprep.subr.mxu0 0.0
        %1489 = vmatpush2.msra.mxu0 0.0
        %1490 = vmatprep.subr.mxu0 0.0
        %1491 = vmatpush2.msra.mxu0 0.0
        %1492 = vmatprep.subr.mxu0 0.0
        %1493 = vmatpush2.msra.mxu0 0.0
        %1494 = vmatprep.subr.mxu0 0.0
        %1495 = vmatpush2.msra.mxu0 0.0
        %1496 = vmatprep.subr.mxu0 0.0
        %1497 = vmatpush2.msra.mxu0 0.0
        %1498 = vmatprep.subr.mxu0 0.0
        %1499 = vmatpush2.msra.mxu0 0.0
        %1500 = vmatprep.subr.mxu0 0.0
        %1501 = vmatpush2.msra.mxu0 0.0
        %1502 = vmatprep.subr.mxu0 0.0
        %1503 = vmatpush2.msra.mxu0 0.0
        %1504 = vmatprep.subr.mxu0 0.0
        %1505 = vmatpush2.msra.mxu0 0.0
        %1506 = vmatprep.subr.mxu0 0.0
        %1507 = vmatpush2.msra.mxu0 0.0
        %1508 = vmatprep.mubr.f32.mxu0 0.0
        %1509 = vmatmul.mubr.f32.gmra.mxu0 %v1439
        %v1510 = vpop.f32.mrf.mxu0
        %v1511 = vadd.f32 %v1430, %v1510
        %v1512 = vpop.f32.mrf.mxu0
        %1513 = vmatprep.mubr.f32.mxu0 0.0
        %1514 = vmatmul.mubr.f32.gmra.mxu0 %v1442
        %v1515 = vpop.f32.mrf.mxu0
        %v1516 = vadd.f32 %v1435, %v1515
        %v1517 = vpop.f32.mrf.mxu0
        %1518 = vdwg.mxu0
        %v1519 = vadd.f32 %v1511, %v584
        %v1520 = vadd.f32 %v1516, %v584
        %v1521 = vmul.f32 %v1519, 0.5
        %v1522 = vmul.f32 %v1520, 0.5
        %v1523 = vtanh.pop %v1521
        %v1524 = vtanh.pop %v1522
        %v1525 = vadd.f32 %v1523, 1.0
        %v1526 = vadd.f32 %v1524, 1.0
        %v1527 = vmul.f32 %v1525, 0.5
        %v1528 = vmul.f32 %v1526, 0.5
        %v1529 = vtanh.pop %v1519
        %v1530 = vtanh.pop %v1520
        %1533 = vrot.lane.b32.xlu0 %v1355, 16
        %v1534 = vpop.permute.xlu0 %1533
        %1535 = vrot.lane.b32.xlu0 %v1356, 16
        %v1536 = vpop.permute.xlu0 %1535
        %v1539 = vmul.f32 %v1527, %v1534
        %v1540 = vmul.f32 %v1528, %v1536
        %1543 = vrot.lane.b32.xlu0 %v1529, 96
        %v1544 = vpop.permute.xlu0 %1543
        %1545 = vrot.lane.b32.xlu0 %v1530, 96
        %v1546 = vpop.permute.xlu0 %1545
        %v1549 = vmul.f32 %v1527, %v1544
        %v1550 = vmul.f32 %v1528, %v1546
        %1553 = vrot.lane.b32.xlu0 %v1549, 16
        %v1554 = vpop.permute.xlu0 %1553
        %1555 = vrot.lane.b32.xlu0 %v1550, 16
        %v1556 = vpop.permute.xlu0 %1555
        %v1559 = vadd.f32 %v1539, %v1554
        %v1560 = vadd.f32 %v1540, %v1556
        %v1561 = vtanh.pop %v1559
        %v1562 = vtanh.pop %v1560
        %1565 = vrot.lane.b32.xlu0 %v1561, 32
        %v1566 = vpop.permute.xlu0 %1565
        %1567 = vrot.lane.b32.xlu0 %v1562, 32
        %v1568 = vpop.permute.xlu0 %1567
        %v1571 = vmul.f32 %v1527, %v1566
        %v1572 = vmul.f32 %v1528, %v1568
        %1574 = vset.pattern.permute.xlu0 0
        %1575 = vperm.xlu0 %1574, %v1351
        %v1576 = vpop.permute.xlu0 %1575
        %1579 = vset.pattern.permute.xlu0 0
        %1580 = vperm.xlu0 %1579, %v1352
        %v1581 = vpop.permute.xlu0 %1580
        %v1583 = vmul.f32 %v1576, %v1571
        %v1584 = vmul.f32 %v1581, %v1572
        %v1585 = vsub.f32 1.0, %v1351
        %v1586 = vsub.f32 1.0, %v1352
        %1588 = vset.pattern.permute.xlu0 0
        %1589 = vperm.xlu0 %1588, %v1585
        %v1590 = vpop.permute.xlu0 %1589
        %1593 = vset.pattern.permute.xlu0 0
        %1594 = vperm.xlu0 %1593, %v1586
        %v1595 = vpop.permute.xlu0 %1594
        %v1597 = vmul.f32 %v1590, %v1353
        %v1598 = vmul.f32 %v1595, %v1354
        %1601 = vrot.lane.b32.xlu0 %v1597, 48
        %v1602 = vpop.permute.xlu0 %1601
        %1603 = vrot.lane.b32.xlu0 %v1598, 48
        %v1604 = vpop.permute.xlu0 %1603
        %v1607 = vadd.f32 %v1583, %v1602
        %v1608 = vadd.f32 %v1584, %v1604
        %v1609 = vmul.f32 %v1576, %v1559
        %v1610 = vmul.f32 %v1581, %v1560
        %v1611 = vmul.f32 %v1590, %v1355
        %v1612 = vmul.f32 %v1595, %v1356
        %1615 = vrot.lane.b32.xlu0 %v1611, 16
        %v1616 = vpop.permute.xlu0 %1615
        %1617 = vrot.lane.b32.xlu0 %v1612, 16
        %v1618 = vpop.permute.xlu0 %1617
        %v1621 = vadd.f32 %v1609, %v1616
        %v1622 = vadd.f32 %v1610, %v1618
        %1625 = vrot.lane.b32.xlu0 %v1607, 80
        %v1626 = vpop.permute.xlu0 %1625
        %1627 = vrot.lane.b32.xlu0 %v1608, 80
        %v1628 = vpop.permute.xlu0 %1627
        %1631 = vst.msk [vmem:[#allocation2] sm:$0xff] %vm393, %v1626
        %1632 = vst.msk [vmem:[#allocation2 + $0x8] sm:$0xff] %vm393, %v1628
        %1635 = vrot.lane.b32.xlu0 %v1621, 112
        %v1636 = vpop.permute.xlu0 %1635
        %1637 = vrot.lane.b32.xlu0 %v1622, 112
        %v1638 = vpop.permute.xlu0 %1637
        %1641 = vst.msk [vmem:[#allocation3] sm:$0xff] %vm393, %v1636
        %1642 = vst.msk [vmem:[#allocation3 + $0x8] sm:$0xff] %vm393, %v1638
        %v1643 = vmul.f32 %v1607, %v1576
        %v1644 = vmul.f32 %v1608, %v1581
        %1647 = vrot.lane.b32.xlu0 %v1643, 80
        %v1648 = vpop.permute.xlu0 %1647
        %1649 = vrot.lane.b32.xlu0 %v1644, 80
        %v1650 = vpop.permute.xlu0 %1649
        %s1653 = scalar_lea.vmem %s355, %s1346 [#allocation4]
        %1654 = vst.msk [vmem:[%s1653] sm:$0xff] %vm393, %v1648
        %1655 = vst.msk [vmem:[%s1653 + $0x8] sm:$0xff] %vm393, %v1650
        %s1656 = scalar_select %p405, 4, 1
        %s1657 = smul.u32 %s1656, 16
        %s1658 = scalar_lea.vmem %s0, %s1657
        %v1659 = vld [vmem:[%s1658] sm:$0xff]
        %v1660 = vld [vmem:[%s1658 + $0x8] sm:$0xff]
        %s1661 = scalar_lea.vmem %s1, %s1657
        %v1662 = vld [vmem:[%s1661] sm:$0xff]
        %v1663 = vld [vmem:[%s1661 + $0x8] sm:$0xff]
        %v1664 = vld [vmem:[#allocation2] sm:$0xff]
        %v1665 = vld [vmem:[#allocation2 + $0x8] sm:$0xff]
        %v1666 = vld [vmem:[#allocation3] sm:$0xff]
        %v1667 = vld [vmem:[#allocation3 + $0x8] sm:$0xff]
        %v1669 = vsel %vm393, %v1664, 0
        %v1672 = vsel %vm393, %v1665, 0
        %1674 = vmatprep.subr.mxu0 0.0
        %1675 = vmatpush1.msra.mxu0 0.0
        %1676 = vmatprep.subr.mxu0 0.0
        %1677 = vmatpush1.msra.mxu0 0.0
        %1678 = vmatprep.subr.mxu0 0.0
        %1679 = vmatpush1.msra.mxu0 0.0
        %1680 = vmatprep.subr.mxu0 0.0
        %1681 = vmatpush1.msra.mxu0 0.0
        %1682 = vmatprep.subr.mxu0 0.0
        %1683 = vmatpush1.msra.mxu0 0.0
        %1684 = vmatprep.subr.mxu0 0.0
        %1685 = vmatpush1.msra.mxu0 0.0
        %1686 = vmatprep.subr.mxu0 0.0
        %1687 = vmatpush1.msra.mxu0 0.0
        %1688 = vmatprep.subr.mxu0 0.0
        %1689 = vmatpush1.msra.mxu0 0.0
        %1690 = vmatprep.subr.mxu0 0.0
        %1691 = vmatpush1.msra.mxu0 0.0
        %1692 = vmatprep.subr.mxu0 0.0
        %1693 = vmatpush1.msra.mxu0 0.0
        %1694 = vmatprep.subr.mxu0 0.0
        %1695 = vmatpush1.msra.mxu0 0.0
        %1696 = vmatprep.subr.mxu0 0.0
        %1697 = vmatpush1.msra.mxu0 0.0
        %1698 = vmatprep.subr.mxu0 0.0
        %1699 = vmatpush1.msra.mxu0 0.0
        %1700 = vmatprep.subr.mxu0 0.0
        %1701 = vmatpush1.msra.mxu0 0.0
        %1702 = vmatprep.subr.mxu0 0.0
        %1703 = vmatpush1.msra.mxu0 %v403
        %1704 = vmatprep.subr.mxu0 0.0
        %1705 = vmatpush1.msra.mxu0 %v402
        %1706 = vmatprep.subr.mxu0 0.0
        %1707 = vmatpush2.msra.mxu0 0.0
        %1708 = vmatprep.subr.mxu0 0.0
        %1709 = vmatpush2.msra.mxu0 0.0
        %1710 = vmatprep.subr.mxu0 0.0
        %1711 = vmatpush2.msra.mxu0 0.0
        %1712 = vmatprep.subr.mxu0 0.0
        %1713 = vmatpush2.msra.mxu0 0.0
        %1714 = vmatprep.subr.mxu0 0.0
        %1715 = vmatpush2.msra.mxu0 0.0
        %1716 = vmatprep.subr.mxu0 0.0
        %1717 = vmatpush2.msra.mxu0 0.0
        %1718 = vmatprep.subr.mxu0 0.0
        %1719 = vmatpush2.msra.mxu0 0.0
        %1720 = vmatprep.subr.mxu0 0.0
        %1721 = vmatpush2.msra.mxu0 0.0
        %1722 = vmatprep.subr.mxu0 0.0
        %1723 = vmatpush2.msra.mxu0 0.0
        %1724 = vmatprep.subr.mxu0 0.0
        %1725 = vmatpush2.msra.mxu0 0.0
        %1726 = vmatprep.subr.mxu0 0.0
        %1727 = vmatpush2.msra.mxu0 0.0
        %1728 = vmatprep.subr.mxu0 0.0
        %1729 = vmatpush2.msra.mxu0 0.0
        %1730 = vmatprep.subr.mxu0 0.0
        %1731 = vmatpush2.msra.mxu0 0.0
        %1732 = vmatprep.subr.mxu0 0.0
        %1733 = vmatpush2.msra.mxu0 0.0
        %1734 = vmatprep.subr.mxu0 0.0
        %1735 = vmatpush2.msra.mxu0 0.0
        %1736 = vmatprep.subr.mxu0 0.0
        %1737 = vmatpush2.msra.mxu0 0.0
        %1738 = vmatprep.mubr.f32.mxu0 0.0
        %1739 = vmatmul.mubr.f32.gmra.mxu0 %v1669
        %v1740 = vpop.f32.mrf.mxu0
        %v1741 = vadd.f32 0.0, %v1740
        %v1742 = vpop.f32.mrf.mxu0
        %1743 = vmatprep.mubr.f32.mxu0 0.0
        %1744 = vmatmul.mubr.f32.gmra.mxu0 %v1672
        %v1745 = vpop.f32.mrf.mxu0
        %v1746 = vadd.f32 0.0, %v1745
        %v1747 = vpop.f32.mrf.mxu0
        %1748 = vdwg.mxu0
        %v1750 = vsel %vm393, %v1659, 0
        %v1753 = vsel %vm393, %v1660, 0
        %1755 = vmatprep.subr.mxu0 0.0
        %1756 = vmatpush1.msra.mxu0 0.0
        %1757 = vmatprep.subr.mxu0 0.0
        %1758 = vmatpush1.msra.mxu0 0.0
        %1759 = vmatprep.subr.mxu0 0.0
        %1760 = vmatpush1.msra.mxu0 0.0
        %1761 = vmatprep.subr.mxu0 0.0
        %1762 = vmatpush1.msra.mxu0 0.0
        %1763 = vmatprep.subr.mxu0 0.0
        %1764 = vmatpush1.msra.mxu0 0.0
        %1765 = vmatprep.subr.mxu0 0.0
        %1766 = vmatpush1.msra.mxu0 0.0
        %1767 = vmatprep.subr.mxu0 0.0
        %1768 = vmatpush1.msra.mxu0 0.0
        %1769 = vmatprep.subr.mxu0 0.0
        %1770 = vmatpush1.msra.mxu0 0.0
        %1771 = vmatprep.subr.mxu0 0.0
        %1772 = vmatpush1.msra.mxu0 0.0
        %1773 = vmatprep.subr.mxu0 0.0
        %1774 = vmatpush1.msra.mxu0 0.0
        %1775 = vmatprep.subr.mxu0 0.0
        %1776 = vmatpush1.msra.mxu0 0.0
        %1777 = vmatprep.subr.mxu0 0.0
        %1778 = vmatpush1.msra.mxu0 0.0
        %1779 = vmatprep.subr.mxu0 0.0
        %1780 = vmatpush1.msra.mxu0 0.0
        %1781 = vmatprep.subr.mxu0 0.0
        %1782 = vmatpush1.msra.mxu0 0.0
        %1783 = vmatprep.subr.mxu0 0.0
        %1784 = vmatpush1.msra.mxu0 %v401
        %1785 = vmatprep.subr.mxu0 0.0
        %1786 = vmatpush1.msra.mxu0 %v400
        %1787 = vmatprep.subr.mxu0 0.0
        %1788 = vmatpush2.msra.mxu0 0.0
        %1789 = vmatprep.subr.mxu0 0.0
        %1790 = vmatpush2.msra.mxu0 0.0
        %1791 = vmatprep.subr.mxu0 0.0
        %1792 = vmatpush2.msra.mxu0 0.0
        %1793 = vmatprep.subr.mxu0 0.0
        %1794 = vmatpush2.msra.mxu0 0.0
        %1795 = vmatprep.subr.mxu0 0.0
        %1796 = vmatpush2.msra.mxu0 0.0
        %1797 = vmatprep.subr.mxu0 0.0
        %1798 = vmatpush2.msra.mxu0 0.0
        %1799 = vmatprep.subr.mxu0 0.0
        %1800 = vmatpush2.msra.mxu0 0.0
        %1801 = vmatprep.subr.mxu0 0.0
        %1802 = vmatpush2.msra.mxu0 0.0
        %1803 = vmatprep.subr.mxu0 0.0
        %1804 = vmatpush2.msra.mxu0 0.0
        %1805 = vmatprep.subr.mxu0 0.0
        %1806 = vmatpush2.msra.mxu0 0.0
        %1807 = vmatprep.subr.mxu0 0.0
        %1808 = vmatpush2.msra.mxu0 0.0
        %1809 = vmatprep.subr.mxu0 0.0
        %1810 = vmatpush2.msra.mxu0 0.0
        %1811 = vmatprep.subr.mxu0 0.0
        %1812 = vmatpush2.msra.mxu0 0.0
        %1813 = vmatprep.subr.mxu0 0.0
        %1814 = vmatpush2.msra.mxu0 0.0
        %1815 = vmatprep.subr.mxu0 0.0
        %1816 = vmatpush2.msra.mxu0 0.0
        %1817 = vmatprep.subr.mxu0 0.0
        %1818 = vmatpush2.msra.mxu0 0.0
        %1819 = vmatprep.mubr.f32.mxu0 0.0
        %1820 = vmatmul.mubr.f32.gmra.mxu0 %v1750
        %v1821 = vpop.f32.mrf.mxu0
        %v1822 = vadd.f32 %v1741, %v1821
        %v1823 = vpop.f32.mrf.mxu0
        %1824 = vmatprep.mubr.f32.mxu0 0.0
        %1825 = vmatmul.mubr.f32.gmra.mxu0 %v1753
        %v1826 = vpop.f32.mrf.mxu0
        %v1827 = vadd.f32 %v1746, %v1826
        %v1828 = vpop.f32.mrf.mxu0
        %1829 = vdwg.mxu0
        %v1830 = vadd.f32 %v1822, %v584
        %v1831 = vadd.f32 %v1827, %v584
        %v1832 = vmul.f32 %v1830, 0.5
        %v1833 = vmul.f32 %v1831, 0.5
        %v1834 = vtanh.pop %v1832
        %v1835 = vtanh.pop %v1833
        %v1836 = vadd.f32 %v1834, 1.0
        %v1837 = vadd.f32 %v1835, 1.0
        %v1838 = vmul.f32 %v1836, 0.5
        %v1839 = vmul.f32 %v1837, 0.5
        %v1840 = vtanh.pop %v1830
        %v1841 = vtanh.pop %v1831
        %1844 = vrot.lane.b32.xlu0 %v1666, 16
        %v1845 = vpop.permute.xlu0 %1844
        %1846 = vrot.lane.b32.xlu0 %v1667, 16
        %v1847 = vpop.permute.xlu0 %1846
        %v1850 = vmul.f32 %v1838, %v1845
        %v1851 = vmul.f32 %v1839, %v1847
        %1854 = vrot.lane.b32.xlu0 %v1840, 96
        %v1855 = vpop.permute.xlu0 %1854
        %1856 = vrot.lane.b32.xlu0 %v1841, 96
        %v1857 = vpop.permute.xlu0 %1856
        %v1860 = vmul.f32 %v1838, %v1855
        %v1861 = vmul.f32 %v1839, %v1857
        %1864 = vrot.lane.b32.xlu0 %v1860, 16
        %v1865 = vpop.permute.xlu0 %1864
        %1866 = vrot.lane.b32.xlu0 %v1861, 16
        %v1867 = vpop.permute.xlu0 %1866
        %v1870 = vadd.f32 %v1850, %v1865
        %v1871 = vadd.f32 %v1851, %v1867
        %v1872 = vtanh.pop %v1870
        %v1873 = vtanh.pop %v1871
        %1876 = vrot.lane.b32.xlu0 %v1872, 32
        %v1877 = vpop.permute.xlu0 %1876
        %1878 = vrot.lane.b32.xlu0 %v1873, 32
        %v1879 = vpop.permute.xlu0 %1878
        %v1882 = vmul.f32 %v1838, %v1877
        %v1883 = vmul.f32 %v1839, %v1879
        %1885 = vset.pattern.permute.xlu0 0
        %1886 = vperm.xlu0 %1885, %v1662
        %v1887 = vpop.permute.xlu0 %1886
        %1890 = vset.pattern.permute.xlu0 0
        %1891 = vperm.xlu0 %1890, %v1663
        %v1892 = vpop.permute.xlu0 %1891
        %v1894 = vmul.f32 %v1887, %v1882
        %v1895 = vmul.f32 %v1892, %v1883
        %v1896 = vsub.f32 1.0, %v1662
        %v1897 = vsub.f32 1.0, %v1663
        %1899 = vset.pattern.permute.xlu0 0
        %1900 = vperm.xlu0 %1899, %v1896
        %v1901 = vpop.permute.xlu0 %1900
        %1904 = vset.pattern.permute.xlu0 0
        %1905 = vperm.xlu0 %1904, %v1897
        %v1906 = vpop.permute.xlu0 %1905
        %v1908 = vmul.f32 %v1901, %v1664
        %v1909 = vmul.f32 %v1906, %v1665
        %1912 = vrot.lane.b32.xlu0 %v1908, 48
        %v1913 = vpop.permute.xlu0 %1912
        %1914 = vrot.lane.b32.xlu0 %v1909, 48
        %v1915 = vpop.permute.xlu0 %1914
        %v1918 = vadd.f32 %v1894, %v1913
        %v1919 = vadd.f32 %v1895, %v1915
        %v1920 = vmul.f32 %v1887, %v1870
        %v1921 = vmul.f32 %v1892, %v1871
        %v1922 = vmul.f32 %v1901, %v1666
        %v1923 = vmul.f32 %v1906, %v1667
        %1926 = vrot.lane.b32.xlu0 %v1922, 16
        %v1927 = vpop.permute.xlu0 %1926
        %1928 = vrot.lane.b32.xlu0 %v1923, 16
        %v1929 = vpop.permute.xlu0 %1928
        %v1932 = vadd.f32 %v1920, %v1927
        %v1933 = vadd.f32 %v1921, %v1929
        %1936 = vrot.lane.b32.xlu0 %v1918, 80
        %v1937 = vpop.permute.xlu0 %1936
        %1938 = vrot.lane.b32.xlu0 %v1919, 80
        %v1939 = vpop.permute.xlu0 %1938
        %1942 = vst.msk [vmem:[#allocation2] sm:$0xff] %vm393, %v1937
        %1943 = vst.msk [vmem:[#allocation2 + $0x8] sm:$0xff] %vm393, %v1939
        %1946 = vrot.lane.b32.xlu0 %v1932, 112
        %v1947 = vpop.permute.xlu0 %1946
        %1948 = vrot.lane.b32.xlu0 %v1933, 112
        %v1949 = vpop.permute.xlu0 %1948
        %1952 = vst.msk [vmem:[#allocation3] sm:$0xff] %vm393, %v1947
        %1953 = vst.msk [vmem:[#allocation3 + $0x8] sm:$0xff] %vm393, %v1949
        %v1954 = vmul.f32 %v1918, %v1887
        %v1955 = vmul.f32 %v1919, %v1892
        %1958 = vrot.lane.b32.xlu0 %v1954, 80
        %v1959 = vpop.permute.xlu0 %1958
        %1960 = vrot.lane.b32.xlu0 %v1955, 80
        %v1961 = vpop.permute.xlu0 %1960
        %s1964 = scalar_lea.vmem %s355, %s1657 [#allocation4]
        %1965 = vst.msk [vmem:[%s1964] sm:$0xff] %vm393, %v1959
        %1966 = vst.msk [vmem:[%s1964 + $0x8] sm:$0xff] %vm393, %v1961
        %s1967 = scalar_select %p405, 5, 0
        %s1968 = smul.u32 %s1967, 16
        %s1969 = scalar_lea.vmem %s0, %s1968
        %v1970 = vld [vmem:[%s1969] sm:$0xff]
        %v1971 = vld [vmem:[%s1969 + $0x8] sm:$0xff]
        %s1972 = scalar_lea.vmem %s1, %s1968
        %v1973 = vld [vmem:[%s1972] sm:$0xff]
        %v1974 = vld [vmem:[%s1972 + $0x8] sm:$0xff]
        %v1975 = vld [vmem:[#allocation2] sm:$0xff]
        %v1976 = vld [vmem:[#allocation2 + $0x8] sm:$0xff]
        %v1977 = vld [vmem:[#allocation3] sm:$0xff]
        %v1978 = vld [vmem:[#allocation3 + $0x8] sm:$0xff]
        %v1980 = vsel %vm393, %v1975, 0
        %v1983 = vsel %vm393, %v1976, 0
        %1985 = vmatprep.subr.mxu0 0.0
        %1986 = vmatpush1.msra.mxu0 0.0
        %1987 = vmatprep.subr.mxu0 0.0
        %1988 = vmatpush1.msra.mxu0 0.0
        %1989 = vmatprep.subr.mxu0 0.0
        %1990 = vmatpush1.msra.mxu0 0.0
        %1991 = vmatprep.subr.mxu0 0.0
        %1992 = vmatpush1.msra.mxu0 0.0
        %1993 = vmatprep.subr.mxu0 0.0
        %1994 = vmatpush1.msra.mxu0 0.0
        %1995 = vmatprep.subr.mxu0 0.0
        %1996 = vmatpush1.msra.mxu0 0.0
        %1997 = vmatprep.subr.mxu0 0.0
        %1998 = vmatpush1.msra.mxu0 0.0
        %1999 = vmatprep.subr.mxu0 0.0
        %2000 = vmatpush1.msra.mxu0 0.0
        %2001 = vmatprep.subr.mxu0 0.0
        %2002 = vmatpush1.msra.mxu0 0.0
        %2003 = vmatprep.subr.mxu0 0.0
        %2004 = vmatpush1.msra.mxu0 0.0
        %2005 = vmatprep.subr.mxu0 0.0
        %2006 = vmatpush1.msra.mxu0 0.0
        %2007 = vmatprep.subr.mxu0 0.0
        %2008 = vmatpush1.msra.mxu0 0.0
        %2009 = vmatprep.subr.mxu0 0.0
        %2010 = vmatpush1.msra.mxu0 0.0
        %2011 = vmatprep.subr.mxu0 0.0
        %2012 = vmatpush1.msra.mxu0 0.0
        %2013 = vmatprep.subr.mxu0 0.0
        %2014 = vmatpush1.msra.mxu0 %v403
        %2015 = vmatprep.subr.mxu0 0.0
        %2016 = vmatpush1.msra.mxu0 %v402
        %2017 = vmatprep.subr.mxu0 0.0
        %2018 = vmatpush2.msra.mxu0 0.0
        %2019 = vmatprep.subr.mxu0 0.0
        %2020 = vmatpush2.msra.mxu0 0.0
        %2021 = vmatprep.subr.mxu0 0.0
        %2022 = vmatpush2.msra.mxu0 0.0
        %2023 = vmatprep.subr.mxu0 0.0
        %2024 = vmatpush2.msra.mxu0 0.0
        %2025 = vmatprep.subr.mxu0 0.0
        %2026 = vmatpush2.msra.mxu0 0.0
        %2027 = vmatprep.subr.mxu0 0.0
        %2028 = vmatpush2.msra.mxu0 0.0
        %2029 = vmatprep.subr.mxu0 0.0
        %2030 = vmatpush2.msra.mxu0 0.0
        %2031 = vmatprep.subr.mxu0 0.0
        %2032 = vmatpush2.msra.mxu0 0.0
        %2033 = vmatprep.subr.mxu0 0.0
        %2034 = vmatpush2.msra.mxu0 0.0
        %2035 = vmatprep.subr.mxu0 0.0
        %2036 = vmatpush2.msra.mxu0 0.0
        %2037 = vmatprep.subr.mxu0 0.0
        %2038 = vmatpush2.msra.mxu0 0.0
        %2039 = vmatprep.subr.mxu0 0.0
        %2040 = vmatpush2.msra.mxu0 0.0
        %2041 = vmatprep.subr.mxu0 0.0
        %2042 = vmatpush2.msra.mxu0 0.0
        %2043 = vmatprep.subr.mxu0 0.0
        %2044 = vmatpush2.msra.mxu0 0.0
        %2045 = vmatprep.subr.mxu0 0.0
        %2046 = vmatpush2.msra.mxu0 0.0
        %2047 = vmatprep.subr.mxu0 0.0
        %2048 = vmatpush2.msra.mxu0 0.0
        %2049 = vmatprep.mubr.f32.mxu0 0.0
        %2050 = vmatmul.mubr.f32.gmra.mxu0 %v1980
        %v2051 = vpop.f32.mrf.mxu0
        %v2052 = vadd.f32 0.0, %v2051
        %v2053 = vpop.f32.mrf.mxu0
        %2054 = vmatprep.mubr.f32.mxu0 0.0
        %2055 = vmatmul.mubr.f32.gmra.mxu0 %v1983
        %v2056 = vpop.f32.mrf.mxu0
        %v2057 = vadd.f32 0.0, %v2056
        %v2058 = vpop.f32.mrf.mxu0
        %2059 = vdwg.mxu0
        %v2061 = vsel %vm393, %v1970, 0
        %v2064 = vsel %vm393, %v1971, 0
        %2066 = vmatprep.subr.mxu0 0.0
        %2067 = vmatpush1.msra.mxu0 0.0
        %2068 = vmatprep.subr.mxu0 0.0
        %2069 = vmatpush1.msra.mxu0 0.0
        %2070 = vmatprep.subr.mxu0 0.0
        %2071 = vmatpush1.msra.mxu0 0.0
        %2072 = vmatprep.subr.mxu0 0.0
        %2073 = vmatpush1.msra.mxu0 0.0
        %2074 = vmatprep.subr.mxu0 0.0
        %2075 = vmatpush1.msra.mxu0 0.0
        %2076 = vmatprep.subr.mxu0 0.0
        %2077 = vmatpush1.msra.mxu0 0.0
        %2078 = vmatprep.subr.mxu0 0.0
        %2079 = vmatpush1.msra.mxu0 0.0
        %2080 = vmatprep.subr.mxu0 0.0
        %2081 = vmatpush1.msra.mxu0 0.0
        %2082 = vmatprep.subr.mxu0 0.0
        %2083 = vmatpush1.msra.mxu0 0.0
        %2084 = vmatprep.subr.mxu0 0.0
        %2085 = vmatpush1.msra.mxu0 0.0
        %2086 = vmatprep.subr.mxu0 0.0
        %2087 = vmatpush1.msra.mxu0 0.0
        %2088 = vmatprep.subr.mxu0 0.0
        %2089 = vmatpush1.msra.mxu0 0.0
        %2090 = vmatprep.subr.mxu0 0.0
        %2091 = vmatpush1.msra.mxu0 0.0
        %2092 = vmatprep.subr.mxu0 0.0
        %2093 = vmatpush1.msra.mxu0 0.0
        %2094 = vmatprep.subr.mxu0 0.0
        %2095 = vmatpush1.msra.mxu0 %v401
        %2096 = vmatprep.subr.mxu0 0.0
        %2097 = vmatpush1.msra.mxu0 %v400
        %2098 = vmatprep.subr.mxu0 0.0
        %2099 = vmatpush2.msra.mxu0 0.0
        %2100 = vmatprep.subr.mxu0 0.0
        %2101 = vmatpush2.msra.mxu0 0.0
        %2102 = vmatprep.subr.mxu0 0.0
        %2103 = vmatpush2.msra.mxu0 0.0
        %2104 = vmatprep.subr.mxu0 0.0
        %2105 = vmatpush2.msra.mxu0 0.0
        %2106 = vmatprep.subr.mxu0 0.0
        %2107 = vmatpush2.msra.mxu0 0.0
        %2108 = vmatprep.subr.mxu0 0.0
        %2109 = vmatpush2.msra.mxu0 0.0
        %2110 = vmatprep.subr.mxu0 0.0
        %2111 = vmatpush2.msra.mxu0 0.0
        %2112 = vmatprep.subr.mxu0 0.0
        %2113 = vmatpush2.msra.mxu0 0.0
        %2114 = vmatprep.subr.mxu0 0.0
        %2115 = vmatpush2.msra.mxu0 0.0
        %2116 = vmatprep.subr.mxu0 0.0
        %2117 = vmatpush2.msra.mxu0 0.0
        %2118 = vmatprep.subr.mxu0 0.0
        %2119 = vmatpush2.msra.mxu0 0.0
        %2120 = vmatprep.subr.mxu0 0.0
        %2121 = vmatpush2.msra.mxu0 0.0
        %2122 = vmatprep.subr.mxu0 0.0
        %2123 = vmatpush2.msra.mxu0 0.0
        %2124 = vmatprep.subr.mxu0 0.0
        %2125 = vmatpush2.msra.mxu0 0.0
        %2126 = vmatprep.subr.mxu0 0.0
        %2127 = vmatpush2.msra.mxu0 0.0
        %2128 = vmatprep.subr.mxu0 0.0
        %2129 = vmatpush2.msra.mxu0 0.0
        %2130 = vmatprep.mubr.f32.mxu0 0.0
        %2131 = vmatmul.mubr.f32.gmra.mxu0 %v2061
        %v2132 = vpop.f32.mrf.mxu0
        %v2133 = vadd.f32 %v2052, %v2132
        %v2134 = vpop.f32.mrf.mxu0
        %2135 = vmatprep.mubr.f32.mxu0 0.0
        %2136 = vmatmul.mubr.f32.gmra.mxu0 %v2064
        %v2137 = vpop.f32.mrf.mxu0
        %v2138 = vadd.f32 %v2057, %v2137
        %v2139 = vpop.f32.mrf.mxu0
        %2140 = vdwg.mxu0
        %v2141 = vadd.f32 %v2133, %v584
        %v2142 = vadd.f32 %v2138, %v584
        %v2143 = vmul.f32 %v2141, 0.5
        %v2144 = vmul.f32 %v2142, 0.5
        %v2145 = vtanh.pop %v2143
        %v2146 = vtanh.pop %v2144
        %v2147 = vadd.f32 %v2145, 1.0
        %v2148 = vadd.f32 %v2146, 1.0
        %v2149 = vmul.f32 %v2147, 0.5
        %v2150 = vmul.f32 %v2148, 0.5
        %v2151 = vtanh.pop %v2141
        %v2152 = vtanh.pop %v2142
        %2155 = vrot.lane.b32.xlu0 %v1977, 16
        %v2156 = vpop.permute.xlu0 %2155
        %2157 = vrot.lane.b32.xlu0 %v1978, 16
        %v2158 = vpop.permute.xlu0 %2157
        %v2161 = vmul.f32 %v2149, %v2156
        %v2162 = vmul.f32 %v2150, %v2158
        %2165 = vrot.lane.b32.xlu0 %v2151, 96
        %v2166 = vpop.permute.xlu0 %2165
        %2167 = vrot.lane.b32.xlu0 %v2152, 96
        %v2168 = vpop.permute.xlu0 %2167
        %v2171 = vmul.f32 %v2149, %v2166
        %v2172 = vmul.f32 %v2150, %v2168
        %2175 = vrot.lane.b32.xlu0 %v2171, 16
        %v2176 = vpop.permute.xlu0 %2175
        %2177 = vrot.lane.b32.xlu0 %v2172, 16
        %v2178 = vpop.permute.xlu0 %2177
        %v2181 = vadd.f32 %v2161, %v2176
        %v2182 = vadd.f32 %v2162, %v2178
        %v2183 = vtanh.pop %v2181
        %v2184 = vtanh.pop %v2182
        %2187 = vrot.lane.b32.xlu0 %v2183, 32
        %v2188 = vpop.permute.xlu0 %2187
        %2189 = vrot.lane.b32.xlu0 %v2184, 32
        %v2190 = vpop.permute.xlu0 %2189
        %v2193 = vmul.f32 %v2149, %v2188
        %v2194 = vmul.f32 %v2150, %v2190
        %2196 = vset.pattern.permute.xlu0 0
        %2197 = vperm.xlu0 %2196, %v1973
        %v2198 = vpop.permute.xlu0 %2197
        %2201 = vset.pattern.permute.xlu0 0
        %2202 = vperm.xlu0 %2201, %v1974
        %v2203 = vpop.permute.xlu0 %2202
        %v2205 = vmul.f32 %v2198, %v2193
        %v2206 = vmul.f32 %v2203, %v2194
        %v2207 = vsub.f32 1.0, %v1973
        %v2208 = vsub.f32 1.0, %v1974
        %2210 = vset.pattern.permute.xlu0 0
        %2211 = vperm.xlu0 %2210, %v2207
        %v2212 = vpop.permute.xlu0 %2211
        %2215 = vset.pattern.permute.xlu0 0
        %2216 = vperm.xlu0 %2215, %v2208
        %v2217 = vpop.permute.xlu0 %2216
        %v2219 = vmul.f32 %v2212, %v1975
        %v2220 = vmul.f32 %v2217, %v1976
        %2223 = vrot.lane.b32.xlu0 %v2219, 48
        %v2224 = vpop.permute.xlu0 %2223
        %2225 = vrot.lane.b32.xlu0 %v2220, 48
        %v2226 = vpop.permute.xlu0 %2225
        %v2229 = vadd.f32 %v2205, %v2224
        %v2230 = vadd.f32 %v2206, %v2226
        %v2231 = vmul.f32 %v2198, %v2181
        %v2232 = vmul.f32 %v2203, %v2182
        %v2233 = vmul.f32 %v2212, %v1977
        %v2234 = vmul.f32 %v2217, %v1978
        %2237 = vrot.lane.b32.xlu0 %v2233, 16
        %v2238 = vpop.permute.xlu0 %2237
        %2239 = vrot.lane.b32.xlu0 %v2234, 16
        %v2240 = vpop.permute.xlu0 %2239
        %v2243 = vadd.f32 %v2231, %v2238
        %v2244 = vadd.f32 %v2232, %v2240
        %2247 = vrot.lane.b32.xlu0 %v2229, 80
        %v2248 = vpop.permute.xlu0 %2247
        %2249 = vrot.lane.b32.xlu0 %v2230, 80
        %v2250 = vpop.permute.xlu0 %2249
        %2253 = vst.msk [vmem:[#allocation2] sm:$0xff] %vm393, %v2248
        %2254 = vst.msk [vmem:[#allocation2 + $0x8] sm:$0xff] %vm393, %v2250
        %2257 = vrot.lane.b32.xlu0 %v2243, 112
        %v2258 = vpop.permute.xlu0 %2257
        %2259 = vrot.lane.b32.xlu0 %v2244, 112
        %v2260 = vpop.permute.xlu0 %2259
        %2263 = vst.msk [vmem:[#allocation3] sm:$0xff] %vm393, %v2258
        %2264 = vst.msk [vmem:[#allocation3 + $0x8] sm:$0xff] %vm393, %v2260
        %v2265 = vmul.f32 %v2229, %v2198
        %v2266 = vmul.f32 %v2230, %v2203
        %2269 = vrot.lane.b32.xlu0 %v2265, 80
        %v2270 = vpop.permute.xlu0 %2269
        %2271 = vrot.lane.b32.xlu0 %v2266, 80
        %v2272 = vpop.permute.xlu0 %2271
        %s2275 = scalar_lea.vmem %s355, %s1968 [#allocation4]
        %2276 = vst.msk [vmem:[%s2275] sm:$0xff] %vm393, %v2270
        %2277 = vst.msk [vmem:[%s2275 + $0x8] sm:$0xff] %vm393, %v2272
        %v2278 = vld [vmem:[#allocation2] sm:$0xff]
        %v2279 = vld [vmem:[#allocation2 + $0x8] sm:$0xff]
        %2280 = vst.msk [vmem:[%s390] sm:$0xff] %vm393, %v2278
        %2281 = vst.msk [vmem:[%s390 + $0x8] sm:$0xff] %vm393, %v2279
        %s2282 = sand.u32 %s203, 1
        %s2283 = scalar_lea.sflag [#allocation5], %s2282
        %s2284 = sand.u32 %s203, 1
        %s2285 = smul.addr %s2284, 96
        %s2286 = scalar_lea.vmem [#allocation4], %s2285
        %p2287 = scmp.lt.s32.totalorder %s23, 1
        %s2288 = scalar_select %p2287, %s23, 1
        %s2289 = smul.addr %s2288, 2
        %s2290 = smul.addr %s2289, 8
        %s2291 = scalar_lea.vmem %s8, %s2290
        // Predicated region
        $region49: #{bilstm_crf_forward.3} parent=47 // pred_check
          %p2292 = pneg %p213
        $region50: #{bilstm_crf_forward.3} parent=47 // pred_check_branch
          %2294 = sbr.rel (%p2292) target = $region52
        $region51: #{bilstm_crf_forward.3} parent=47 // pred_region
          %s2296 = ssub.s32 1536, 1536
          %2297 = vsyncadd %s2283, %s2296
          %s2298 = smul.addr %s23, 12
          %s2299 = smul.addr %s2298, 128
          %s2300 = scalar_lea.hbm %s7, %s2299
          %s2301 = sshll.u32 %s2286, 4
          %s2302 = int_to_ptr.vmem [resolvable:$true] %s2301
          %2307 = dma.vmem_to_hbm [thread:$0]  %s2302, 1536, %s2300, %s2283, 128, 128, 8
        $region52: #{bilstm_crf_forward.3} parent=47 // pred_fallthru
          _
        // Predicated region
        $region53: #{bilstm_crf_forward.3} parent=47 // pred_check
          %p2308 = pneg %p239
        $region54: #{bilstm_crf_forward.3} parent=47 // pred_check_branch
          %2310 = sbr.rel (%p2308) target = $region56
        $region55: #{bilstm_crf_forward.3} parent=47 // pred_region
          _
        $region56: #{bilstm_crf_forward.3} parent=47 // pred_fallthru
          _
      $region48: #{bilstm_crf_forward.3} parent=5 // pred_fallthru
        _
      %p2311 = scmp.le.s32.totalorder 2, %s18
      // Predicated region
      $region57: #{bilstm_crf_forward.3} parent=5 // pred_check
        %p2312 = pneg %p2311
      $region58: #{bilstm_crf_forward.3} parent=5 // pred_check_branch
        %2314 = sbr.rel (%p2312) target = $region60
      $region59: #{bilstm_crf_forward.3} parent=5 // pred_region
        %s2315 = ssub.s32 %s18, 2
        // Predicated region
        $region61: #{bilstm_crf_forward.3} parent=59 // pred_check
          %p2316 = pneg %p219
        $region62: #{bilstm_crf_forward.3} parent=59 // pred_check_branch
          %2318 = sbr.rel (%p2316) target = $region64
        $region63: #{bilstm_crf_forward.3} parent=59 // pred_region
          %s2319 = sand.u32 %s204, 1
          %s2320 = scalar_lea.sflag [#allocation5], %s2319
          %s2321 = sand.u32 %s204, 1
          %s2322 = smul.addr %s2321, 96
          %s2323 = scalar_lea.vmem [#allocation4], %s2322
          %2324 = dma.done %s2320, 1536
        $region64: #{bilstm_crf_forward.3} parent=59 // pred_fallthru
          _
        // Predicated region
        $region65: #{bilstm_crf_forward.3} parent=59 // pred_check
          %p2325 = pneg %p245
        $region66: #{bilstm_crf_forward.3} parent=59 // pred_check_branch
          %2327 = sbr.rel (%p2325) target = $region68
        $region67: #{bilstm_crf_forward.3} parent=59 // pred_region
          %p2328 = scmp.lt.s32.totalorder %s24, 1
          %s2329 = scalar_select %p2328, %s24, 1
          %s2330 = smul.addr %s2329, 2
          %s2331 = smul.addr %s2330, 8
          %s2332 = scalar_lea.vmem %s8, %s2331
        $region68: #{bilstm_crf_forward.3} parent=59 // pred_fallthru
          _
      $region60: #{bilstm_crf_forward.3} parent=5 // pred_fallthru
        _
    $region6: #{bilstm_crf_forward.3} parent=1 // loop_footer
      %s22 = sadd.s32 1, %s18
    $region7: #{bilstm_crf_forward.3} parent=1 // loop_footer_branch
      %17 = sbr.rel target = $region3
    $region8: #{bilstm_crf_forward.3} parent=1 // loop_exit
      _
    %2333 = vsyncpa [#allocation5], 1
    %s2334 = scalar_lea.sflag [#allocation5], 1
    %2335 = vsyncpa %s2334, 1

// kernel: bilstm_crf_forward.4
$region0: #{bilstm_crf_forward.4}
  #allocation0 [shape = 'u32[]', space=smem, size = 0x4, offset = 0x4, fixed_abs, tag = 'smem constant byte address 0x4 - core index']
  #allocation1 [shape = 'u32[144,128]{1,0:T(1,128)}', space=vmem, size = 0x12000, scoped, tag = 'internal scratch']
  #allocation2 [shape = 'f32[2,16]{1,0:T(2,128)}', space=vmem, size = 0x400, scoped, tag = 'scratch operand']
  #allocation3 [shape = 'f32[2,16]{1,0:T(2,128)}', space=vmem, size = 0x400, scoped, tag = 'scratch operand']
  %s0 = inlined_call_operand.vmem [shape: f32[8,2,56], index: 0, kind: input, shape index: {}]
  %s1 = inlined_call_operand.vmem [shape: f32[8,2,1], index: 1, kind: input, shape index: {}]
  %s2 = inlined_call_operand.vmem [shape: f32[2,56,64], index: 2, kind: input, shape index: {}]
  %s3 = inlined_call_operand.vmem [shape: f32[2,16,64], index: 3, kind: input, shape index: {}]
  %s4 = inlined_call_operand.vmem [shape: f32[2,1,64], index: 4, kind: input, shape index: {}]
  %s5 = inlined_call_operand.vmem [shape: f32[2,2,16], index: 5, kind: input, shape index: {}]
  %s6 = inlined_call_operand.vmem [shape: f32[2,2,16], index: 6, kind: input, shape index: {}]
  %s7 = inlined_call_operand.vmem [shape: f32[2,8,2,16], index: 7, kind: output, shape index: {0}]
  %s8 = inlined_call_operand.hbm [shape: f32[2,2,16], index: 8, kind: output, shape index: {1}]
  %9 = xla_tuple %s7, %s8
  %s10 = sld [smem:[#allocation0]]
  $region69: #{bilstm_crf_forward.4} parent=0
    _
  %s12 = ssub.s32 1, %s10
  %s13 = scalar_select 0, %s12, %s10
  $region1: #{bilstm_crf_forward.4} parent=0
    #allocation4 [shape = 'u8[2048]{0}', space=vmem, size = 0x800, scoped, tag = 'output window, operand 1']
    #allocation5 [shape = 's32[2]{0}', space=sflag, size = 0x8, scoped, tag = 'scoped memory for bilstm_crf_forward.4']
    %14 = vsyncpa [#allocation5], 0
    %s15 = scalar_lea.sflag [#allocation5], 1
    %16 = vsyncpa %s15, 0
    loop: start=0, step=1, limit=4
    $region2: #{bilstm_crf_forward.4} parent=1 // loop_pre_header
      _
    $region3: #{bilstm_crf_forward.4} parent=1 // loop_header
      %s18 = sphi 0, %s22
      %p19 = scmp.ge.s32.totalorder %s18, 4
      %s26 = sphi 0, %s26
      %s28 = sphi 0, %s26
      %s29 = sphi 0, %s28
      %s43 = sphi 0, %s29
      %s47 = sphi 0, %s47
      %s49 = sphi 0, %s47
      %s50 = sphi 0, %s49
      %s64 = sphi 0, %s50
      %s70 = sphi 0, %s72
      %s73 = sphi 0, %s70
      %s74 = sphi 0, %s73
      %s90 = sphi 0, %s74
      %s96 = sphi 0, %s98
      %s99 = sphi 0, %s96
      %s100 = sphi 0, %s99
      %s116 = sphi 0, %s100
      %s122 = sphi 0, %s124
      %s125 = sphi 0, %s122
      %s126 = sphi 0, %s125
      %s142 = sphi 0, %s126
      %s148 = sphi 0, %s150
      %s151 = sphi 0, %s148
      %s152 = sphi 0, %s151
      %s168 = sphi 0, %s152
      %s174 = sphi 0, %s176
      %s177 = sphi 0, %s174
      %s178 = sphi 0, %s177
      %s194 = sphi 0, %s178
      %s200 = sphi 0, %s202
      %s203 = sphi 0, %s200
      %s204 = sphi 0, %s203
      %s220 = sphi 0, %s204
      %s226 = sphi 0, %s228
      %s229 = sphi 0, %s226
      %s230 = sphi 0, %s229
      %s246 = sphi 0, %s230
    $region4: #{bilstm_crf_forward.4} parent=1 // loop_header_branch
      %21 = sbr.rel (%p19) target = $region8
    $region5: #{bilstm_crf_forward.4} parent=1 // loop_body
      %s23 = ssub.s32 %s18, 1
      %s24 = ssub.s32 %s18, 2
      %s25 = sadd.s32 %s18, 1
      %s27 = sadd.s32 %s26, 1
      %p30 = scmp.eq.s32.totalorder %s18, 1
      %p31 = scmp.ne.s32.totalorder %s26, %s28
      %p32 = scmp.eq.s32.totalorder %s18, 0
      %p33 = por %p31, %p32
      %p34 = scmp.ne.s32.totalorder %s26, %s28
      %p35 = scmp.eq.s32.totalorder %s23, 1
      %p36 = por %p34, %p35
      %p37 = scmp.ne.s32.totalorder %s28, %s29
      %p38 = scmp.eq.s32.totalorder %s23, 0
      %p39 = por %p37, %p38
      %p40 = scmp.ne.s32.totalorder %s28, %s29
      %p41 = scmp.eq.s32.totalorder %s24, 1
      %p42 = por %p40, %p41
      %p44 = scmp.ne.s32.totalorder %s29, %s43
      %p45 = scmp.eq.s32.totalorder %s24, 0
      %p46 = por %p44, %p45
      %s48 = sadd.s32 %s47, 1
      %p51 = scmp.eq.s32.totalorder %s18, 1
      %p52 = scmp.ne.s32.totalorder %s47, %s49
      %p53 = scmp.eq.s32.totalorder %s18, 0
      %p54 = por %p52, %p53
      %p55 = scmp.ne.s32.totalorder %s47, %s49
      %p56 = scmp.eq.s32.totalorder %s23, 1
      %p57 = por %p55, %p56
      %p58 = scmp.ne.s32.totalorder %s49, %s50
      %p59 = scmp.eq.s32.totalorder %s23, 0
      %p60 = por %p58, %p59
      %p61 = scmp.ne.s32.totalorder %s49, %s50
      %p62 = scmp.eq.s32.totalorder %s24, 1
      %p63 = por %p61, %p62
      %p65 = scmp.ne.s32.totalorder %s50, %s64
      %p66 = scmp.eq.s32.totalorder %s24, 0
      %p67 = por %p65, %p66
      %s68 = ssub.s32 %s18, %s25
      %p69 = scmp.eq.s32.totalorder %s68, 0
      %s71 = sadd.s32 %s70, 1
      %s72 = scalar_select %p69, %s70, %s71
      %p75 = pneg %p69
      %p76 = scmp.eq.s32.totalorder %s18, 1
      %p77 = por %p75, %p76
      %p78 = scmp.ne.s32.totalorder %s70, %s73
      %p79 = scmp.eq.s32.totalorder %s18, 0
      %p80 = por %p78, %p79
      %p81 = scmp.ne.s32.totalorder %s70, %s73
      %p82 = scmp.eq.s32.totalorder %s23, 1
      %p83 = por %p81, %p82
      %p84 = scmp.ne.s32.totalorder %s73, %s74
      %p85 = scmp.eq.s32.totalorder %s23, 0
      %p86 = por %p84, %p85
      %p87 = scmp.ne.s32.totalorder %s73, %s74
      %p88 = scmp.eq.s32.totalorder %s24, 1
      %p89 = por %p87, %p88
      %p91 = scmp.ne.s32.totalorder %s74, %s90
      %p92 = scmp.eq.s32.totalorder %s24, 0
      %p93 = por %p91, %p92
      %s94 = ssub.s32 %s18, %s25
      %p95 = scmp.eq.s32.totalorder %s94, 0
      %s97 = sadd.s32 %s96, 1
      %s98 = scalar_select %p95, %s96, %s97
      %p101 = pneg %p95
      %p102 = scmp.eq.s32.totalorder %s18, 1
      %p103 = por %p101, %p102
      %p104 = scmp.ne.s32.totalorder %s96, %s99
      %p105 = scmp.eq.s32.totalorder %s18, 0
      %p106 = por %p104, %p105
      %p107 = scmp.ne.s32.totalorder %s96, %s99
      %p108 = scmp.eq.s32.totalorder %s23, 1
      %p109 = por %p107, %p108
      %p110 = scmp.ne.s32.totalorder %s99, %s100
      %p111 = scmp.eq.s32.totalorder %s23, 0
      %p112 = por %p110, %p111
      %p113 = scmp.ne.s32.totalorder %s99, %s100
      %p114 = scmp.eq.s32.totalorder %s24, 1
      %p115 = por %p113, %p114
      %p117 = scmp.ne.s32.totalorder %s100, %s116
      %p118 = scmp.eq.s32.totalorder %s24, 0
      %p119 = por %p117, %p118
      %s120 = ssub.s32 %s18, %s25
      %p121 = scmp.eq.s32.totalorder %s120, 0
      %s123 = sadd.s32 %s122, 1
      %s124 = scalar_select %p121, %s122, %s123
      %p127 = pneg %p121
      %p128 = scmp.eq.s32.totalorder %s18, 1
      %p129 = por %p127, %p128
      %p130 = scmp.ne.s32.totalorder %s122, %s125
      %p131 = scmp.eq.s32.totalorder %s18, 0
      %p132 = por %p130, %p131
      %p133 = scmp.ne.s32.totalorder %s122, %s125
      %p134 = scmp.eq.s32.totalorder %s23, 1
      %p135 = por %p133, %p134
      %p136 = scmp.ne.s32.totalorder %s125, %s126
      %p137 = scmp.eq.s32.totalorder %s23, 0
      %p138 = por %p136, %p137
      %p139 = scmp.ne.s32.totalorder %s125, %s126
      %p140 = scmp.eq.s32.totalorder %s24, 1
      %p141 = por %p139, %p140
      %p143 = scmp.ne.s32.totalorder %s126, %s142
      %p144 = scmp.eq.s32.totalorder %s24, 0
      %p145 = por %p143, %p144
      %s146 = ssub.s32 %s18, %s25
      %p147 = scmp.eq.s32.totalorder %s146, 0
      %s149 = sadd.s32 %s148, 1
      %s150 = scalar_select %p147, %s148, %s149
      %p153 = pneg %p147
      %p154 = scmp.eq.s32.totalorder %s18, 1
      %p155 = por %p153, %p154
      %p156 = scmp.ne.s32.totalorder %s148, %s151
      %p157 = scmp.eq.s32.totalorder %s18, 0
      %p158 = por %p156, %p157
      %p159 = scmp.ne.s32.totalorder %s148, %s151
      %p160 = scmp.eq.s32.totalorder %s23, 1
      %p161 = por %p159, %p160
      %p162 = scmp.ne.s32.totalorder %s151, %s152
      %p163 = scmp.eq.s32.totalorder %s23, 0
      %p164 = por %p162, %p163
      %p165 = scmp.ne.s32.totalorder %s151, %s152
      %p166 = scmp.eq.s32.totalorder %s24, 1
      %p167 = por %p165, %p166
      %p169 = scmp.ne.s32.totalorder %s152, %s168
      %p170 = scmp.eq.s32.totalorder %s24, 0
      %p171 = por %p169, %p170
      %s172 = ssub.s32 %s18, %s25
      %p173 = scmp.eq.s32.totalorder %s172, 0
      %s175 = sadd.s32 %s174, 1
      %s176 = scalar_select %p173, %s174, %s175
      %p179 = pneg %p173
      %p180 = scmp.eq.s32.totalorder %s18, 1
      %p181 = por %p179, %p180
      %p182 = scmp.ne.s32.totalorder %s174, %s177
      %p183 = scmp.eq.s32.totalorder %s18, 0
      %p184 = por %p182, %p183
      %p185 = scmp.ne.s32.totalorder %s174, %s177
      %p186 = scmp.eq.s32.totalorder %s23, 1
      %p187 = por %p185, %p186
      %p188 = scmp.ne.s32.totalorder %s177, %s178
      %p189 = scmp.eq.s32.totalorder %s23, 0
      %p190 = por %p188, %p189
      %p191 = scmp.ne.s32.totalorder %s177, %s178
      %p192 = scmp.eq.s32.totalorder %s24, 1
      %p193 = por %p191, %p192
      %p195 = scmp.ne.s32.totalorder %s178, %s194
      %p196 = scmp.eq.s32.totalorder %s24, 0
      %p197 = por %p195, %p196
      %s198 = ssub.s32 %s18, %s25
      %p199 = scmp.eq.s32.totalorder %s198, 0
      %s201 = sadd.s32 %s200, 1
      %s202 = scalar_select %p199, %s200, %s201
      %p205 = pneg %p199
      %p206 = scmp.eq.s32.totalorder %s18, 1
      %p207 = por %p205, %p206
      %p208 = scmp.ne.s32.totalorder %s200, %s203
      %p209 = scmp.eq.s32.totalorder %s18, 0
      %p210 = por %p208, %p209
      %p211 = scmp.ne.s32.totalorder %s200, %s203
      %p212 = scmp.eq.s32.totalorder %s23, 1
      %p213 = por %p211, %p212
      %p214 = scmp.ne.s32.totalorder %s203, %s204
      %p215 = scmp.eq.s32.totalorder %s23, 0
      %p216 = por %p214, %p215
      %p217 = scmp.ne.s32.totalorder %s203, %s204
      %p218 = scmp.eq.s32.totalorder %s24, 1
      %p219 = por %p217, %p218
      %p221 = scmp.ne.s32.totalorder %s204, %s220
      %p222 = scmp.eq.s32.totalorder %s24, 0
      %p223 = por %p221, %p222
      %s224 = ssub.s32 %s18, %s25
      %p225 = scmp.eq.s32.totalorder %s224, 0
      %s227 = sadd.s32 %s226, 1
      %s228 = scalar_select %p225, %s226, %s227
      %p231 = pneg %p225
      %p232 = scmp.eq.s32.totalorder %s18, 1
      %p233 = por %p231, %p232
      %p234 = scmp.ne.s32.totalorder %s226, %s229
      %p235 = scmp.eq.s32.totalorder %s18, 0
      %p236 = por %p234, %p235
      %p237 = scmp.ne.s32.totalorder %s226, %s229
      %p238 = scmp.eq.s32.totalorder %s23, 1
      %p239 = por %p237, %p238
      %p240 = scmp.ne.s32.totalorder %s229, %s230
      %p241 = scmp.eq.s32.totalorder %s23, 0
      %p242 = por %p240, %p241
      %p243 = scmp.ne.s32.totalorder %s229, %s230
      %p244 = scmp.eq.s32.totalorder %s24, 1
      %p245 = por %p243, %p244
      %p247 = scmp.ne.s32.totalorder %s230, %s246
      %p248 = scmp.eq.s32.totalorder %s24, 0
      %p249 = por %p247, %p248
      %p250 = scmp.le.s32.totalorder 1, %s18
      %p251 = scmp.lt.s32.totalorder %s18, 3
      %p252 = pnand %p250, %p251
      %p253 = pneg %p252
      // Predicated region
      $region9: #{bilstm_crf_forward.4} parent=5 // pred_check
        _
      $region10: #{bilstm_crf_forward.4} parent=5 // pred_check_branch
        %255 = sbr.rel (%p252) target = $region12
      $region11: #{bilstm_crf_forward.4} parent=5 // pred_region
        %s256 = ssub.s32 %s18, 1
        // Predicated region
        $region13: #{bilstm_crf_forward.4} parent=11 // pred_check
          %p257 = pneg %p39
        $region14: #{bilstm_crf_forward.4} parent=11 // pred_check_branch
          %259 = sbr.rel (%p257) target = $region16
        $region15: #{bilstm_crf_forward.4} parent=11 // pred_region
          _
        $region16: #{bilstm_crf_forward.4} parent=11 // pred_fallthru
          _
        // Predicated region
        $region17: #{bilstm_crf_forward.4} parent=11 // pred_check
          %p260 = pneg %p60
        $region18: #{bilstm_crf_forward.4} parent=11 // pred_check_branch
          %262 = sbr.rel (%p260) target = $region20
        $region19: #{bilstm_crf_forward.4} parent=11 // pred_region
          _
        $region20: #{bilstm_crf_forward.4} parent=11 // pred_fallthru
          _
      $region12: #{bilstm_crf_forward.4} parent=5 // pred_fallthru
        _
      %p263 = scmp.lt.s32.totalorder %s18, 2
      // Predicated region
      $region21: #{bilstm_crf_forward.4} parent=5 // pred_check
        %p264 = pneg %p263
      $region22: #{bilstm_crf_forward.4} parent=5 // pred_check_branch
        %266 = sbr.rel (%p264) target = $region24
      $region23: #{bilstm_crf_forward.4} parent=5 // pred_region
        // Predicated region
        $region25: #{bilstm_crf_forward.4} parent=23 // pred_check
          %p267 = pneg %p80
        $region26: #{bilstm_crf_forward.4} parent=23 // pred_check_branch
          %269 = sbr.rel (%p267) target = $region28
        $region27: #{bilstm_crf_forward.4} parent=23 // pred_region
          %p270 = scmp.lt.s32.totalorder %s18, 1
          %s271 = scalar_select %p270, %s18, 1
          %s272 = smul.addr %s271, 7
          %s273 = smul.addr %s272, 8
          %s274 = scalar_lea.vmem %s2, %s273
        $region28: #{bilstm_crf_forward.4} parent=23 // pred_fallthru
          _
        // Predicated region
        $region29: #{bilstm_crf_forward.4} parent=23 // pred_check
          %p275 = pneg %p106
        $region30: #{bilstm_crf_forward.4} parent=23 // pred_check_branch
          %277 = sbr.rel (%p275) target = $region32
        $region31: #{bilstm_crf_forward.4} parent=23 // pred_region
          %p278 = scmp.lt.s32.totalorder %s18, 1
          %s279 = scalar_select %p278, %s18, 1
          %s280 = smul.addr %s279, 2
          %s281 = smul.addr %s280, 8
          %s282 = scalar_lea.vmem %s3, %s281
        $region32: #{bilstm_crf_forward.4} parent=23 // pred_fallthru
          _
        // Predicated region
        $region33: #{bilstm_crf_forward.4} parent=23 // pred_check
          %p283 = pneg %p132
        $region34: #{bilstm_crf_forward.4} parent=23 // pred_check_branch
          %285 = sbr.rel (%p283) target = $region36
        $region35: #{bilstm_crf_forward.4} parent=23 // pred_region
          %p286 = scmp.lt.s32.totalorder %s18, 1
          %s287 = scalar_select %p286, %s18, 1
          %s288 = scalar_lea.vmem %s4, %s287
        $region36: #{bilstm_crf_forward.4} parent=23 // pred_fallthru
          _
        // Predicated region
        $region37: #{bilstm_crf_forward.4} parent=23 // pred_check
          %p289 = pneg %p158
        $region38: #{bilstm_crf_forward.4} parent=23 // pred_check_branch
          %291 = sbr.rel (%p289) target = $region40
        $region39: #{bilstm_crf_forward.4} parent=23 // pred_region
          %p292 = scmp.lt.s32.totalorder %s18, 1
          %s293 = scalar_select %p292, %s18, 1
          %s294 = smul.addr %s293, 2
          %s295 = scalar_lea.vmem %s5, %s294
        $region40: #{bilstm_crf_forward.4} parent=23 // pred_fallthru
          _
        // Predicated region
        $region41: #{bilstm_crf_forward.4} parent=23 // pred_check
          %p296 = pneg %p184
        $region42: #{bilstm_crf_forward.4} parent=23 // pred_check_branch
          %298 = sbr.rel (%p296) target = $region44
        $region43: #{bilstm_crf_forward.4} parent=23 // pred_region
          %p299 = scmp.lt.s32.totalorder %s18, 1
          %s300 = scalar_select %p299, %s18, 1
          %s301 = smul.addr %s300, 2
          %s302 = scalar_lea.vmem %s6, %s301
        $region44: #{bilstm_crf_forward.4} parent=23 // pred_fallthru
          _
      $region24: #{bilstm_crf_forward.4} parent=5 // pred_fallthru
        _
      %p303 = scmp.le.s32.totalorder 1, %s18
      %p304 = scmp.lt.s32.totalorder %s18, 3
      %p305 = pnand %p303, %p304
      %p306 = pneg %p305
      // Predicated region
      $region45: #{bilstm_crf_forward.4} parent=5 // pred_check
        _
      $region46: #{bilstm_crf_forward.4} parent=5 // pred_check_branch
        %308 = sbr.rel (%p305) target = $region48
      $region47: #{bilstm_crf_forward.4} parent=5 // pred_region
        %s309 = ssub.s32 %s18, 1
        %p310 = pneg %p39
        %p311 = pneg %p36
        %p312 = pneg %p60
        %p313 = pneg %p57
        %p314 = scmp.lt.s32.totalorder %s23, 1
        %s315 = scalar_select %p314, %s23, 1
        %s316 = smul.addr %s315, 7
        %s317 = smul.addr %s316, 8
        %s318 = scalar_lea.vmem %s2, %s317
        %p319 = pneg %p86
        %p320 = pneg %p83
        %p321 = scmp.lt.s32.totalorder %s23, 1
        %s322 = scalar_select %p321, %s23, 1
        %s323 = smul.addr %s322, 2
        %s324 = smul.addr %s323, 8
        %s325 = scalar_lea.vmem %s3, %s324
        %p326 = pneg %p112
        %p327 = pneg %p109
        %p328 = scmp.lt.s32.totalorder %s23, 1
        %s329 = scalar_select %p328, %s23, 1
        %s330 = scalar_lea.vmem %s4, %s329
        %p331 = pneg %p138
        %p332 = pneg %p135
        %p333 = scmp.lt.s32.totalorder %s23, 1
        %s334 = scalar_select %p333, %s23, 1
        %s335 = smul.addr %s334, 2
        %s336 = scalar_lea.vmem %s5, %s335
        %p337 = pneg %p164
        %p338 = pneg %p161
        %p339 = scmp.lt.s32.totalorder %s23, 1
        %s340 = scalar_select %p339, %s23, 1
        %s341 = smul.addr %s340, 2
        %s342 = scalar_lea.vmem %s6, %s341
        %p343 = pneg %p190
        %p344 = pneg %p187
        %p345 = pneg %p216
        %p346 = pneg %p213
        %p347 = scmp.lt.s32.totalorder %s23, 1
        %s348 = scalar_select %p347, %s23, 1
        %s349 = smul.addr %s348, 8
        %s350 = smul.addr %s349, 2
        %s351 = scalar_lea.vmem %s7, %s350
        %p352 = pneg %p242
        %p353 = pneg %p239
        %s354 = sand.u32 %s229, 1
        %s355 = scalar_lea.sflag [#allocation5], %s354
        %s356 = sand.u32 %s229, 1
        %s357 = smul.addr %s356, 2
        %s358 = scalar_lea.vmem [#allocation4], %s357
        %p359 = scmp.lt.s32.totalorder %s23, 1
        %s360 = scalar_select %p359, %s23, 1
        %s361 = smul.addr %s360, 7
        %s362 = smul.addr %s361, 8
        %s363 = scalar_lea.vmem %s2, %s362
        %p364 = scmp.lt.s32.totalorder %s23, 1
        %s365 = scalar_select %p364, %s23, 1
        %s366 = smul.addr %s365, 2
        %s367 = smul.addr %s366, 8
        %s368 = scalar_lea.vmem %s3, %s367
        %p369 = scmp.lt.s32.totalorder %s23, 1
        %s370 = scalar_select %p369, %s23, 1
        %s371 = scalar_lea.vmem %s4, %s370
        %p372 = scmp.lt.s32.totalorder %s23, 1
        %s373 = scalar_select %p372, %s23, 1
        %s374 = smul.addr %s373, 2
        %s375 = scalar_lea.vmem %s5, %s374
        %p376 = scmp.lt.s32.totalorder %s23, 1
        %s377 = scalar_select %p376, %s23, 1
        %s378 = smul.addr %s377, 2
        %s379 = scalar_lea.vmem %s6, %s378
        %p380 = scmp.lt.s32.totalorder %s23, 1
        %s381 = scalar_select %p380, %s23, 1
        %s382 = smul.addr %s381, 8
        %s383 = smul.addr %s382, 2
        %s384 = scalar_lea.vmem %s7, %s383
        %v385 = vld [vmem:[%s375] sm:$0x3]
        %vm386 = vcmask 123904
        %387 = vst.msk [vmem:[#allocation2] sm:$0x3] %vm386, %v385
        %v388 = vld [vmem:[%s379] sm:$0x3]
        %389 = vst.msk [vmem:[#allocation3] sm:$0x3] %vm386, %v388
        %v390 = vld [vmem:[%s363] sm:$0xff]
        %v391 = vld [vmem:[%s363 + $0x8] sm:$0xff]
        %v392 = vld [vmem:[%s363 + $0x10] sm:$0xff]
        %v393 = vld [vmem:[%s363 + $0x18] sm:$0xff]
        %v394 = vld [vmem:[%s363 + $0x20] sm:$0xff]
        %v395 = vld [vmem:[%s363 + $0x28] sm:$0xff]
        %v396 = vld [vmem:[%s363 + $0x30] sm:$0xff]
        %v397 = vld [vmem:[%s368] sm:$0xff]
        %v398 = vld [vmem:[%s368 + $0x8] sm:$0xff]
        %v399 = vld [vmem:[%s371] sm:$0x1]
        %p400 = scmp.eq.s32.totalorder %s23, 0
        %s401 = scalar_select %p400, 0, 7
        %s402 = smul.u32 %s401, 2
        %s403 = scalar_lea.vmem %s0, %s402
        %v404 = vld [vmem:[%s403] sm:$0x3]
        %s405 = scalar_lea.vmem %s1, %s402
        %v406 = vld [vmem:[%s405] sm:$0x3]
        %v407 = vld [vmem:[#allocation2] sm:$0x3]
        %v408 = vld [vmem:[#allocation3] sm:$0x3]
        %vm409 = vcmask 130048
        %v411 = vsel %vm409, %v407, 0
        %413 = vmatprep.subr.mxu0 0.0
        %414 = vmatpush1.msra.mxu0 0.0
        %415 = vmatprep.subr.mxu0 0.0
        %416 = vmatpush1.msra.mxu0 0.0
        %417 = vmatprep.subr.mxu0 0.0
        %418 = vmatpush1.msra.mxu0 0.0
        %419 = vmatprep.subr.mxu0 0.0
        %420 = vmatpush1.msra.mxu0 0.0
        %421 = vmatprep.subr.mxu0 0.0
        %422 = vmatpush1.msra.mxu0 0.0
        %423 = vmatprep.subr.mxu0 0.0
        %424 = vmatpush1.msra.mxu0 0.0
        %425 = vmatprep.subr.mxu0 0.0
        %426 = vmatpush1.msra.mxu0 0.0
        %427 = vmatprep.subr.mxu0 0.0
        %428 = vmatpush1.msra.mxu0 0.0
        %429 = vmatprep.subr.mxu0 0.0
        %430 = vmatpush1.msra.mxu0 0.0
        %431 = vmatprep.subr.mxu0 0.0
        %432 = vmatpush1.msra.mxu0 0.0
        %433 = vmatprep.subr.mxu0 0.0
        %434 = vmatpush1.msra.mxu0 0.0
        %435 = vmatprep.subr.mxu0 0.0
        %436 = vmatpush1.msra.mxu0 0.0
        %437 = vmatprep.subr.mxu0 0.0
        %438 = vmatpush1.msra.mxu0 0.0
        %439 = vmatprep.subr.mxu0 0.0
        %440 = vmatpush1.msra.mxu0 0.0
        %441 = vmatprep.subr.mxu0 0.0
        %442 = vmatpush1.msra.mxu0 %v398
        %443 = vmatprep.subr.mxu0 0.0
        %444 = vmatpush1.msra.mxu0 %v397
        %445 = vmatprep.subr.mxu0 0.0
        %446 = vmatpush2.msra.mxu0 0.0
        %447 = vmatprep.subr.mxu0 0.0
        %448 = vmatpush2.msra.mxu0 0.0
        %449 = vmatprep.subr.mxu0 0.0
        %450 = vmatpush2.msra.mxu0 0.0
        %451 = vmatprep.subr.mxu0 0.0
        %452 = vmatpush2.msra.mxu0 0.0
        %453 = vmatprep.subr.mxu0 0.0
        %454 = vmatpush2.msra.mxu0 0.0
        %455 = vmatprep.subr.mxu0 0.0
        %456 = vmatpush2.msra.mxu0 0.0
        %457 = vmatprep.subr.mxu0 0.0
        %458 = vmatpush2.msra.mxu0 0.0
        %459 = vmatprep.subr.mxu0 0.0
        %460 = vmatpush2.msra.mxu0 0.0
        %461 = vmatprep.subr.mxu0 0.0
        %462 = vmatpush2.msra.mxu0 0.0
        %463 = vmatprep.subr.mxu0 0.0
        %464 = vmatpush2.msra.mxu0 0.0
        %465 = vmatprep.subr.mxu0 0.0
        %466 = vmatpush2.msra.mxu0 0.0
        %467 = vmatprep.subr.mxu0 0.0
        %468 = vmatpush2.msra.mxu0 0.0
        %469 = vmatprep.subr.mxu0 0.0
        %470 = vmatpush2.msra.mxu0 0.0
        %471 = vmatprep.subr.mxu0 0.0
        %472 = vmatpush2.msra.mxu0 0.0
        %473 = vmatprep.subr.mxu0 0.0
        %474 = vmatpush2.msra.mxu0 0.0
        %475 = vmatprep.subr.mxu0 0.0
        %476 = vmatpush2.msra.mxu0 0.0
        %477 = vmatprep.mubr.f32.mxu0 0.0
        %478 = vmatmul.mubr.f32.gmra.mxu0 %v411
        %v479 = vpop.f32.mrf.mxu0
        %v480 = vadd.f32 0.0, %v479
        %v481 = vpop.f32.mrf.mxu0
        %482 = vdwg.mxu0
        %vm483 = vcmask 457728
        %v485 = vsel %vm483, %v404, 0
        %487 = vmatprep.subr.mxu0 0.0
        %488 = vmatpush1.msra.mxu0 0.0
        %489 = vmatprep.subr.mxu0 0.0
        %490 = vmatpush1.msra.mxu0 0.0
        %491 = vmatprep.subr.mxu0 0.0
        %492 = vmatpush1.msra.mxu0 0.0
        %493 = vmatprep.subr.mxu0 0.0
        %494 = vmatpush1.msra.mxu0 0.0
        %495 = vmatprep.subr.mxu0 0.0
        %496 = vmatpush1.msra.mxu0 0.0
        %497 = vmatprep.subr.mxu0 0.0
        %498 = vmatpush1.msra.mxu0 0.0
        %499 = vmatprep.subr.mxu0 0.0
        %500 = vmatpush1.msra.mxu0 0.0
        %501 = vmatprep.subr.mxu0 0.0
        %502 = vmatpush1.msra.mxu0 0.0
        %503 = vmatprep.subr.mxu0 0.0
        %504 = vmatpush1.msra.mxu0 0.0
        %505 = vmatprep.subr.mxu0 0.0
        %506 = vmatpush1.msra.mxu0 %v396
        %507 = vmatprep.subr.mxu0 0.0
        %508 = vmatpush1.msra.mxu0 %v395
        %509 = vmatprep.subr.mxu0 0.0
        %510 = vmatpush1.msra.mxu0 %v394
        %511 = vmatprep.subr.mxu0 0.0
        %512 = vmatpush1.msra.mxu0 %v393
        %513 = vmatprep.subr.mxu0 0.0
        %514 = vmatpush1.msra.mxu0 %v392
        %515 = vmatprep.subr.mxu0 0.0
        %516 = vmatpush1.msra.mxu0 %v391
        %517 = vmatprep.subr.mxu0 0.0
        %518 = vmatpush1.msra.mxu0 %v390
        %519 = vmatprep.subr.mxu0 0.0
        %520 = vmatpush2.msra.mxu0 0.0
        %521 = vmatprep.subr.mxu0 0.0
        %522 = vmatpush2.msra.mxu0 0.0
        %523 = vmatprep.subr.mxu0 0.0
        %524 = vmatpush2.msra.mxu0 0.0
        %525 = vmatprep.subr.mxu0 0.0
        %526 = vmatpush2.msra.mxu0 0.0
        %527 = vmatprep.subr.mxu0 0.0
        %528 = vmatpush2.msra.mxu0 0.0
        %529 = vmatprep.subr.mxu0 0.0
        %530 = vmatpush2.msra.mxu0 0.0
        %531 = vmatprep.subr.mxu0 0.0
        %532 = vmatpush2.msra.mxu0 0.0
        %533 = vmatprep.subr.mxu0 0.0
        %534 = vmatpush2.msra.mxu0 0.0
        %535 = vmatprep.subr.mxu0 0.0
        %536 = vmatpush2.msra.mxu0 0.0
        %537 = vmatprep.subr.mxu0 0.0
        %538 = vmatpush2.msra.mxu0 0.0
        %539 = vmatprep.subr.mxu0 0.0
        %540 = vmatpush2.msra.mxu0 0.0
        %541 = vmatprep.subr.mxu0 0.0
        %542 = vmatpush2.msra.mxu0 0.0
        %543 = vmatprep.subr.mxu0 0.0
        %544 = vmatpush2.msra.mxu0 0.0
        %545 = vmatprep.subr.mxu0 0.0
        %546 = vmatpush2.msra.mxu0 0.0
        %547 = vmatprep.subr.mxu0 0.0
        %548 = vmatpush2.msra.mxu0 0.0
        %549 = vmatprep.subr.mxu0 0.0
        %550 = vmatpush2.msra.mxu0 0.0
        %551 = vmatprep.mubr.f32.mxu0 0.0
        %552 = vmatmul.mubr.f32.gmra.mxu0 %v485
        %v553 = vpop.f32.mrf.mxu0
        %v554 = vadd.f32 %v480, %v553
        %v555 = vpop.f32.mrf.mxu0
        %556 = vdwg.mxu0
        %v558 = vlaneseq
        %v559 = vshrl.u32 %v558, 7
        %v560 = vsub.s32 0, %v559
        %v561 = vrot.slane %v399, %v560
        %v563 = vadd.f32 %v554, %v561
        %v564 = vmul.f32 %v563, 0.5
        %v565 = vtanh.pop %v564
        %v566 = vadd.f32 %v565, 1.0
        %v567 = vmul.f32 %v566, 0.5
        %v568 = vtanh.pop %v563
        %570 = vrot.lane.b32.xlu0 %v408, 16
        %v571 = vpop.permute.xlu0 %570
        %v573 = vmul.f32 %v567, %v571
        %575 = vrot.lane.b32.xlu0 %v568, 96
        %v576 = vpop.permute.xlu0 %575
        %v578 = vmul.f32 %v567, %v576
        %580 = vrot.lane.b32.xlu0 %v578, 16
        %v581 = vpop.permute.xlu0 %580
        %v583 = vadd.f32 %v573, %v581
        %v584 = vtanh.pop %v583
        %586 = vrot.lane.b32.xlu0 %v584, 32
        %v587 = vpop.permute.xlu0 %586
        %v589 = vmul.f32 %v567, %v587
        %591 = vset.pattern.permute.xlu0 0
        %592 = vperm.xlu0 %591, %v406
        %v593 = vpop.permute.xlu0 %592
        %v595 = vmul.f32 %v593, %v589
        %v596 = vsub.f32 1.0, %v406
        %598 = vset.pattern.permute.xlu0 0
        %599 = vperm.xlu0 %598, %v596
        %v600 = vpop.permute.xlu0 %599
        %v602 = vmul.f32 %v600, %v407
        %604 = vrot.lane.b32.xlu0 %v602, 48
        %v605 = vpop.permute.xlu0 %604
        %v607 = vadd.f32 %v595, %v605
        %v608 = vmul.f32 %v593, %v583
        %v609 = vmul.f32 %v600, %v408
        %611 = vrot.lane.b32.xlu0 %v609, 16
        %v612 = vpop.permute.xlu0 %611
        %v614 = vadd.f32 %v608, %v612
        %616 = vrot.lane.b32.xlu0 %v607, 80
        %v617 = vpop.permute.xlu0 %616
        %619 = vst.msk [vmem:[#allocation2] sm:$0x3] %vm386, %v617
        %621 = vrot.lane.b32.xlu0 %v614, 112
        %v622 = vpop.permute.xlu0 %621
        %624 = vst.msk [vmem:[#allocation3] sm:$0x3] %vm386, %v622
        %v625 = vmul.f32 %v607, %v593
        %627 = vrot.lane.b32.xlu0 %v625, 80
        %v628 = vpop.permute.xlu0 %627
        %s630 = scalar_lea.vmem %s384, %s402
        %631 = vst.msk [vmem:[%s630] sm:$0x3] %vm386, %v628
        %s632 = scalar_select %p400, 1, 6
        %s633 = smul.u32 %s632, 2
        %s634 = scalar_lea.vmem %s0, %s633
        %v635 = vld [vmem:[%s634] sm:$0x3]
        %s636 = scalar_lea.vmem %s1, %s633
        %v637 = vld [vmem:[%s636] sm:$0x3]
        %v638 = vld [vmem:[#allocation2] sm:$0x3]
        %v639 = vld [vmem:[#allocation3] sm:$0x3]
        %v641 = vsel %vm409, %v638, 0
        %643 = vmatprep.subr.mxu0 0.0
        %644 = vmatpush1.msra.mxu0 0.0
        %645 = vmatprep.subr.mxu0 0.0
        %646 = vmatpush1.msra.mxu0 0.0
        %647 = vmatprep.subr.mxu0 0.0
        %648 = vmatpush1.msra.mxu0 0.0
        %649 = vmatprep.subr.mxu0 0.0
        %650 = vmatpush1.msra.mxu0 0.0
        %651 = vmatprep.subr.mxu0 0.0
        %652 = vmatpush1.msra.mxu0 0.0
        %653 = vmatprep.subr.mxu0 0.0
        %654 = vmatpush1.msra.mxu0 0.0
        %655 = vmatprep.subr.mxu0 0.0
        %656 = vmatpush1.msra.mxu0 0.0
        %657 = vmatprep.subr.mxu0 0.0
        %658 = vmatpush1.msra.mxu0 0.0
        %659 = vmatprep.subr.mxu0 0.0
        %660 = vmatpush1.msra.mxu0 0.0
        %661 = vmatprep.subr.mxu0 0.0
        %662 = vmatpush1.msra.mxu0 0.0
        %663 = vmatprep.subr.mxu0 0.0
        %664 = vmatpush1.msra.mxu0 0.0
        %665 = vmatprep.subr.mxu0 0.0
        %666 = vmatpush1.msra.mxu0 0.0
        %667 = vmatprep.subr.mxu0 0.0
        %668 = vmatpush1.msra.mxu0 0.0
        %669 = vmatprep.subr.mxu0 0.0
        %670 = vmatpush1.msra.mxu0 0.0
        %671 = vmatprep.subr.mxu0 0.0
        %672 = vmatpush1.msra.mxu0 %v398
        %673 = vmatprep.subr.mxu0 0.0
        %674 = vmatpush1.msra.mxu0 %v397
        %675 = vmatprep.subr.mxu0 0.0
        %676 = vmatpush2.msra.mxu0 0.0
        %677 = vmatprep.subr.mxu0 0.0
        %678 = vmatpush2.msra.mxu0 0.0
        %679 = vmatprep.subr.mxu0 0.0
        %680 = vmatpush2.msra.mxu0 0.0
        %681 = vmatprep.subr.mxu0 0.0
        %682 = vmatpush2.msra.mxu0 0.0
        %683 = vmatprep.subr.mxu0 0.0
        %684 = vmatpush2.msra.mxu0 0.0
        %685 = vmatprep.subr.mxu0 0.0
        %686 = vmatpush2.msra.mxu0 0.0
        %687 = vmatprep.subr.mxu0 0.0
        %688 = vmatpush2.msra.mxu0 0.0
        %689 = vmatprep.subr.mxu0 0.0
        %690 = vmatpush2.msra.mxu0 0.0
        %691 = vmatprep.subr.mxu0 0.0
        %692 = vmatpush2.msra.mxu0 0.0
        %693 = vmatprep.subr.mxu0 0.0
        %694 = vmatpush2.msra.mxu0 0.0
        %695 = vmatprep.subr.mxu0 0.0
        %696 = vmatpush2.msra.mxu0 0.0
        %697 = vmatprep.subr.mxu0 0.0
        %698 = vmatpush2.msra.mxu0 0.0
        %699 = vmatprep.subr.mxu0 0.0
        %700 = vmatpush2.msra.mxu0 0.0
        %701 = vmatprep.subr.mxu0 0.0
        %702 = vmatpush2.msra.mxu0 0.0
        %703 = vmatprep.subr.mxu0 0.0
        %704 = vmatpush2.msra.mxu0 0.0
        %705 = vmatprep.subr.mxu0 0.0
        %706 = vmatpush2.msra.mxu0 0.0
        %707 = vmatprep.mubr.f32.mxu0 0.0
        %708 = vmatmul.mubr.f32.gmra.mxu0 %v641
        %v709 = vpop.f32.mrf.mxu0
        %v710 = vadd.f32 0.0, %v709
        %v711 = vpop.f32.mrf.mxu0
        %712 = vdwg.mxu0
        %v714 = vsel %vm483, %v635, 0
        %716 = vmatprep.subr.mxu0 0.0
        %717 = vmatpush1.msra.mxu0 0.0
        %718 = vmatprep.subr.mxu0 0.0
        %719 = vmatpush1.msra.mxu0 0.0
        %720 = vmatprep.subr.mxu0 0.0
        %721 = vmatpush1.msra.mxu0 0.0
        %722 = vmatprep.subr.mxu0 0.0
        %723 = vmatpush1.msra.mxu0 0.0
        %724 = vmatprep.subr.mxu0 0.0
        %725 = vmatpush1.msra.mxu0 0.0
        %726 = vmatprep.subr.mxu0 0.0
        %727 = vmatpush1.msra.mxu0 0.0
        %728 = vmatprep.subr.mxu0 0.0
        %729 = vmatpush1.msra.mxu0 0.0
        %730 = vmatprep.subr.mxu0 0.0
        %731 = vmatpush1.msra.mxu0 0.0
        %732 = vmatprep.subr.mxu0 0.0
        %733 = vmatpush1.msra.mxu0 0.0
        %734 = vmatprep.subr.mxu0 0.0
        %735 = vmatpush1.msra.mxu0 %v396
        %736 = vmatprep.subr.mxu0 0.0
        %737 = vmatpush1.msra.mxu0 %v395
        %738 = vmatprep.subr.mxu0 0.0
        %739 = vmatpush1.msra.mxu0 %v394
        %740 = vmatprep.subr.mxu0 0.0
        %741 = vmatpush1.msra.mxu0 %v393
        %742 = vmatprep.subr.mxu0 0.0
        %743 = vmatpush1.msra.mxu0 %v392
        %744 = vmatprep.subr.mxu0 0.0
        %745 = vmatpush1.msra.mxu0 %v391
        %746 = vmatprep.subr.mxu0 0.0
        %747 = vmatpush1.msra.mxu0 %v390
        %748 = vmatprep.subr.mxu0 0.0
        %749 = vmatpush2.msra.mxu0 0.0
        %750 = vmatprep.subr.mxu0 0.0
        %751 = vmatpush2.msra.mxu0 0.0
        %752 = vmatprep.subr.mxu0 0.0
        %753 = vmatpush2.msra.mxu0 0.0
        %754 = vmatprep.subr.mxu0 0.0
        %755 = vmatpush2.msra.mxu0 0.0
        %756 = vmatprep.subr.mxu0 0.0
        %757 = vmatpush2.msra.mxu0 0.0
        %758 = vmatprep.subr.mxu0 0.0
        %759 = vmatpush2.msra.mxu0 0.0
        %760 = vmatprep.subr.mxu0 0.0
        %761 = vmatpush2.msra.mxu0 0.0
        %762 = vmatprep.subr.mxu0 0.0
        %763 = vmatpush2.msra.mxu0 0.0
        %764 = vmatprep.subr.mxu0 0.0
        %765 = vmatpush2.msra.mxu0 0.0
        %766 = vmatprep.subr.mxu0 0.0
        %767 = vmatpush2.msra.mxu0 0.0
        %768 = vmatprep.subr.mxu0 0.0
        %769 = vmatpush2.msra.mxu0 0.0
        %770 = vmatprep.subr.mxu0 0.0
        %771 = vmatpush2.msra.mxu0 0.0
        %772 = vmatprep.subr.mxu0 0.0
        %773 = vmatpush2.msra.mxu0 0.0
        %774 = vmatprep.subr.mxu0 0.0
        %775 = vmatpush2.msra.mxu0 0.0
        %776 = vmatprep.subr.mxu0 0.0
        %777 = vmatpush2.msra.mxu0 0.0
        %778 = vmatprep.subr.mxu0 0.0
        %779 = vmatpush2.msra.mxu0 0.0
        %780 = vmatprep.mubr.f32.mxu0 0.0
        %781 = vmatmul.mubr.f32.gmra.mxu0 %v714
        %v782 = vpop.f32.mrf.mxu0
        %v783 = vadd.f32 %v710, %v782
        %v784 = vpop.f32.mrf.mxu0
        %785 = vdwg.mxu0
        %v786 = vadd.f32 %v783, %v561
        %v787 = vmul.f32 %v786, 0.5
        %v788 = vtanh.pop %v787
        %v789 = vadd.f32 %v788, 1.0
        %v790 = vmul.f32 %v789, 0.5
        %v791 = vtanh.pop %v786
        %793 = vrot.lane.b32.xlu0 %v639, 16
        %v794 = vpop.permute.xlu0 %793
        %v796 = vmul.f32 %v790, %v794
        %798 = vrot.lane.b32.xlu0 %v791, 96
        %v799 = vpop.permute.xlu0 %798
        %v801 = vmul.f32 %v790, %v799
        %803 = vrot.lane.b32.xlu0 %v801, 16
        %v804 = vpop.permute.xlu0 %803
        %v806 = vadd.f32 %v796, %v804
        %v807 = vtanh.pop %v806
        %809 = vrot.lane.b32.xlu0 %v807, 32
        %v810 = vpop.permute.xlu0 %809
        %v812 = vmul.f32 %v790, %v810
        %814 = vset.pattern.permute.xlu0 0
        %815 = vperm.xlu0 %814, %v637
        %v816 = vpop.permute.xlu0 %815
        %v818 = vmul.f32 %v816, %v812
        %v819 = vsub.f32 1.0, %v637
        %821 = vset.pattern.permute.xlu0 0
        %822 = vperm.xlu0 %821, %v819
        %v823 = vpop.permute.xlu0 %822
        %v825 = vmul.f32 %v823, %v638
        %827 = vrot.lane.b32.xlu0 %v825, 48
        %v828 = vpop.permute.xlu0 %827
        %v830 = vadd.f32 %v818, %v828
        %v831 = vmul.f32 %v816, %v806
        %v832 = vmul.f32 %v823, %v639
        %834 = vrot.lane.b32.xlu0 %v832, 16
        %v835 = vpop.permute.xlu0 %834
        %v837 = vadd.f32 %v831, %v835
        %839 = vrot.lane.b32.xlu0 %v830, 80
        %v840 = vpop.permute.xlu0 %839
        %842 = vst.msk [vmem:[#allocation2] sm:$0x3] %vm386, %v840
        %844 = vrot.lane.b32.xlu0 %v837, 112
        %v845 = vpop.permute.xlu0 %844
        %847 = vst.msk [vmem:[#allocation3] sm:$0x3] %vm386, %v845
        %v848 = vmul.f32 %v830, %v816
        %850 = vrot.lane.b32.xlu0 %v848, 80
        %v851 = vpop.permute.xlu0 %850
        %s853 = scalar_lea.vmem %s384, %s633
        %854 = vst.msk [vmem:[%s853] sm:$0x3] %vm386, %v851
        %s855 = scalar_select %p400, 2, 5
        %s856 = smul.u32 %s855, 2
        %s857 = scalar_lea.vmem %s0, %s856
        %v858 = vld [vmem:[%s857] sm:$0x3]
        %s859 = scalar_lea.vmem %s1, %s856
        %v860 = vld [vmem:[%s859] sm:$0x3]
        %v861 = vld [vmem:[#allocation2] sm:$0x3]
        %v862 = vld [vmem:[#allocation3] sm:$0x3]
        %v864 = vsel %vm409, %v861, 0
        %866 = vmatprep.subr.mxu0 0.0
        %867 = vmatpush1.msra.mxu0 0.0
        %868 = vmatprep.subr.mxu0 0.0
        %869 = vmatpush1.msra.mxu0 0.0
        %870 = vmatprep.subr.mxu0 0.0
        %871 = vmatpush1.msra.mxu0 0.0
        %872 = vmatprep.subr.mxu0 0.0
        %873 = vmatpush1.msra.mxu0 0.0
        %874 = vmatprep.subr.mxu0 0.0
        %875 = vmatpush1.msra.mxu0 0.0
        %876 = vmatprep.subr.mxu0 0.0
        %877 = vmatpush1.msra.mxu0 0.0
        %878 = vmatprep.subr.mxu0 0.0
        %879 = vmatpush1.msra.mxu0 0.0
        %880 = vmatprep.subr.mxu0 0.0
        %881 = vmatpush1.msra.mxu0 0.0
        %882 = vmatprep.subr.mxu0 0.0
        %883 = vmatpush1.msra.mxu0 0.0
        %884 = vmatprep.subr.mxu0 0.0
        %885 = vmatpush1.msra.mxu0 0.0
        %886 = vmatprep.subr.mxu0 0.0
        %887 = vmatpush1.msra.mxu0 0.0
        %888 = vmatprep.subr.mxu0 0.0
        %889 = vmatpush1.msra.mxu0 0.0
        %890 = vmatprep.subr.mxu0 0.0
        %891 = vmatpush1.msra.mxu0 0.0
        %892 = vmatprep.subr.mxu0 0.0
        %893 = vmatpush1.msra.mxu0 0.0
        %894 = vmatprep.subr.mxu0 0.0
        %895 = vmatpush1.msra.mxu0 %v398
        %896 = vmatprep.subr.mxu0 0.0
        %897 = vmatpush1.msra.mxu0 %v397
        %898 = vmatprep.subr.mxu0 0.0
        %899 = vmatpush2.msra.mxu0 0.0
        %900 = vmatprep.subr.mxu0 0.0
        %901 = vmatpush2.msra.mxu0 0.0
        %902 = vmatprep.subr.mxu0 0.0
        %903 = vmatpush2.msra.mxu0 0.0
        %904 = vmatprep.subr.mxu0 0.0
        %905 = vmatpush2.msra.mxu0 0.0
        %906 = vmatprep.subr.mxu0 0.0
        %907 = vmatpush2.msra.mxu0 0.0
        %908 = vmatprep.subr.mxu0 0.0
        %909 = vmatpush2.msra.mxu0 0.0
        %910 = vmatprep.subr.mxu0 0.0
        %911 = vmatpush2.msra.mxu0 0.0
        %912 = vmatprep.subr.mxu0 0.0
        %913 = vmatpush2.msra.mxu0 0.0
        %914 = vmatprep.subr.mxu0 0.0
        %915 = vmatpush2.msra.mxu0 0.0
        %916 = vmatprep.subr.mxu0 0.0
        %917 = vmatpush2.msra.mxu0 0.0
        %918 = vmatprep.subr.mxu0 0.0
        %919 = vmatpush2.msra.mxu0 0.0
        %920 = vmatprep.subr.mxu0 0.0
        %921 = vmatpush2.msra.mxu0 0.0
        %922 = vmatprep.subr.mxu0 0.0
        %923 = vmatpush2.msra.mxu0 0.0
        %924 = vmatprep.subr.mxu0 0.0
        %925 = vmatpush2.msra.mxu0 0.0
        %926 = vmatprep.subr.mxu0 0.0
        %927 = vmatpush2.msra.mxu0 0.0
        %928 = vmatprep.subr.mxu0 0.0
        %929 = vmatpush2.msra.mxu0 0.0
        %930 = vmatprep.mubr.f32.mxu0 0.0
        %931 = vmatmul.mubr.f32.gmra.mxu0 %v864
        %v932 = vpop.f32.mrf.mxu0
        %v933 = vadd.f32 0.0, %v932
        %v934 = vpop.f32.mrf.mxu0
        %935 = vdwg.mxu0
        %v937 = vsel %vm483, %v858, 0
        %939 = vmatprep.subr.mxu0 0.0
        %940 = vmatpush1.msra.mxu0 0.0
        %941 = vmatprep.subr.mxu0 0.0
        %942 = vmatpush1.msra.mxu0 0.0
        %943 = vmatprep.subr.mxu0 0.0
        %944 = vmatpush1.msra.mxu0 0.0
        %945 = vmatprep.subr.mxu0 0.0
        %946 = vmatpush1.msra.mxu0 0.0
        %947 = vmatprep.subr.mxu0 0.0
        %948 = vmatpush1.msra.mxu0 0.0
        %949 = vmatprep.subr.mxu0 0.0
        %950 = vmatpush1.msra.mxu0 0.0
        %951 = vmatprep.subr.mxu0 0.0
        %952 = vmatpush1.msra.mxu0 0.0
        %953 = vmatprep.subr.mxu0 0.0
        %954 = vmatpush1.msra.mxu0 0.0
        %955 = vmatprep.subr.mxu0 0.0
        %956 = vmatpush1.msra.mxu0 0.0
        %957 = vmatprep.subr.mxu0 0.0
        %958 = vmatpush1.msra.mxu0 %v396
        %959 = vmatprep.subr.mxu0 0.0
        %960 = vmatpush1.msra.mxu0 %v395
        %961 = vmatprep.subr.mxu0 0.0
        %962 = vmatpush1.msra.mxu0 %v394
        %963 = vmatprep.subr.mxu0 0.0
        %964 = vmatpush1.msra.mxu0 %v393
        %965 = vmatprep.subr.mxu0 0.0
        %966 = vmatpush1.msra.mxu0 %v392
        %967 = vmatprep.subr.mxu0 0.0
        %968 = vmatpush1.msra.mxu0 %v391
        %969 = vmatprep.subr.mxu0 0.0
        %970 = vmatpush1.msra.mxu0 %v390
        %971 = vmatprep.subr.mxu0 0.0
        %972 = vmatpush2.msra.mxu0 0.0
        %973 = vmatprep.subr.mxu0 0.0
        %974 = vmatpush2.msra.mxu0 0.0
        %975 = vmatprep.subr.mxu0 0.0
        %976 = vmatpush2.msra.mxu0 0.0
        %977 = vmatprep.subr.mxu0 0.0
        %978 = vmatpush2.msra.mxu0 0.0
        %979 = vmatprep.subr.mxu0 0.0
        %980 = vmatpush2.msra.mxu0 0.0
        %981 = vmatprep.subr.mxu0 0.0
        %982 = vmatpush2.msra.mxu0 0.0
        %983 = vmatprep.subr.mxu0 0.0
        %984 = vmatpush2.msra.mxu0 0.0
        %985 = vmatprep.subr.mxu0 0.0
        %986 = vmatpush2.msra.mxu0 0.0
        %987 = vmatprep.subr.mxu0 0.0
        %988 = vmatpush2.msra.mxu0 0.0
        %989 = vmatprep.subr.mxu0 0.0
        %990 = vmatpush2.msra.mxu0 0.0
        %991 = vmatprep.subr.mxu0 0.0
        %992 = vmatpush2.msra.mxu0 0.0
        %993 = vmatprep.subr.mxu0 0.0
        %994 = vmatpush2.msra.mxu0 0.0
        %995 = vmatprep.subr.mxu0 0.0
        %996 = vmatpush2.msra.mxu0 0.0
        %997 = vmatprep.subr.mxu0 0.0
        %998 = vmatpush2.msra.mxu0 0.0
        %999 = vmatprep.subr.mxu0 0.0
        %1000 = vmatpush2.msra.mxu0 0.0
        %1001 = vmatprep.subr.mxu0 0.0
        %1002 = vmatpush2.msra.mxu0 0.0
        %1003 = vmatprep.mubr.f32.mxu0 0.0
        %1004 = vmatmul.mubr.f32.gmra.mxu0 %v937
        %v1005 = vpop.f32.mrf.mxu0
        %v1006 = vadd.f32 %v933, %v1005
        %v1007 = vpop.f32.mrf.mxu0
        %1008 = vdwg.mxu0
        %v1009 = vadd.f32 %v1006, %v561
        %v1010 = vmul.f32 %v1009, 0.5
        %v1011 = vtanh.pop %v1010
        %v1012 = vadd.f32 %v1011, 1.0
        %v1013 = vmul.f32 %v1012, 0.5
        %v1014 = vtanh.pop %v1009
        %1016 = vrot.lane.b32.xlu0 %v862, 16
        %v1017 = vpop.permute.xlu0 %1016
        %v1019 = vmul.f32 %v1013, %v1017
        %1021 = vrot.lane.b32.xlu0 %v1014, 96
        %v1022 = vpop.permute.xlu0 %1021
        %v1024 = vmul.f32 %v1013, %v1022
        %1026 = vrot.lane.b32.xlu0 %v1024, 16
        %v1027 = vpop.permute.xlu0 %1026
        %v1029 = vadd.f32 %v1019, %v1027
        %v1030 = vtanh.pop %v1029
        %1032 = vrot.lane.b32.xlu0 %v1030, 32
        %v1033 = vpop.permute.xlu0 %1032
        %v1035 = vmul.f32 %v1013, %v1033
        %1037 = vset.pattern.permute.xlu0 0
        %1038 = vperm.xlu0 %1037, %v860
        %v1039 = vpop.permute.xlu0 %1038
        %v1041 = vmul.f32 %v1039, %v1035
        %v1042 = vsub.f32 1.0, %v860
        %1044 = vset.pattern.permute.xlu0 0
        %1045 = vperm.xlu0 %1044, %v1042
        %v1046 = vpop.permute.xlu0 %1045
        %v1048 = vmul.f32 %v1046, %v861
        %1050 = vrot.lane.b32.xlu0 %v1048, 48
        %v1051 = vpop.permute.xlu0 %1050
        %v1053 = vadd.f32 %v1041, %v1051
        %v1054 = vmul.f32 %v1039, %v1029
        %v1055 = vmul.f32 %v1046, %v862
        %1057 = vrot.lane.b32.xlu0 %v1055, 16
        %v1058 = vpop.permute.xlu0 %1057
        %v1060 = vadd.f32 %v1054, %v1058
        %1062 = vrot.lane.b32.xlu0 %v1053, 80
        %v1063 = vpop.permute.xlu0 %1062
        %1065 = vst.msk [vmem:[#allocation2] sm:$0x3] %vm386, %v1063
        %1067 = vrot.lane.b32.xlu0 %v1060, 112
        %v1068 = vpop.permute.xlu0 %1067
        %1070 = vst.msk [vmem:[#allocation3] sm:$0x3] %vm386, %v1068
        %v1071 = vmul.f32 %v1053, %v1039
        %1073 = vrot.lane.b32.xlu0 %v1071, 80
        %v1074 = vpop.permute.xlu0 %1073
        %s1076 = scalar_lea.vmem %s384, %s856
        %1077 = vst.msk [vmem:[%s1076] sm:$0x3] %vm386, %v1074
        %s1078 = scalar_select %p400, 3, 4
        %s1079 = smul.u32 %s1078, 2
        %s1080 = scalar_lea.vmem %s0, %s1079
        %v1081 = vld [vmem:[%s1080] sm:$0x3]
        %s1082 = scalar_lea.vmem %s1, %s1079
        %v1083 = vld [vmem:[%s1082] sm:$0x3]
        %v1084 = vld [vmem:[#allocation2] sm:$0x3]
        %v1085 = vld [vmem:[#allocation3] sm:$0x3]
        %v1087 = vsel %vm409, %v1084, 0
        %1089 = vmatprep.subr.mxu0 0.0
        %1090 = vmatpush1.msra.mxu0 0.0
        %1091 = vmatprep.subr.mxu0 0.0
        %1092 = vmatpush1.msra.mxu0 0.0
        %1093 = vmatprep.subr.mxu0 0.0
        %1094 = vmatpush1.msra.mxu0 0.0
        %1095 = vmatprep.subr.mxu0 0.0
        %1096 = vmatpush1.msra.mxu0 0.0
        %1097 = vmatprep.subr.mxu0 0.0
        %1098 = vmatpush1.msra.mxu0 0.0
        %1099 = vmatprep.subr.mxu0 0.0
        %1100 = vmatpush1.msra.mxu0 0.0
        %1101 = vmatprep.subr.mxu0 0.0
        %1102 = vmatpush1.msra.mxu0 0.0
        %1103 = vmatprep.subr.mxu0 0.0
        %1104 = vmatpush1.msra.mxu0 0.0
        %1105 = vmatprep.subr.mxu0 0.0
        %1106 = vmatpush1.msra.mxu0 0.0
        %1107 = vmatprep.subr.mxu0 0.0
        %1108 = vmatpush1.msra.mxu0 0.0
        %1109 = vmatprep.subr.mxu0 0.0
        %1110 = vmatpush1.msra.mxu0 0.0
        %1111 = vmatprep.subr.mxu0 0.0
        %1112 = vmatpush1.msra.mxu0 0.0
        %1113 = vmatprep.subr.mxu0 0.0
        %1114 = vmatpush1.msra.mxu0 0.0
        %1115 = vmatprep.subr.mxu0 0.0
        %1116 = vmatpush1.msra.mxu0 0.0
        %1117 = vmatprep.subr.mxu0 0.0
        %1118 = vmatpush1.msra.mxu0 %v398
        %1119 = vmatprep.subr.mxu0 0.0
        %1120 = vmatpush1.msra.mxu0 %v397
        %1121 = vmatprep.subr.mxu0 0.0
        %1122 = vmatpush2.msra.mxu0 0.0
        %1123 = vmatprep.subr.mxu0 0.0
        %1124 = vmatpush2.msra.mxu0 0.0
        %1125 = vmatprep.subr.mxu0 0.0
        %1126 = vmatpush2.msra.mxu0 0.0
        %1127 = vmatprep.subr.mxu0 0.0
        %1128 = vmatpush2.msra.mxu0 0.0
        %1129 = vmatprep.subr.mxu0 0.0
        %1130 = vmatpush2.msra.mxu0 0.0
        %1131 = vmatprep.subr.mxu0 0.0
        %1132 = vmatpush2.msra.mxu0 0.0
        %1133 = vmatprep.subr.mxu0 0.0
        %1134 = vmatpush2.msra.mxu0 0.0
        %1135 = vmatprep.subr.mxu0 0.0
        %1136 = vmatpush2.msra.mxu0 0.0
        %1137 = vmatprep.subr.mxu0 0.0
        %1138 = vmatpush2.msra.mxu0 0.0
        %1139 = vmatprep.subr.mxu0 0.0
        %1140 = vmatpush2.msra.mxu0 0.0
        %1141 = vmatprep.subr.mxu0 0.0
        %1142 = vmatpush2.msra.mxu0 0.0
        %1143 = vmatprep.subr.mxu0 0.0
        %1144 = vmatpush2.msra.mxu0 0.0
        %1145 = vmatprep.subr.mxu0 0.0
        %1146 = vmatpush2.msra.mxu0 0.0
        %1147 = vmatprep.subr.mxu0 0.0
        %1148 = vmatpush2.msra.mxu0 0.0
        %1149 = vmatprep.subr.mxu0 0.0
        %1150 = vmatpush2.msra.mxu0 0.0
        %1151 = vmatprep.subr.mxu0 0.0
        %1152 = vmatpush2.msra.mxu0 0.0
        %1153 = vmatprep.mubr.f32.mxu0 0.0
        %1154 = vmatmul.mubr.f32.gmra.mxu0 %v1087
        %v1155 = vpop.f32.mrf.mxu0
        %v1156 = vadd.f32 0.0, %v1155
        %v1157 = vpop.f32.mrf.mxu0
        %1158 = vdwg.mxu0
        %v1160 = vsel %vm483, %v1081, 0
        %1162 = vmatprep.subr.mxu0 0.0
        %1163 = vmatpush1.msra.mxu0 0.0
        %1164 = vmatprep.subr.mxu0 0.0
        %1165 = vmatpush1.msra.mxu0 0.0
        %1166 = vmatprep.subr.mxu0 0.0
        %1167 = vmatpush1.msra.mxu0 0.0
        %1168 = vmatprep.subr.mxu0 0.0
        %1169 = vmatpush1.msra.mxu0 0.0
        %1170 = vmatprep.subr.mxu0 0.0
        %1171 = vmatpush1.msra.mxu0 0.0
        %1172 = vmatprep.subr.mxu0 0.0
        %1173 = vmatpush1.msra.mxu0 0.0
        %1174 = vmatprep.subr.mxu0 0.0
        %1175 = vmatpush1.msra.mxu0 0.0
        %1176 = vmatprep.subr.mxu0 0.0
        %1177 = vmatpush1.msra.mxu0 0.0
        %1178 = vmatprep.subr.mxu0 0.0
        %1179 = vmatpush1.msra.mxu0 0.0
        %1180 = vmatprep.subr.mxu0 0.0
        %1181 = vmatpush1.msra.mxu0 %v396
        %1182 = vmatprep.subr.mxu0 0.0
        %1183 = vmatpush1.msra.mxu0 %v395
        %1184 = vmatprep.subr.mxu0 0.0
        %1185 = vmatpush1.msra.mxu0 %v394
        %1186 = vmatprep.subr.mxu0 0.0
        %1187 = vmatpush1.msra.mxu0 %v393
        %1188 = vmatprep.subr.mxu0 0.0
        %1189 = vmatpush1.msra.mxu0 %v392
        %1190 = vmatprep.subr.mxu0 0.0
        %1191 = vmatpush1.msra.mxu0 %v391
        %1192 = vmatprep.subr.mxu0 0.0
        %1193 = vmatpush1.msra.mxu0 %v390
        %1194 = vmatprep.subr.mxu0 0.0
        %1195 = vmatpush2.msra.mxu0 0.0
        %1196 = vmatprep.subr.mxu0 0.0
        %1197 = vmatpush2.msra.mxu0 0.0
        %1198 = vmatprep.subr.mxu0 0.0
        %1199 = vmatpush2.msra.mxu0 0.0
        %1200 = vmatprep.subr.mxu0 0.0
        %1201 = vmatpush2.msra.mxu0 0.0
        %1202 = vmatprep.subr.mxu0 0.0
        %1203 = vmatpush2.msra.mxu0 0.0
        %1204 = vmatprep.subr.mxu0 0.0
        %1205 = vmatpush2.msra.mxu0 0.0
        %1206 = vmatprep.subr.mxu0 0.0
        %1207 = vmatpush2.msra.mxu0 0.0
        %1208 = vmatprep.subr.mxu0 0.0
        %1209 = vmatpush2.msra.mxu0 0.0
        %1210 = vmatprep.subr.mxu0 0.0
        %1211 = vmatpush2.msra.mxu0 0.0
        %1212 = vmatprep.subr.mxu0 0.0
        %1213 = vmatpush2.msra.mxu0 0.0
        %1214 = vmatprep.subr.mxu0 0.0
        %1215 = vmatpush2.msra.mxu0 0.0
        %1216 = vmatprep.subr.mxu0 0.0
        %1217 = vmatpush2.msra.mxu0 0.0
        %1218 = vmatprep.subr.mxu0 0.0
        %1219 = vmatpush2.msra.mxu0 0.0
        %1220 = vmatprep.subr.mxu0 0.0
        %1221 = vmatpush2.msra.mxu0 0.0
        %1222 = vmatprep.subr.mxu0 0.0
        %1223 = vmatpush2.msra.mxu0 0.0
        %1224 = vmatprep.subr.mxu0 0.0
        %1225 = vmatpush2.msra.mxu0 0.0
        %1226 = vmatprep.mubr.f32.mxu0 0.0
        %1227 = vmatmul.mubr.f32.gmra.mxu0 %v1160
        %v1228 = vpop.f32.mrf.mxu0
        %v1229 = vadd.f32 %v1156, %v1228
        %v1230 = vpop.f32.mrf.mxu0
        %1231 = vdwg.mxu0
        %v1232 = vadd.f32 %v1229, %v561
        %v1233 = vmul.f32 %v1232, 0.5
        %v1234 = vtanh.pop %v1233
        %v1235 = vadd.f32 %v1234, 1.0
        %v1236 = vmul.f32 %v1235, 0.5
        %v1237 = vtanh.pop %v1232
        %1239 = vrot.lane.b32.xlu0 %v1085, 16
        %v1240 = vpop.permute.xlu0 %1239
        %v1242 = vmul.f32 %v1236, %v1240
        %1244 = vrot.lane.b32.xlu0 %v1237, 96
        %v1245 = vpop.permute.xlu0 %1244
        %v1247 = vmul.f32 %v1236, %v1245
        %1249 = vrot.lane.b32.xlu0 %v1247, 16
        %v1250 = vpop.permute.xlu0 %1249
        %v1252 = vadd.f32 %v1242, %v1250
        %v1253 = vtanh.pop %v1252
        %1255 = vrot.lane.b32.xlu0 %v1253, 32
        %v1256 = vpop.permute.xlu0 %1255
        %v1258 = vmul.f32 %v1236, %v1256
        %1260 = vset.pattern.permute.xlu0 0
        %1261 = vperm.xlu0 %1260, %v1083
        %v1262 = vpop.permute.xlu0 %1261
        %v1264 = vmul.f32 %v1262, %v1258
        %v1265 = vsub.f32 1.0, %v1083
        %1267 = vset.pattern.permute.xlu0 0
        %1268 = vperm.xlu0 %1267, %v1265
        %v1269 = vpop.permute.xlu0 %1268
        %v1271 = vmul.f32 %v1269, %v1084
        %1273 = vrot.lane.b32.xlu0 %v1271, 48
        %v1274 = vpop.permute.xlu0 %1273
        %v1276 = vadd.f32 %v1264, %v1274
        %v1277 = vmul.f32 %v1262, %v1252
        %v1278 = vmul.f32 %v1269, %v1085
        %1280 = vrot.lane.b32.xlu0 %v1278, 16
        %v1281 = vpop.permute.xlu0 %1280
        %v1283 = vadd.f32 %v1277, %v1281
        %1285 = vrot.lane.b32.xlu0 %v1276, 80
        %v1286 = vpop.permute.xlu0 %1285
        %1288 = vst.msk [vmem:[#allocation2] sm:$0x3] %vm386, %v1286
        %1290 = vrot.lane.b32.xlu0 %v1283, 112
        %v1291 = vpop.permute.xlu0 %1290
        %1293 = vst.msk [vmem:[#allocation3] sm:$0x3] %vm386, %v1291
        %v1294 = vmul.f32 %v1276, %v1262
        %1296 = vrot.lane.b32.xlu0 %v1294, 80
        %v1297 = vpop.permute.xlu0 %1296
        %s1299 = scalar_lea.vmem %s384, %s1079
        %1300 = vst.msk [vmem:[%s1299] sm:$0x3] %vm386, %v1297
        %s1301 = scalar_select %p400, 4, 3
        %s1302 = smul.u32 %s1301, 2
        %s1303 = scalar_lea.vmem %s0, %s1302
        %v1304 = vld [vmem:[%s1303] sm:$0x3]
        %s1305 = scalar_lea.vmem %s1, %s1302
        %v1306 = vld [vmem:[%s1305] sm:$0x3]
        %v1307 = vld [vmem:[#allocation2] sm:$0x3]
        %v1308 = vld [vmem:[#allocation3] sm:$0x3]
        %v1310 = vsel %vm409, %v1307, 0
        %1312 = vmatprep.subr.mxu0 0.0
        %1313 = vmatpush1.msra.mxu0 0.0
        %1314 = vmatprep.subr.mxu0 0.0
        %1315 = vmatpush1.msra.mxu0 0.0
        %1316 = vmatprep.subr.mxu0 0.0
        %1317 = vmatpush1.msra.mxu0 0.0
        %1318 = vmatprep.subr.mxu0 0.0
        %1319 = vmatpush1.msra.mxu0 0.0
        %1320 = vmatprep.subr.mxu0 0.0
        %1321 = vmatpush1.msra.mxu0 0.0
        %1322 = vmatprep.subr.mxu0 0.0
        %1323 = vmatpush1.msra.mxu0 0.0
        %1324 = vmatprep.subr.mxu0 0.0
        %1325 = vmatpush1.msra.mxu0 0.0
        %1326 = vmatprep.subr.mxu0 0.0
        %1327 = vmatpush1.msra.mxu0 0.0
        %1328 = vmatprep.subr.mxu0 0.0
        %1329 = vmatpush1.msra.mxu0 0.0
        %1330 = vmatprep.subr.mxu0 0.0
        %1331 = vmatpush1.msra.mxu0 0.0
        %1332 = vmatprep.subr.mxu0 0.0
        %1333 = vmatpush1.msra.mxu0 0.0
        %1334 = vmatprep.subr.mxu0 0.0
        %1335 = vmatpush1.msra.mxu0 0.0
        %1336 = vmatprep.subr.mxu0 0.0
        %1337 = vmatpush1.msra.mxu0 0.0
        %1338 = vmatprep.subr.mxu0 0.0
        %1339 = vmatpush1.msra.mxu0 0.0
        %1340 = vmatprep.subr.mxu0 0.0
        %1341 = vmatpush1.msra.mxu0 %v398
        %1342 = vmatprep.subr.mxu0 0.0
        %1343 = vmatpush1.msra.mxu0 %v397
        %1344 = vmatprep.subr.mxu0 0.0
        %1345 = vmatpush2.msra.mxu0 0.0
        %1346 = vmatprep.subr.mxu0 0.0
        %1347 = vmatpush2.msra.mxu0 0.0
        %1348 = vmatprep.subr.mxu0 0.0
        %1349 = vmatpush2.msra.mxu0 0.0
        %1350 = vmatprep.subr.mxu0 0.0
        %1351 = vmatpush2.msra.mxu0 0.0
        %1352 = vmatprep.subr.mxu0 0.0
        %1353 = vmatpush2.msra.mxu0 0.0
        %1354 = vmatprep.subr.mxu0 0.0
        %1355 = vmatpush2.msra.mxu0 0.0
        %1356 = vmatprep.subr.mxu0 0.0
        %1357 = vmatpush2.msra.mxu0 0.0
        %1358 = vmatprep.subr.mxu0 0.0
        %1359 = vmatpush2.msra.mxu0 0.0
        %1360 = vmatprep.subr.mxu0 0.0
        %1361 = vmatpush2.msra.mxu0 0.0
        %1362 = vmatprep.subr.mxu0 0.0
        %1363 = vmatpush2.msra.mxu0 0.0
        %1364 = vmatprep.subr.mxu0 0.0
        %1365 = vmatpush2.msra.mxu0 0.0
        %1366 = vmatprep.subr.mxu0 0.0
        %1367 = vmatpush2.msra.mxu0 0.0
        %1368 = vmatprep.subr.mxu0 0.0
        %1369 = vmatpush2.msra.mxu0 0.0
        %1370 = vmatprep.subr.mxu0 0.0
        %1371 = vmatpush2.msra.mxu0 0.0
        %1372 = vmatprep.subr.mxu0 0.0
        %1373 = vmatpush2.msra.mxu0 0.0
        %1374 = vmatprep.subr.mxu0 0.0
        %1375 = vmatpush2.msra.mxu0 0.0
        %1376 = vmatprep.mubr.f32.mxu0 0.0
        %1377 = vmatmul.mubr.f32.gmra.mxu0 %v1310
        %v1378 = vpop.f32.mrf.mxu0
        %v1379 = vadd.f32 0.0, %v1378
        %v1380 = vpop.f32.mrf.mxu0
        %1381 = vdwg.mxu0
        %v1383 = vsel %vm483, %v1304, 0
        %1385 = vmatprep.subr.mxu0 0.0
        %1386 = vmatpush1.msra.mxu0 0.0
        %1387 = vmatprep.subr.mxu0 0.0
        %1388 = vmatpush1.msra.mxu0 0.0
        %1389 = vmatprep.subr.mxu0 0.0
        %1390 = vmatpush1.msra.mxu0 0.0
        %1391 = vmatprep.subr.mxu0 0.0
        %1392 = vmatpush1.msra.mxu0 0.0
        %1393 = vmatprep.subr.mxu0 0.0
        %1394 = vmatpush1.msra.mxu0 0.0
        %1395 = vmatprep.subr.mxu0 0.0
        %1396 = vmatpush1.msra.mxu0 0.0
        %1397 = vmatprep.subr.mxu0 0.0
        %1398 = vmatpush1.msra.mxu0 0.0
        %1399 = vmatprep.subr.mxu0 0.0
        %1400 = vmatpush1.msra.mxu0 0.0
        %1401 = vmatprep.subr.mxu0 0.0
        %1402 = vmatpush1.msra.mxu0 0.0
        %1403 = vmatprep.subr.mxu0 0.0
        %1404 = vmatpush1.msra.mxu0 %v396
        %1405 = vmatprep.subr.mxu0 0.0
        %1406 = vmatpush1.msra.mxu0 %v395
        %1407 = vmatprep.subr.mxu0 0.0
        %1408 = vmatpush1.msra.mxu0 %v394
        %1409 = vmatprep.subr.mxu0 0.0
        %1410 = vmatpush1.msra.mxu0 %v393
        %1411 = vmatprep.subr.mxu0 0.0
        %1412 = vmatpush1.msra.mxu0 %v392
        %1413 = vmatprep.subr.mxu0 0.0
        %1414 = vmatpush1.msra.mxu0 %v391
        %1415 = vmatprep.subr.mxu0 0.0
        %1416 = vmatpush1.msra.mxu0 %v390
        %1417 = vmatprep.subr.mxu0 0.0
        %1418 = vmatpush2.msra.mxu0 0.0
        %1419 = vmatprep.subr.mxu0 0.0
        %1420 = vmatpush2.msra.mxu0 0.0
        %1421 = vmatprep.subr.mxu0 0.0
        %1422 = vmatpush2.msra.mxu0 0.0
        %1423 = vmatprep.subr.mxu0 0.0
        %1424 = vmatpush2.msra.mxu0 0.0
        %1425 = vmatprep.subr.mxu0 0.0
        %1426 = vmatpush2.msra.mxu0 0.0
        %1427 = vmatprep.subr.mxu0 0.0
        %1428 = vmatpush2.msra.mxu0 0.0
        %1429 = vmatprep.subr.mxu0 0.0
        %1430 = vmatpush2.msra.mxu0 0.0
        %1431 = vmatprep.subr.mxu0 0.0
        %1432 = vmatpush2.msra.mxu0 0.0
        %1433 = vmatprep.subr.mxu0 0.0
        %1434 = vmatpush2.msra.mxu0 0.0
        %1435 = vmatprep.subr.mxu0 0.0
        %1436 = vmatpush2.msra.mxu0 0.0
        %1437 = vmatprep.subr.mxu0 0.0
        %1438 = vmatpush2.msra.mxu0 0.0
        %1439 = vmatprep.subr.mxu0 0.0
        %1440 = vmatpush2.msra.mxu0 0.0
        %1441 = vmatprep.subr.mxu0 0.0
        %1442 = vmatpush2.msra.mxu0 0.0
        %1443 = vmatprep.subr.mxu0 0.0
        %1444 = vmatpush2.msra.mxu0 0.0
        %1445 = vmatprep.subr.mxu0 0.0
        %1446 = vmatpush2.msra.mxu0 0.0
        %1447 = vmatprep.subr.mxu0 0.0
        %1448 = vmatpush2.msra.mxu0 0.0
        %1449 = vmatprep.mubr.f32.mxu0 0.0
        %1450 = vmatmul.mubr.f32.gmra.mxu0 %v1383
        %v1451 = vpop.f32.mrf.mxu0
        %v1452 = vadd.f32 %v1379, %v1451
        %v1453 = vpop.f32.mrf.mxu0
        %1454 = vdwg.mxu0
        %v1455 = vadd.f32 %v1452, %v561
        %v1456 = vmul.f32 %v1455, 0.5
        %v1457 = vtanh.pop %v1456
        %v1458 = vadd.f32 %v1457, 1.0
        %v1459 = vmul.f32 %v1458, 0.5
        %v1460 = vtanh.pop %v1455
        %1462 = vrot.lane.b32.xlu0 %v1308, 16
        %v1463 = vpop.permute.xlu0 %1462
        %v1465 = vmul.f32 %v1459, %v1463
        %1467 = vrot.lane.b32.xlu0 %v1460, 96
        %v1468 = vpop.permute.xlu0 %1467
        %v1470 = vmul.f32 %v1459, %v1468
        %1472 = vrot.lane.b32.xlu0 %v1470, 16
        %v1473 = vpop.permute.xlu0 %1472
        %v1475 = vadd.f32 %v1465, %v1473
        %v1476 = vtanh.pop %v1475
        %1478 = vrot.lane.b32.xlu0 %v1476, 32
        %v1479 = vpop.permute.xlu0 %1478
        %v1481 = vmul.f32 %v1459, %v1479
        %1483 = vset.pattern.permute.xlu0 0
        %1484 = vperm.xlu0 %1483, %v1306
        %v1485 = vpop.permute.xlu0 %1484
        %v1487 = vmul.f32 %v1485, %v1481
        %v1488 = vsub.f32 1.0, %v1306
        %1490 = vset.pattern.permute.xlu0 0
        %1491 = vperm.xlu0 %1490, %v1488
        %v1492 = vpop.permute.xlu0 %1491
        %v1494 = vmul.f32 %v1492, %v1307
        %1496 = vrot.lane.b32.xlu0 %v1494, 48
        %v1497 = vpop.permute.xlu0 %1496
        %v1499 = vadd.f32 %v1487, %v1497
        %v1500 = vmul.f32 %v1485, %v1475
        %v1501 = vmul.f32 %v1492, %v1308
        %1503 = vrot.lane.b32.xlu0 %v1501, 16
        %v1504 = vpop.permute.xlu0 %1503
        %v1506 = vadd.f32 %v1500, %v1504
        %1508 = vrot.lane.b32.xlu0 %v1499, 80
        %v1509 = vpop.permute.xlu0 %1508
        %1511 = vst.msk [vmem:[#allocation2] sm:$0x3] %vm386, %v1509
        %1513 = vrot.lane.b32.xlu0 %v1506, 112
        %v1514 = vpop.permute.xlu0 %1513
        %1516 = vst.msk [vmem:[#allocation3] sm:$0x3] %vm386, %v1514
        %v1517 = vmul.f32 %v1499, %v1485
        %1519 = vrot.lane.b32.xlu0 %v1517, 80
        %v1520 = vpop.permute.xlu0 %1519
        %s1522 = scalar_lea.vmem %s384, %s1302
        %1523 = vst.msk [vmem:[%s1522] sm:$0x3] %vm386, %v1520
        %s1524 = scalar_select %p400, 5, 2
        %s1525 = smul.u32 %s1524, 2
        %s1526 = scalar_lea.vmem %s0, %s1525
        %v1527 = vld [vmem:[%s1526] sm:$0x3]
        %s1528 = scalar_lea.vmem %s1, %s1525
        %v1529 = vld [vmem:[%s1528] sm:$0x3]
        %v1530 = vld [vmem:[#allocation2] sm:$0x3]
        %v1531 = vld [vmem:[#allocation3] sm:$0x3]
        %v1533 = vsel %vm409, %v1530, 0
        %1535 = vmatprep.subr.mxu0 0.0
        %1536 = vmatpush1.msra.mxu0 0.0
        %1537 = vmatprep.subr.mxu0 0.0
        %1538 = vmatpush1.msra.mxu0 0.0
        %1539 = vmatprep.subr.mxu0 0.0
        %1540 = vmatpush1.msra.mxu0 0.0
        %1541 = vmatprep.subr.mxu0 0.0
        %1542 = vmatpush1.msra.mxu0 0.0
        %1543 = vmatprep.subr.mxu0 0.0
        %1544 = vmatpush1.msra.mxu0 0.0
        %1545 = vmatprep.subr.mxu0 0.0
        %1546 = vmatpush1.msra.mxu0 0.0
        %1547 = vmatprep.subr.mxu0 0.0
        %1548 = vmatpush1.msra.mxu0 0.0
        %1549 = vmatprep.subr.mxu0 0.0
        %1550 = vmatpush1.msra.mxu0 0.0
        %1551 = vmatprep.subr.mxu0 0.0
        %1552 = vmatpush1.msra.mxu0 0.0
        %1553 = vmatprep.subr.mxu0 0.0
        %1554 = vmatpush1.msra.mxu0 0.0
        %1555 = vmatprep.subr.mxu0 0.0
        %1556 = vmatpush1.msra.mxu0 0.0
        %1557 = vmatprep.subr.mxu0 0.0
        %1558 = vmatpush1.msra.mxu0 0.0
        %1559 = vmatprep.subr.mxu0 0.0
        %1560 = vmatpush1.msra.mxu0 0.0
        %1561 = vmatprep.subr.mxu0 0.0
        %1562 = vmatpush1.msra.mxu0 0.0
        %1563 = vmatprep.subr.mxu0 0.0
        %1564 = vmatpush1.msra.mxu0 %v398
        %1565 = vmatprep.subr.mxu0 0.0
        %1566 = vmatpush1.msra.mxu0 %v397
        %1567 = vmatprep.subr.mxu0 0.0
        %1568 = vmatpush2.msra.mxu0 0.0
        %1569 = vmatprep.subr.mxu0 0.0
        %1570 = vmatpush2.msra.mxu0 0.0
        %1571 = vmatprep.subr.mxu0 0.0
        %1572 = vmatpush2.msra.mxu0 0.0
        %1573 = vmatprep.subr.mxu0 0.0
        %1574 = vmatpush2.msra.mxu0 0.0
        %1575 = vmatprep.subr.mxu0 0.0
        %1576 = vmatpush2.msra.mxu0 0.0
        %1577 = vmatprep.subr.mxu0 0.0
        %1578 = vmatpush2.msra.mxu0 0.0
        %1579 = vmatprep.subr.mxu0 0.0
        %1580 = vmatpush2.msra.mxu0 0.0
        %1581 = vmatprep.subr.mxu0 0.0
        %1582 = vmatpush2.msra.mxu0 0.0
        %1583 = vmatprep.subr.mxu0 0.0
        %1584 = vmatpush2.msra.mxu0 0.0
        %1585 = vmatprep.subr.mxu0 0.0
        %1586 = vmatpush2.msra.mxu0 0.0
        %1587 = vmatprep.subr.mxu0 0.0
        %1588 = vmatpush2.msra.mxu0 0.0
        %1589 = vmatprep.subr.mxu0 0.0
        %1590 = vmatpush2.msra.mxu0 0.0
        %1591 = vmatprep.subr.mxu0 0.0
        %1592 = vmatpush2.msra.mxu0 0.0
        %1593 = vmatprep.subr.mxu0 0.0
        %1594 = vmatpush2.msra.mxu0 0.0
        %1595 = vmatprep.subr.mxu0 0.0
        %1596 = vmatpush2.msra.mxu0 0.0
        %1597 = vmatprep.subr.mxu0 0.0
        %1598 = vmatpush2.msra.mxu0 0.0
        %1599 = vmatprep.mubr.f32.mxu0 0.0
        %1600 = vmatmul.mubr.f32.gmra.mxu0 %v1533
        %v1601 = vpop.f32.mrf.mxu0
        %v1602 = vadd.f32 0.0, %v1601
        %v1603 = vpop.f32.mrf.mxu0
        %1604 = vdwg.mxu0
        %v1606 = vsel %vm483, %v1527, 0
        %1608 = vmatprep.subr.mxu0 0.0
        %1609 = vmatpush1.msra.mxu0 0.0
        %1610 = vmatprep.subr.mxu0 0.0
        %1611 = vmatpush1.msra.mxu0 0.0
        %1612 = vmatprep.subr.mxu0 0.0
        %1613 = vmatpush1.msra.mxu0 0.0
        %1614 = vmatprep.subr.mxu0 0.0
        %1615 = vmatpush1.msra.mxu0 0.0
        %1616 = vmatprep.subr.mxu0 0.0
        %1617 = vmatpush1.msra.mxu0 0.0
        %1618 = vmatprep.subr.mxu0 0.0
        %1619 = vmatpush1.msra.mxu0 0.0
        %1620 = vmatprep.subr.mxu0 0.0
        %1621 = vmatpush1.msra.mxu0 0.0
        %1622 = vmatprep.subr.mxu0 0.0
        %1623 = vmatpush1.msra.mxu0 0.0
        %1624 = vmatprep.subr.mxu0 0.0
        %1625 = vmatpush1.msra.mxu0 0.0
        %1626 = vmatprep.subr.mxu0 0.0
        %1627 = vmatpush1.msra.mxu0 %v396
        %1628 = vmatprep.subr.mxu0 0.0
        %1629 = vmatpush1.msra.mxu0 %v395
        %1630 = vmatprep.subr.mxu0 0.0
        %1631 = vmatpush1.msra.mxu0 %v394
        %1632 = vmatprep.subr.mxu0 0.0
        %1633 = vmatpush1.msra.mxu0 %v393
        %1634 = vmatprep.subr.mxu0 0.0
        %1635 = vmatpush1.msra.mxu0 %v392
        %1636 = vmatprep.subr.mxu0 0.0
        %1637 = vmatpush1.msra.mxu0 %v391
        %1638 = vmatprep.subr.mxu0 0.0
        %1639 = vmatpush1.msra.mxu0 %v390
        %1640 = vmatprep.subr.mxu0 0.0
        %1641 = vmatpush2.msra.mxu0 0.0
        %1642 = vmatprep.subr.mxu0 0.0
        %1643 = vmatpush2.msra.mxu0 0.0
        %1644 = vmatprep.subr.mxu0 0.0
        %1645 = vmatpush2.msra.mxu0 0.0
        %1646 = vmatprep.subr.mxu0 0.0
        %1647 = vmatpush2.msra.mxu0 0.0
        %1648 = vmatprep.subr.mxu0 0.0
        %1649 = vmatpush2.msra.mxu0 0.0
        %1650 = vmatprep.subr.mxu0 0.0
        %1651 = vmatpush2.msra.mxu0 0.0
        %1652 = vmatprep.subr.mxu0 0.0
        %1653 = vmatpush2.msra.mxu0 0.0
        %1654 = vmatprep.subr.mxu0 0.0
        %1655 = vmatpush2.msra.mxu0 0.0
        %1656 = vmatprep.subr.mxu0 0.0
        %1657 = vmatpush2.msra.mxu0 0.0
        %1658 = vmatprep.subr.mxu0 0.0
        %1659 = vmatpush2.msra.mxu0 0.0
        %1660 = vmatprep.subr.mxu0 0.0
        %1661 = vmatpush2.msra.mxu0 0.0
        %1662 = vmatprep.subr.mxu0 0.0
        %1663 = vmatpush2.msra.mxu0 0.0
        %1664 = vmatprep.subr.mxu0 0.0
        %1665 = vmatpush2.msra.mxu0 0.0
        %1666 = vmatprep.subr.mxu0 0.0
        %1667 = vmatpush2.msra.mxu0 0.0
        %1668 = vmatprep.subr.mxu0 0.0
        %1669 = vmatpush2.msra.mxu0 0.0
        %1670 = vmatprep.subr.mxu0 0.0
        %1671 = vmatpush2.msra.mxu0 0.0
        %1672 = vmatprep.mubr.f32.mxu0 0.0
        %1673 = vmatmul.mubr.f32.gmra.mxu0 %v1606
        %v1674 = vpop.f32.mrf.mxu0
        %v1675 = vadd.f32 %v1602, %v1674
        %v1676 = vpop.f32.mrf.mxu0
        %1677 = vdwg.mxu0
        %v1678 = vadd.f32 %v1675, %v561
        %v1679 = vmul.f32 %v1678, 0.5
        %v1680 = vtanh.pop %v1679
        %v1681 = vadd.f32 %v1680, 1.0
        %v1682 = vmul.f32 %v1681, 0.5
        %v1683 = vtanh.pop %v1678
        %1685 = vrot.lane.b32.xlu0 %v1531, 16
        %v1686 = vpop.permute.xlu0 %1685
        %v1688 = vmul.f32 %v1682, %v1686
        %1690 = vrot.lane.b32.xlu0 %v1683, 96
        %v1691 = vpop.permute.xlu0 %1690
        %v1693 = vmul.f32 %v1682, %v1691
        %1695 = vrot.lane.b32.xlu0 %v1693, 16
        %v1696 = vpop.permute.xlu0 %1695
        %v1698 = vadd.f32 %v1688, %v1696
        %v1699 = vtanh.pop %v1698
        %1701 = vrot.lane.b32.xlu0 %v1699, 32
        %v1702 = vpop.permute.xlu0 %1701
        %v1704 = vmul.f32 %v1682, %v1702
        %1706 = vset.pattern.permute.xlu0 0
        %1707 = vperm.xlu0 %1706, %v1529
        %v1708 = vpop.permute.xlu0 %1707
        %v1710 = vmul.f32 %v1708, %v1704
        %v1711 = vsub.f32 1.0, %v1529
        %1713 = vset.pattern.permute.xlu0 0
        %1714 = vperm.xlu0 %1713, %v1711
        %v1715 = vpop.permute.xlu0 %1714
        %v1717 = vmul.f32 %v1715, %v1530
        %1719 = vrot.lane.b32.xlu0 %v1717, 48
        %v1720 = vpop.permute.xlu0 %1719
        %v1722 = vadd.f32 %v1710, %v1720
        %v1723 = vmul.f32 %v1708, %v1698
        %v1724 = vmul.f32 %v1715, %v1531
        %1726 = vrot.lane.b32.xlu0 %v1724, 16
        %v1727 = vpop.permute.xlu0 %1726
        %v1729 = vadd.f32 %v1723, %v1727
        %1731 = vrot.lane.b32.xlu0 %v1722, 80
        %v1732 = vpop.permute.xlu0 %1731
        %1734 = vst.msk [vmem:[#allocation2] sm:$0x3] %vm386, %v1732
        %1736 = vrot.lane.b32.xlu0 %v1729, 112
        %v1737 = vpop.permute.xlu0 %1736
        %1739 = vst.msk [vmem:[#allocation3] sm:$0x3] %vm386, %v1737
        %v1740 = vmul.f32 %v1722, %v1708
        %1742 = vrot.lane.b32.xlu0 %v1740, 80
        %v1743 = vpop.permute.xlu0 %1742
        %s1745 = scalar_lea.vmem %s384, %s1525
        %1746 = vst.msk [vmem:[%s1745] sm:$0x3] %vm386, %v1743
        %s1747 = scalar_select %p400, 6, 1
        %s1748 = smul.u32 %s1747, 2
        %s1749 = scalar_lea.vmem %s0, %s1748
        %v1750 = vld [vmem:[%s1749] sm:$0x3]
        %s1751 = scalar_lea.vmem %s1, %s1748
        %v1752 = vld [vmem:[%s1751] sm:$0x3]
        %v1753 = vld [vmem:[#allocation2] sm:$0x3]
        %v1754 = vld [vmem:[#allocation3] sm:$0x3]
        %v1756 = vsel %vm409, %v1753, 0
        %1758 = vmatprep.subr.mxu0 0.0
        %1759 = vmatpush1.msra.mxu0 0.0
        %1760 = vmatprep.subr.mxu0 0.0
        %1761 = vmatpush1.msra.mxu0 0.0
        %1762 = vmatprep.subr.mxu0 0.0
        %1763 = vmatpush1.msra.mxu0 0.0
        %1764 = vmatprep.subr.mxu0 0.0
        %1765 = vmatpush1.msra.mxu0 0.0
        %1766 = vmatprep.subr.mxu0 0.0
        %1767 = vmatpush1.msra.mxu0 0.0
        %1768 = vmatprep.subr.mxu0 0.0
        %1769 = vmatpush1.msra.mxu0 0.0
        %1770 = vmatprep.subr.mxu0 0.0
        %1771 = vmatpush1.msra.mxu0 0.0
        %1772 = vmatprep.subr.mxu0 0.0
        %1773 = vmatpush1.msra.mxu0 0.0
        %1774 = vmatprep.subr.mxu0 0.0
        %1775 = vmatpush1.msra.mxu0 0.0
        %1776 = vmatprep.subr.mxu0 0.0
        %1777 = vmatpush1.msra.mxu0 0.0
        %1778 = vmatprep.subr.mxu0 0.0
        %1779 = vmatpush1.msra.mxu0 0.0
        %1780 = vmatprep.subr.mxu0 0.0
        %1781 = vmatpush1.msra.mxu0 0.0
        %1782 = vmatprep.subr.mxu0 0.0
        %1783 = vmatpush1.msra.mxu0 0.0
        %1784 = vmatprep.subr.mxu0 0.0
        %1785 = vmatpush1.msra.mxu0 0.0
        %1786 = vmatprep.subr.mxu0 0.0
        %1787 = vmatpush1.msra.mxu0 %v398
        %1788 = vmatprep.subr.mxu0 0.0
        %1789 = vmatpush1.msra.mxu0 %v397
        %1790 = vmatprep.subr.mxu0 0.0
        %1791 = vmatpush2.msra.mxu0 0.0
        %1792 = vmatprep.subr.mxu0 0.0
        %1793 = vmatpush2.msra.mxu0 0.0
        %1794 = vmatprep.subr.mxu0 0.0
        %1795 = vmatpush2.msra.mxu0 0.0
        %1796 = vmatprep.subr.mxu0 0.0
        %1797 = vmatpush2.msra.mxu0 0.0
        %1798 = vmatprep.subr.mxu0 0.0
        %1799 = vmatpush2.msra.mxu0 0.0
        %1800 = vmatprep.subr.mxu0 0.0
        %1801 = vmatpush2.msra.mxu0 0.0
        %1802 = vmatprep.subr.mxu0 0.0
        %1803 = vmatpush2.msra.mxu0 0.0
        %1804 = vmatprep.subr.mxu0 0.0
        %1805 = vmatpush2.msra.mxu0 0.0
        %1806 = vmatprep.subr.mxu0 0.0
        %1807 = vmatpush2.msra.mxu0 0.0
        %1808 = vmatprep.subr.mxu0 0.0
        %1809 = vmatpush2.msra.mxu0 0.0
        %1810 = vmatprep.subr.mxu0 0.0
        %1811 = vmatpush2.msra.mxu0 0.0
        %1812 = vmatprep.subr.mxu0 0.0
        %1813 = vmatpush2.msra.mxu0 0.0
        %1814 = vmatprep.subr.mxu0 0.0
        %1815 = vmatpush2.msra.mxu0 0.0
        %1816 = vmatprep.subr.mxu0 0.0
        %1817 = vmatpush2.msra.mxu0 0.0
        %1818 = vmatprep.subr.mxu0 0.0
        %1819 = vmatpush2.msra.mxu0 0.0
        %1820 = vmatprep.subr.mxu0 0.0
        %1821 = vmatpush2.msra.mxu0 0.0
        %1822 = vmatprep.mubr.f32.mxu0 0.0
        %1823 = vmatmul.mubr.f32.gmra.mxu0 %v1756
        %v1824 = vpop.f32.mrf.mxu0
        %v1825 = vadd.f32 0.0, %v1824
        %v1826 = vpop.f32.mrf.mxu0
        %1827 = vdwg.mxu0
        %v1829 = vsel %vm483, %v1750, 0
        %1831 = vmatprep.subr.mxu0 0.0
        %1832 = vmatpush1.msra.mxu0 0.0
        %1833 = vmatprep.subr.mxu0 0.0
        %1834 = vmatpush1.msra.mxu0 0.0
        %1835 = vmatprep.subr.mxu0 0.0
        %1836 = vmatpush1.msra.mxu0 0.0
        %1837 = vmatprep.subr.mxu0 0.0
        %1838 = vmatpush1.msra.mxu0 0.0
        %1839 = vmatprep.subr.mxu0 0.0
        %1840 = vmatpush1.msra.mxu0 0.0
        %1841 = vmatprep.subr.mxu0 0.0
        %1842 = vmatpush1.msra.mxu0 0.0
        %1843 = vmatprep.subr.mxu0 0.0
        %1844 = vmatpush1.msra.mxu0 0.0
        %1845 = vmatprep.subr.mxu0 0.0
        %1846 = vmatpush1.msra.mxu0 0.0
        %1847 = vmatprep.subr.mxu0 0.0
        %1848 = vmatpush1.msra.mxu0 0.0
        %1849 = vmatprep.subr.mxu0 0.0
        %1850 = vmatpush1.msra.mxu0 %v396
        %1851 = vmatprep.subr.mxu0 0.0
        %1852 = vmatpush1.msra.mxu0 %v395
        %1853 = vmatprep.subr.mxu0 0.0
        %1854 = vmatpush1.msra.mxu0 %v394
        %1855 = vmatprep.subr.mxu0 0.0
        %1856 = vmatpush1.msra.mxu0 %v393
        %1857 = vmatprep.subr.mxu0 0.0
        %1858 = vmatpush1.msra.mxu0 %v392
        %1859 = vmatprep.subr.mxu0 0.0
        %1860 = vmatpush1.msra.mxu0 %v391
        %1861 = vmatprep.subr.mxu0 0.0
        %1862 = vmatpush1.msra.mxu0 %v390
        %1863 = vmatprep.subr.mxu0 0.0
        %1864 = vmatpush2.msra.mxu0 0.0
        %1865 = vmatprep.subr.mxu0 0.0
        %1866 = vmatpush2.msra.mxu0 0.0
        %1867 = vmatprep.subr.mxu0 0.0
        %1868 = vmatpush2.msra.mxu0 0.0
        %1869 = vmatprep.subr.mxu0 0.0
        %1870 = vmatpush2.msra.mxu0 0.0
        %1871 = vmatprep.subr.mxu0 0.0
        %1872 = vmatpush2.msra.mxu0 0.0
        %1873 = vmatprep.subr.mxu0 0.0
        %1874 = vmatpush2.msra.mxu0 0.0
        %1875 = vmatprep.subr.mxu0 0.0
        %1876 = vmatpush2.msra.mxu0 0.0
        %1877 = vmatprep.subr.mxu0 0.0
        %1878 = vmatpush2.msra.mxu0 0.0
        %1879 = vmatprep.subr.mxu0 0.0
        %1880 = vmatpush2.msra.mxu0 0.0
        %1881 = vmatprep.subr.mxu0 0.0
        %1882 = vmatpush2.msra.mxu0 0.0
        %1883 = vmatprep.subr.mxu0 0.0
        %1884 = vmatpush2.msra.mxu0 0.0
        %1885 = vmatprep.subr.mxu0 0.0
        %1886 = vmatpush2.msra.mxu0 0.0
        %1887 = vmatprep.subr.mxu0 0.0
        %1888 = vmatpush2.msra.mxu0 0.0
        %1889 = vmatprep.subr.mxu0 0.0
        %1890 = vmatpush2.msra.mxu0 0.0
        %1891 = vmatprep.subr.mxu0 0.0
        %1892 = vmatpush2.msra.mxu0 0.0
        %1893 = vmatprep.subr.mxu0 0.0
        %1894 = vmatpush2.msra.mxu0 0.0
        %1895 = vmatprep.mubr.f32.mxu0 0.0
        %1896 = vmatmul.mubr.f32.gmra.mxu0 %v1829
        %v1897 = vpop.f32.mrf.mxu0
        %v1898 = vadd.f32 %v1825, %v1897
        %v1899 = vpop.f32.mrf.mxu0
        %1900 = vdwg.mxu0
        %v1901 = vadd.f32 %v1898, %v561
        %v1902 = vmul.f32 %v1901, 0.5
        %v1903 = vtanh.pop %v1902
        %v1904 = vadd.f32 %v1903, 1.0
        %v1905 = vmul.f32 %v1904, 0.5
        %v1906 = vtanh.pop %v1901
        %1908 = vrot.lane.b32.xlu0 %v1754, 16
        %v1909 = vpop.permute.xlu0 %1908
        %v1911 = vmul.f32 %v1905, %v1909
        %1913 = vrot.lane.b32.xlu0 %v1906, 96
        %v1914 = vpop.permute.xlu0 %1913
        %v1916 = vmul.f32 %v1905, %v1914
        %1918 = vrot.lane.b32.xlu0 %v1916, 16
        %v1919 = vpop.permute.xlu0 %1918
        %v1921 = vadd.f32 %v1911, %v1919
        %v1922 = vtanh.pop %v1921
        %1924 = vrot.lane.b32.xlu0 %v1922, 32
        %v1925 = vpop.permute.xlu0 %1924
        %v1927 = vmul.f32 %v1905, %v1925
        %1929 = vset.pattern.permute.xlu0 0
        %1930 = vperm.xlu0 %1929, %v1752
        %v1931 = vpop.permute.xlu0 %1930
        %v1933 = vmul.f32 %v1931, %v1927
        %v1934 = vsub.f32 1.0, %v1752
        %1936 = vset.pattern.permute.xlu0 0
        %1937 = vperm.xlu0 %1936, %v1934
        %v1938 = vpop.permute.xlu0 %1937
        %v1940 = vmul.f32 %v1938, %v1753
        %1942 = vrot.lane.b32.xlu0 %v1940, 48
        %v1943 = vpop.permute.xlu0 %1942
        %v1945 = vadd.f32 %v1933, %v1943
        %v1946 = vmul.f32 %v1931, %v1921
        %v1947 = vmul.f32 %v1938, %v1754
        %1949 = vrot.lane.b32.xlu0 %v1947, 16
        %v1950 = vpop.permute.xlu0 %1949
        %v1952 = vadd.f32 %v1946, %v1950
        %1954 = vrot.lane.b32.xlu0 %v1945, 80
        %v1955 = vpop.permute.xlu0 %1954
        %1957 = vst.msk [vmem:[#allocation2] sm:$0x3] %vm386, %v1955
        %1959 = vrot.lane.b32.xlu0 %v1952, 112
        %v1960 = vpop.permute.xlu0 %1959
        %1962 = vst.msk [vmem:[#allocation3] sm:$0x3] %vm386, %v1960
        %v1963 = vmul.f32 %v1945, %v1931
        %1965 = vrot.lane.b32.xlu0 %v1963, 80
        %v1966 = vpop.permute.xlu0 %1965
        %s1968 = scalar_lea.vmem %s384, %s1748
        %1969 = vst.msk [vmem:[%s1968] sm:$0x3] %vm386, %v1966
        %s1970 = scalar_select %p400, 7, 0
        %s1971 = smul.u32 %s1970, 2
        %s1972 = scalar_lea.vmem %s0, %s1971
        %v1973 = vld [vmem:[%s1972] sm:$0x3]
        %s1974 = scalar_lea.vmem %s1, %s1971
        %v1975 = vld [vmem:[%s1974] sm:$0x3]
        %v1976 = vld [vmem:[#allocation2] sm:$0x3]
        %v1977 = vld [vmem:[#allocation3] sm:$0x3]
        %v1979 = vsel %vm409, %v1976, 0
        %1981 = vmatprep.subr.mxu0 0.0
        %1982 = vmatpush1.msra.mxu0 0.0
        %1983 = vmatprep.subr.mxu0 0.0
        %1984 = vmatpush1.msra.mxu0 0.0
        %1985 = vmatprep.subr.mxu0 0.0
        %1986 = vmatpush1.msra.mxu0 0.0
        %1987 = vmatprep.subr.mxu0 0.0
        %1988 = vmatpush1.msra.mxu0 0.0
        %1989 = vmatprep.subr.mxu0 0.0
        %1990 = vmatpush1.msra.mxu0 0.0
        %1991 = vmatprep.subr.mxu0 0.0
        %1992 = vmatpush1.msra.mxu0 0.0
        %1993 = vmatprep.subr.mxu0 0.0
        %1994 = vmatpush1.msra.mxu0 0.0
        %1995 = vmatprep.subr.mxu0 0.0
        %1996 = vmatpush1.msra.mxu0 0.0
        %1997 = vmatprep.subr.mxu0 0.0
        %1998 = vmatpush1.msra.mxu0 0.0
        %1999 = vmatprep.subr.mxu0 0.0
        %2000 = vmatpush1.msra.mxu0 0.0
        %2001 = vmatprep.subr.mxu0 0.0
        %2002 = vmatpush1.msra.mxu0 0.0
        %2003 = vmatprep.subr.mxu0 0.0
        %2004 = vmatpush1.msra.mxu0 0.0
        %2005 = vmatprep.subr.mxu0 0.0
        %2006 = vmatpush1.msra.mxu0 0.0
        %2007 = vmatprep.subr.mxu0 0.0
        %2008 = vmatpush1.msra.mxu0 0.0
        %2009 = vmatprep.subr.mxu0 0.0
        %2010 = vmatpush1.msra.mxu0 %v398
        %2011 = vmatprep.subr.mxu0 0.0
        %2012 = vmatpush1.msra.mxu0 %v397
        %2013 = vmatprep.subr.mxu0 0.0
        %2014 = vmatpush2.msra.mxu0 0.0
        %2015 = vmatprep.subr.mxu0 0.0
        %2016 = vmatpush2.msra.mxu0 0.0
        %2017 = vmatprep.subr.mxu0 0.0
        %2018 = vmatpush2.msra.mxu0 0.0
        %2019 = vmatprep.subr.mxu0 0.0
        %2020 = vmatpush2.msra.mxu0 0.0
        %2021 = vmatprep.subr.mxu0 0.0
        %2022 = vmatpush2.msra.mxu0 0.0
        %2023 = vmatprep.subr.mxu0 0.0
        %2024 = vmatpush2.msra.mxu0 0.0
        %2025 = vmatprep.subr.mxu0 0.0
        %2026 = vmatpush2.msra.mxu0 0.0
        %2027 = vmatprep.subr.mxu0 0.0
        %2028 = vmatpush2.msra.mxu0 0.0
        %2029 = vmatprep.subr.mxu0 0.0
        %2030 = vmatpush2.msra.mxu0 0.0
        %2031 = vmatprep.subr.mxu0 0.0
        %2032 = vmatpush2.msra.mxu0 0.0
        %2033 = vmatprep.subr.mxu0 0.0
        %2034 = vmatpush2.msra.mxu0 0.0
        %2035 = vmatprep.subr.mxu0 0.0
        %2036 = vmatpush2.msra.mxu0 0.0
        %2037 = vmatprep.subr.mxu0 0.0
        %2038 = vmatpush2.msra.mxu0 0.0
        %2039 = vmatprep.subr.mxu0 0.0
        %2040 = vmatpush2.msra.mxu0 0.0
        %2041 = vmatprep.subr.mxu0 0.0
        %2042 = vmatpush2.msra.mxu0 0.0
        %2043 = vmatprep.subr.mxu0 0.0
        %2044 = vmatpush2.msra.mxu0 0.0
        %2045 = vmatprep.mubr.f32.mxu0 0.0
        %2046 = vmatmul.mubr.f32.gmra.mxu0 %v1979
        %v2047 = vpop.f32.mrf.mxu0
        %v2048 = vadd.f32 0.0, %v2047
        %v2049 = vpop.f32.mrf.mxu0
        %2050 = vdwg.mxu0
        %v2052 = vsel %vm483, %v1973, 0
        %2054 = vmatprep.subr.mxu0 0.0
        %2055 = vmatpush1.msra.mxu0 0.0
        %2056 = vmatprep.subr.mxu0 0.0
        %2057 = vmatpush1.msra.mxu0 0.0
        %2058 = vmatprep.subr.mxu0 0.0
        %2059 = vmatpush1.msra.mxu0 0.0
        %2060 = vmatprep.subr.mxu0 0.0
        %2061 = vmatpush1.msra.mxu0 0.0
        %2062 = vmatprep.subr.mxu0 0.0
        %2063 = vmatpush1.msra.mxu0 0.0
        %2064 = vmatprep.subr.mxu0 0.0
        %2065 = vmatpush1.msra.mxu0 0.0
        %2066 = vmatprep.subr.mxu0 0.0
        %2067 = vmatpush1.msra.mxu0 0.0
        %2068 = vmatprep.subr.mxu0 0.0
        %2069 = vmatpush1.msra.mxu0 0.0
        %2070 = vmatprep.subr.mxu0 0.0
        %2071 = vmatpush1.msra.mxu0 0.0
        %2072 = vmatprep.subr.mxu0 0.0
        %2073 = vmatpush1.msra.mxu0 %v396
        %2074 = vmatprep.subr.mxu0 0.0
        %2075 = vmatpush1.msra.mxu0 %v395
        %2076 = vmatprep.subr.mxu0 0.0
        %2077 = vmatpush1.msra.mxu0 %v394
        %2078 = vmatprep.subr.mxu0 0.0
        %2079 = vmatpush1.msra.mxu0 %v393
        %2080 = vmatprep.subr.mxu0 0.0
        %2081 = vmatpush1.msra.mxu0 %v392
        %2082 = vmatprep.subr.mxu0 0.0
        %2083 = vmatpush1.msra.mxu0 %v391
        %2084 = vmatprep.subr.mxu0 0.0
        %2085 = vmatpush1.msra.mxu0 %v390
        %2086 = vmatprep.subr.mxu0 0.0
        %2087 = vmatpush2.msra.mxu0 0.0
        %2088 = vmatprep.subr.mxu0 0.0
        %2089 = vmatpush2.msra.mxu0 0.0
        %2090 = vmatprep.subr.mxu0 0.0
        %2091 = vmatpush2.msra.mxu0 0.0
        %2092 = vmatprep.subr.mxu0 0.0
        %2093 = vmatpush2.msra.mxu0 0.0
        %2094 = vmatprep.subr.mxu0 0.0
        %2095 = vmatpush2.msra.mxu0 0.0
        %2096 = vmatprep.subr.mxu0 0.0
        %2097 = vmatpush2.msra.mxu0 0.0
        %2098 = vmatprep.subr.mxu0 0.0
        %2099 = vmatpush2.msra.mxu0 0.0
        %2100 = vmatprep.subr.mxu0 0.0
        %2101 = vmatpush2.msra.mxu0 0.0
        %2102 = vmatprep.subr.mxu0 0.0
        %2103 = vmatpush2.msra.mxu0 0.0
        %2104 = vmatprep.subr.mxu0 0.0
        %2105 = vmatpush2.msra.mxu0 0.0
        %2106 = vmatprep.subr.mxu0 0.0
        %2107 = vmatpush2.msra.mxu0 0.0
        %2108 = vmatprep.subr.mxu0 0.0
        %2109 = vmatpush2.msra.mxu0 0.0
        %2110 = vmatprep.subr.mxu0 0.0
        %2111 = vmatpush2.msra.mxu0 0.0
        %2112 = vmatprep.subr.mxu0 0.0
        %2113 = vmatpush2.msra.mxu0 0.0
        %2114 = vmatprep.subr.mxu0 0.0
        %2115 = vmatpush2.msra.mxu0 0.0
        %2116 = vmatprep.subr.mxu0 0.0
        %2117 = vmatpush2.msra.mxu0 0.0
        %2118 = vmatprep.mubr.f32.mxu0 0.0
        %2119 = vmatmul.mubr.f32.gmra.mxu0 %v2052
        %v2120 = vpop.f32.mrf.mxu0
        %v2121 = vadd.f32 %v2048, %v2120
        %v2122 = vpop.f32.mrf.mxu0
        %2123 = vdwg.mxu0
        %v2124 = vadd.f32 %v2121, %v561
        %v2125 = vmul.f32 %v2124, 0.5
        %v2126 = vtanh.pop %v2125
        %v2127 = vadd.f32 %v2126, 1.0
        %v2128 = vmul.f32 %v2127, 0.5
        %v2129 = vtanh.pop %v2124
        %2131 = vrot.lane.b32.xlu0 %v1977, 16
        %v2132 = vpop.permute.xlu0 %2131
        %v2134 = vmul.f32 %v2128, %v2132
        %2136 = vrot.lane.b32.xlu0 %v2129, 96
        %v2137 = vpop.permute.xlu0 %2136
        %v2139 = vmul.f32 %v2128, %v2137
        %2141 = vrot.lane.b32.xlu0 %v2139, 16
        %v2142 = vpop.permute.xlu0 %2141
        %v2144 = vadd.f32 %v2134, %v2142
        %v2145 = vtanh.pop %v2144
        %2147 = vrot.lane.b32.xlu0 %v2145, 32
        %v2148 = vpop.permute.xlu0 %2147
        %v2150 = vmul.f32 %v2128, %v2148
        %2152 = vset.pattern.permute.xlu0 0
        %2153 = vperm.xlu0 %2152, %v1975
        %v2154 = vpop.permute.xlu0 %2153
        %v2156 = vmul.f32 %v2154, %v2150
        %v2157 = vsub.f32 1.0, %v1975
        %2159 = vset.pattern.permute.xlu0 0
        %2160 = vperm.xlu0 %2159, %v2157
        %v2161 = vpop.permute.xlu0 %2160
        %v2163 = vmul.f32 %v2161, %v1976
        %2165 = vrot.lane.b32.xlu0 %v2163, 48
        %v2166 = vpop.permute.xlu0 %2165
        %v2168 = vadd.f32 %v2156, %v2166
        %v2169 = vmul.f32 %v2154, %v2144
        %v2170 = vmul.f32 %v2161, %v1977
        %2172 = vrot.lane.b32.xlu0 %v2170, 16
        %v2173 = vpop.permute.xlu0 %2172
        %v2175 = vadd.f32 %v2169, %v2173
        %2177 = vrot.lane.b32.xlu0 %v2168, 80
        %v2178 = vpop.permute.xlu0 %2177
        %2180 = vst.msk [vmem:[#allocation2] sm:$0x3] %vm386, %v2178
        %2182 = vrot.lane.b32.xlu0 %v2175, 112
        %v2183 = vpop.permute.xlu0 %2182
        %2185 = vst.msk [vmem:[#allocation3] sm:$0x3] %vm386, %v2183
        %v2186 = vmul.f32 %v2168, %v2154
        %2188 = vrot.lane.b32.xlu0 %v2186, 80
        %v2189 = vpop.permute.xlu0 %2188
        %s2191 = scalar_lea.vmem %s384, %s1971
        %2192 = vst.msk [vmem:[%s2191] sm:$0x3] %vm386, %v2189
        %v2193 = vld [vmem:[#allocation2] sm:$0x3]
        %2194 = vst.msk [vmem:[%s358] sm:$0x3] %vm386, %v2193
        %p2195 = scmp.lt.s32.totalorder %s23, 1
        %s2196 = scalar_select %p2195, %s23, 1
        %s2197 = smul.addr %s2196, 8
        %s2198 = smul.addr %s2197, 2
        %s2199 = scalar_lea.vmem %s7, %s2198
        %s2200 = sand.u32 %s229, 1
        %s2201 = scalar_lea.sflag [#allocation5], %s2200
        %s2202 = sand.u32 %s229, 1
        %s2203 = smul.addr %s2202, 2
        %s2204 = scalar_lea.vmem [#allocation4], %s2203
        // Predicated region
        $region49: #{bilstm_crf_forward.4} parent=47 // pred_check
          %p2205 = pneg %p213
        $region50: #{bilstm_crf_forward.4} parent=47 // pred_check_branch
          %2207 = sbr.rel (%p2205) target = $region52
        $region51: #{bilstm_crf_forward.4} parent=47 // pred_region
          _
        $region52: #{bilstm_crf_forward.4} parent=47 // pred_fallthru
          _
        // Predicated region
        $region53: #{bilstm_crf_forward.4} parent=47 // pred_check
          %p2208 = pneg %p239
        $region54: #{bilstm_crf_forward.4} parent=47 // pred_check_branch
          %2210 = sbr.rel (%p2208) target = $region56
        $region55: #{bilstm_crf_forward.4} parent=47 // pred_region
          %s2212 = ssub.s32 32, 32
          %2213 = vsyncadd %s2201, %s2212
          %s2214 = smul.addr %s23, 32
          %s2215 = scalar_lea.hbm %s8, %s2214
          %s2217 = sshll.u32 %s2204, 4
          %s2218 = int_to_ptr.vmem [resolvable:$true] %s2217
          %2220 = dma.vmem_to_hbm [thread:$0]  %s2218, 32, %s2215, %s2201
        $region56: #{bilstm_crf_forward.4} parent=47 // pred_fallthru
          _
      $region48: #{bilstm_crf_forward.4} parent=5 // pred_fallthru
        _
      %p2221 = scmp.le.s32.totalorder 2, %s18
      // Predicated region
      $region57: #{bilstm_crf_forward.4} parent=5 // pred_check
        %p2222 = pneg %p2221
      $region58: #{bilstm_crf_forward.4} parent=5 // pred_check_branch
        %2224 = sbr.rel (%p2222) target = $region60
      $region59: #{bilstm_crf_forward.4} parent=5 // pred_region
        %s2225 = ssub.s32 %s18, 2
        // Predicated region
        $region61: #{bilstm_crf_forward.4} parent=59 // pred_check
          %p2226 = pneg %p219
        $region62: #{bilstm_crf_forward.4} parent=59 // pred_check_branch
          %2228 = sbr.rel (%p2226) target = $region64
        $region63: #{bilstm_crf_forward.4} parent=59 // pred_region
          %p2229 = scmp.lt.s32.totalorder %s24, 1
          %s2230 = scalar_select %p2229, %s24, 1
          %s2231 = smul.addr %s2230, 8
          %s2232 = smul.addr %s2231, 2
          %s2233 = scalar_lea.vmem %s7, %s2232
        $region64: #{bilstm_crf_forward.4} parent=59 // pred_fallthru
          _
        // Predicated region
        $region65: #{bilstm_crf_forward.4} parent=59 // pred_check
          %p2234 = pneg %p245
        $region66: #{bilstm_crf_forward.4} parent=59 // pred_check_branch
          %2236 = sbr.rel (%p2234) target = $region68
        $region67: #{bilstm_crf_forward.4} parent=59 // pred_region
          %s2237 = sand.u32 %s230, 1
          %s2238 = scalar_lea.sflag [#allocation5], %s2237
          %s2239 = sand.u32 %s230, 1
          %s2240 = smul.addr %s2239, 2
          %s2241 = scalar_lea.vmem [#allocation4], %s2240
          %2242 = dma.done %s2238, 32
        $region68: #{bilstm_crf_forward.4} parent=59 // pred_fallthru
          _
      $region60: #{bilstm_crf_forward.4} parent=5 // pred_fallthru
        _
    $region6: #{bilstm_crf_forward.4} parent=1 // loop_footer
      %s22 = sadd.s32 1, %s18
    $region7: #{bilstm_crf_forward.4} parent=1 // loop_footer_branch
      %17 = sbr.rel target = $region3
    $region8: #{bilstm_crf_forward.4} parent=1 // loop_exit
      _
    %2243 = vsyncpa [#allocation5], 1
    %s2244 = scalar_lea.sflag [#allocation5], 1
    %2245 = vsyncpa %s2244, 1

// kernel: custom-call.26
$region0: #{custom-call.26}
  %s0 = inlined_call_operand.vmem [shape: s32[7,2], index: 0, kind: output, shape index: {}]

</llo_original>
